<compile_context>
chip_gen: v7x
topology: tpu7x:2x2x1
jax: 0.10.0
libtpu: 0.0.40
codegen_flags: <defaults>
</compile_context>

<pallas_src>
import jax
import jax.numpy as jnp
from jax.experimental import pallas as pl
from jax.experimental.pallas import tpu as pltpu

HO = 256
WO = 256
ROW_TILE = 64          # output-row tile; 256 % ROW_TILE == 0


# ---------------- fused Pallas kernel ----------------

def _fused_after_res_kernel(x_ref, ah_ref, awt_ref,
                            wb_ref, bb_ref, wc_ref, bc_ref,
                            xup_ref, g_ref):
    # x_ref  : (1, Cin, H, W)            VMEM   input image (NCHW slice)
    # ah_ref : (ROW_TILE, H)             VMEM   H-upsample rows for this tile
    # awt_ref: (W, WO)                   VMEM   W-upsample matrix (transposed)
    # wb_ref : (Cout, Cin)               SMEM   bridge conv weight
    # bb_ref : (Cout,)                   SMEM   bridge conv bias
    # wc_ref : (Cout, Cout)              SMEM   second conv weight
    # bc_ref : (Cout,)                   SMEM   second conv bias
    # xup_ref: (1, Cout, ROW_TILE, WO)   VMEM   output: bridged + upsampled
    # g_ref  : (1, Cout, ROW_TILE, WO)   VMEM   output: conv + sigmoid
    cin = x_ref.shape[1]
    cout = xup_ref.shape[1]

    ah = ah_ref[...]           # (ROW_TILE, H)
    awt = awt_ref[...]         # (W, WO)

    # ---- bridge 1x1 conv + separable bilinear upsample (per out channel) ----
    for c in range(cout):
        acc = x_ref[0, 0] * wb_ref[c, 0]
        for k in range(1, cin):
            acc = acc + x_ref[0, k] * wb_ref[c, k]
        y = acc + bb_ref[c]                                           # (H, W)
        # W-upsample first -> lane-dense (H, WO), then H-upsample for this tile.
        tmp = jnp.dot(y, awt, preferred_element_type=jnp.float32)     # (H, WO)
        xup_ref[0, c] = jnp.dot(ah, tmp,
                                preferred_element_type=jnp.float32)   # (ROW_TILE, WO)

    # ---- second 1x1 conv + sigmoid, reading the just-written x_up block ----
    for c in range(cout):
        gacc = xup_ref[0, 0] * wc_ref[c, 0]
        for k in range(1, cout):
            gacc = gacc + xup_ref[0, k] * wc_ref[c, k]
        g_ref[0, c] = jax.nn.sigmoid(gacc + bc_ref[c])


# ---------------- glue (plain JAX) ----------------

def resize_matrix(out_size, in_size):
    """Row-interpolation matrix matching F.interpolate bilinear, align_corners=False."""
    scale = in_size / out_size
    i = jnp.arange(out_size, dtype=jnp.float32)
    src = (i + 0.5) * scale - 0.5
    src = jnp.maximum(src, 0.0)                       # PyTorch clamps negative src to 0
    i0 = jnp.minimum(jnp.floor(src).astype(jnp.int32), in_size - 1)
    i1 = jnp.minimum(i0 + 1, in_size - 1)
    w1 = jnp.clip(src - i0.astype(jnp.float32), 0.0, 1.0)
    w0 = 1.0 - w1
    A = jnp.zeros((out_size, in_size), dtype=jnp.float32)
    rows = jnp.arange(out_size)
    A = A.at[rows, i0].add(w0)
    A = A.at[rows, i1].add(w1)
    return A


def after_res_forward(x, w_bridge, b_bridge, w_conv, b_conv):
    """x: (N, Cin, H, W) NCHW f32. Returns (x_up, g), both (N, Cout, 256, 256)."""
    N, Cin, H, W = x.shape
    Cout = w_bridge.shape[0]
    rt = ROW_TILE
    n_row_tiles = HO // rt

    ah = resize_matrix(HO, H)          # (256, H)
    awt = resize_matrix(WO, W).T       # (W, 256)

    smem_spec = pl.BlockSpec(memory_space=pltpu.MemorySpace.SMEM)
    out_sds = jax.ShapeDtypeStruct((N, Cout, HO, WO), jnp.float32)

    x_up, g = pl.pallas_call(
        _fused_after_res_kernel,
        out_shape=(out_sds, out_sds),
        grid_spec=pltpu.PrefetchScalarGridSpec(
            num_scalar_prefetch=0,
            grid=(N, n_row_tiles),
            in_specs=[
                pl.BlockSpec((1, Cin, H, W), lambda n, r: (n, 0, 0, 0)),
                pl.BlockSpec((rt, H), lambda n, r: (r, 0)),
                pl.BlockSpec((W, WO), lambda n, r: (0, 0)),
                smem_spec,   # w_bridge
                smem_spec,   # b_bridge
                smem_spec,   # w_conv
                smem_spec,   # b_conv
            ],
            out_specs=(
                pl.BlockSpec((1, Cout, rt, WO), lambda n, r: (n, 0, r, 0)),
                pl.BlockSpec((1, Cout, rt, WO), lambda n, r: (n, 0, r, 0)),
            ),
        ),
        compiler_params=pltpu.CompilerParams(
            dimension_semantics=("parallel", "parallel"),
            vmem_limit_bytes=32 * 1024 * 1024,
        ),
    )(x, ah, awt, w_bridge, b_bridge, w_conv, b_conv)

    return x_up, g


if __name__ == "__main__":
    key = jax.random.PRNGKey(0)
    N, Cin, Cout, H, W = 2, 4, 8, 16, 16
    k1, k2, k3, k4, k5 = jax.random.split(key, 5)

    x = jax.random.normal(k1, (N, Cin, H, W), dtype=jnp.float32)

    # deterministic synthetic parameters (Conv2d 1x1 weights flattened to (out, in))
    w_bridge = 0.1 * jax.random.normal(k2, (Cout, Cin), dtype=jnp.float32)
    b_bridge = 0.1 * jax.random.normal(k3, (Cout,), dtype=jnp.float32)
    w_conv = 0.1 * jax.random.normal(k4, (Cout, Cout), dtype=jnp.float32)
    b_conv = 0.1 * jax.random.normal(k5, (Cout,), dtype=jnp.float32)

    x_up, g = jax.jit(after_res_forward)(x, w_bridge, b_bridge, w_conv, b_conv)
    jax.block_until_ready((x_up, g))

    assert x_up.shape == (N, Cout, HO, WO)
    assert g.shape == (N, Cout, HO, WO)

    # Lightweight correctness check against a pure-JAX reference using the
    # same interpolation matrices (loose tolerance; f32 throughout).
    ah = resize_matrix(HO, H)
    awt = resize_matrix(WO, W).T
    y_ref = jnp.einsum('nkhw,ck->nchw', x, w_bridge) + b_bridge[None, :, None, None]
    up_ref = jnp.einsum('Oh,nchw,wX->ncOX', ah, y_ref, awt)
    g_ref = jax.nn.sigmoid(
        jnp.einsum('nkhw,ck->nchw', up_ref, w_conv) + b_conv[None, :, None, None])
    assert jnp.allclose(x_up, up_ref, atol=1e-3, rtol=1e-3)
    assert jnp.allclose(g, g_ref, atol=1e-3, rtol=1e-3)

    print("KERNEL_OK")
</pallas_src>

<mosaic_0001>
module attributes {stable_mosaic.version = 11 : i64} {
  func.func private @main(%arg0: i32) attributes {dimension_semantics = [#tpu.dimension_semantics<core_parallel>], iteration_bounds = array<i64: 2>, tpu.core_type = #tpu.core_type<sc_scalar_subcore>, window_params = []} {
    return
  }
}

module attributes {stable_mosaic.version = 11 : i64} {
  func.func private @main(%arg0: i32) attributes {dimension_semantics = [#tpu.dimension_semantics<core_parallel>], iteration_bounds = array<i64: 2>, tpu.core_type = #tpu.core_type<sc_scalar_subcore>, window_params = []} {
    return
  }
}

module attributes {stable_mosaic.version = 11 : i64} {
  func.func @_fused_after_res_kernel(%arg0: i32, %arg1: i32, %arg2: memref<1x4x16x16xf32, #tpu.memory_space<vmem>>, %arg3: memref<64x16xf32, #tpu.memory_space<vmem>>, %arg4: memref<16x256xf32, #tpu.memory_space<vmem>>, %arg5: memref<8x4xf32, #tpu.memory_space<smem>>, %arg6: memref<8xf32, #tpu.memory_space<smem>>, %arg7: memref<8x8xf32, #tpu.memory_space<smem>>, %arg8: memref<8xf32, #tpu.memory_space<smem>>, %arg9: memref<1x8x64x256xf32, #tpu.memory_space<vmem>>, %arg10: memref<1x8x64x256xf32, #tpu.memory_space<vmem>>) attributes {dimension_semantics = [#tpu.dimension_semantics<parallel>, #tpu.dimension_semantics<parallel>], iteration_bounds = array<i64: 2, 4>, scalar_prefetch = 0 : i64, scratch_operands = 0 : i64, tpu.core_type = #tpu.core_type<tc>, window_params = [{transform_indices = @transform_0, window_bounds = array<i64: 1, 4, 16, 16>}, {transform_indices = @transform_1, window_bounds = array<i64: 64, 16>}, {pipeline_mode = #tpu.pipeline_mode<synchronous>, transform_indices = @transform_2, window_bounds = array<i64: 16, 256>}, {transform_indices = @transform_3, window_bounds = array<i64: 8, 4>}, {transform_indices = @transform_4, window_bounds = array<i64: 8>}, {transform_indices = @transform_5, window_bounds = array<i64: 8, 8>}, {transform_indices = @transform_6, window_bounds = array<i64: 8>}, {transform_indices = @transform_7, window_bounds = array<i64: 1, 8, 64, 256>}, {transform_indices = @transform_8, window_bounds = array<i64: 1, 8, 64, 256>}]} {
    %c0 = arith.constant 0 : index
    %c0_0 = arith.constant 0 : index
    %0 = vector.load %arg3[%c0, %c0_0] : memref<64x16xf32, #tpu.memory_space<vmem>>, vector<64x16xf32>
    %c0_1 = arith.constant 0 : index
    %c0_2 = arith.constant 0 : index
    %1 = vector.load %arg4[%c0_1, %c0_2] : memref<16x256xf32, #tpu.memory_space<vmem>>, vector<16x256xf32>
    %c0_3 = arith.constant 0 : index
    %c0_4 = arith.constant 0 : index
    %c0_5 = arith.constant 0 : index
    %c0_6 = arith.constant 0 : index
    %2 = vector.load %arg2[%c0_3, %c0_4, %c0_5, %c0_6] : memref<1x4x16x16xf32, #tpu.memory_space<vmem>>, vector<1x1x16x16xf32>
    %3 = vector.shape_cast %2 : vector<1x1x16x16xf32> to vector<16x16xf32>
    %c0_7 = arith.constant 0 : index
    %c0_8 = arith.constant 0 : index
    %4 = memref.load %arg5[%c0_7, %c0_8] : memref<8x4xf32, #tpu.memory_space<smem>>
    %5 = vector.broadcast %4 : f32 to vector<16x16xf32>
    %6 = arith.mulf %3, %5 : vector<16x16xf32>
    %c0_9 = arith.constant 0 : index
    %c1 = arith.constant 1 : index
    %c0_10 = arith.constant 0 : index
    %c0_11 = arith.constant 0 : index
    %7 = vector.load %arg2[%c0_9, %c1, %c0_10, %c0_11] : memref<1x4x16x16xf32, #tpu.memory_space<vmem>>, vector<1x1x16x16xf32>
    %8 = vector.shape_cast %7 : vector<1x1x16x16xf32> to vector<16x16xf32>
    %c0_12 = arith.constant 0 : index
    %c1_13 = arith.constant 1 : index
    %9 = memref.load %arg5[%c0_12, %c1_13] : memref<8x4xf32, #tpu.memory_space<smem>>
    %10 = vector.broadcast %9 : f32 to vector<16x16xf32>
    %11 = arith.mulf %8, %10 : vector<16x16xf32>
    %12 = arith.addf %6, %11 : vector<16x16xf32>
    %c0_14 = arith.constant 0 : index
    %c2 = arith.constant 2 : index
    %c0_15 = arith.constant 0 : index
    %c0_16 = arith.constant 0 : index
    %13 = vector.load %arg2[%c0_14, %c2, %c0_15, %c0_16] : memref<1x4x16x16xf32, #tpu.memory_space<vmem>>, vector<1x1x16x16xf32>
    %14 = vector.shape_cast %13 : vector<1x1x16x16xf32> to vector<16x16xf32>
    %c0_17 = arith.constant 0 : index
    %c2_18 = arith.constant 2 : index
    %15 = memref.load %arg5[%c0_17, %c2_18] : memref<8x4xf32, #tpu.memory_space<smem>>
    %16 = vector.broadcast %15 : f32 to vector<16x16xf32>
    %17 = arith.mulf %14, %16 : vector<16x16xf32>
    %18 = arith.addf %12, %17 : vector<16x16xf32>
    %c0_19 = arith.constant 0 : index
    %c3 = arith.constant 3 : index
    %c0_20 = arith.constant 0 : index
    %c0_21 = arith.constant 0 : index
    %19 = vector.load %arg2[%c0_19, %c3, %c0_20, %c0_21] : memref<1x4x16x16xf32, #tpu.memory_space<vmem>>, vector<1x1x16x16xf32>
    %20 = vector.shape_cast %19 : vector<1x1x16x16xf32> to vector<16x16xf32>
    %c0_22 = arith.constant 0 : index
    %c3_23 = arith.constant 3 : index
    %21 = memref.load %arg5[%c0_22, %c3_23] : memref<8x4xf32, #tpu.memory_space<smem>>
    %22 = vector.broadcast %21 : f32 to vector<16x16xf32>
    %23 = arith.mulf %20, %22 : vector<16x16xf32>
    %24 = arith.addf %18, %23 : vector<16x16xf32>
    %c0_24 = arith.constant 0 : index
    %25 = memref.load %arg6[%c0_24] : memref<8xf32, #tpu.memory_space<smem>>
    %26 = vector.broadcast %25 : f32 to vector<16x16xf32>
    %27 = arith.addf %24, %26 : vector<16x16xf32>
    %cst = arith.constant dense<0.000000e+00> : vector<16x256xf32>
    %28 = tpu.matmul %27, %1, %cst {dimension_numbers = #tpu.dot_dimension_numbers<[1], [0], [0], [1], [0, 0, 1, 1], [], []>} : vector<16x16xf32>, vector<16x256xf32>, vector<16x256xf32> -> vector<16x256xf32>
    %cst_25 = arith.constant dense<0.000000e+00> : vector<64x256xf32>
    %29 = tpu.matmul %0, %28, %cst_25 {dimension_numbers = #tpu.dot_dimension_numbers<[1], [0], [0], [1], [0, 0, 1, 1], [], []>} : vector<64x16xf32>, vector<16x256xf32>, vector<64x256xf32> -> vector<64x256xf32>
    %c0_26 = arith.constant 0 : index
    %c0_27 = arith.constant 0 : index
    %c0_28 = arith.constant 0 : index
    %c0_29 = arith.constant 0 : index
    %30 = vector.load %arg9[%c0_26, %c0_27, %c0_28, %c0_29] : memref<1x8x64x256xf32, #tpu.memory_space<vmem>>, vector<1x1x64x256xf32>
    %31 = vector.shape_cast %30 : vector<1x1x64x256xf32> to vector<64x256xf32>
    %32 = vector.shape_cast %29 : vector<64x256xf32> to vector<1x1x64x256xf32>
    tpu.vector_store %arg9[%c0_26, %c0_27, %c0_28, %c0_29], %32 {strides = array<i32>} : memref<1x8x64x256xf32, #tpu.memory_space<vmem>>, vector<1x1x64x256xf32>,
    %c0_30 = arith.constant 0 : index
    %c0_31 = arith.constant 0 : index
    %c0_32 = arith.constant 0 : index
    %c0_33 = arith.constant 0 : index
    %33 = vector.load %arg2[%c0_30, %c0_31, %c0_32, %c0_33] : memref<1x4x16x16xf32, #tpu.memory_space<vmem>>, vector<1x1x16x16xf32>
    %34 = vector.shape_cast %33 : vector<1x1x16x16xf32> to vector<16x16xf32>
    %c1_34 = arith.constant 1 : index
    %c0_35 = arith.constant 0 : index
    %35 = memref.load %arg5[%c1_34, %c0_35] : memref<8x4xf32, #tpu.memory_space<smem>>
    %36 = vector.broadcast %35 : f32 to vector<16x16xf32>
    %37 = arith.mulf %34, %36 : vector<16x16xf32>
    %c0_36 = arith.constant 0 : index
    %c1_37 = arith.constant 1 : index
    %c0_38 = arith.constant 0 : index
    %c0_39 = arith.constant 0 : index
    %38 = vector.load %arg2[%c0_36, %c1_37, %c0_38, %c0_39] : memref<1x4x16x16xf32, #tpu.memory_space<vmem>>, vector<1x1x16x16xf32>
    %39 = vector.shape_cast %38 : vector<1x1x16x16xf32> to vector<16x16xf32>
    %c1_40 = arith.constant 1 : index
    %c1_41 = arith.constant 1 : index
    %40 = memref.load %arg5[%c1_40, %c1_41] : memref<8x4xf32, #tpu.memory_space<smem>>
    %41 = vector.broadcast %40 : f32 to vector<16x16xf32>
    %42 = arith.mulf %39, %41 : vector<16x16xf32>
    %43 = arith.addf %37, %42 : vector<16x16xf32>
    %c0_42 = arith.constant 0 : index
    %c2_43 = arith.constant 2 : index
    %c0_44 = arith.constant 0 : index
    %c0_45 = arith.constant 0 : index
    %44 = vector.load %arg2[%c0_42, %c2_43, %c0_44, %c0_45] : memref<1x4x16x16xf32, #tpu.memory_space<vmem>>, vector<1x1x16x16xf32>
    %45 = vector.shape_cast %44 : vector<1x1x16x16xf32> to vector<16x16xf32>
    %c1_46 = arith.constant 1 : index
    %c2_47 = arith.constant 2 : index
    %46 = memref.load %arg5[%c1_46, %c2_47] : memref<8x4xf32, #tpu.memory_space<smem>>
    %47 = vector.broadcast %46 : f32 to vector<16x16xf32>
    %48 = arith.mulf %45, %47 : vector<16x16xf32>
    %49 = arith.addf %43, %48 : vector<16x16xf32>
    %c0_48 = arith.constant 0 : index
    %c3_49 = arith.constant 3 : index
    %c0_50 = arith.constant 0 : index
    %c0_51 = arith.constant 0 : index
    %50 = vector.load %arg2[%c0_48, %c3_49, %c0_50, %c0_51] : memref<1x4x16x16xf32, #tpu.memory_space<vmem>>, vector<1x1x16x16xf32>
    %51 = vector.shape_cast %50 : vector<1x1x16x16xf32> to vector<16x16xf32>
    %c1_52 = arith.constant 1 : index
    %c3_53 = arith.constant 3 : index
    %52 = memref.load %arg5[%c1_52, %c3_53] : memref<8x4xf32, #tpu.memory_space<smem>>
    %53 = vector.broadcast %52 : f32 to vector<16x16xf32>
    %54 = arith.mulf %51, %53 : vector<16x16xf32>
    %55 = arith.addf %49, %54 : vector<16x16xf32>
    %c1_54 = arith.constant 1 : index
    %56 = memref.load %arg6[%c1_54] : memref<8xf32, #tpu.memory_space<smem>>
    %57 = vector.broadcast %56 : f32 to vector<16x16xf32>
    %58 = arith.addf %55, %57 : vector<16x16xf32>
    %cst_55 = arith.constant dense<0.000000e+00> : vector<16x256xf32>
    %59 = tpu.matmul %58, %1, %cst_55 {dimension_numbers = #tpu.dot_dimension_numbers<[1], [0], [0], [1], [0, 0, 1, 1], [], []>} : vector<16x16xf32>, vector<16x256xf32>, vector<16x256xf32> -> vector<16x256xf32>
    %cst_56 = arith.constant dense<0.000000e+00> : vector<64x256xf32>
    %60 = tpu.matmul %0, %59, %cst_56 {dimension_numbers = #tpu.dot_dimension_numbers<[1], [0], [0], [1], [0, 0, 1, 1], [], []>} : vector<64x16xf32>, vector<16x256xf32>, vector<64x256xf32> -> vector<64x256xf32>
    %c0_57 = arith.constant 0 : index
    %c1_58 = arith.constant 1 : index
    %c0_59 = arith.constant 0 : index
    %c0_60 = arith.constant 0 : index
    %61 = vector.load %arg9[%c0_57, %c1_58, %c0_59, %c0_60] : memref<1x8x64x256xf32, #tpu.memory_space<vmem>>, vector<1x1x64x256xf32>
    %62 = vector.shape_cast %61 : vector<1x1x64x256xf32> to vector<64x256xf32>
    %63 = vector.shape_cast %60 : vector<64x256xf32> to vector<1x1x64x256xf32>
    tpu.vector_store %arg9[%c0_57, %c1_58, %c0_59, %c0_60], %63 {strides = array<i32>} : memref<1x8x64x256xf32, #tpu.memory_space<vmem>>, vector<1x1x64x256xf32>,
    %c0_61 = arith.constant 0 : index
    %c0_62 = arith.constant 0 : index
    %c0_63 = arith.constant 0 : index
    %c0_64 = arith.constant 0 : index
    %64 = vector.load %arg2[%c0_61, %c0_62, %c0_63, %c0_64] : memref<1x4x16x16xf32, #tpu.memory_space<vmem>>, vector<1x1x16x16xf32>
    %65 = vector.shape_cast %64 : vector<1x1x16x16xf32> to vector<16x16xf32>
    %c2_65 = arith.constant 2 : index
    %c0_66 = arith.constant 0 : index
    %66 = memref.load %arg5[%c2_65, %c0_66] : memref<8x4xf32, #tpu.memory_space<smem>>
    %67 = vector.broadcast %66 : f32 to vector<16x16xf32>
    %68 = arith.mulf %65, %67 : vector<16x16xf32>
    %c0_67 = arith.constant 0 : index
    %c1_68 = arith.constant 1 : index
    %c0_69 = arith.constant 0 : index
    %c0_70 = arith.constant 0 : index
    %69 = vector.load %arg2[%c0_67, %c1_68, %c0_69, %c0_70] : memref<1x4x16x16xf32, #tpu.memory_space<vmem>>, vector<1x1x16x16xf32>
    %70 = vector.shape_cast %69 : vector<1x1x16x16xf32> to vector<16x16xf32>
    %c2_71 = arith.constant 2 : index
    %c1_72 = arith.constant 1 : index
    %71 = memref.load %arg5[%c2_71, %c1_72] : memref<8x4xf32, #tpu.memory_space<smem>>
    %72 = vector.broadcast %71 : f32 to vector<16x16xf32>
    %73 = arith.mulf %70, %72 : vector<16x16xf32>
    %74 = arith.addf %68, %73 : vector<16x16xf32>
    %c0_73 = arith.constant 0 : index
    %c2_74 = arith.constant 2 : index
    %c0_75 = arith.constant 0 : index
    %c0_76 = arith.constant 0 : index
    %75 = vector.load %arg2[%c0_73, %c2_74, %c0_75, %c0_76] : memref<1x4x16x16xf32, #tpu.memory_space<vmem>>, vector<1x1x16x16xf32>
    %76 = vector.shape_cast %75 : vector<1x1x16x16xf32> to vector<16x16xf32>
    %c2_77 = arith.constant 2 : index
    %c2_78 = arith.constant 2 : index
    %77 = memref.load %arg5[%c2_77, %c2_78] : memref<8x4xf32, #tpu.memory_space<smem>>
    %78 = vector.broadcast %77 : f32 to vector<16x16xf32>
    %79 = arith.mulf %76, %78 : vector<16x16xf32>
    %80 = arith.addf %74, %79 : vector<16x16xf32>
    %c0_79 = arith.constant 0 : index
    %c3_80 = arith.constant 3 : index
    %c0_81 = arith.constant 0 : index
    %c0_82 = arith.constant 0 : index
    %81 = vector.load %arg2[%c0_79, %c3_80, %c0_81, %c0_82] : memref<1x4x16x16xf32, #tpu.memory_space<vmem>>, vector<1x1x16x16xf32>
    %82 = vector.shape_cast %81 : vector<1x1x16x16xf32> to vector<16x16xf32>
    %c2_83 = arith.constant 2 : index
    %c3_84 = arith.constant 3 : index
    %83 = memref.load %arg5[%c2_83, %c3_84] : memref<8x4xf32, #tpu.memory_space<smem>>
    %84 = vector.broadcast %83 : f32 to vector<16x16xf32>
    %85 = arith.mulf %82, %84 : vector<16x16xf32>
    %86 = arith.addf %80, %85 : vector<16x16xf32>
    %c2_85 = arith.constant 2 : index
    %87 = memref.load %arg6[%c2_85] : memref<8xf32, #tpu.memory_space<smem>>
    %88 = vector.broadcast %87 : f32 to vector<16x16xf32>
    %89 = arith.addf %86, %88 : vector<16x16xf32>
    %cst_86 = arith.constant dense<0.000000e+00> : vector<16x256xf32>
    %90 = tpu.matmul %89, %1, %cst_86 {dimension_numbers = #tpu.dot_dimension_numbers<[1], [0], [0], [1], [0, 0, 1, 1], [], []>} : vector<16x16xf32>, vector<16x256xf32>, vector<16x256xf32> -> vector<16x256xf32>
    %cst_87 = arith.constant dense<0.000000e+00> : vector<64x256xf32>
    %91 = tpu.matmul %0, %90, %cst_87 {dimension_numbers = #tpu.dot_dimension_numbers<[1], [0], [0], [1], [0, 0, 1, 1], [], []>} : vector<64x16xf32>, vector<16x256xf32>, vector<64x256xf32> -> vector<64x256xf32>
    %c0_88 = arith.constant 0 : index
    %c2_89 = arith.constant 2 : index
    %c0_90 = arith.constant 0 : index
    %c0_91 = arith.constant 0 : index
    %92 = vector.load %arg9[%c0_88, %c2_89, %c0_90, %c0_91] : memref<1x8x64x256xf32, #tpu.memory_space<vmem>>, vector<1x1x64x256xf32>
    %93 = vector.shape_cast %92 : vector<1x1x64x256xf32> to vector<64x256xf32>
    %94 = vector.shape_cast %91 : vector<64x256xf32> to vector<1x1x64x256xf32>
    tpu.vector_store %arg9[%c0_88, %c2_89, %c0_90, %c0_91], %94 {strides = array<i32>} : memref<1x8x64x256xf32, #tpu.memory_space<vmem>>, vector<1x1x64x256xf32>,
    %c0_92 = arith.constant 0 : index
    %c0_93 = arith.constant 0 : index
    %c0_94 = arith.constant 0 : index
    %c0_95 = arith.constant 0 : index
    %95 = vector.load %arg2[%c0_92, %c0_93, %c0_94, %c0_95] : memref<1x4x16x16xf32, #tpu.memory_space<vmem>>, vector<1x1x16x16xf32>
    %96 = vector.shape_cast %95 : vector<1x1x16x16xf32> to vector<16x16xf32>
    %c3_96 = arith.constant 3 : index
    %c0_97 = arith.constant 0 : index
    %97 = memref.load %arg5[%c3_96, %c0_97] : memref<8x4xf32, #tpu.memory_space<smem>>
    %98 = vector.broadcast %97 : f32 to vector<16x16xf32>
    %99 = arith.mulf %96, %98 : vector<16x16xf32>
    %c0_98 = arith.constant 0 : index
    %c1_99 = arith.constant 1 : index
    %c0_100 = arith.constant 0 : index
    %c0_101 = arith.constant 0 : index
    %100 = vector.load %arg2[%c0_98, %c1_99, %c0_100, %c0_101] : memref<1x4x16x16xf32, #tpu.memory_space<vmem>>, vector<1x1x16x16xf32>
    %101 = vector.shape_cast %100 : vector<1x1x16x16xf32> to vector<16x16xf32>
    %c3_102 = arith.constant 3 : index
    %c1_103 = arith.constant 1 : index
    %102 = memref.load %arg5[%c3_102, %c1_103] : memref<8x4xf32, #tpu.memory_space<smem>>
    %103 = vector.broadcast %102 : f32 to vector<16x16xf32>
    %104 = arith.mulf %101, %103 : vector<16x16xf32>
    %105 = arith.addf %99, %104 : vector<16x16xf32>
    %c0_104 = arith.constant 0 : index
    %c2_105 = arith.constant 2 : index
    %c0_106 = arith.constant 0 : index
    %c0_107 = arith.constant 0 : index
    %106 = vector.load %arg2[%c0_104, %c2_105, %c0_106, %c0_107] : memref<1x4x16x16xf32, #tpu.memory_space<vmem>>, vector<1x1x16x16xf32>
    %107 = vector.shape_cast %106 : vector<1x1x16x16xf32> to vector<16x16xf32>
    %c3_108 = arith.constant 3 : index
    %c2_109 = arith.constant 2 : index
    %108 = memref.load %arg5[%c3_108, %c2_109] : memref<8x4xf32, #tpu.memory_space<smem>>
    %109 = vector.broadcast %108 : f32 to vector<16x16xf32>
    %110 = arith.mulf %107, %109 : vector<16x16xf32>
    %111 = arith.addf %105, %110 : vector<16x16xf32>
    %c0_110 = arith.constant 0 : index
    %c3_111 = arith.constant 3 : index
    %c0_112 = arith.constant 0 : index
    %c0_113 = arith.constant 0 : index
    %112 = vector.load %arg2[%c0_110, %c3_111, %c0_112, %c0_113] : memref<1x4x16x16xf32, #tpu.memory_space<vmem>>, vector<1x1x16x16xf32>
    %113 = vector.shape_cast %112 : vector<1x1x16x16xf32> to vector<16x16xf32>
    %c3_114 = arith.constant 3 : index
    %c3_115 = arith.constant 3 : index
    %114 = memref.load %arg5[%c3_114, %c3_115] : memref<8x4xf32, #tpu.memory_space<smem>>
    %115 = vector.broadcast %114 : f32 to vector<16x16xf32>
    %116 = arith.mulf %113, %115 : vector<16x16xf32>
    %117 = arith.addf %111, %116 : vector<16x16xf32>
    %c3_116 = arith.constant 3 : index
    %118 = memref.load %arg6[%c3_116] : memref<8xf32, #tpu.memory_space<smem>>
    %119 = vector.broadcast %118 : f32 to vector<16x16xf32>
    %120 = arith.addf %117, %119 : vector<16x16xf32>
    %cst_117 = arith.constant dense<0.000000e+00> : vector<16x256xf32>
    %121 = tpu.matmul %120, %1, %cst_117 {dimension_numbers = #tpu.dot_dimension_numbers<[1], [0], [0], [1], [0, 0, 1, 1], [], []>} : vector<16x16xf32>, vector<16x256xf32>, vector<16x256xf32> -> vector<16x256xf32>
    %cst_118 = arith.constant dense<0.000000e+00> : vector<64x256xf32>
    %122 = tpu.matmul %0, %121, %cst_118 {dimension_numbers = #tpu.dot_dimension_numbers<[1], [0], [0], [1], [0, 0, 1, 1], [], []>} : vector<64x16xf32>, vector<16x256xf32>, vector<64x256xf32> -> vector<64x256xf32>
    %c0_119 = arith.constant 0 : index
    %c3_120 = arith.constant 3 : index
    %c0_121 = arith.constant 0 : index
    %c0_122 = arith.constant 0 : index
    %123 = vector.load %arg9[%c0_119, %c3_120, %c0_121, %c0_122] : memref<1x8x64x256xf32, #tpu.memory_space<vmem>>, vector<1x1x64x256xf32>
    %124 = vector.shape_cast %123 : vector<1x1x64x256xf32> to vector<64x256xf32>
    %125 = vector.shape_cast %122 : vector<64x256xf32> to vector<1x1x64x256xf32>
    tpu.vector_store %arg9[%c0_119, %c3_120, %c0_121, %c0_122], %125 {strides = array<i32>} : memref<1x8x64x256xf32, #tpu.memory_space<vmem>>, vector<1x1x64x256xf32>,
    %c0_123 = arith.constant 0 : index
    %c0_124 = arith.constant 0 : index
    %c0_125 = arith.constant 0 : index
    %c0_126 = arith.constant 0 : index
    %126 = vector.load %arg2[%c0_123, %c0_124, %c0_125, %c0_126] : memref<1x4x16x16xf32, #tpu.memory_space<vmem>>, vector<1x1x16x16xf32>
    %127 = vector.shape_cast %126 : vector<1x1x16x16xf32> to vector<16x16xf32>
    %c4 = arith.constant 4 : index
    %c0_127 = arith.constant 0 : index
    %128 = memref.load %arg5[%c4, %c0_127] : memref<8x4xf32, #tpu.memory_space<smem>>
    %129 = vector.broadcast %128 : f32 to vector<16x16xf32>
    %130 = arith.mulf %127, %129 : vector<16x16xf32>
    %c0_128 = arith.constant 0 : index
    %c1_129 = arith.constant 1 : index
    %c0_130 = arith.constant 0 : index
    %c0_131 = arith.constant 0 : index
    %131 = vector.load %arg2[%c0_128, %c1_129, %c0_130, %c0_131] : memref<1x4x16x16xf32, #tpu.memory_space<vmem>>, vector<1x1x16x16xf32>
    %132 = vector.shape_cast %131 : vector<1x1x16x16xf32> to vector<16x16xf32>
    %c4_132 = arith.constant 4 : index
    %c1_133 = arith.constant 1 : index
    %133 = memref.load %arg5[%c4_132, %c1_133] : memref<8x4xf32, #tpu.memory_space<smem>>
    %134 = vector.broadcast %133 : f32 to vector<16x16xf32>
    %135 = arith.mulf %132, %134 : vector<16x16xf32>
    %136 = arith.addf %130, %135 : vector<16x16xf32>
    %c0_134 = arith.constant 0 : index
    %c2_135 = arith.constant 2 : index
    %c0_136 = arith.constant 0 : index
    %c0_137 = arith.constant 0 : index
    %137 = vector.load %arg2[%c0_134, %c2_135, %c0_136, %c0_137] : memref<1x4x16x16xf32, #tpu.memory_space<vmem>>, vector<1x1x16x16xf32>
    %138 = vector.shape_cast %137 : vector<1x1x16x16xf32> to vector<16x16xf32>
    %c4_138 = arith.constant 4 : index
    %c2_139 = arith.constant 2 : index
    %139 = memref.load %arg5[%c4_138, %c2_139] : memref<8x4xf32, #tpu.memory_space<smem>>
    %140 = vector.broadcast %139 : f32 to vector<16x16xf32>
    %141 = arith.mulf %138, %140 : vector<16x16xf32>
    %142 = arith.addf %136, %141 : vector<16x16xf32>
    %c0_140 = arith.constant 0 : index
    %c3_141 = arith.constant 3 : index
    %c0_142 = arith.constant 0 : index
    %c0_143 = arith.constant 0 : index
    %143 = vector.load %arg2[%c0_140, %c3_141, %c0_142, %c0_143] : memref<1x4x16x16xf32, #tpu.memory_space<vmem>>, vector<1x1x16x16xf32>
    %144 = vector.shape_cast %143 : vector<1x1x16x16xf32> to vector<16x16xf32>
    %c4_144 = arith.constant 4 : index
    %c3_145 = arith.constant 3 : index
    %145 = memref.load %arg5[%c4_144, %c3_145] : memref<8x4xf32, #tpu.memory_space<smem>>
    %146 = vector.broadcast %145 : f32 to vector<16x16xf32>
    %147 = arith.mulf %144, %146 : vector<16x16xf32>
    %148 = arith.addf %142, %147 : vector<16x16xf32>
    %c4_146 = arith.constant 4 : index
    %149 = memref.load %arg6[%c4_146] : memref<8xf32, #tpu.memory_space<smem>>
    %150 = vector.broadcast %149 : f32 to vector<16x16xf32>
    %151 = arith.addf %148, %150 : vector<16x16xf32>
    %cst_147 = arith.constant dense<0.000000e+00> : vector<16x256xf32>
    %152 = tpu.matmul %151, %1, %cst_147 {dimension_numbers = #tpu.dot_dimension_numbers<[1], [0], [0], [1], [0, 0, 1, 1], [], []>} : vector<16x16xf32>, vector<16x256xf32>, vector<16x256xf32> -> vector<16x256xf32>
    %cst_148 = arith.constant dense<0.000000e+00> : vector<64x256xf32>
    %153 = tpu.matmul %0, %152, %cst_148 {dimension_numbers = #tpu.dot_dimension_numbers<[1], [0], [0], [1], [0, 0, 1, 1], [], []>} : vector<64x16xf32>, vector<16x256xf32>, vector<64x256xf32> -> vector<64x256xf32>
    %c0_149 = arith.constant 0 : index
    %c4_150 = arith.constant 4 : index
    %c0_151 = arith.constant 0 : index
    %c0_152 = arith.constant 0 : index
    %154 = vector.load %arg9[%c0_149, %c4_150, %c0_151, %c0_152] : memref<1x8x64x256xf32, #tpu.memory_space<vmem>>, vector<1x1x64x256xf32>
    %155 = vector.shape_cast %154 : vector<1x1x64x256xf32> to vector<64x256xf32>
    %156 = vector.shape_cast %153 : vector<64x256xf32> to vector<1x1x64x256xf32>
    tpu.vector_store %arg9[%c0_149, %c4_150, %c0_151, %c0_152], %156 {strides = array<i32>} : memref<1x8x64x256xf32, #tpu.memory_space<vmem>>, vector<1x1x64x256xf32>,
    %c0_153 = arith.constant 0 : index
    %c0_154 = arith.constant 0 : index
    %c0_155 = arith.constant 0 : index
    %c0_156 = arith.constant 0 : index
    %157 = vector.load %arg2[%c0_153, %c0_154, %c0_155, %c0_156] : memref<1x4x16x16xf32, #tpu.memory_space<vmem>>, vector<1x1x16x16xf32>
    %158 = vector.shape_cast %157 : vector<1x1x16x16xf32> to vector<16x16xf32>
    %c5 = arith.constant 5 : index
    %c0_157 = arith.constant 0 : index
    %159 = memref.load %arg5[%c5, %c0_157] : memref<8x4xf32, #tpu.memory_space<smem>>
    %160 = vector.broadcast %159 : f32 to vector<16x16xf32>
    %161 = arith.mulf %158, %160 : vector<16x16xf32>
    %c0_158 = arith.constant 0 : index
    %c1_159 = arith.constant 1 : index
    %c0_160 = arith.constant 0 : index
    %c0_161 = arith.constant 0 : index
    %162 = vector.load %arg2[%c0_158, %c1_159, %c0_160, %c0_161] : memref<1x4x16x16xf32, #tpu.memory_space<vmem>>, vector<1x1x16x16xf32>
    %163 = vector.shape_cast %162 : vector<1x1x16x16xf32> to vector<16x16xf32>
    %c5_162 = arith.constant 5 : index
    %c1_163 = arith.constant 1 : index
    %164 = memref.load %arg5[%c5_162, %c1_163] : memref<8x4xf32, #tpu.memory_space<smem>>
    %165 = vector.broadcast %164 : f32 to vector<16x16xf32>
    %166 = arith.mulf %163, %165 : vector<16x16xf32>
    %167 = arith.addf %161, %166 : vector<16x16xf32>
    %c0_164 = arith.constant 0 : index
    %c2_165 = arith.constant 2 : index
    %c0_166 = arith.constant 0 : index
    %c0_167 = arith.constant 0 : index
    %168 = vector.load %arg2[%c0_164, %c2_165, %c0_166, %c0_167] : memref<1x4x16x16xf32, #tpu.memory_space<vmem>>, vector<1x1x16x16xf32>
    %169 = vector.shape_cast %168 : vector<1x1x16x16xf32> to vector<16x16xf32>
    %c5_168 = arith.constant 5 : index
    %c2_169 = arith.constant 2 : index
    %170 = memref.load %arg5[%c5_168, %c2_169] : memref<8x4xf32, #tpu.memory_space<smem>>
    %171 = vector.broadcast %170 : f32 to vector<16x16xf32>
    %172 = arith.mulf %169, %171 : vector<16x16xf32>
    %173 = arith.addf %167, %172 : vector<16x16xf32>
    %c0_170 = arith.constant 0 : index
    %c3_171 = arith.constant 3 : index
    %c0_172 = arith.constant 0 : index
    %c0_173 = arith.constant 0 : index
    %174 = vector.load %arg2[%c0_170, %c3_171, %c0_172, %c0_173] : memref<1x4x16x16xf32, #tpu.memory_space<vmem>>, vector<1x1x16x16xf32>
    %175 = vector.shape_cast %174 : vector<1x1x16x16xf32> to vector<16x16xf32>
    %c5_174 = arith.constant 5 : index
    %c3_175 = arith.constant 3 : index
    %176 = memref.load %arg5[%c5_174, %c3_175] : memref<8x4xf32, #tpu.memory_space<smem>>
    %177 = vector.broadcast %176 : f32 to vector<16x16xf32>
    %178 = arith.mulf %175, %177 : vector<16x16xf32>
    %179 = arith.addf %173, %178 : vector<16x16xf32>
    %c5_176 = arith.constant 5 : index
    %180 = memref.load %arg6[%c5_176] : memref<8xf32, #tpu.memory_space<smem>>
    %181 = vector.broadcast %180 : f32 to vector<16x16xf32>
    %182 = arith.addf %179, %181 : vector<16x16xf32>
    %cst_177 = arith.constant dense<0.000000e+00> : vector<16x256xf32>
    %183 = tpu.matmul %182, %1, %cst_177 {dimension_numbers = #tpu.dot_dimension_numbers<[1], [0], [0], [1], [0, 0, 1, 1], [], []>} : vector<16x16xf32>, vector<16x256xf32>, vector<16x256xf32> -> vector<16x256xf32>
    %cst_178 = arith.constant dense<0.000000e+00> : vector<64x256xf32>
    %184 = tpu.matmul %0, %183, %cst_178 {dimension_numbers = #tpu.dot_dimension_numbers<[1], [0], [0], [1], [0, 0, 1, 1], [], []>} : vector<64x16xf32>, vector<16x256xf32>, vector<64x256xf32> -> vector<64x256xf32>
    %c0_179 = arith.constant 0 : index
    %c5_180 = arith.constant 5 : index
    %c0_181 = arith.constant 0 : index
    %c0_182 = arith.constant 0 : index
    %185 = vector.load %arg9[%c0_179, %c5_180, %c0_181, %c0_182] : memref<1x8x64x256xf32, #tpu.memory_space<vmem>>, vector<1x1x64x256xf32>
    %186 = vector.shape_cast %185 : vector<1x1x64x256xf32> to vector<64x256xf32>
    %187 = vector.shape_cast %184 : vector<64x256xf32> to vector<1x1x64x256xf32>
    tpu.vector_store %arg9[%c0_179, %c5_180, %c0_181, %c0_182], %187 {strides = array<i32>} : memref<1x8x64x256xf32, #tpu.memory_space<vmem>>, vector<1x1x64x256xf32>,
    %c0_183 = arith.constant 0 : index
    %c0_184 = arith.constant 0 : index
    %c0_185 = arith.constant 0 : index
    %c0_186 = arith.constant 0 : index
    %188 = vector.load %arg2[%c0_183, %c0_184, %c0_185, %c0_186] : memref<1x4x16x16xf32, #tpu.memory_space<vmem>>, vector<1x1x16x16xf32>
    %189 = vector.shape_cast %188 : vector<1x1x16x16xf32> to vector<16x16xf32>
    %c6 = arith.constant 6 : index
    %c0_187 = arith.constant 0 : index
    %190 = memref.load %arg5[%c6, %c0_187] : memref<8x4xf32, #tpu.memory_space<smem>>
    %191 = vector.broadcast %190 : f32 to vector<16x16xf32>
    %192 = arith.mulf %189, %191 : vector<16x16xf32>
    %c0_188 = arith.constant 0 : index
    %c1_189 = arith.constant 1 : index
    %c0_190 = arith.constant 0 : index
    %c0_191 = arith.constant 0 : index
    %193 = vector.load %arg2[%c0_188, %c1_189, %c0_190, %c0_191] : memref<1x4x16x16xf32, #tpu.memory_space<vmem>>, vector<1x1x16x16xf32>
    %194 = vector.shape_cast %193 : vector<1x1x16x16xf32> to vector<16x16xf32>
    %c6_192 = arith.constant 6 : index
    %c1_193 = arith.constant 1 : index
    %195 = memref.load %arg5[%c6_192, %c1_193] : memref<8x4xf32, #tpu.memory_space<smem>>
    %196 = vector.broadcast %195 : f32 to vector<16x16xf32>
    %197 = arith.mulf %194, %196 : vector<16x16xf32>
    %198 = arith.addf %192, %197 : vector<16x16xf32>
    %c0_194 = arith.constant 0 : index
    %c2_195 = arith.constant 2 : index
    %c0_196 = arith.constant 0 : index
    %c0_197 = arith.constant 0 : index
    %199 = vector.load %arg2[%c0_194, %c2_195, %c0_196, %c0_197] : memref<1x4x16x16xf32, #tpu.memory_space<vmem>>, vector<1x1x16x16xf32>
    %200 = vector.shape_cast %199 : vector<1x1x16x16xf32> to vector<16x16xf32>
    %c6_198 = arith.constant 6 : index
    %c2_199 = arith.constant 2 : index
    %201 = memref.load %arg5[%c6_198, %c2_199] : memref<8x4xf32, #tpu.memory_space<smem>>
    %202 = vector.broadcast %201 : f32 to vector<16x16xf32>
    %203 = arith.mulf %200, %202 : vector<16x16xf32>
    %204 = arith.addf %198, %203 : vector<16x16xf32>
    %c0_200 = arith.constant 0 : index
    %c3_201 = arith.constant 3 : index
    %c0_202 = arith.constant 0 : index
    %c0_203 = arith.constant 0 : index
    %205 = vector.load %arg2[%c0_200, %c3_201, %c0_202, %c0_203] : memref<1x4x16x16xf32, #tpu.memory_space<vmem>>, vector<1x1x16x16xf32>
    %206 = vector.shape_cast %205 : vector<1x1x16x16xf32> to vector<16x16xf32>
    %c6_204 = arith.constant 6 : index
    %c3_205 = arith.constant 3 : index
    %207 = memref.load %arg5[%c6_204, %c3_205] : memref<8x4xf32, #tpu.memory_space<smem>>
    %208 = vector.broadcast %207 : f32 to vector<16x16xf32>
    %209 = arith.mulf %206, %208 : vector<16x16xf32>
    %210 = arith.addf %204, %209 : vector<16x16xf32>
    %c6_206 = arith.constant 6 : index
    %211 = memref.load %arg6[%c6_206] : memref<8xf32, #tpu.memory_space<smem>>
    %212 = vector.broadcast %211 : f32 to vector<16x16xf32>
    %213 = arith.addf %210, %212 : vector<16x16xf32>
    %cst_207 = arith.constant dense<0.000000e+00> : vector<16x256xf32>
    %214 = tpu.matmul %213, %1, %cst_207 {dimension_numbers = #tpu.dot_dimension_numbers<[1], [0], [0], [1], [0, 0, 1, 1], [], []>} : vector<16x16xf32>, vector<16x256xf32>, vector<16x256xf32> -> vector<16x256xf32>
    %cst_208 = arith.constant dense<0.000000e+00> : vector<64x256xf32>
    %215 = tpu.matmul %0, %214, %cst_208 {dimension_numbers = #tpu.dot_dimension_numbers<[1], [0], [0], [1], [0, 0, 1, 1], [], []>} : vector<64x16xf32>, vector<16x256xf32>, vector<64x256xf32> -> vector<64x256xf32>
    %c0_209 = arith.constant 0 : index
    %c6_210 = arith.constant 6 : index
    %c0_211 = arith.constant 0 : index
    %c0_212 = arith.constant 0 : index
    %216 = vector.load %arg9[%c0_209, %c6_210, %c0_211, %c0_212] : memref<1x8x64x256xf32, #tpu.memory_space<vmem>>, vector<1x1x64x256xf32>
    %217 = vector.shape_cast %216 : vector<1x1x64x256xf32> to vector<64x256xf32>
    %218 = vector.shape_cast %215 : vector<64x256xf32> to vector<1x1x64x256xf32>
    tpu.vector_store %arg9[%c0_209, %c6_210, %c0_211, %c0_212], %218 {strides = array<i32>} : memref<1x8x64x256xf32, #tpu.memory_space<vmem>>, vector<1x1x64x256xf32>,
    %c0_213 = arith.constant 0 : index
    %c0_214 = arith.constant 0 : index
    %c0_215 = arith.constant 0 : index
    %c0_216 = arith.constant 0 : index
    %219 = vector.load %arg2[%c0_213, %c0_214, %c0_215, %c0_216] : memref<1x4x16x16xf32, #tpu.memory_space<vmem>>, vector<1x1x16x16xf32>
    %220 = vector.shape_cast %219 : vector<1x1x16x16xf32> to vector<16x16xf32>
    %c7 = arith.constant 7 : index
    %c0_217 = arith.constant 0 : index
    %221 = memref.load %arg5[%c7, %c0_217] : memref<8x4xf32, #tpu.memory_space<smem>>
    %222 = vector.broadcast %221 : f32 to vector<16x16xf32>
    %223 = arith.mulf %220, %222 : vector<16x16xf32>
    %c0_218 = arith.constant 0 : index
    %c1_219 = arith.constant 1 : index
    %c0_220 = arith.constant 0 : index
    %c0_221 = arith.constant 0 : index
    %224 = vector.load %arg2[%c0_218, %c1_219, %c0_220, %c0_221] : memref<1x4x16x16xf32, #tpu.memory_space<vmem>>, vector<1x1x16x16xf32>
    %225 = vector.shape_cast %224 : vector<1x1x16x16xf32> to vector<16x16xf32>
    %c7_222 = arith.constant 7 : index
    %c1_223 = arith.constant 1 : index
    %226 = memref.load %arg5[%c7_222, %c1_223] : memref<8x4xf32, #tpu.memory_space<smem>>
    %227 = vector.broadcast %226 : f32 to vector<16x16xf32>
    %228 = arith.mulf %225, %227 : vector<16x16xf32>
    %229 = arith.addf %223, %228 : vector<16x16xf32>
    %c0_224 = arith.constant 0 : index
    %c2_225 = arith.constant 2 : index
    %c0_226 = arith.constant 0 : index
    %c0_227 = arith.constant 0 : index
    %230 = vector.load %arg2[%c0_224, %c2_225, %c0_226, %c0_227] : memref<1x4x16x16xf32, #tpu.memory_space<vmem>>, vector<1x1x16x16xf32>
    %231 = vector.shape_cast %230 : vector<1x1x16x16xf32> to vector<16x16xf32>
    %c7_228 = arith.constant 7 : index
    %c2_229 = arith.constant 2 : index
    %232 = memref.load %arg5[%c7_228, %c2_229] : memref<8x4xf32, #tpu.memory_space<smem>>
    %233 = vector.broadcast %232 : f32 to vector<16x16xf32>
    %234 = arith.mulf %231, %233 : vector<16x16xf32>
    %235 = arith.addf %229, %234 : vector<16x16xf32>
    %c0_230 = arith.constant 0 : index
    %c3_231 = arith.constant 3 : index
    %c0_232 = arith.constant 0 : index
    %c0_233 = arith.constant 0 : index
    %236 = vector.load %arg2[%c0_230, %c3_231, %c0_232, %c0_233] : memref<1x4x16x16xf32, #tpu.memory_space<vmem>>, vector<1x1x16x16xf32>
    %237 = vector.shape_cast %236 : vector<1x1x16x16xf32> to vector<16x16xf32>
    %c7_234 = arith.constant 7 : index
    %c3_235 = arith.constant 3 : index
    %238 = memref.load %arg5[%c7_234, %c3_235] : memref<8x4xf32, #tpu.memory_space<smem>>
    %239 = vector.broadcast %238 : f32 to vector<16x16xf32>
    %240 = arith.mulf %237, %239 : vector<16x16xf32>
    %241 = arith.addf %235, %240 : vector<16x16xf32>
    %c7_236 = arith.constant 7 : index
    %242 = memref.load %arg6[%c7_236] : memref<8xf32, #tpu.memory_space<smem>>
    %243 = vector.broadcast %242 : f32 to vector<16x16xf32>
    %244 = arith.addf %241, %243 : vector<16x16xf32>
    %cst_237 = arith.constant dense<0.000000e+00> : vector<16x256xf32>
    %245 = tpu.matmul %244, %1, %cst_237 {dimension_numbers = #tpu.dot_dimension_numbers<[1], [0], [0], [1], [0, 0, 1, 1], [], []>} : vector<16x16xf32>, vector<16x256xf32>, vector<16x256xf32> -> vector<16x256xf32>
    %cst_238 = arith.constant dense<0.000000e+00> : vector<64x256xf32>
    %246 = tpu.matmul %0, %245, %cst_238 {dimension_numbers = #tpu.dot_dimension_numbers<[1], [0], [0], [1], [0, 0, 1, 1], [], []>} : vector<64x16xf32>, vector<16x256xf32>, vector<64x256xf32> -> vector<64x256xf32>
    %c0_239 = arith.constant 0 : index
    %c7_240 = arith.constant 7 : index
    %c0_241 = arith.constant 0 : index
    %c0_242 = arith.constant 0 : index
    %247 = vector.load %arg9[%c0_239, %c7_240, %c0_241, %c0_242] : memref<1x8x64x256xf32, #tpu.memory_space<vmem>>, vector<1x1x64x256xf32>
    %248 = vector.shape_cast %247 : vector<1x1x64x256xf32> to vector<64x256xf32>
    %249 = vector.shape_cast %246 : vector<64x256xf32> to vector<1x1x64x256xf32>
    tpu.vector_store %arg9[%c0_239, %c7_240, %c0_241, %c0_242], %249 {strides = array<i32>} : memref<1x8x64x256xf32, #tpu.memory_space<vmem>>, vector<1x1x64x256xf32>,
    %c0_243 = arith.constant 0 : index
    %c0_244 = arith.constant 0 : index
    %c0_245 = arith.constant 0 : index
    %c0_246 = arith.constant 0 : index
    %250 = vector.load %arg9[%c0_243, %c0_244, %c0_245, %c0_246] : memref<1x8x64x256xf32, #tpu.memory_space<vmem>>, vector<1x1x64x256xf32>
    %251 = vector.shape_cast %250 : vector<1x1x64x256xf32> to vector<64x256xf32>
    %c0_247 = arith.constant 0 : index
    %c0_248 = arith.constant 0 : index
    %252 = memref.load %arg7[%c0_247, %c0_248] : memref<8x8xf32, #tpu.memory_space<smem>>
    %253 = vector.broadcast %252 : f32 to vector<64x256xf32>
    %254 = arith.mulf %251, %253 : vector<64x256xf32>
    %c0_249 = arith.constant 0 : index
    %c1_250 = arith.constant 1 : index
    %c0_251 = arith.constant 0 : index
    %c0_252 = arith.constant 0 : index
    %255 = vector.load %arg9[%c0_249, %c1_250, %c0_251, %c0_252] : memref<1x8x64x256xf32, #tpu.memory_space<vmem>>, vector<1x1x64x256xf32>
    %256 = vector.shape_cast %255 : vector<1x1x64x256xf32> to vector<64x256xf32>
    %c0_253 = arith.constant 0 : index
    %c1_254 = arith.constant 1 : index
    %257 = memref.load %arg7[%c0_253, %c1_254] : memref<8x8xf32, #tpu.memory_space<smem>>
    %258 = vector.broadcast %257 : f32 to vector<64x256xf32>
    %259 = arith.mulf %256, %258 : vector<64x256xf32>
    %260 = arith.addf %254, %259 : vector<64x256xf32>
    %c0_255 = arith.constant 0 : index
    %c2_256 = arith.constant 2 : index
    %c0_257 = arith.constant 0 : index
    %c0_258 = arith.constant 0 : index
    %261 = vector.load %arg9[%c0_255, %c2_256, %c0_257, %c0_258] : memref<1x8x64x256xf32, #tpu.memory_space<vmem>>, vector<1x1x64x256xf32>
    %262 = vector.shape_cast %261 : vector<1x1x64x256xf32> to vector<64x256xf32>
    %c0_259 = arith.constant 0 : index
    %c2_260 = arith.constant 2 : index
    %263 = memref.load %arg7[%c0_259, %c2_260] : memref<8x8xf32, #tpu.memory_space<smem>>
    %264 = vector.broadcast %263 : f32 to vector<64x256xf32>
    %265 = arith.mulf %262, %264 : vector<64x256xf32>
    %266 = arith.addf %260, %265 : vector<64x256xf32>
    %c0_261 = arith.constant 0 : index
    %c3_262 = arith.constant 3 : index
    %c0_263 = arith.constant 0 : index
    %c0_264 = arith.constant 0 : index
    %267 = vector.load %arg9[%c0_261, %c3_262, %c0_263, %c0_264] : memref<1x8x64x256xf32, #tpu.memory_space<vmem>>, vector<1x1x64x256xf32>
    %268 = vector.shape_cast %267 : vector<1x1x64x256xf32> to vector<64x256xf32>
    %c0_265 = arith.constant 0 : index
    %c3_266 = arith.constant 3 : index
    %269 = memref.load %arg7[%c0_265, %c3_266] : memref<8x8xf32, #tpu.memory_space<smem>>
    %270 = vector.broadcast %269 : f32 to vector<64x256xf32>
    %271 = arith.mulf %268, %270 : vector<64x256xf32>
    %272 = arith.addf %266, %271 : vector<64x256xf32>
    %c0_267 = arith.constant 0 : index
    %c4_268 = arith.constant 4 : index
    %c0_269 = arith.constant 0 : index
    %c0_270 = arith.constant 0 : index
    %273 = vector.load %arg9[%c0_267, %c4_268, %c0_269, %c0_270] : memref<1x8x64x256xf32, #tpu.memory_space<vmem>>, vector<1x1x64x256xf32>
    %274 = vector.shape_cast %273 : vector<1x1x64x256xf32> to vector<64x256xf32>
    %c0_271 = arith.constant 0 : index
    %c4_272 = arith.constant 4 : index
    %275 = memref.load %arg7[%c0_271, %c4_272] : memref<8x8xf32, #tpu.memory_space<smem>>
    %276 = vector.broadcast %275 : f32 to vector<64x256xf32>
    %277 = arith.mulf %274, %276 : vector<64x256xf32>
    %278 = arith.addf %272, %277 : vector<64x256xf32>
    %c0_273 = arith.constant 0 : index
    %c5_274 = arith.constant 5 : index
    %c0_275 = arith.constant 0 : index
    %c0_276 = arith.constant 0 : index
    %279 = vector.load %arg9[%c0_273, %c5_274, %c0_275, %c0_276] : memref<1x8x64x256xf32, #tpu.memory_space<vmem>>, vector<1x1x64x256xf32>
    %280 = vector.shape_cast %279 : vector<1x1x64x256xf32> to vector<64x256xf32>
    %c0_277 = arith.constant 0 : index
    %c5_278 = arith.constant 5 : index
    %281 = memref.load %arg7[%c0_277, %c5_278] : memref<8x8xf32, #tpu.memory_space<smem>>
    %282 = vector.broadcast %281 : f32 to vector<64x256xf32>
    %283 = arith.mulf %280, %282 : vector<64x256xf32>
    %284 = arith.addf %278, %283 : vector<64x256xf32>
    %c0_279 = arith.constant 0 : index
    %c6_280 = arith.constant 6 : index
    %c0_281 = arith.constant 0 : index
    %c0_282 = arith.constant 0 : index
    %285 = vector.load %arg9[%c0_279, %c6_280, %c0_281, %c0_282] : memref<1x8x64x256xf32, #tpu.memory_space<vmem>>, vector<1x1x64x256xf32>
    %286 = vector.shape_cast %285 : vector<1x1x64x256xf32> to vector<64x256xf32>
    %c0_283 = arith.constant 0 : index
    %c6_284 = arith.constant 6 : index
    %287 = memref.load %arg7[%c0_283, %c6_284] : memref<8x8xf32, #tpu.memory_space<smem>>
    %288 = vector.broadcast %287 : f32 to vector<64x256xf32>
    %289 = arith.mulf %286, %288 : vector<64x256xf32>
    %290 = arith.addf %284, %289 : vector<64x256xf32>
    %c0_285 = arith.constant 0 : index
    %c7_286 = arith.constant 7 : index
    %c0_287 = arith.constant 0 : index
    %c0_288 = arith.constant 0 : index
    %291 = vector.load %arg9[%c0_285, %c7_286, %c0_287, %c0_288] : memref<1x8x64x256xf32, #tpu.memory_space<vmem>>, vector<1x1x64x256xf32>
    %292 = vector.shape_cast %291 : vector<1x1x64x256xf32> to vector<64x256xf32>
    %c0_289 = arith.constant 0 : index
    %c7_290 = arith.constant 7 : index
    %293 = memref.load %arg7[%c0_289, %c7_290] : memref<8x8xf32, #tpu.memory_space<smem>>
    %294 = vector.broadcast %293 : f32 to vector<64x256xf32>
    %295 = arith.mulf %292, %294 : vector<64x256xf32>
    %296 = arith.addf %290, %295 : vector<64x256xf32>
    %c0_291 = arith.constant 0 : index
    %297 = memref.load %arg8[%c0_291] : memref<8xf32, #tpu.memory_space<smem>>
    %298 = vector.broadcast %297 : f32 to vector<64x256xf32>
    %299 = arith.addf %296, %298 : vector<64x256xf32>
    %300 = arith.negf %299 : vector<64x256xf32>
    %301 = math.exp %300 : vector<64x256xf32>
    %cst_292 = arith.constant 1.000000e+00 : f32
    %302 = vector.broadcast %cst_292 : f32 to vector<64x256xf32>
    %303 = arith.addf %302, %301 : vector<64x256xf32>
    %304 = arith.divf %302, %303 : vector<64x256xf32>
    %c0_293 = arith.constant 0 : index
    %c0_294 = arith.constant 0 : index
    %c0_295 = arith.constant 0 : index
    %c0_296 = arith.constant 0 : index
    %305 = vector.load %arg10[%c0_293, %c0_294, %c0_295, %c0_296] : memref<1x8x64x256xf32, #tpu.memory_space<vmem>>, vector<1x1x64x256xf32>
    %306 = vector.shape_cast %305 : vector<1x1x64x256xf32> to vector<64x256xf32>
    %307 = vector.shape_cast %304 : vector<64x256xf32> to vector<1x1x64x256xf32>
    tpu.vector_store %arg10[%c0_293, %c0_294, %c0_295, %c0_296], %307 {strides = array<i32>} : memref<1x8x64x256xf32, #tpu.memory_space<vmem>>, vector<1x1x64x256xf32>,
    %c0_297 = arith.constant 0 : index
    %c0_298 = arith.constant 0 : index
    %c0_299 = arith.constant 0 : index
    %c0_300 = arith.constant 0 : index
    %308 = vector.load %arg9[%c0_297, %c0_298, %c0_299, %c0_300] : memref<1x8x64x256xf32, #tpu.memory_space<vmem>>, vector<1x1x64x256xf32>
    %309 = vector.shape_cast %308 : vector<1x1x64x256xf32> to vector<64x256xf32>
    %c1_301 = arith.constant 1 : index
    %c0_302 = arith.constant 0 : index
    %310 = memref.load %arg7[%c1_301, %c0_302] : memref<8x8xf32, #tpu.memory_space<smem>>
    %311 = vector.broadcast %310 : f32 to vector<64x256xf32>
    %312 = arith.mulf %309, %311 : vector<64x256xf32>
    %c0_303 = arith.constant 0 : index
    %c1_304 = arith.constant 1 : index
    %c0_305 = arith.constant 0 : index
    %c0_306 = arith.constant 0 : index
    %313 = vector.load %arg9[%c0_303, %c1_304, %c0_305, %c0_306] : memref<1x8x64x256xf32, #tpu.memory_space<vmem>>, vector<1x1x64x256xf32>
    %314 = vector.shape_cast %313 : vector<1x1x64x256xf32> to vector<64x256xf32>
    %c1_307 = arith.constant 1 : index
    %c1_308 = arith.constant 1 : index
    %315 = memref.load %arg7[%c1_307, %c1_308] : memref<8x8xf32, #tpu.memory_space<smem>>
    %316 = vector.broadcast %315 : f32 to vector<64x256xf32>
    %317 = arith.mulf %314, %316 : vector<64x256xf32>
    %318 = arith.addf %312, %317 : vector<64x256xf32>
    %c0_309 = arith.constant 0 : index
    %c2_310 = arith.constant 2 : index
    %c0_311 = arith.constant 0 : index
    %c0_312 = arith.constant 0 : index
    %319 = vector.load %arg9[%c0_309, %c2_310, %c0_311, %c0_312] : memref<1x8x64x256xf32, #tpu.memory_space<vmem>>, vector<1x1x64x256xf32>
    %320 = vector.shape_cast %319 : vector<1x1x64x256xf32> to vector<64x256xf32>
    %c1_313 = arith.constant 1 : index
    %c2_314 = arith.constant 2 : index
    %321 = memref.load %arg7[%c1_313, %c2_314] : memref<8x8xf32, #tpu.memory_space<smem>>
    %322 = vector.broadcast %321 : f32 to vector<64x256xf32>
    %323 = arith.mulf %320, %322 : vector<64x256xf32>
    %324 = arith.addf %318, %323 : vector<64x256xf32>
    %c0_315 = arith.constant 0 : index
    %c3_316 = arith.constant 3 : index
    %c0_317 = arith.constant 0 : index
    %c0_318 = arith.constant 0 : index
    %325 = vector.load %arg9[%c0_315, %c3_316, %c0_317, %c0_318] : memref<1x8x64x256xf32, #tpu.memory_space<vmem>>, vector<1x1x64x256xf32>
    %326 = vector.shape_cast %325 : vector<1x1x64x256xf32> to vector<64x256xf32>
    %c1_319 = arith.constant 1 : index
    %c3_320 = arith.constant 3 : index
    %327 = memref.load %arg7[%c1_319, %c3_320] : memref<8x8xf32, #tpu.memory_space<smem>>
    %328 = vector.broadcast %327 : f32 to vector<64x256xf32>
    %329 = arith.mulf %326, %328 : vector<64x256xf32>
    %330 = arith.addf %324, %329 : vector<64x256xf32>
    %c0_321 = arith.constant 0 : index
    %c4_322 = arith.constant 4 : index
    %c0_323 = arith.constant 0 : index
    %c0_324 = arith.constant 0 : index
    %331 = vector.load %arg9[%c0_321, %c4_322, %c0_323, %c0_324] : memref<1x8x64x256xf32, #tpu.memory_space<vmem>>, vector<1x1x64x256xf32>
    %332 = vector.shape_cast %331 : vector<1x1x64x256xf32> to vector<64x256xf32>
    %c1_325 = arith.constant 1 : index
    %c4_326 = arith.constant 4 : index
    %333 = memref.load %arg7[%c1_325, %c4_326] : memref<8x8xf32, #tpu.memory_space<smem>>
    %334 = vector.broadcast %333 : f32 to vector<64x256xf32>
    %335 = arith.mulf %332, %334 : vector<64x256xf32>
    %336 = arith.addf %330, %335 : vector<64x256xf32>
    %c0_327 = arith.constant 0 : index
    %c5_328 = arith.constant 5 : index
    %c0_329 = arith.constant 0 : index
    %c0_330 = arith.constant 0 : index
    %337 = vector.load %arg9[%c0_327, %c5_328, %c0_329, %c0_330] : memref<1x8x64x256xf32, #tpu.memory_space<vmem>>, vector<1x1x64x256xf32>
    %338 = vector.shape_cast %337 : vector<1x1x64x256xf32> to vector<64x256xf32>
    %c1_331 = arith.constant 1 : index
    %c5_332 = arith.constant 5 : index
    %339 = memref.load %arg7[%c1_331, %c5_332] : memref<8x8xf32, #tpu.memory_space<smem>>
    %340 = vector.broadcast %339 : f32 to vector<64x256xf32>
    %341 = arith.mulf %338, %340 : vector<64x256xf32>
    %342 = arith.addf %336, %341 : vector<64x256xf32>
    %c0_333 = arith.constant 0 : index
    %c6_334 = arith.constant 6 : index
    %c0_335 = arith.constant 0 : index
    %c0_336 = arith.constant 0 : index
    %343 = vector.load %arg9[%c0_333, %c6_334, %c0_335, %c0_336] : memref<1x8x64x256xf32, #tpu.memory_space<vmem>>, vector<1x1x64x256xf32>
    %344 = vector.shape_cast %343 : vector<1x1x64x256xf32> to vector<64x256xf32>
    %c1_337 = arith.constant 1 : index
    %c6_338 = arith.constant 6 : index
    %345 = memref.load %arg7[%c1_337, %c6_338] : memref<8x8xf32, #tpu.memory_space<smem>>
    %346 = vector.broadcast %345 : f32 to vector<64x256xf32>
    %347 = arith.mulf %344, %346 : vector<64x256xf32>
    %348 = arith.addf %342, %347 : vector<64x256xf32>
    %c0_339 = arith.constant 0 : index
    %c7_340 = arith.constant 7 : index
    %c0_341 = arith.constant 0 : index
    %c0_342 = arith.constant 0 : index
    %349 = vector.load %arg9[%c0_339, %c7_340, %c0_341, %c0_342] : memref<1x8x64x256xf32, #tpu.memory_space<vmem>>, vector<1x1x64x256xf32>
    %350 = vector.shape_cast %349 : vector<1x1x64x256xf32> to vector<64x256xf32>
    %c1_343 = arith.constant 1 : index
    %c7_344 = arith.constant 7 : index
    %351 = memref.load %arg7[%c1_343, %c7_344] : memref<8x8xf32, #tpu.memory_space<smem>>
    %352 = vector.broadcast %351 : f32 to vector<64x256xf32>
    %353 = arith.mulf %350, %352 : vector<64x256xf32>
    %354 = arith.addf %348, %353 : vector<64x256xf32>
    %c1_345 = arith.constant 1 : index
    %355 = memref.load %arg8[%c1_345] : memref<8xf32, #tpu.memory_space<smem>>
    %356 = vector.broadcast %355 : f32 to vector<64x256xf32>
    %357 = arith.addf %354, %356 : vector<64x256xf32>
    %358 = arith.negf %357 : vector<64x256xf32>
    %359 = math.exp %358 : vector<64x256xf32>
    %cst_346 = arith.constant 1.000000e+00 : f32
    %360 = vector.broadcast %cst_346 : f32 to vector<64x256xf32>
    %361 = arith.addf %360, %359 : vector<64x256xf32>
    %362 = arith.divf %360, %361 : vector<64x256xf32>
    %c0_347 = arith.constant 0 : index
    %c1_348 = arith.constant 1 : index
    %c0_349 = arith.constant 0 : index
    %c0_350 = arith.constant 0 : index
    %363 = vector.load %arg10[%c0_347, %c1_348, %c0_349, %c0_350] : memref<1x8x64x256xf32, #tpu.memory_space<vmem>>, vector<1x1x64x256xf32>
    %364 = vector.shape_cast %363 : vector<1x1x64x256xf32> to vector<64x256xf32>
    %365 = vector.shape_cast %362 : vector<64x256xf32> to vector<1x1x64x256xf32>
    tpu.vector_store %arg10[%c0_347, %c1_348, %c0_349, %c0_350], %365 {strides = array<i32>} : memref<1x8x64x256xf32, #tpu.memory_space<vmem>>, vector<1x1x64x256xf32>,
    %c0_351 = arith.constant 0 : index
    %c0_352 = arith.constant 0 : index
    %c0_353 = arith.constant 0 : index
    %c0_354 = arith.constant 0 : index
    %366 = vector.load %arg9[%c0_351, %c0_352, %c0_353, %c0_354] : memref<1x8x64x256xf32, #tpu.memory_space<vmem>>, vector<1x1x64x256xf32>
    %367 = vector.shape_cast %366 : vector<1x1x64x256xf32> to vector<64x256xf32>
    %c2_355 = arith.constant 2 : index
    %c0_356 = arith.constant 0 : index
    %368 = memref.load %arg7[%c2_355, %c0_356] : memref<8x8xf32, #tpu.memory_space<smem>>
    %369 = vector.broadcast %368 : f32 to vector<64x256xf32>
    %370 = arith.mulf %367, %369 : vector<64x256xf32>
    %c0_357 = arith.constant 0 : index
    %c1_358 = arith.constant 1 : index
    %c0_359 = arith.constant 0 : index
    %c0_360 = arith.constant 0 : index
    %371 = vector.load %arg9[%c0_357, %c1_358, %c0_359, %c0_360] : memref<1x8x64x256xf32, #tpu.memory_space<vmem>>, vector<1x1x64x256xf32>
    %372 = vector.shape_cast %371 : vector<1x1x64x256xf32> to vector<64x256xf32>
    %c2_361 = arith.constant 2 : index
    %c1_362 = arith.constant 1 : index
    %373 = memref.load %arg7[%c2_361, %c1_362] : memref<8x8xf32, #tpu.memory_space<smem>>
    %374 = vector.broadcast %373 : f32 to vector<64x256xf32>
    %375 = arith.mulf %372, %374 : vector<64x256xf32>
    %376 = arith.addf %370, %375 : vector<64x256xf32>
    %c0_363 = arith.constant 0 : index
    %c2_364 = arith.constant 2 : index
    %c0_365 = arith.constant 0 : index
    %c0_366 = arith.constant 0 : index
    %377 = vector.load %arg9[%c0_363, %c2_364, %c0_365, %c0_366] : memref<1x8x64x256xf32, #tpu.memory_space<vmem>>, vector<1x1x64x256xf32>
    %378 = vector.shape_cast %377 : vector<1x1x64x256xf32> to vector<64x256xf32>
    %c2_367 = arith.constant 2 : index
    %c2_368 = arith.constant 2 : index
    %379 = memref.load %arg7[%c2_367, %c2_368] : memref<8x8xf32, #tpu.memory_space<smem>>
    %380 = vector.broadcast %379 : f32 to vector<64x256xf32>
    %381 = arith.mulf %378, %380 : vector<64x256xf32>
    %382 = arith.addf %376, %381 : vector<64x256xf32>
    %c0_369 = arith.constant 0 : index
    %c3_370 = arith.constant 3 : index
    %c0_371 = arith.constant 0 : index
    %c0_372 = arith.constant 0 : index
    %383 = vector.load %arg9[%c0_369, %c3_370, %c0_371, %c0_372] : memref<1x8x64x256xf32, #tpu.memory_space<vmem>>, vector<1x1x64x256xf32>
    %384 = vector.shape_cast %383 : vector<1x1x64x256xf32> to vector<64x256xf32>
    %c2_373 = arith.constant 2 : index
    %c3_374 = arith.constant 3 : index
    %385 = memref.load %arg7[%c2_373, %c3_374] : memref<8x8xf32, #tpu.memory_space<smem>>
    %386 = vector.broadcast %385 : f32 to vector<64x256xf32>
    %387 = arith.mulf %384, %386 : vector<64x256xf32>
    %388 = arith.addf %382, %387 : vector<64x256xf32>
    %c0_375 = arith.constant 0 : index
    %c4_376 = arith.constant 4 : index
    %c0_377 = arith.constant 0 : index
    %c0_378 = arith.constant 0 : index
    %389 = vector.load %arg9[%c0_375, %c4_376, %c0_377, %c0_378] : memref<1x8x64x256xf32, #tpu.memory_space<vmem>>, vector<1x1x64x256xf32>
    %390 = vector.shape_cast %389 : vector<1x1x64x256xf32> to vector<64x256xf32>
    %c2_379 = arith.constant 2 : index
    %c4_380 = arith.constant 4 : index
    %391 = memref.load %arg7[%c2_379, %c4_380] : memref<8x8xf32, #tpu.memory_space<smem>>
    %392 = vector.broadcast %391 : f32 to vector<64x256xf32>
    %393 = arith.mulf %390, %392 : vector<64x256xf32>
    %394 = arith.addf %388, %393 : vector<64x256xf32>
    %c0_381 = arith.constant 0 : index
    %c5_382 = arith.constant 5 : index
    %c0_383 = arith.constant 0 : index
    %c0_384 = arith.constant 0 : index
    %395 = vector.load %arg9[%c0_381, %c5_382, %c0_383, %c0_384] : memref<1x8x64x256xf32, #tpu.memory_space<vmem>>, vector<1x1x64x256xf32>
    %396 = vector.shape_cast %395 : vector<1x1x64x256xf32> to vector<64x256xf32>
    %c2_385 = arith.constant 2 : index
    %c5_386 = arith.constant 5 : index
    %397 = memref.load %arg7[%c2_385, %c5_386] : memref<8x8xf32, #tpu.memory_space<smem>>
    %398 = vector.broadcast %397 : f32 to vector<64x256xf32>
    %399 = arith.mulf %396, %398 : vector<64x256xf32>
    %400 = arith.addf %394, %399 : vector<64x256xf32>
    %c0_387 = arith.constant 0 : index
    %c6_388 = arith.constant 6 : index
    %c0_389 = arith.constant 0 : index
    %c0_390 = arith.constant 0 : index
    %401 = vector.load %arg9[%c0_387, %c6_388, %c0_389, %c0_390] : memref<1x8x64x256xf32, #tpu.memory_space<vmem>>, vector<1x1x64x256xf32>
    %402 = vector.shape_cast %401 : vector<1x1x64x256xf32> to vector<64x256xf32>
    %c2_391 = arith.constant 2 : index
    %c6_392 = arith.constant 6 : index
    %403 = memref.load %arg7[%c2_391, %c6_392] : memref<8x8xf32, #tpu.memory_space<smem>>
    %404 = vector.broadcast %403 : f32 to vector<64x256xf32>
    %405 = arith.mulf %402, %404 : vector<64x256xf32>
    %406 = arith.addf %400, %405 : vector<64x256xf32>
    %c0_393 = arith.constant 0 : index
    %c7_394 = arith.constant 7 : index
    %c0_395 = arith.constant 0 : index
    %c0_396 = arith.constant 0 : index
    %407 = vector.load %arg9[%c0_393, %c7_394, %c0_395, %c0_396] : memref<1x8x64x256xf32, #tpu.memory_space<vmem>>, vector<1x1x64x256xf32>
    %408 = vector.shape_cast %407 : vector<1x1x64x256xf32> to vector<64x256xf32>
    %c2_397 = arith.constant 2 : index
    %c7_398 = arith.constant 7 : index
    %409 = memref.load %arg7[%c2_397, %c7_398] : memref<8x8xf32, #tpu.memory_space<smem>>
    %410 = vector.broadcast %409 : f32 to vector<64x256xf32>
    %411 = arith.mulf %408, %410 : vector<64x256xf32>
    %412 = arith.addf %406, %411 : vector<64x256xf32>
    %c2_399 = arith.constant 2 : index
    %413 = memref.load %arg8[%c2_399] : memref<8xf32, #tpu.memory_space<smem>>
    %414 = vector.broadcast %413 : f32 to vector<64x256xf32>
    %415 = arith.addf %412, %414 : vector<64x256xf32>
    %416 = arith.negf %415 : vector<64x256xf32>
    %417 = math.exp %416 : vector<64x256xf32>
    %cst_400 = arith.constant 1.000000e+00 : f32
    %418 = vector.broadcast %cst_400 : f32 to vector<64x256xf32>
    %419 = arith.addf %418, %417 : vector<64x256xf32>
    %420 = arith.divf %418, %419 : vector<64x256xf32>
    %c0_401 = arith.constant 0 : index
    %c2_402 = arith.constant 2 : index
    %c0_403 = arith.constant 0 : index
    %c0_404 = arith.constant 0 : index
    %421 = vector.load %arg10[%c0_401, %c2_402, %c0_403, %c0_404] : memref<1x8x64x256xf32, #tpu.memory_space<vmem>>, vector<1x1x64x256xf32>
    %422 = vector.shape_cast %421 : vector<1x1x64x256xf32> to vector<64x256xf32>
    %423 = vector.shape_cast %420 : vector<64x256xf32> to vector<1x1x64x256xf32>
    tpu.vector_store %arg10[%c0_401, %c2_402, %c0_403, %c0_404], %423 {strides = array<i32>} : memref<1x8x64x256xf32, #tpu.memory_space<vmem>>, vector<1x1x64x256xf32>,
    %c0_405 = arith.constant 0 : index
    %c0_406 = arith.constant 0 : index
    %c0_407 = arith.constant 0 : index
    %c0_408 = arith.constant 0 : index
    %424 = vector.load %arg9[%c0_405, %c0_406, %c0_407, %c0_408] : memref<1x8x64x256xf32, #tpu.memory_space<vmem>>, vector<1x1x64x256xf32>
    %425 = vector.shape_cast %424 : vector<1x1x64x256xf32> to vector<64x256xf32>
    %c3_409 = arith.constant 3 : index
    %c0_410 = arith.constant 0 : index
    %426 = memref.load %arg7[%c3_409, %c0_410] : memref<8x8xf32, #tpu.memory_space<smem>>
    %427 = vector.broadcast %426 : f32 to vector<64x256xf32>
    %428 = arith.mulf %425, %427 : vector<64x256xf32>
    %c0_411 = arith.constant 0 : index
    %c1_412 = arith.constant 1 : index
    %c0_413 = arith.constant 0 : index
    %c0_414 = arith.constant 0 : index
    %429 = vector.load %arg9[%c0_411, %c1_412, %c0_413, %c0_414] : memref<1x8x64x256xf32, #tpu.memory_space<vmem>>, vector<1x1x64x256xf32>
    %430 = vector.shape_cast %429 : vector<1x1x64x256xf32> to vector<64x256xf32>
    %c3_415 = arith.constant 3 : index
    %c1_416 = arith.constant 1 : index
    %431 = memref.load %arg7[%c3_415, %c1_416] : memref<8x8xf32, #tpu.memory_space<smem>>
    %432 = vector.broadcast %431 : f32 to vector<64x256xf32>
    %433 = arith.mulf %430, %432 : vector<64x256xf32>
    %434 = arith.addf %428, %433 : vector<64x256xf32>
    %c0_417 = arith.constant 0 : index
    %c2_418 = arith.constant 2 : index
    %c0_419 = arith.constant 0 : index
    %c0_420 = arith.constant 0 : index
    %435 = vector.load %arg9[%c0_417, %c2_418, %c0_419, %c0_420] : memref<1x8x64x256xf32, #tpu.memory_space<vmem>>, vector<1x1x64x256xf32>
    %436 = vector.shape_cast %435 : vector<1x1x64x256xf32> to vector<64x256xf32>
    %c3_421 = arith.constant 3 : index
    %c2_422 = arith.constant 2 : index
    %437 = memref.load %arg7[%c3_421, %c2_422] : memref<8x8xf32, #tpu.memory_space<smem>>
    %438 = vector.broadcast %437 : f32 to vector<64x256xf32>
    %439 = arith.mulf %436, %438 : vector<64x256xf32>
    %440 = arith.addf %434, %439 : vector<64x256xf32>
    %c0_423 = arith.constant 0 : index
    %c3_424 = arith.constant 3 : index
    %c0_425 = arith.constant 0 : index
    %c0_426 = arith.constant 0 : index
    %441 = vector.load %arg9[%c0_423, %c3_424, %c0_425, %c0_426] : memref<1x8x64x256xf32, #tpu.memory_space<vmem>>, vector<1x1x64x256xf32>
    %442 = vector.shape_cast %441 : vector<1x1x64x256xf32> to vector<64x256xf32>
    %c3_427 = arith.constant 3 : index
    %c3_428 = arith.constant 3 : index
    %443 = memref.load %arg7[%c3_427, %c3_428] : memref<8x8xf32, #tpu.memory_space<smem>>
    %444 = vector.broadcast %443 : f32 to vector<64x256xf32>
    %445 = arith.mulf %442, %444 : vector<64x256xf32>
    %446 = arith.addf %440, %445 : vector<64x256xf32>
    %c0_429 = arith.constant 0 : index
    %c4_430 = arith.constant 4 : index
    %c0_431 = arith.constant 0 : index
    %c0_432 = arith.constant 0 : index
    %447 = vector.load %arg9[%c0_429, %c4_430, %c0_431, %c0_432] : memref<1x8x64x256xf32, #tpu.memory_space<vmem>>, vector<1x1x64x256xf32>
    %448 = vector.shape_cast %447 : vector<1x1x64x256xf32> to vector<64x256xf32>
    %c3_433 = arith.constant 3 : index
    %c4_434 = arith.constant 4 : index
    %449 = memref.load %arg7[%c3_433, %c4_434] : memref<8x8xf32, #tpu.memory_space<smem>>
    %450 = vector.broadcast %449 : f32 to vector<64x256xf32>
    %451 = arith.mulf %448, %450 : vector<64x256xf32>
    %452 = arith.addf %446, %451 : vector<64x256xf32>
    %c0_435 = arith.constant 0 : index
    %c5_436 = arith.constant 5 : index
    %c0_437 = arith.constant 0 : index
    %c0_438 = arith.constant 0 : index
    %453 = vector.load %arg9[%c0_435, %c5_436, %c0_437, %c0_438] : memref<1x8x64x256xf32, #tpu.memory_space<vmem>>, vector<1x1x64x256xf32>
    %454 = vector.shape_cast %453 : vector<1x1x64x256xf32> to vector<64x256xf32>
    %c3_439 = arith.constant 3 : index
    %c5_440 = arith.constant 5 : index
    %455 = memref.load %arg7[%c3_439, %c5_440] : memref<8x8xf32, #tpu.memory_space<smem>>
    %456 = vector.broadcast %455 : f32 to vector<64x256xf32>
    %457 = arith.mulf %454, %456 : vector<64x256xf32>
    %458 = arith.addf %452, %457 : vector<64x256xf32>
    %c0_441 = arith.constant 0 : index
    %c6_442 = arith.constant 6 : index
    %c0_443 = arith.constant 0 : index
    %c0_444 = arith.constant 0 : index
    %459 = vector.load %arg9[%c0_441, %c6_442, %c0_443, %c0_444] : memref<1x8x64x256xf32, #tpu.memory_space<vmem>>, vector<1x1x64x256xf32>
    %460 = vector.shape_cast %459 : vector<1x1x64x256xf32> to vector<64x256xf32>
    %c3_445 = arith.constant 3 : index
    %c6_446 = arith.constant 6 : index
    %461 = memref.load %arg7[%c3_445, %c6_446] : memref<8x8xf32, #tpu.memory_space<smem>>
    %462 = vector.broadcast %461 : f32 to vector<64x256xf32>
    %463 = arith.mulf %460, %462 : vector<64x256xf32>
    %464 = arith.addf %458, %463 : vector<64x256xf32>
    %c0_447 = arith.constant 0 : index
    %c7_448 = arith.constant 7 : index
    %c0_449 = arith.constant 0 : index
    %c0_450 = arith.constant 0 : index
    %465 = vector.load %arg9[%c0_447, %c7_448, %c0_449, %c0_450] : memref<1x8x64x256xf32, #tpu.memory_space<vmem>>, vector<1x1x64x256xf32>
    %466 = vector.shape_cast %465 : vector<1x1x64x256xf32> to vector<64x256xf32>
    %c3_451 = arith.constant 3 : index
    %c7_452 = arith.constant 7 : index
    %467 = memref.load %arg7[%c3_451, %c7_452] : memref<8x8xf32, #tpu.memory_space<smem>>
    %468 = vector.broadcast %467 : f32 to vector<64x256xf32>
    %469 = arith.mulf %466, %468 : vector<64x256xf32>
    %470 = arith.addf %464, %469 : vector<64x256xf32>
    %c3_453 = arith.constant 3 : index
    %471 = memref.load %arg8[%c3_453] : memref<8xf32, #tpu.memory_space<smem>>
    %472 = vector.broadcast %471 : f32 to vector<64x256xf32>
    %473 = arith.addf %470, %472 : vector<64x256xf32>
    %474 = arith.negf %473 : vector<64x256xf32>
    %475 = math.exp %474 : vector<64x256xf32>
    %cst_454 = arith.constant 1.000000e+00 : f32
    %476 = vector.broadcast %cst_454 : f32 to vector<64x256xf32>
    %477 = arith.addf %476, %475 : vector<64x256xf32>
    %478 = arith.divf %476, %477 : vector<64x256xf32>
    %c0_455 = arith.constant 0 : index
    %c3_456 = arith.constant 3 : index
    %c0_457 = arith.constant 0 : index
    %c0_458 = arith.constant 0 : index
    %479 = vector.load %arg10[%c0_455, %c3_456, %c0_457, %c0_458] : memref<1x8x64x256xf32, #tpu.memory_space<vmem>>, vector<1x1x64x256xf32>
    %480 = vector.shape_cast %479 : vector<1x1x64x256xf32> to vector<64x256xf32>
    %481 = vector.shape_cast %478 : vector<64x256xf32> to vector<1x1x64x256xf32>
    tpu.vector_store %arg10[%c0_455, %c3_456, %c0_457, %c0_458], %481 {strides = array<i32>} : memref<1x8x64x256xf32, #tpu.memory_space<vmem>>, vector<1x1x64x256xf32>,
    %c0_459 = arith.constant 0 : index
    %c0_460 = arith.constant 0 : index
    %c0_461 = arith.constant 0 : index
    %c0_462 = arith.constant 0 : index
    %482 = vector.load %arg9[%c0_459, %c0_460, %c0_461, %c0_462] : memref<1x8x64x256xf32, #tpu.memory_space<vmem>>, vector<1x1x64x256xf32>
    %483 = vector.shape_cast %482 : vector<1x1x64x256xf32> to vector<64x256xf32>
    %c4_463 = arith.constant 4 : index
    %c0_464 = arith.constant 0 : index
    %484 = memref.load %arg7[%c4_463, %c0_464] : memref<8x8xf32, #tpu.memory_space<smem>>
    %485 = vector.broadcast %484 : f32 to vector<64x256xf32>
    %486 = arith.mulf %483, %485 : vector<64x256xf32>
    %c0_465 = arith.constant 0 : index
    %c1_466 = arith.constant 1 : index
    %c0_467 = arith.constant 0 : index
    %c0_468 = arith.constant 0 : index
    %487 = vector.load %arg9[%c0_465, %c1_466, %c0_467, %c0_468] : memref<1x8x64x256xf32, #tpu.memory_space<vmem>>, vector<1x1x64x256xf32>
    %488 = vector.shape_cast %487 : vector<1x1x64x256xf32> to vector<64x256xf32>
    %c4_469 = arith.constant 4 : index
    %c1_470 = arith.constant 1 : index
    %489 = memref.load %arg7[%c4_469, %c1_470] : memref<8x8xf32, #tpu.memory_space<smem>>
    %490 = vector.broadcast %489 : f32 to vector<64x256xf32>
    %491 = arith.mulf %488, %490 : vector<64x256xf32>
    %492 = arith.addf %486, %491 : vector<64x256xf32>
    %c0_471 = arith.constant 0 : index
    %c2_472 = arith.constant 2 : index
    %c0_473 = arith.constant 0 : index
    %c0_474 = arith.constant 0 : index
    %493 = vector.load %arg9[%c0_471, %c2_472, %c0_473, %c0_474] : memref<1x8x64x256xf32, #tpu.memory_space<vmem>>, vector<1x1x64x256xf32>
    %494 = vector.shape_cast %493 : vector<1x1x64x256xf32> to vector<64x256xf32>
    %c4_475 = arith.constant 4 : index
    %c2_476 = arith.constant 2 : index
    %495 = memref.load %arg7[%c4_475, %c2_476] : memref<8x8xf32, #tpu.memory_space<smem>>
    %496 = vector.broadcast %495 : f32 to vector<64x256xf32>
    %497 = arith.mulf %494, %496 : vector<64x256xf32>
    %498 = arith.addf %492, %497 : vector<64x256xf32>
    %c0_477 = arith.constant 0 : index
    %c3_478 = arith.constant 3 : index
    %c0_479 = arith.constant 0 : index
    %c0_480 = arith.constant 0 : index
    %499 = vector.load %arg9[%c0_477, %c3_478, %c0_479, %c0_480] : memref<1x8x64x256xf32, #tpu.memory_space<vmem>>, vector<1x1x64x256xf32>
    %500 = vector.shape_cast %499 : vector<1x1x64x256xf32> to vector<64x256xf32>
    %c4_481 = arith.constant 4 : index
    %c3_482 = arith.constant 3 : index
    %501 = memref.load %arg7[%c4_481, %c3_482] : memref<8x8xf32, #tpu.memory_space<smem>>
    %502 = vector.broadcast %501 : f32 to vector<64x256xf32>
    %503 = arith.mulf %500, %502 : vector<64x256xf32>
    %504 = arith.addf %498, %503 : vector<64x256xf32>
    %c0_483 = arith.constant 0 : index
    %c4_484 = arith.constant 4 : index
    %c0_485 = arith.constant 0 : index
    %c0_486 = arith.constant 0 : index
    %505 = vector.load %arg9[%c0_483, %c4_484, %c0_485, %c0_486] : memref<1x8x64x256xf32, #tpu.memory_space<vmem>>, vector<1x1x64x256xf32>
    %506 = vector.shape_cast %505 : vector<1x1x64x256xf32> to vector<64x256xf32>
    %c4_487 = arith.constant 4 : index
    %c4_488 = arith.constant 4 : index
    %507 = memref.load %arg7[%c4_487, %c4_488] : memref<8x8xf32, #tpu.memory_space<smem>>
    %508 = vector.broadcast %507 : f32 to vector<64x256xf32>
    %509 = arith.mulf %506, %508 : vector<64x256xf32>
    %510 = arith.addf %504, %509 : vector<64x256xf32>
    %c0_489 = arith.constant 0 : index
    %c5_490 = arith.constant 5 : index
    %c0_491 = arith.constant 0 : index
    %c0_492 = arith.constant 0 : index
    %511 = vector.load %arg9[%c0_489, %c5_490, %c0_491, %c0_492] : memref<1x8x64x256xf32, #tpu.memory_space<vmem>>, vector<1x1x64x256xf32>
    %512 = vector.shape_cast %511 : vector<1x1x64x256xf32> to vector<64x256xf32>
    %c4_493 = arith.constant 4 : index
    %c5_494 = arith.constant 5 : index
    %513 = memref.load %arg7[%c4_493, %c5_494] : memref<8x8xf32, #tpu.memory_space<smem>>
    %514 = vector.broadcast %513 : f32 to vector<64x256xf32>
    %515 = arith.mulf %512, %514 : vector<64x256xf32>
    %516 = arith.addf %510, %515 : vector<64x256xf32>
    %c0_495 = arith.constant 0 : index
    %c6_496 = arith.constant 6 : index
    %c0_497 = arith.constant 0 : index
    %c0_498 = arith.constant 0 : index
    %517 = vector.load %arg9[%c0_495, %c6_496, %c0_497, %c0_498] : memref<1x8x64x256xf32, #tpu.memory_space<vmem>>, vector<1x1x64x256xf32>
    %518 = vector.shape_cast %517 : vector<1x1x64x256xf32> to vector<64x256xf32>
    %c4_499 = arith.constant 4 : index
    %c6_500 = arith.constant 6 : index
    %519 = memref.load %arg7[%c4_499, %c6_500] : memref<8x8xf32, #tpu.memory_space<smem>>
    %520 = vector.broadcast %519 : f32 to vector<64x256xf32>
    %521 = arith.mulf %518, %520 : vector<64x256xf32>
    %522 = arith.addf %516, %521 : vector<64x256xf32>
    %c0_501 = arith.constant 0 : index
    %c7_502 = arith.constant 7 : index
    %c0_503 = arith.constant 0 : index
    %c0_504 = arith.constant 0 : index
    %523 = vector.load %arg9[%c0_501, %c7_502, %c0_503, %c0_504] : memref<1x8x64x256xf32, #tpu.memory_space<vmem>>, vector<1x1x64x256xf32>
    %524 = vector.shape_cast %523 : vector<1x1x64x256xf32> to vector<64x256xf32>
    %c4_505 = arith.constant 4 : index
    %c7_506 = arith.constant 7 : index
    %525 = memref.load %arg7[%c4_505, %c7_506] : memref<8x8xf32, #tpu.memory_space<smem>>
    %526 = vector.broadcast %525 : f32 to vector<64x256xf32>
    %527 = arith.mulf %524, %526 : vector<64x256xf32>
    %528 = arith.addf %522, %527 : vector<64x256xf32>
    %c4_507 = arith.constant 4 : index
    %529 = memref.load %arg8[%c4_507] : memref<8xf32, #tpu.memory_space<smem>>
    %530 = vector.broadcast %529 : f32 to vector<64x256xf32>
    %531 = arith.addf %528, %530 : vector<64x256xf32>
    %532 = arith.negf %531 : vector<64x256xf32>
    %533 = math.exp %532 : vector<64x256xf32>
    %cst_508 = arith.constant 1.000000e+00 : f32
    %534 = vector.broadcast %cst_508 : f32 to vector<64x256xf32>
    %535 = arith.addf %534, %533 : vector<64x256xf32>
    %536 = arith.divf %534, %535 : vector<64x256xf32>
    %c0_509 = arith.constant 0 : index
    %c4_510 = arith.constant 4 : index
    %c0_511 = arith.constant 0 : index
    %c0_512 = arith.constant 0 : index
    %537 = vector.load %arg10[%c0_509, %c4_510, %c0_511, %c0_512] : memref<1x8x64x256xf32, #tpu.memory_space<vmem>>, vector<1x1x64x256xf32>
    %538 = vector.shape_cast %537 : vector<1x1x64x256xf32> to vector<64x256xf32>
    %539 = vector.shape_cast %536 : vector<64x256xf32> to vector<1x1x64x256xf32>
    tpu.vector_store %arg10[%c0_509, %c4_510, %c0_511, %c0_512], %539 {strides = array<i32>} : memref<1x8x64x256xf32, #tpu.memory_space<vmem>>, vector<1x1x64x256xf32>,
    %c0_513 = arith.constant 0 : index
    %c0_514 = arith.constant 0 : index
    %c0_515 = arith.constant 0 : index
    %c0_516 = arith.constant 0 : index
    %540 = vector.load %arg9[%c0_513, %c0_514, %c0_515, %c0_516] : memref<1x8x64x256xf32, #tpu.memory_space<vmem>>, vector<1x1x64x256xf32>
    %541 = vector.shape_cast %540 : vector<1x1x64x256xf32> to vector<64x256xf32>
    %c5_517 = arith.constant 5 : index
    %c0_518 = arith.constant 0 : index
    %542 = memref.load %arg7[%c5_517, %c0_518] : memref<8x8xf32, #tpu.memory_space<smem>>
    %543 = vector.broadcast %542 : f32 to vector<64x256xf32>
    %544 = arith.mulf %541, %543 : vector<64x256xf32>
    %c0_519 = arith.constant 0 : index
    %c1_520 = arith.constant 1 : index
    %c0_521 = arith.constant 0 : index
    %c0_522 = arith.constant 0 : index
    %545 = vector.load %arg9[%c0_519, %c1_520, %c0_521, %c0_522] : memref<1x8x64x256xf32, #tpu.memory_space<vmem>>, vector<1x1x64x256xf32>
    %546 = vector.shape_cast %545 : vector<1x1x64x256xf32> to vector<64x256xf32>
    %c5_523 = arith.constant 5 : index
    %c1_524 = arith.constant 1 : index
    %547 = memref.load %arg7[%c5_523, %c1_524] : memref<8x8xf32, #tpu.memory_space<smem>>
    %548 = vector.broadcast %547 : f32 to vector<64x256xf32>
    %549 = arith.mulf %546, %548 : vector<64x256xf32>
    %550 = arith.addf %544, %549 : vector<64x256xf32>
    %c0_525 = arith.constant 0 : index
    %c2_526 = arith.constant 2 : index
    %c0_527 = arith.constant 0 : index
    %c0_528 = arith.constant 0 : index
    %551 = vector.load %arg9[%c0_525, %c2_526, %c0_527, %c0_528] : memref<1x8x64x256xf32, #tpu.memory_space<vmem>>, vector<1x1x64x256xf32>
    %552 = vector.shape_cast %551 : vector<1x1x64x256xf32> to vector<64x256xf32>
    %c5_529 = arith.constant 5 : index
    %c2_530 = arith.constant 2 : index
    %553 = memref.load %arg7[%c5_529, %c2_530] : memref<8x8xf32, #tpu.memory_space<smem>>
    %554 = vector.broadcast %553 : f32 to vector<64x256xf32>
    %555 = arith.mulf %552, %554 : vector<64x256xf32>
    %556 = arith.addf %550, %555 : vector<64x256xf32>
    %c0_531 = arith.constant 0 : index
    %c3_532 = arith.constant 3 : index
    %c0_533 = arith.constant 0 : index
    %c0_534 = arith.constant 0 : index
    %557 = vector.load %arg9[%c0_531, %c3_532, %c0_533, %c0_534] : memref<1x8x64x256xf32, #tpu.memory_space<vmem>>, vector<1x1x64x256xf32>
    %558 = vector.shape_cast %557 : vector<1x1x64x256xf32> to vector<64x256xf32>
    %c5_535 = arith.constant 5 : index
    %c3_536 = arith.constant 3 : index
    %559 = memref.load %arg7[%c5_535, %c3_536] : memref<8x8xf32, #tpu.memory_space<smem>>
    %560 = vector.broadcast %559 : f32 to vector<64x256xf32>
    %561 = arith.mulf %558, %560 : vector<64x256xf32>
    %562 = arith.addf %556, %561 : vector<64x256xf32>
    %c0_537 = arith.constant 0 : index
    %c4_538 = arith.constant 4 : index
    %c0_539 = arith.constant 0 : index
    %c0_540 = arith.constant 0 : index
    %563 = vector.load %arg9[%c0_537, %c4_538, %c0_539, %c0_540] : memref<1x8x64x256xf32, #tpu.memory_space<vmem>>, vector<1x1x64x256xf32>
    %564 = vector.shape_cast %563 : vector<1x1x64x256xf32> to vector<64x256xf32>
    %c5_541 = arith.constant 5 : index
    %c4_542 = arith.constant 4 : index
    %565 = memref.load %arg7[%c5_541, %c4_542] : memref<8x8xf32, #tpu.memory_space<smem>>
    %566 = vector.broadcast %565 : f32 to vector<64x256xf32>
    %567 = arith.mulf %564, %566 : vector<64x256xf32>
    %568 = arith.addf %562, %567 : vector<64x256xf32>
    %c0_543 = arith.constant 0 : index
    %c5_544 = arith.constant 5 : index
    %c0_545 = arith.constant 0 : index
    %c0_546 = arith.constant 0 : index
    %569 = vector.load %arg9[%c0_543, %c5_544, %c0_545, %c0_546] : memref<1x8x64x256xf32, #tpu.memory_space<vmem>>, vector<1x1x64x256xf32>
    %570 = vector.shape_cast %569 : vector<1x1x64x256xf32> to vector<64x256xf32>
    %c5_547 = arith.constant 5 : index
    %c5_548 = arith.constant 5 : index
    %571 = memref.load %arg7[%c5_547, %c5_548] : memref<8x8xf32, #tpu.memory_space<smem>>
    %572 = vector.broadcast %571 : f32 to vector<64x256xf32>
    %573 = arith.mulf %570, %572 : vector<64x256xf32>
    %574 = arith.addf %568, %573 : vector<64x256xf32>
    %c0_549 = arith.constant 0 : index
    %c6_550 = arith.constant 6 : index
    %c0_551 = arith.constant 0 : index
    %c0_552 = arith.constant 0 : index
    %575 = vector.load %arg9[%c0_549, %c6_550, %c0_551, %c0_552] : memref<1x8x64x256xf32, #tpu.memory_space<vmem>>, vector<1x1x64x256xf32>
    %576 = vector.shape_cast %575 : vector<1x1x64x256xf32> to vector<64x256xf32>
    %c5_553 = arith.constant 5 : index
    %c6_554 = arith.constant 6 : index
    %577 = memref.load %arg7[%c5_553, %c6_554] : memref<8x8xf32, #tpu.memory_space<smem>>
    %578 = vector.broadcast %577 : f32 to vector<64x256xf32>
    %579 = arith.mulf %576, %578 : vector<64x256xf32>
    %580 = arith.addf %574, %579 : vector<64x256xf32>
    %c0_555 = arith.constant 0 : index
    %c7_556 = arith.constant 7 : index
    %c0_557 = arith.constant 0 : index
    %c0_558 = arith.constant 0 : index
    %581 = vector.load %arg9[%c0_555, %c7_556, %c0_557, %c0_558] : memref<1x8x64x256xf32, #tpu.memory_space<vmem>>, vector<1x1x64x256xf32>
    %582 = vector.shape_cast %581 : vector<1x1x64x256xf32> to vector<64x256xf32>
    %c5_559 = arith.constant 5 : index
    %c7_560 = arith.constant 7 : index
    %583 = memref.load %arg7[%c5_559, %c7_560] : memref<8x8xf32, #tpu.memory_space<smem>>
    %584 = vector.broadcast %583 : f32 to vector<64x256xf32>
    %585 = arith.mulf %582, %584 : vector<64x256xf32>
    %586 = arith.addf %580, %585 : vector<64x256xf32>
    %c5_561 = arith.constant 5 : index
    %587 = memref.load %arg8[%c5_561] : memref<8xf32, #tpu.memory_space<smem>>
    %588 = vector.broadcast %587 : f32 to vector<64x256xf32>
    %589 = arith.addf %586, %588 : vector<64x256xf32>
    %590 = arith.negf %589 : vector<64x256xf32>
    %591 = math.exp %590 : vector<64x256xf32>
    %cst_562 = arith.constant 1.000000e+00 : f32
    %592 = vector.broadcast %cst_562 : f32 to vector<64x256xf32>
    %593 = arith.addf %592, %591 : vector<64x256xf32>
    %594 = arith.divf %592, %593 : vector<64x256xf32>
    %c0_563 = arith.constant 0 : index
    %c5_564 = arith.constant 5 : index
    %c0_565 = arith.constant 0 : index
    %c0_566 = arith.constant 0 : index
    %595 = vector.load %arg10[%c0_563, %c5_564, %c0_565, %c0_566] : memref<1x8x64x256xf32, #tpu.memory_space<vmem>>, vector<1x1x64x256xf32>
    %596 = vector.shape_cast %595 : vector<1x1x64x256xf32> to vector<64x256xf32>
    %597 = vector.shape_cast %594 : vector<64x256xf32> to vector<1x1x64x256xf32>
    tpu.vector_store %arg10[%c0_563, %c5_564, %c0_565, %c0_566], %597 {strides = array<i32>} : memref<1x8x64x256xf32, #tpu.memory_space<vmem>>, vector<1x1x64x256xf32>,
    %c0_567 = arith.constant 0 : index
    %c0_568 = arith.constant 0 : index
    %c0_569 = arith.constant 0 : index
    %c0_570 = arith.constant 0 : index
    %598 = vector.load %arg9[%c0_567, %c0_568, %c0_569, %c0_570] : memref<1x8x64x256xf32, #tpu.memory_space<vmem>>, vector<1x1x64x256xf32>
    %599 = vector.shape_cast %598 : vector<1x1x64x256xf32> to vector<64x256xf32>
    %c6_571 = arith.constant 6 : index
    %c0_572 = arith.constant 0 : index
    %600 = memref.load %arg7[%c6_571, %c0_572] : memref<8x8xf32, #tpu.memory_space<smem>>
    %601 = vector.broadcast %600 : f32 to vector<64x256xf32>
    %602 = arith.mulf %599, %601 : vector<64x256xf32>
    %c0_573 = arith.constant 0 : index
    %c1_574 = arith.constant 1 : index
    %c0_575 = arith.constant 0 : index
    %c0_576 = arith.constant 0 : index
    %603 = vector.load %arg9[%c0_573, %c1_574, %c0_575, %c0_576] : memref<1x8x64x256xf32, #tpu.memory_space<vmem>>, vector<1x1x64x256xf32>
    %604 = vector.shape_cast %603 : vector<1x1x64x256xf32> to vector<64x256xf32>
    %c6_577 = arith.constant 6 : index
    %c1_578 = arith.constant 1 : index
    %605 = memref.load %arg7[%c6_577, %c1_578] : memref<8x8xf32, #tpu.memory_space<smem>>
    %606 = vector.broadcast %605 : f32 to vector<64x256xf32>
    %607 = arith.mulf %604, %606 : vector<64x256xf32>
    %608 = arith.addf %602, %607 : vector<64x256xf32>
    %c0_579 = arith.constant 0 : index
    %c2_580 = arith.constant 2 : index
    %c0_581 = arith.constant 0 : index
    %c0_582 = arith.constant 0 : index
    %609 = vector.load %arg9[%c0_579, %c2_580, %c0_581, %c0_582] : memref<1x8x64x256xf32, #tpu.memory_space<vmem>>, vector<1x1x64x256xf32>
    %610 = vector.shape_cast %609 : vector<1x1x64x256xf32> to vector<64x256xf32>
    %c6_583 = arith.constant 6 : index
    %c2_584 = arith.constant 2 : index
    %611 = memref.load %arg7[%c6_583, %c2_584] : memref<8x8xf32, #tpu.memory_space<smem>>
    %612 = vector.broadcast %611 : f32 to vector<64x256xf32>
    %613 = arith.mulf %610, %612 : vector<64x256xf32>
    %614 = arith.addf %608, %613 : vector<64x256xf32>
    %c0_585 = arith.constant 0 : index
    %c3_586 = arith.constant 3 : index
    %c0_587 = arith.constant 0 : index
    %c0_588 = arith.constant 0 : index
    %615 = vector.load %arg9[%c0_585, %c3_586, %c0_587, %c0_588] : memref<1x8x64x256xf32, #tpu.memory_space<vmem>>, vector<1x1x64x256xf32>
    %616 = vector.shape_cast %615 : vector<1x1x64x256xf32> to vector<64x256xf32>
    %c6_589 = arith.constant 6 : index
    %c3_590 = arith.constant 3 : index
    %617 = memref.load %arg7[%c6_589, %c3_590] : memref<8x8xf32, #tpu.memory_space<smem>>
    %618 = vector.broadcast %617 : f32 to vector<64x256xf32>
    %619 = arith.mulf %616, %618 : vector<64x256xf32>
    %620 = arith.addf %614, %619 : vector<64x256xf32>
    %c0_591 = arith.constant 0 : index
    %c4_592 = arith.constant 4 : index
    %c0_593 = arith.constant 0 : index
    %c0_594 = arith.constant 0 : index
    %621 = vector.load %arg9[%c0_591, %c4_592, %c0_593, %c0_594] : memref<1x8x64x256xf32, #tpu.memory_space<vmem>>, vector<1x1x64x256xf32>
    %622 = vector.shape_cast %621 : vector<1x1x64x256xf32> to vector<64x256xf32>
    %c6_595 = arith.constant 6 : index
    %c4_596 = arith.constant 4 : index
    %623 = memref.load %arg7[%c6_595, %c4_596] : memref<8x8xf32, #tpu.memory_space<smem>>
    %624 = vector.broadcast %623 : f32 to vector<64x256xf32>
    %625 = arith.mulf %622, %624 : vector<64x256xf32>
    %626 = arith.addf %620, %625 : vector<64x256xf32>
    %c0_597 = arith.constant 0 : index
    %c5_598 = arith.constant 5 : index
    %c0_599 = arith.constant 0 : index
    %c0_600 = arith.constant 0 : index
    %627 = vector.load %arg9[%c0_597, %c5_598, %c0_599, %c0_600] : memref<1x8x64x256xf32, #tpu.memory_space<vmem>>, vector<1x1x64x256xf32>
    %628 = vector.shape_cast %627 : vector<1x1x64x256xf32> to vector<64x256xf32>
    %c6_601 = arith.constant 6 : index
    %c5_602 = arith.constant 5 : index
    %629 = memref.load %arg7[%c6_601, %c5_602] : memref<8x8xf32, #tpu.memory_space<smem>>
    %630 = vector.broadcast %629 : f32 to vector<64x256xf32>
    %631 = arith.mulf %628, %630 : vector<64x256xf32>
    %632 = arith.addf %626, %631 : vector<64x256xf32>
    %c0_603 = arith.constant 0 : index
    %c6_604 = arith.constant 6 : index
    %c0_605 = arith.constant 0 : index
    %c0_606 = arith.constant 0 : index
    %633 = vector.load %arg9[%c0_603, %c6_604, %c0_605, %c0_606] : memref<1x8x64x256xf32, #tpu.memory_space<vmem>>, vector<1x1x64x256xf32>
    %634 = vector.shape_cast %633 : vector<1x1x64x256xf32> to vector<64x256xf32>
    %c6_607 = arith.constant 6 : index
    %c6_608 = arith.constant 6 : index
    %635 = memref.load %arg7[%c6_607, %c6_608] : memref<8x8xf32, #tpu.memory_space<smem>>
    %636 = vector.broadcast %635 : f32 to vector<64x256xf32>
    %637 = arith.mulf %634, %636 : vector<64x256xf32>
    %638 = arith.addf %632, %637 : vector<64x256xf32>
    %c0_609 = arith.constant 0 : index
    %c7_610 = arith.constant 7 : index
    %c0_611 = arith.constant 0 : index
    %c0_612 = arith.constant 0 : index
    %639 = vector.load %arg9[%c0_609, %c7_610, %c0_611, %c0_612] : memref<1x8x64x256xf32, #tpu.memory_space<vmem>>, vector<1x1x64x256xf32>
    %640 = vector.shape_cast %639 : vector<1x1x64x256xf32> to vector<64x256xf32>
    %c6_613 = arith.constant 6 : index
    %c7_614 = arith.constant 7 : index
    %641 = memref.load %arg7[%c6_613, %c7_614] : memref<8x8xf32, #tpu.memory_space<smem>>
    %642 = vector.broadcast %641 : f32 to vector<64x256xf32>
    %643 = arith.mulf %640, %642 : vector<64x256xf32>
    %644 = arith.addf %638, %643 : vector<64x256xf32>
    %c6_615 = arith.constant 6 : index
    %645 = memref.load %arg8[%c6_615] : memref<8xf32, #tpu.memory_space<smem>>
    %646 = vector.broadcast %645 : f32 to vector<64x256xf32>
    %647 = arith.addf %644, %646 : vector<64x256xf32>
    %648 = arith.negf %647 : vector<64x256xf32>
    %649 = math.exp %648 : vector<64x256xf32>
    %cst_616 = arith.constant 1.000000e+00 : f32
    %650 = vector.broadcast %cst_616 : f32 to vector<64x256xf32>
    %651 = arith.addf %650, %649 : vector<64x256xf32>
    %652 = arith.divf %650, %651 : vector<64x256xf32>
    %c0_617 = arith.constant 0 : index
    %c6_618 = arith.constant 6 : index
    %c0_619 = arith.constant 0 : index
    %c0_620 = arith.constant 0 : index
    %653 = vector.load %arg10[%c0_617, %c6_618, %c0_619, %c0_620] : memref<1x8x64x256xf32, #tpu.memory_space<vmem>>, vector<1x1x64x256xf32>
    %654 = vector.shape_cast %653 : vector<1x1x64x256xf32> to vector<64x256xf32>
    %655 = vector.shape_cast %652 : vector<64x256xf32> to vector<1x1x64x256xf32>
    tpu.vector_store %arg10[%c0_617, %c6_618, %c0_619, %c0_620], %655 {strides = array<i32>} : memref<1x8x64x256xf32, #tpu.memory_space<vmem>>, vector<1x1x64x256xf32>,
    %c0_621 = arith.constant 0 : index
    %c0_622 = arith.constant 0 : index
    %c0_623 = arith.constant 0 : index
    %c0_624 = arith.constant 0 : index
    %656 = vector.load %arg9[%c0_621, %c0_622, %c0_623, %c0_624] : memref<1x8x64x256xf32, #tpu.memory_space<vmem>>, vector<1x1x64x256xf32>
    %657 = vector.shape_cast %656 : vector<1x1x64x256xf32> to vector<64x256xf32>
    %c7_625 = arith.constant 7 : index
    %c0_626 = arith.constant 0 : index
    %658 = memref.load %arg7[%c7_625, %c0_626] : memref<8x8xf32, #tpu.memory_space<smem>>
    %659 = vector.broadcast %658 : f32 to vector<64x256xf32>
    %660 = arith.mulf %657, %659 : vector<64x256xf32>
    %c0_627 = arith.constant 0 : index
    %c1_628 = arith.constant 1 : index
    %c0_629 = arith.constant 0 : index
    %c0_630 = arith.constant 0 : index
    %661 = vector.load %arg9[%c0_627, %c1_628, %c0_629, %c0_630] : memref<1x8x64x256xf32, #tpu.memory_space<vmem>>, vector<1x1x64x256xf32>
    %662 = vector.shape_cast %661 : vector<1x1x64x256xf32> to vector<64x256xf32>
    %c7_631 = arith.constant 7 : index
    %c1_632 = arith.constant 1 : index
    %663 = memref.load %arg7[%c7_631, %c1_632] : memref<8x8xf32, #tpu.memory_space<smem>>
    %664 = vector.broadcast %663 : f32 to vector<64x256xf32>
    %665 = arith.mulf %662, %664 : vector<64x256xf32>
    %666 = arith.addf %660, %665 : vector<64x256xf32>
    %c0_633 = arith.constant 0 : index
    %c2_634 = arith.constant 2 : index
    %c0_635 = arith.constant 0 : index
    %c0_636 = arith.constant 0 : index
    %667 = vector.load %arg9[%c0_633, %c2_634, %c0_635, %c0_636] : memref<1x8x64x256xf32, #tpu.memory_space<vmem>>, vector<1x1x64x256xf32>
    %668 = vector.shape_cast %667 : vector<1x1x64x256xf32> to vector<64x256xf32>
    %c7_637 = arith.constant 7 : index
    %c2_638 = arith.constant 2 : index
    %669 = memref.load %arg7[%c7_637, %c2_638] : memref<8x8xf32, #tpu.memory_space<smem>>
    %670 = vector.broadcast %669 : f32 to vector<64x256xf32>
    %671 = arith.mulf %668, %670 : vector<64x256xf32>
    %672 = arith.addf %666, %671 : vector<64x256xf32>
    %c0_639 = arith.constant 0 : index
    %c3_640 = arith.constant 3 : index
    %c0_641 = arith.constant 0 : index
    %c0_642 = arith.constant 0 : index
    %673 = vector.load %arg9[%c0_639, %c3_640, %c0_641, %c0_642] : memref<1x8x64x256xf32, #tpu.memory_space<vmem>>, vector<1x1x64x256xf32>
    %674 = vector.shape_cast %673 : vector<1x1x64x256xf32> to vector<64x256xf32>
    %c7_643 = arith.constant 7 : index
    %c3_644 = arith.constant 3 : index
    %675 = memref.load %arg7[%c7_643, %c3_644] : memref<8x8xf32, #tpu.memory_space<smem>>
    %676 = vector.broadcast %675 : f32 to vector<64x256xf32>
    %677 = arith.mulf %674, %676 : vector<64x256xf32>
    %678 = arith.addf %672, %677 : vector<64x256xf32>
    %c0_645 = arith.constant 0 : index
    %c4_646 = arith.constant 4 : index
    %c0_647 = arith.constant 0 : index
    %c0_648 = arith.constant 0 : index
    %679 = vector.load %arg9[%c0_645, %c4_646, %c0_647, %c0_648] : memref<1x8x64x256xf32, #tpu.memory_space<vmem>>, vector<1x1x64x256xf32>
    %680 = vector.shape_cast %679 : vector<1x1x64x256xf32> to vector<64x256xf32>
    %c7_649 = arith.constant 7 : index
    %c4_650 = arith.constant 4 : index
    %681 = memref.load %arg7[%c7_649, %c4_650] : memref<8x8xf32, #tpu.memory_space<smem>>
    %682 = vector.broadcast %681 : f32 to vector<64x256xf32>
    %683 = arith.mulf %680, %682 : vector<64x256xf32>
    %684 = arith.addf %678, %683 : vector<64x256xf32>
    %c0_651 = arith.constant 0 : index
    %c5_652 = arith.constant 5 : index
    %c0_653 = arith.constant 0 : index
    %c0_654 = arith.constant 0 : index
    %685 = vector.load %arg9[%c0_651, %c5_652, %c0_653, %c0_654] : memref<1x8x64x256xf32, #tpu.memory_space<vmem>>, vector<1x1x64x256xf32>
    %686 = vector.shape_cast %685 : vector<1x1x64x256xf32> to vector<64x256xf32>
    %c7_655 = arith.constant 7 : index
    %c5_656 = arith.constant 5 : index
    %687 = memref.load %arg7[%c7_655, %c5_656] : memref<8x8xf32, #tpu.memory_space<smem>>
    %688 = vector.broadcast %687 : f32 to vector<64x256xf32>
    %689 = arith.mulf %686, %688 : vector<64x256xf32>
    %690 = arith.addf %684, %689 : vector<64x256xf32>
    %c0_657 = arith.constant 0 : index
    %c6_658 = arith.constant 6 : index
    %c0_659 = arith.constant 0 : index
    %c0_660 = arith.constant 0 : index
    %691 = vector.load %arg9[%c0_657, %c6_658, %c0_659, %c0_660] : memref<1x8x64x256xf32, #tpu.memory_space<vmem>>, vector<1x1x64x256xf32>
    %692 = vector.shape_cast %691 : vector<1x1x64x256xf32> to vector<64x256xf32>
    %c7_661 = arith.constant 7 : index
    %c6_662 = arith.constant 6 : index
    %693 = memref.load %arg7[%c7_661, %c6_662] : memref<8x8xf32, #tpu.memory_space<smem>>
    %694 = vector.broadcast %693 : f32 to vector<64x256xf32>
    %695 = arith.mulf %692, %694 : vector<64x256xf32>
    %696 = arith.addf %690, %695 : vector<64x256xf32>
    %c0_663 = arith.constant 0 : index
    %c7_664 = arith.constant 7 : index
    %c0_665 = arith.constant 0 : index
    %c0_666 = arith.constant 0 : index
    %697 = vector.load %arg9[%c0_663, %c7_664, %c0_665, %c0_666] : memref<1x8x64x256xf32, #tpu.memory_space<vmem>>, vector<1x1x64x256xf32>
    %698 = vector.shape_cast %697 : vector<1x1x64x256xf32> to vector<64x256xf32>
    %c7_667 = arith.constant 7 : index
    %c7_668 = arith.constant 7 : index
    %699 = memref.load %arg7[%c7_667, %c7_668] : memref<8x8xf32, #tpu.memory_space<smem>>
    %700 = vector.broadcast %699 : f32 to vector<64x256xf32>
    %701 = arith.mulf %698, %700 : vector<64x256xf32>
    %702 = arith.addf %696, %701 : vector<64x256xf32>
    %c7_669 = arith.constant 7 : index
    %703 = memref.load %arg8[%c7_669] : memref<8xf32, #tpu.memory_space<smem>>
    %704 = vector.broadcast %703 : f32 to vector<64x256xf32>
    %705 = arith.addf %702, %704 : vector<64x256xf32>
    %706 = arith.negf %705 : vector<64x256xf32>
    %707 = math.exp %706 : vector<64x256xf32>
    %cst_670 = arith.constant 1.000000e+00 : f32
    %708 = vector.broadcast %cst_670 : f32 to vector<64x256xf32>
    %709 = arith.addf %708, %707 : vector<64x256xf32>
    %710 = arith.divf %708, %709 : vector<64x256xf32>
    %c0_671 = arith.constant 0 : index
    %c7_672 = arith.constant 7 : index
    %c0_673 = arith.constant 0 : index
    %c0_674 = arith.constant 0 : index
    %711 = vector.load %arg10[%c0_671, %c7_672, %c0_673, %c0_674] : memref<1x8x64x256xf32, #tpu.memory_space<vmem>>, vector<1x1x64x256xf32>
    %712 = vector.shape_cast %711 : vector<1x1x64x256xf32> to vector<64x256xf32>
    %713 = vector.shape_cast %710 : vector<64x256xf32> to vector<1x1x64x256xf32>
    tpu.vector_store %arg10[%c0_671, %c7_672, %c0_673, %c0_674], %713 {strides = array<i32>} : memref<1x8x64x256xf32, #tpu.memory_space<vmem>>, vector<1x1x64x256xf32>,
    return
  }
  func.func @transform_0(%arg0: i32, %arg1: i32) -> (i32, i32, i32, i32) {
    %c0_i32 = arith.constant 0 : i32
    %c0_i32_0 = arith.constant 0 : i32
    %c0_i32_1 = arith.constant 0 : i32
    %c0_i32_2 = arith.constant 0 : i32
    return %arg0, %c0_i32, %c0_i32_0, %c0_i32_1 : i32, i32, i32, i32
  }
  func.func @transform_1(%arg0: i32, %arg1: i32) -> (i32, i32) {
    %c0_i32 = arith.constant 0 : i32
    %c0_i32_0 = arith.constant 0 : i32
    return %arg1, %c0_i32 : i32, i32
  }
  func.func @transform_2(%arg0: i32, %arg1: i32) -> (i32, i32) {
    %c0_i32 = arith.constant 0 : i32
    %c0_i32_0 = arith.constant 0 : i32
    %c0_i32_1 = arith.constant 0 : i32
    return %c0_i32, %c0_i32_0 : i32, i32
  }
  func.func @transform_3(%arg0: i32, %arg1: i32) -> (i32, i32) {
    %c0_i32 = arith.constant 0 : i32
    %c0_i32_0 = arith.constant 0 : i32
    %c0_i32_1 = arith.constant 0 : i32
    return %c0_i32, %c0_i32_0 : i32, i32
  }
  func.func @transform_4(%arg0: i32, %arg1: i32) -> i32 {
    %c0_i32 = arith.constant 0 : i32
    %c0_i32_0 = arith.constant 0 : i32
    return %c0_i32 : i32
  }
  func.func @transform_5(%arg0: i32, %arg1: i32) -> (i32, i32) {
    %c0_i32 = arith.constant 0 : i32
    %c0_i32_0 = arith.constant 0 : i32
    %c0_i32_1 = arith.constant 0 : i32
    return %c0_i32, %c0_i32_0 : i32, i32
  }
  func.func @transform_6(%arg0: i32, %arg1: i32) -> i32 {
    %c0_i32 = arith.constant 0 : i32
    %c0_i32_0 = arith.constant 0 : i32
    return %c0_i32 : i32
  }
  func.func @transform_7(%arg0: i32, %arg1: i32) -> (i32, i32, i32, i32) {
    %c0_i32 = arith.constant 0 : i32
    %c0_i32_0 = arith.constant 0 : i32
    %c0_i32_1 = arith.constant 0 : i32
    return %arg0, %c0_i32, %arg1, %c0_i32_0 : i32, i32, i32, i32
  }
  func.func @transform_8(%arg0: i32, %arg1: i32) -> (i32, i32, i32, i32) {
    %c0_i32 = arith.constant 0 : i32
    %c0_i32_0 = arith.constant 0 : i32
    %c0_i32_1 = arith.constant 0 : i32
    return %arg0, %c0_i32, %arg1, %c0_i32_0 : i32, i32, i32, i32
  }
}

</mosaic_0001>

<llo_original>
// kernel: after_res_forward.1
$region0: #{after_res_forward.1}
  #allocation0 [shape = 'u32[]', space=smem, size = 0x4, offset = 0x4, fixed_abs, tag = 'smem constant byte address 0x4 - core index']
  #allocation1 [shape = 'u32[144,128]{1,0:T(1,128)}', space=vmem, size = 0x12000, scoped, tag = 'internal scratch']
  #allocation15 [shape = 's32[]', space=sflag, size = 0x4, offset = 0, fixed_abs, tag = 'sflag constant byte address 0x0 - dummy sync flag']
  #allocation17 [shape = 's32[]', space=sflag, size = 0x4, offset = 0, fixed_abs, tag = 'sflag constant byte address 0x0 - dummy sync flag']
  %s0 = inlined_call_operand.vmem [shape: f32[2,4,16,16], index: 0, kind: input, shape index: {}]
  %s1 = inlined_call_operand.vmem [shape: f32[256,16], index: 1, kind: input, shape index: {}]
  %s2 = inlined_call_operand.hbm [shape: f32[16,256], index: 2, kind: input, shape index: {}]
  %s3 = inlined_call_operand.vmem [shape: f32[8,4], index: 3, kind: input, shape index: {}]
  %s4 = inlined_call_operand.vmem [shape: f32[8], index: 4, kind: input, shape index: {}]
  %s5 = inlined_call_operand.vmem [shape: f32[8,8], index: 5, kind: input, shape index: {}]
  %s6 = inlined_call_operand.vmem [shape: f32[8], index: 6, kind: input, shape index: {}]
  %s7 = inlined_call_operand.hbm [shape: f32[2,8,256,256], index: 7, kind: output, shape index: {0}]
  %s8 = inlined_call_operand.hbm [shape: f32[2,8,256,256], index: 8, kind: output, shape index: {1}]
  %9 = xla_tuple %s7, %s8
  %s10 = sld [smem:[#allocation0]]
  $region89: #{after_res_forward.1} parent=0
    _
  %s12 = ssub.s32 1, %s10
  %s13 = scalar_select 0, %s12, %s10
  $region1: #{after_res_forward.1} parent=0
    #allocation2 [shape = 'u8[16384]{0}', space=vmem, size = 0x4000, scoped, tag = 'input window, operand 2, single buffered']
    #allocation3 [shape = 's32[2]{0}', space=sflag, size = 0x8, scoped, tag = 'scoped memory for after_res_forward.1']
    #allocation4 [shape = 's32[2]{0}', space=sflag, size = 0x8, scoped, tag = 'scoped memory for after_res_forward.1']
    #allocation5 [shape = 's32[2]{0}', space=sflag, size = 0x8, scoped, tag = 'scoped memory for after_res_forward.1']
    #allocation6 [shape = 'u8[4096]{0}', space=smem, size = 0x1000, scoped, tag = 'input window, operand 3, single buffered']
    #allocation7 [shape = 'u8[512]{0}', space=smem, size = 0x200, scoped, tag = 'input window, operand 4, single buffered']
    #allocation8 [shape = 's32[1]{0}', space=sflag, size = 0x4, scoped, tag = 'scoped memory for after_res_forward.1']
    #allocation9 [shape = 'u8[4096]{0}', space=smem, size = 0x1000, scoped, tag = 'input window, operand 5, single buffered']
    #allocation10 [shape = 'u8[512]{0}', space=smem, size = 0x200, scoped, tag = 'input window, operand 6, single buffered']
    #allocation11 [shape = 's32[1]{0}', space=sflag, size = 0x4, scoped, tag = 'scoped memory for after_res_forward.1']
    #allocation12 [shape = 'u8[1048576]{0}', space=vmem, size = 0x100000, scoped, tag = 'output window, operand 0']
    #allocation13 [shape = 'u8[1048576]{0}', space=vmem, size = 0x100000, scoped, tag = 'output window, operand 1']
    #allocation14 [shape = 's32[2]{0}', space=sflag, size = 0x8, scoped, tag = 'scoped memory for after_res_forward.1']
    %14 = vsyncpa [#allocation3], 0
    %15 = vsyncpa [#allocation5], 0
    %16 = vsyncpa [#allocation8], 0
    %17 = vsyncpa [#allocation11], 0
    %18 = vsyncpa [#allocation4], 0
    %s19 = scalar_lea.sflag [#allocation4], 1
    %20 = vsyncpa %s19, 0
    %21 = vsyncpa [#allocation14], 0
    %s22 = scalar_lea.sflag [#allocation14], 1
    %23 = vsyncpa %s22, 0
    loop: start=0, step=1, limit=10
    $region2: #{after_res_forward.1} parent=1 // loop_pre_header
      _
    $region3: #{after_res_forward.1} parent=1 // loop_header
      %s25 = sphi 0, %s29
      %p26 = scmp.ge.s32.totalorder %s25, 10
      %s32 = sphi 0, %s44
      %s33 = sphi 0, %s40
      %s34 = sphi 0, %s32
      %s35 = sphi 0, %s33
      %s36 = sphi 0, %s34
      %s37 = sphi 0, %s35
      %s47 = sphi 0, %s49
      %s50 = sphi 0, %s47
      %s51 = sphi 0, %s50
      %s67 = sphi 0, %s51
      %s73 = sphi 0, %s75
      %s76 = sphi 0, %s73
      %s77 = sphi 0, %s76
      %s93 = sphi 0, %s77
      %s97 = sphi 0, %s97
      %s99 = sphi 0, %s97
      %s100 = sphi 0, %s99
      %s114 = sphi 0, %s100
      %s118 = sphi 0, %s118
      %s120 = sphi 0, %s118
      %s121 = sphi 0, %s120
      %s135 = sphi 0, %s121
      %s139 = sphi 0, %s139
      %s141 = sphi 0, %s139
      %s142 = sphi 0, %s141
      %s156 = sphi 0, %s142
      %s160 = sphi 0, %s160
      %s162 = sphi 0, %s160
      %s163 = sphi 0, %s162
      %s177 = sphi 0, %s163
      %s181 = sphi 0, %s181
      %s183 = sphi 0, %s181
      %s184 = sphi 0, %s183
      %s198 = sphi 0, %s184
      %s206 = sphi 0, %s208
      %s209 = sphi 0, %s206
      %s210 = sphi 0, %s209
      %s226 = sphi 0, %s210
      %s234 = sphi 0, %s236
      %s237 = sphi 0, %s234
      %s238 = sphi 0, %s237
      %s254 = sphi 0, %s238
    $region4: #{after_res_forward.1} parent=1 // loop_header_branch
      %28 = sbr.rel (%p26) target = $region8
    $region5: #{after_res_forward.1} parent=1 // loop_body
      %s30 = ssub.s32 %s25, 1
      %s31 = ssub.s32 %s25, 2
      %s38 = sadd.s32 1, %s33
      %p39 = scmp.ge.s32.totalorder %s38, 4
      %s40 = scalar_select %p39, 0, %s38
      %s41 = sadd.s32 1, %s32
      %s42 = scalar_select %p39, %s41, %s32
      %p43 = scmp.ge.s32.totalorder %s42, 2
      %s44 = scalar_select %p43, 0, %s42
      %s45 = ssub.s32 %s32, %s44
      %p46 = scmp.eq.s32.totalorder %s45, 0
      %s48 = sadd.s32 %s47, 1
      %s49 = scalar_select %p46, %s47, %s48
      %p52 = pneg %p46
      %p53 = scmp.eq.s32.totalorder %s25, 7
      %p54 = por %p52, %p53
      %p55 = scmp.ne.s32.totalorder %s47, %s50
      %p56 = scmp.eq.s32.totalorder %s25, 0
      %p57 = por %p55, %p56
      %p58 = scmp.ne.s32.totalorder %s47, %s50
      %p59 = scmp.eq.s32.totalorder %s30, 7
      %p60 = por %p58, %p59
      %p61 = scmp.ne.s32.totalorder %s50, %s51
      %p62 = scmp.eq.s32.totalorder %s30, 0
      %p63 = por %p61, %p62
      %p64 = scmp.ne.s32.totalorder %s50, %s51
      %p65 = scmp.eq.s32.totalorder %s31, 7
      %p66 = por %p64, %p65
      %p68 = scmp.ne.s32.totalorder %s51, %s67
      %p69 = scmp.eq.s32.totalorder %s31, 0
      %p70 = por %p68, %p69
      %s71 = ssub.s32 %s33, %s40
      %p72 = scmp.eq.s32.totalorder %s71, 0
      %s74 = sadd.s32 %s73, 1
      %s75 = scalar_select %p72, %s73, %s74
      %p78 = pneg %p72
      %p79 = scmp.eq.s32.totalorder %s25, 7
      %p80 = por %p78, %p79
      %p81 = scmp.ne.s32.totalorder %s73, %s76
      %p82 = scmp.eq.s32.totalorder %s25, 0
      %p83 = por %p81, %p82
      %p84 = scmp.ne.s32.totalorder %s73, %s76
      %p85 = scmp.eq.s32.totalorder %s30, 7
      %p86 = por %p84, %p85
      %p87 = scmp.ne.s32.totalorder %s76, %s77
      %p88 = scmp.eq.s32.totalorder %s30, 0
      %p89 = por %p87, %p88
      %p90 = scmp.ne.s32.totalorder %s76, %s77
      %p91 = scmp.eq.s32.totalorder %s31, 7
      %p92 = por %p90, %p91
      %p94 = scmp.ne.s32.totalorder %s77, %s93
      %p95 = scmp.eq.s32.totalorder %s31, 0
      %p96 = por %p94, %p95
      %s98 = sadd.s32 %s97, 1
      %p101 = scmp.eq.s32.totalorder %s25, 7
      %p102 = scmp.ne.s32.totalorder %s97, %s99
      %p103 = scmp.eq.s32.totalorder %s25, 0
      %p104 = por %p102, %p103
      %p105 = scmp.ne.s32.totalorder %s97, %s99
      %p106 = scmp.eq.s32.totalorder %s30, 7
      %p107 = por %p105, %p106
      %p108 = scmp.ne.s32.totalorder %s99, %s100
      %p109 = scmp.eq.s32.totalorder %s30, 0
      %p110 = por %p108, %p109
      %p111 = scmp.ne.s32.totalorder %s99, %s100
      %p112 = scmp.eq.s32.totalorder %s31, 7
      %p113 = por %p111, %p112
      %p115 = scmp.ne.s32.totalorder %s100, %s114
      %p116 = scmp.eq.s32.totalorder %s31, 0
      %p117 = por %p115, %p116
      %s119 = sadd.s32 %s118, 1
      %p122 = scmp.eq.s32.totalorder %s25, 7
      %p123 = scmp.ne.s32.totalorder %s118, %s120
      %p124 = scmp.eq.s32.totalorder %s25, 0
      %p125 = por %p123, %p124
      %p126 = scmp.ne.s32.totalorder %s118, %s120
      %p127 = scmp.eq.s32.totalorder %s30, 7
      %p128 = por %p126, %p127
      %p129 = scmp.ne.s32.totalorder %s120, %s121
      %p130 = scmp.eq.s32.totalorder %s30, 0
      %p131 = por %p129, %p130
      %p132 = scmp.ne.s32.totalorder %s120, %s121
      %p133 = scmp.eq.s32.totalorder %s31, 7
      %p134 = por %p132, %p133
      %p136 = scmp.ne.s32.totalorder %s121, %s135
      %p137 = scmp.eq.s32.totalorder %s31, 0
      %p138 = por %p136, %p137
      %s140 = sadd.s32 %s139, 1
      %p143 = scmp.eq.s32.totalorder %s25, 7
      %p144 = scmp.ne.s32.totalorder %s139, %s141
      %p145 = scmp.eq.s32.totalorder %s25, 0
      %p146 = por %p144, %p145
      %p147 = scmp.ne.s32.totalorder %s139, %s141
      %p148 = scmp.eq.s32.totalorder %s30, 7
      %p149 = por %p147, %p148
      %p150 = scmp.ne.s32.totalorder %s141, %s142
      %p151 = scmp.eq.s32.totalorder %s30, 0
      %p152 = por %p150, %p151
      %p153 = scmp.ne.s32.totalorder %s141, %s142
      %p154 = scmp.eq.s32.totalorder %s31, 7
      %p155 = por %p153, %p154
      %p157 = scmp.ne.s32.totalorder %s142, %s156
      %p158 = scmp.eq.s32.totalorder %s31, 0
      %p159 = por %p157, %p158
      %s161 = sadd.s32 %s160, 1
      %p164 = scmp.eq.s32.totalorder %s25, 7
      %p165 = scmp.ne.s32.totalorder %s160, %s162
      %p166 = scmp.eq.s32.totalorder %s25, 0
      %p167 = por %p165, %p166
      %p168 = scmp.ne.s32.totalorder %s160, %s162
      %p169 = scmp.eq.s32.totalorder %s30, 7
      %p170 = por %p168, %p169
      %p171 = scmp.ne.s32.totalorder %s162, %s163
      %p172 = scmp.eq.s32.totalorder %s30, 0
      %p173 = por %p171, %p172
      %p174 = scmp.ne.s32.totalorder %s162, %s163
      %p175 = scmp.eq.s32.totalorder %s31, 7
      %p176 = por %p174, %p175
      %p178 = scmp.ne.s32.totalorder %s163, %s177
      %p179 = scmp.eq.s32.totalorder %s31, 0
      %p180 = por %p178, %p179
      %s182 = sadd.s32 %s181, 1
      %p185 = scmp.eq.s32.totalorder %s25, 7
      %p186 = scmp.ne.s32.totalorder %s181, %s183
      %p187 = scmp.eq.s32.totalorder %s25, 0
      %p188 = por %p186, %p187
      %p189 = scmp.ne.s32.totalorder %s181, %s183
      %p190 = scmp.eq.s32.totalorder %s30, 7
      %p191 = por %p189, %p190
      %p192 = scmp.ne.s32.totalorder %s183, %s184
      %p193 = scmp.eq.s32.totalorder %s30, 0
      %p194 = por %p192, %p193
      %p195 = scmp.ne.s32.totalorder %s183, %s184
      %p196 = scmp.eq.s32.totalorder %s31, 7
      %p197 = por %p195, %p196
      %p199 = scmp.ne.s32.totalorder %s184, %s198
      %p200 = scmp.eq.s32.totalorder %s31, 0
      %p201 = por %p199, %p200
      %s202 = ssub.s32 %s32, %s44
      %s203 = ssub.s32 %s33, %s40
      %s204 = sor.u32 %s202, %s203
      %p205 = scmp.eq.s32.totalorder %s204, 0
      %s207 = sadd.s32 %s206, 1
      %s208 = scalar_select %p205, %s206, %s207
      %p211 = pneg %p205
      %p212 = scmp.eq.s32.totalorder %s25, 7
      %p213 = por %p211, %p212
      %p214 = scmp.ne.s32.totalorder %s206, %s209
      %p215 = scmp.eq.s32.totalorder %s25, 0
      %p216 = por %p214, %p215
      %p217 = scmp.ne.s32.totalorder %s206, %s209
      %p218 = scmp.eq.s32.totalorder %s30, 7
      %p219 = por %p217, %p218
      %p220 = scmp.ne.s32.totalorder %s209, %s210
      %p221 = scmp.eq.s32.totalorder %s30, 0
      %p222 = por %p220, %p221
      %p223 = scmp.ne.s32.totalorder %s209, %s210
      %p224 = scmp.eq.s32.totalorder %s31, 7
      %p225 = por %p223, %p224
      %p227 = scmp.ne.s32.totalorder %s210, %s226
      %p228 = scmp.eq.s32.totalorder %s31, 0
      %p229 = por %p227, %p228
      %s230 = ssub.s32 %s32, %s44
      %s231 = ssub.s32 %s33, %s40
      %s232 = sor.u32 %s230, %s231
      %p233 = scmp.eq.s32.totalorder %s232, 0
      %s235 = sadd.s32 %s234, 1
      %s236 = scalar_select %p233, %s234, %s235
      %p239 = pneg %p233
      %p240 = scmp.eq.s32.totalorder %s25, 7
      %p241 = por %p239, %p240
      %p242 = scmp.ne.s32.totalorder %s234, %s237
      %p243 = scmp.eq.s32.totalorder %s25, 0
      %p244 = por %p242, %p243
      %p245 = scmp.ne.s32.totalorder %s234, %s237
      %p246 = scmp.eq.s32.totalorder %s30, 7
      %p247 = por %p245, %p246
      %p248 = scmp.ne.s32.totalorder %s237, %s238
      %p249 = scmp.eq.s32.totalorder %s30, 0
      %p250 = por %p248, %p249
      %p251 = scmp.ne.s32.totalorder %s237, %s238
      %p252 = scmp.eq.s32.totalorder %s31, 7
      %p253 = por %p251, %p252
      %p255 = scmp.ne.s32.totalorder %s238, %s254
      %p256 = scmp.eq.s32.totalorder %s31, 0
      %p257 = por %p255, %p256
      %p258 = scmp.le.s32.totalorder 1, %s25
      %p259 = scmp.lt.s32.totalorder %s25, 9
      %p260 = pnand %p258, %p259
      %p261 = pneg %p260
      // Predicated region
      $region9: #{after_res_forward.1} parent=5 // pred_check
        _
      $region10: #{after_res_forward.1} parent=5 // pred_check_branch
        %263 = sbr.rel (%p260) target = $region12
      $region11: #{after_res_forward.1} parent=5 // pred_region
        %s264 = ssub.s32 %s25, 1
        // Predicated region
        $region13: #{after_res_forward.1} parent=11 // pred_check
          %p265 = pneg %p110
        $region14: #{after_res_forward.1} parent=11 // pred_check_branch
          %267 = sbr.rel (%p265) target = $region16
        $region15: #{after_res_forward.1} parent=11 // pred_region
          %s269 = ssub.s32 512, 512
          %270 = vsyncadd [#allocation3], %s269
          %s271 = sshll.u32 [#allocation2], 4
          %s272 = int_to_ptr.vmem [resolvable:$true] %s271
          %277 = dma.hbm_to_vmem [thread:$0]  %s2, 512, %s272, [#allocation3], 256, 256, 16
        $region16: #{after_res_forward.1} parent=11 // pred_fallthru
          _
        // Predicated region
        $region17: #{after_res_forward.1} parent=11 // pred_check
          %p278 = pneg %p131
        $region18: #{after_res_forward.1} parent=11 // pred_check_branch
          %280 = sbr.rel (%p278) target = $region20
        $region19: #{after_res_forward.1} parent=11 // pred_region
          %s282 = ssub.s32 128, 128
          %283 = vsyncadd [#allocation5], %s282
          %s285 = sshll.u32 %s3, 4
          %s286 = int_to_ptr.vmem [resolvable:$true] %s285
          %288 = dma.vmem_to_smem %s286, 128, [#allocation6], [#allocation5]
        $region20: #{after_res_forward.1} parent=11 // pred_fallthru
          _
        // Predicated region
        $region21: #{after_res_forward.1} parent=11 // pred_check
          %p289 = pneg %p152
        $region22: #{after_res_forward.1} parent=11 // pred_check_branch
          %291 = sbr.rel (%p289) target = $region24
        $region23: #{after_res_forward.1} parent=11 // pred_region
          %s293 = ssub.s32 16, 16
          %294 = vsyncadd [#allocation8], %s293
          %s296 = sshll.u32 %s4, 4
          %s297 = int_to_ptr.vmem [resolvable:$true] %s296
          %299 = dma.vmem_to_smem %s297, 16, [#allocation7], [#allocation8]
        $region24: #{after_res_forward.1} parent=11 // pred_fallthru
          _
        // Predicated region
        $region25: #{after_res_forward.1} parent=11 // pred_check
          %p300 = pneg %p173
        $region26: #{after_res_forward.1} parent=11 // pred_check_branch
          %302 = sbr.rel (%p300) target = $region28
        $region27: #{after_res_forward.1} parent=11 // pred_region
          %s304 = ssub.s32 128, 128
          %305 = vsyncadd [#allocation8], %s304
          %s307 = sshll.u32 %s5, 4
          %s308 = int_to_ptr.vmem [resolvable:$true] %s307
          %310 = dma.vmem_to_smem %s308, 128, [#allocation9], [#allocation8]
        $region28: #{after_res_forward.1} parent=11 // pred_fallthru
          _
        // Predicated region
        $region29: #{after_res_forward.1} parent=11 // pred_check
          %p311 = pneg %p194
        $region30: #{after_res_forward.1} parent=11 // pred_check_branch
          %313 = sbr.rel (%p311) target = $region32
        $region31: #{after_res_forward.1} parent=11 // pred_region
          %s315 = ssub.s32 16, 16
          %316 = vsyncadd [#allocation11], %s315
          %s318 = sshll.u32 %s6, 4
          %s319 = int_to_ptr.vmem [resolvable:$true] %s318
          %321 = dma.vmem_to_smem %s319, 16, [#allocation10], [#allocation11]
        $region32: #{after_res_forward.1} parent=11 // pred_fallthru
          _
      $region12: #{after_res_forward.1} parent=5 // pred_fallthru
        _
      %p322 = scmp.lt.s32.totalorder %s25, 8
      // Predicated region
      $region33: #{after_res_forward.1} parent=5 // pred_check
        %p323 = pneg %p322
      $region34: #{after_res_forward.1} parent=5 // pred_check_branch
        %325 = sbr.rel (%p323) target = $region36
      $region35: #{after_res_forward.1} parent=5 // pred_region
        // Predicated region
        $region37: #{after_res_forward.1} parent=35 // pred_check
          %p326 = pneg %p57
        $region38: #{after_res_forward.1} parent=35 // pred_check_branch
          %328 = sbr.rel (%p326) target = $region40
        $region39: #{after_res_forward.1} parent=35 // pred_region
          %p329 = scmp.lt.s32.totalorder %s32, 1
          %s330 = scalar_select %p329, %s32, 1
          %s331 = smul.addr %s330, 8
          %s332 = smul.addr %s331, 8
          %s333 = scalar_lea.vmem %s0, %s332
        $region40: #{after_res_forward.1} parent=35 // pred_fallthru
          _
        // Predicated region
        $region41: #{after_res_forward.1} parent=35 // pred_check
          %p334 = pneg %p83
        $region42: #{after_res_forward.1} parent=35 // pred_check_branch
          %336 = sbr.rel (%p334) target = $region44
        $region43: #{after_res_forward.1} parent=35 // pred_region
          %s337 = smul.u32 8, %s33
          %p338 = scmp.lt.s32.totalorder %s337, 31
          %s339 = scalar_select %p338, %s337, 31
          %s340 = smul.addr %s339, 8
          %s341 = scalar_lea.vmem %s1, %s340
          %s342 = smul.u32 8, %s33
        $region44: #{after_res_forward.1} parent=35 // pred_fallthru
          _
      $region36: #{after_res_forward.1} parent=5 // pred_fallthru
        _
      %p343 = scmp.le.s32.totalorder 1, %s25
      %p344 = scmp.lt.s32.totalorder %s25, 9
      %p345 = pnand %p343, %p344
      %p346 = pneg %p345
      // Predicated region
      $region45: #{after_res_forward.1} parent=5 // pred_check
        _
      $region46: #{after_res_forward.1} parent=5 // pred_check_branch
        %348 = sbr.rel (%p345) target = $region48
      $region47: #{after_res_forward.1} parent=5 // pred_region
        %s349 = ssub.s32 %s25, 1
        // Predicated region
        $region49: #{after_res_forward.1} parent=47 // pred_check
          %p350 = pneg %p110
        $region50: #{after_res_forward.1} parent=47 // pred_check_branch
          %352 = sbr.rel (%p350) target = $region52
        $region51: #{after_res_forward.1} parent=47 // pred_region
          %353 = dma.done [#allocation3], 512
        $region52: #{after_res_forward.1} parent=47 // pred_fallthru
          _
        // Predicated region
        $region53: #{after_res_forward.1} parent=47 // pred_check
          %p354 = pneg %p131
        $region54: #{after_res_forward.1} parent=47 // pred_check_branch
          %356 = sbr.rel (%p354) target = $region56
        $region55: #{after_res_forward.1} parent=47 // pred_region
          %357 = dma.done [#allocation5], 128
        $region56: #{after_res_forward.1} parent=47 // pred_fallthru
          _
        // Predicated region
        $region57: #{after_res_forward.1} parent=47 // pred_check
          %p358 = pneg %p152
        $region58: #{after_res_forward.1} parent=47 // pred_check_branch
          %360 = sbr.rel (%p358) target = $region60
        $region59: #{after_res_forward.1} parent=47 // pred_region
          %361 = dma.done [#allocation8], 16
        $region60: #{after_res_forward.1} parent=47 // pred_fallthru
          _
        // Predicated region
        $region61: #{after_res_forward.1} parent=47 // pred_check
          %p362 = pneg %p173
        $region62: #{after_res_forward.1} parent=47 // pred_check_branch
          %364 = sbr.rel (%p362) target = $region64
        $region63: #{after_res_forward.1} parent=47 // pred_region
          %365 = dma.done [#allocation8], 128
        $region64: #{after_res_forward.1} parent=47 // pred_fallthru
          _
        // Predicated region
        $region65: #{after_res_forward.1} parent=47 // pred_check
          %p366 = pneg %p194
        $region66: #{after_res_forward.1} parent=47 // pred_check_branch
          %368 = sbr.rel (%p366) target = $region68
        $region67: #{after_res_forward.1} parent=47 // pred_region
          %369 = dma.done [#allocation11], 16
        $region68: #{after_res_forward.1} parent=47 // pred_fallthru
          _
        %370 = sfence
        %p371 = scmp.lt.s32.totalorder %s34, 1
        %s372 = scalar_select %p371, %s34, 1
        %s373 = smul.addr %s372, 8
        %s374 = smul.addr %s373, 8
        %s375 = scalar_lea.vmem %s0, %s374
        %p376 = pneg %p63
        %p377 = pneg %p60
        %s378 = smul.u32 8, %s35
        %p379 = scmp.lt.s32.totalorder %s378, 31
        %s380 = scalar_select %p379, %s378, 31
        %s381 = smul.addr %s380, 8
        %s382 = scalar_lea.vmem %s1, %s381
        %p383 = pneg %p89
        %p384 = pneg %p86
        %p385 = pneg %p110
        %p386 = pneg %p107
        %p387 = pneg %p131
        %p388 = pneg %p128
        %p389 = pneg %p152
        %p390 = pneg %p149
        %p391 = pneg %p173
        %p392 = pneg %p170
        %p393 = pneg %p194
        %p394 = pneg %p191
        %p395 = pneg %p222
        %p396 = pneg %p219
        %s397 = sand.u32 %s209, 1
        %s398 = scalar_lea.sflag [#allocation4], %s397
        %s399 = sand.u32 %s209, 1
        %s400 = smul.addr %s399, 1024
        %s401 = scalar_lea.vmem [#allocation12], %s400
        %p402 = pneg %p250
        %p403 = pneg %p247
        %s404 = sand.u32 %s237, 1
        %s405 = scalar_lea.sflag [#allocation14], %s404
        %s406 = sand.u32 %s237, 1
        %s407 = smul.addr %s406, 1024
        %s408 = scalar_lea.vmem [#allocation13], %s407
        %p409 = scmp.lt.s32.totalorder %s34, 1
        %s410 = scalar_select %p409, %s34, 1
        %s411 = smul.addr %s410, 8
        %s412 = smul.addr %s411, 8
        %s413 = scalar_lea.vmem %s0, %s412
        %s414 = smul.u32 8, %s35
        %p415 = scmp.lt.s32.totalorder %s414, 31
        %s416 = scalar_select %p415, %s414, 31
        %s417 = smul.addr %s416, 8
        %s418 = scalar_lea.vmem %s1, %s417
        %s419 = smul.u32 8, %s35
        %s420 = smul.u32 8, %s35
        %s421 = smul.u32 8, %s35
        %v422 = vld [vmem:[%s418] sm:$0xff]
        %v423 = vld [vmem:[%s418 + $0x8] sm:$0xff]
        %v424 = vld [vmem:[%s418 + $0x10] sm:$0xff]
        %v425 = vld [vmem:[%s418 + $0x18] sm:$0xff]
        %v426 = vld [vmem:[%s418 + $0x20] sm:$0xff]
        %v427 = vld [vmem:[%s418 + $0x28] sm:$0xff]
        %v428 = vld [vmem:[%s418 + $0x30] sm:$0xff]
        %v429 = vld [vmem:[%s418 + $0x38] sm:$0xff]
        %v430 = vld [vmem:[#allocation2] sm:$0xff]
        %v431 = vld [vmem:[#allocation2 + $0x8] sm:$0xff]
        %v432 = vld [vmem:[#allocation2 + $0x10] sm:$0xff]
        %v433 = vld [vmem:[#allocation2 + $0x18] sm:$0xff]
        %v434 = vld [vmem:[%s413] sm:$0xff]
        %v435 = vld [vmem:[%s413 + $0x8] sm:$0xff]
        %s436 = sld [smem:[#allocation6]]
        %v437 = vstv %s436
        %v438 = vmul.f32 %v434, %v437
        %v439 = vmul.f32 %v435, %v437
        %s440 = scalar_lea.vmem %s413, 16
        %v441 = vld [vmem:[%s440] sm:$0xff]
        %v442 = vld [vmem:[%s440 + $0x8] sm:$0xff]
        %s443 = sld [smem:[#allocation6 + $0x1]]
        %v444 = vstv %s443
        %v445 = vmul.f32 %v441, %v444
        %v446 = vmul.f32 %v442, %v444
        %v447 = vadd.f32 %v438, %v445
        %v448 = vadd.f32 %v439, %v446
        %s449 = scalar_lea.vmem %s413, 32
        %v450 = vld [vmem:[%s449] sm:$0xff]
        %v451 = vld [vmem:[%s449 + $0x8] sm:$0xff]
        %s452 = sld [smem:[#allocation6 + $0x2]]
        %v453 = vstv %s452
        %v454 = vmul.f32 %v450, %v453
        %v455 = vmul.f32 %v451, %v453
        %v456 = vadd.f32 %v447, %v454
        %v457 = vadd.f32 %v448, %v455
        %s458 = scalar_lea.vmem %s413, 48
        %v459 = vld [vmem:[%s458] sm:$0xff]
        %v460 = vld [vmem:[%s458 + $0x8] sm:$0xff]
        %s461 = sld [smem:[#allocation6 + $0x3]]
        %v462 = vstv %s461
        %v463 = vmul.f32 %v459, %v462
        %v464 = vmul.f32 %v460, %v462
        %v465 = vadd.f32 %v456, %v463
        %v466 = vadd.f32 %v457, %v464
        %s467 = sld [smem:[#allocation7]]
        %v468 = vstv %s467
        %v469 = vadd.f32 %v465, %v468
        %v470 = vadd.f32 %v466, %v468
        %vm471 = vcmask 130048
        %v473 = vsel %vm471, %v469, 0
        %v476 = vsel %vm471, %v470, 0
        %478 = vmatprep.subr.mxu0 %v431
        %479 = vmatpush1.msra.mxu0 %v430
        %480 = vmatprep.subr.mxu0 %v433
        %481 = vmatpush1.msra.mxu0 %v432
        %482 = vmatprep.subr.mxu0 0.0
        %483 = vmatpush1.msra.mxu0 0.0
        %484 = vmatprep.subr.mxu0 0.0
        %485 = vmatpush1.msra.mxu0 0.0
        %486 = vmatprep.subr.mxu0 0.0
        %487 = vmatpush1.msra.mxu0 0.0
        %488 = vmatprep.subr.mxu0 0.0
        %489 = vmatpush1.msra.mxu0 0.0
        %490 = vmatprep.subr.mxu0 0.0
        %491 = vmatpush1.msra.mxu0 0.0
        %492 = vmatprep.subr.mxu0 0.0
        %493 = vmatpush1.msra.mxu0 0.0
        %494 = vmatprep.subr.mxu0 0.0
        %495 = vmatpush1.msra.mxu0 0.0
        %496 = vmatprep.subr.mxu0 0.0
        %497 = vmatpush1.msra.mxu0 0.0
        %498 = vmatprep.subr.mxu0 0.0
        %499 = vmatpush1.msra.mxu0 0.0
        %500 = vmatprep.subr.mxu0 0.0
        %501 = vmatpush1.msra.mxu0 0.0
        %502 = vmatprep.subr.mxu0 0.0
        %503 = vmatpush1.msra.mxu0 0.0
        %504 = vmatprep.subr.mxu0 0.0
        %505 = vmatpush1.msra.mxu0 0.0
        %506 = vmatprep.subr.mxu0 0.0
        %507 = vmatpush1.msra.mxu0 0.0
        %508 = vmatprep.subr.mxu0 0.0
        %509 = vmatpush1.msra.mxu0 0.0
        %510 = vmatprep.subr.mxu0 0.0
        %511 = vmatpush1.msra.mxu0 0.0
        %512 = vmatprep.subr.mxu0 0.0
        %513 = vmatpush1.msra.mxu0 0.0
        %514 = vmatprep.subr.mxu0 0.0
        %515 = vmatpush1.msra.mxu0 0.0
        %516 = vmatprep.subr.mxu0 0.0
        %517 = vmatpush1.msra.mxu0 0.0
        %518 = vmatprep.subr.mxu0 0.0
        %519 = vmatpush1.msra.mxu0 0.0
        %520 = vmatprep.subr.mxu0 0.0
        %521 = vmatpush1.msra.mxu0 0.0
        %522 = vmatprep.subr.mxu0 0.0
        %523 = vmatpush1.msra.mxu0 0.0
        %524 = vmatprep.subr.mxu0 0.0
        %525 = vmatpush1.msra.mxu0 0.0
        %526 = vmatprep.subr.mxu0 0.0
        %527 = vmatpush1.msra.mxu0 0.0
        %528 = vmatprep.subr.mxu0 0.0
        %529 = vmatpush1.msra.mxu0 0.0
        %530 = vmatprep.subr.mxu0 0.0
        %531 = vmatpush1.msra.mxu0 0.0
        %532 = vmatprep.subr.mxu0 0.0
        %533 = vmatpush1.msra.mxu0 0.0
        %534 = vmatprep.subr.mxu0 0.0
        %535 = vmatpush1.msra.mxu0 0.0
        %536 = vmatprep.subr.mxu0 0.0
        %537 = vmatpush1.msra.mxu0 0.0
        %538 = vmatprep.subr.mxu0 0.0
        %539 = vmatpush1.msra.mxu0 0.0
        %540 = vmatprep.subr.mxu0 0.0
        %541 = vmatpush1.msra.mxu0 0.0
        %542 = vmatprep.mubr.f32.mxu0 0.0
        %543 = vmatmul.mubr.f32.gmra.mrb[0].mxu0 %v473
        %v544 = vpop.f32.mrb[0].mxu0
        %v545 = vadd.f32 0.0, %v544
        %v546 = vpop.f32.mrb[0].mxu0
        %v547 = vadd.f32 0.0, %v546
        %548 = vmatprep.mubr.f32.mxu0 0.0
        %549 = vmatmul.mubr.f32.gmra.mrb[0].mxu0 %v476
        %v550 = vpop.f32.mrb[0].mxu0
        %v551 = vadd.f32 0.0, %v550
        %v552 = vpop.f32.mrb[0].mxu0
        %v553 = vadd.f32 0.0, %v552
        %554 = vdwg.mxu0
        %v556 = vsel %vm471, %v422, 0
        %v559 = vsel %vm471, %v423, 0
        %v562 = vsel %vm471, %v424, 0
        %v565 = vsel %vm471, %v425, 0
        %v568 = vsel %vm471, %v426, 0
        %v571 = vsel %vm471, %v427, 0
        %v574 = vsel %vm471, %v428, 0
        %v577 = vsel %vm471, %v429, 0
        %579 = vmatprep.subr.mxu0 %v547
        %580 = vmatpush1.msra.mxu0 %v545
        %581 = vmatprep.subr.mxu0 %v553
        %582 = vmatpush1.msra.mxu0 %v551
        %583 = vmatprep.subr.mxu0 0.0
        %584 = vmatpush1.msra.mxu0 0.0
        %585 = vmatprep.subr.mxu0 0.0
        %586 = vmatpush1.msra.mxu0 0.0
        %587 = vmatprep.subr.mxu0 0.0
        %588 = vmatpush1.msra.mxu0 0.0
        %589 = vmatprep.subr.mxu0 0.0
        %590 = vmatpush1.msra.mxu0 0.0
        %591 = vmatprep.subr.mxu0 0.0
        %592 = vmatpush1.msra.mxu0 0.0
        %593 = vmatprep.subr.mxu0 0.0
        %594 = vmatpush1.msra.mxu0 0.0
        %595 = vmatprep.subr.mxu0 0.0
        %596 = vmatpush1.msra.mxu0 0.0
        %597 = vmatprep.subr.mxu0 0.0
        %598 = vmatpush1.msra.mxu0 0.0
        %599 = vmatprep.subr.mxu0 0.0
        %600 = vmatpush1.msra.mxu0 0.0
        %601 = vmatprep.subr.mxu0 0.0
        %602 = vmatpush1.msra.mxu0 0.0
        %603 = vmatprep.subr.mxu0 0.0
        %604 = vmatpush1.msra.mxu0 0.0
        %605 = vmatprep.subr.mxu0 0.0
        %606 = vmatpush1.msra.mxu0 0.0
        %607 = vmatprep.subr.mxu0 0.0
        %608 = vmatpush1.msra.mxu0 0.0
        %609 = vmatprep.subr.mxu0 0.0
        %610 = vmatpush1.msra.mxu0 0.0
        %611 = vmatprep.subr.mxu0 0.0
        %612 = vmatpush1.msra.mxu0 0.0
        %613 = vmatprep.subr.mxu0 0.0
        %614 = vmatpush1.msra.mxu0 0.0
        %615 = vmatprep.subr.mxu0 0.0
        %616 = vmatpush1.msra.mxu0 0.0
        %617 = vmatprep.subr.mxu0 0.0
        %618 = vmatpush1.msra.mxu0 0.0
        %619 = vmatprep.subr.mxu0 0.0
        %620 = vmatpush1.msra.mxu0 0.0
        %621 = vmatprep.subr.mxu0 0.0
        %622 = vmatpush1.msra.mxu0 0.0
        %623 = vmatprep.subr.mxu0 0.0
        %624 = vmatpush1.msra.mxu0 0.0
        %625 = vmatprep.subr.mxu0 0.0
        %626 = vmatpush1.msra.mxu0 0.0
        %627 = vmatprep.subr.mxu0 0.0
        %628 = vmatpush1.msra.mxu0 0.0
        %629 = vmatprep.subr.mxu0 0.0
        %630 = vmatpush1.msra.mxu0 0.0
        %631 = vmatprep.subr.mxu0 0.0
        %632 = vmatpush1.msra.mxu0 0.0
        %633 = vmatprep.subr.mxu0 0.0
        %634 = vmatpush1.msra.mxu0 0.0
        %635 = vmatprep.subr.mxu0 0.0
        %636 = vmatpush1.msra.mxu0 0.0
        %637 = vmatprep.subr.mxu0 0.0
        %638 = vmatpush1.msra.mxu0 0.0
        %639 = vmatprep.subr.mxu0 0.0
        %640 = vmatpush1.msra.mxu0 0.0
        %641 = vmatprep.subr.mxu0 0.0
        %642 = vmatpush1.msra.mxu0 0.0
        %643 = vmatprep.mubr.f32.mxu0 0.0
        %644 = vmatmul.mubr.f32.gmra.mrb[0].mxu0 %v556
        %v645 = vpop.f32.mrb[0].mxu0
        %v646 = vadd.f32 0.0, %v645
        %v647 = vpop.f32.mrb[0].mxu0
        %v648 = vadd.f32 0.0, %v647
        %649 = vmatprep.mubr.f32.mxu0 0.0
        %650 = vmatmul.mubr.f32.gmra.mrb[0].mxu0 %v559
        %v651 = vpop.f32.mrb[0].mxu0
        %v652 = vadd.f32 0.0, %v651
        %v653 = vpop.f32.mrb[0].mxu0
        %v654 = vadd.f32 0.0, %v653
        %655 = vmatprep.mubr.f32.mxu0 0.0
        %656 = vmatmul.mubr.f32.gmra.mrb[0].mxu0 %v562
        %v657 = vpop.f32.mrb[0].mxu0
        %v658 = vadd.f32 0.0, %v657
        %v659 = vpop.f32.mrb[0].mxu0
        %v660 = vadd.f32 0.0, %v659
        %661 = vmatprep.mubr.f32.mxu0 0.0
        %662 = vmatmul.mubr.f32.gmra.mrb[0].mxu0 %v565
        %v663 = vpop.f32.mrb[0].mxu0
        %v664 = vadd.f32 0.0, %v663
        %v665 = vpop.f32.mrb[0].mxu0
        %v666 = vadd.f32 0.0, %v665
        %667 = vmatprep.mubr.f32.mxu0 0.0
        %668 = vmatmul.mubr.f32.gmra.mrb[0].mxu0 %v568
        %v669 = vpop.f32.mrb[0].mxu0
        %v670 = vadd.f32 0.0, %v669
        %v671 = vpop.f32.mrb[0].mxu0
        %v672 = vadd.f32 0.0, %v671
        %673 = vmatprep.mubr.f32.mxu0 0.0
        %674 = vmatmul.mubr.f32.gmra.mrb[0].mxu0 %v571
        %v675 = vpop.f32.mrb[0].mxu0
        %v676 = vadd.f32 0.0, %v675
        %v677 = vpop.f32.mrb[0].mxu0
        %v678 = vadd.f32 0.0, %v677
        %679 = vmatprep.mubr.f32.mxu0 0.0
        %680 = vmatmul.mubr.f32.gmra.mrb[0].mxu0 %v574
        %v681 = vpop.f32.mrb[0].mxu0
        %v682 = vadd.f32 0.0, %v681
        %v683 = vpop.f32.mrb[0].mxu0
        %v684 = vadd.f32 0.0, %v683
        %685 = vmatprep.mubr.f32.mxu0 0.0
        %686 = vmatmul.mubr.f32.gmra.mrb[0].mxu0 %v577
        %v687 = vpop.f32.mrb[0].mxu0
        %v688 = vadd.f32 0.0, %v687
        %v689 = vpop.f32.mrb[0].mxu0
        %v690 = vadd.f32 0.0, %v689
        %691 = vdwg.mxu0
        %692 = vst [vmem:[%s401] sm:$0xff] %v646
        %693 = vst [vmem:[%s401 + $0x8] sm:$0xff] %v648
        %694 = vst [vmem:[%s401 + $0x10] sm:$0xff] %v652
        %695 = vst [vmem:[%s401 + $0x18] sm:$0xff] %v654
        %696 = vst [vmem:[%s401 + $0x20] sm:$0xff] %v658
        %697 = vst [vmem:[%s401 + $0x28] sm:$0xff] %v660
        %698 = vst [vmem:[%s401 + $0x30] sm:$0xff] %v664
        %699 = vst [vmem:[%s401 + $0x38] sm:$0xff] %v666
        %700 = vst [vmem:[%s401 + $0x40] sm:$0xff] %v670
        %701 = vst [vmem:[%s401 + $0x48] sm:$0xff] %v672
        %702 = vst [vmem:[%s401 + $0x50] sm:$0xff] %v676
        %703 = vst [vmem:[%s401 + $0x58] sm:$0xff] %v678
        %704 = vst [vmem:[%s401 + $0x60] sm:$0xff] %v682
        %705 = vst [vmem:[%s401 + $0x68] sm:$0xff] %v684
        %706 = vst [vmem:[%s401 + $0x70] sm:$0xff] %v688
        %707 = vst [vmem:[%s401 + $0x78] sm:$0xff] %v690
        %v708 = vld [vmem:[%s413] sm:$0xff]
        %v709 = vld [vmem:[%s413 + $0x8] sm:$0xff]
        %s710 = sld [smem:[#allocation6 + $0x80]]
        %v711 = vstv %s710
        %v712 = vmul.f32 %v708, %v711
        %v713 = vmul.f32 %v709, %v711
        %v714 = vld [vmem:[%s440] sm:$0xff]
        %v715 = vld [vmem:[%s440 + $0x8] sm:$0xff]
        %s716 = sld [smem:[#allocation6 + $0x81]]
        %v717 = vstv %s716
        %v718 = vmul.f32 %v714, %v717
        %v719 = vmul.f32 %v715, %v717
        %v720 = vadd.f32 %v712, %v718
        %v721 = vadd.f32 %v713, %v719
        %v722 = vld [vmem:[%s449] sm:$0xff]
        %v723 = vld [vmem:[%s449 + $0x8] sm:$0xff]
        %s724 = sld [smem:[#allocation6 + $0x82]]
        %v725 = vstv %s724
        %v726 = vmul.f32 %v722, %v725
        %v727 = vmul.f32 %v723, %v725
        %v728 = vadd.f32 %v720, %v726
        %v729 = vadd.f32 %v721, %v727
        %v730 = vld [vmem:[%s458] sm:$0xff]
        %v731 = vld [vmem:[%s458 + $0x8] sm:$0xff]
        %s732 = sld [smem:[#allocation6 + $0x83]]
        %v733 = vstv %s732
        %v734 = vmul.f32 %v730, %v733
        %v735 = vmul.f32 %v731, %v733
        %v736 = vadd.f32 %v728, %v734
        %v737 = vadd.f32 %v729, %v735
        %s738 = sld [smem:[#allocation7 + $0x1]]
        %v739 = vstv %s738
        %v740 = vadd.f32 %v736, %v739
        %v741 = vadd.f32 %v737, %v739
        %v743 = vsel %vm471, %v740, 0
        %v746 = vsel %vm471, %v741, 0
        %748 = vmatprep.subr.mxu0 %v431
        %749 = vmatpush1.msra.mxu0 %v430
        %750 = vmatprep.subr.mxu0 %v433
        %751 = vmatpush1.msra.mxu0 %v432
        %752 = vmatprep.subr.mxu0 0.0
        %753 = vmatpush1.msra.mxu0 0.0
        %754 = vmatprep.subr.mxu0 0.0
        %755 = vmatpush1.msra.mxu0 0.0
        %756 = vmatprep.subr.mxu0 0.0
        %757 = vmatpush1.msra.mxu0 0.0
        %758 = vmatprep.subr.mxu0 0.0
        %759 = vmatpush1.msra.mxu0 0.0
        %760 = vmatprep.subr.mxu0 0.0
        %761 = vmatpush1.msra.mxu0 0.0
        %762 = vmatprep.subr.mxu0 0.0
        %763 = vmatpush1.msra.mxu0 0.0
        %764 = vmatprep.subr.mxu0 0.0
        %765 = vmatpush1.msra.mxu0 0.0
        %766 = vmatprep.subr.mxu0 0.0
        %767 = vmatpush1.msra.mxu0 0.0
        %768 = vmatprep.subr.mxu0 0.0
        %769 = vmatpush1.msra.mxu0 0.0
        %770 = vmatprep.subr.mxu0 0.0
        %771 = vmatpush1.msra.mxu0 0.0
        %772 = vmatprep.subr.mxu0 0.0
        %773 = vmatpush1.msra.mxu0 0.0
        %774 = vmatprep.subr.mxu0 0.0
        %775 = vmatpush1.msra.mxu0 0.0
        %776 = vmatprep.subr.mxu0 0.0
        %777 = vmatpush1.msra.mxu0 0.0
        %778 = vmatprep.subr.mxu0 0.0
        %779 = vmatpush1.msra.mxu0 0.0
        %780 = vmatprep.subr.mxu0 0.0
        %781 = vmatpush1.msra.mxu0 0.0
        %782 = vmatprep.subr.mxu0 0.0
        %783 = vmatpush1.msra.mxu0 0.0
        %784 = vmatprep.subr.mxu0 0.0
        %785 = vmatpush1.msra.mxu0 0.0
        %786 = vmatprep.subr.mxu0 0.0
        %787 = vmatpush1.msra.mxu0 0.0
        %788 = vmatprep.subr.mxu0 0.0
        %789 = vmatpush1.msra.mxu0 0.0
        %790 = vmatprep.subr.mxu0 0.0
        %791 = vmatpush1.msra.mxu0 0.0
        %792 = vmatprep.subr.mxu0 0.0
        %793 = vmatpush1.msra.mxu0 0.0
        %794 = vmatprep.subr.mxu0 0.0
        %795 = vmatpush1.msra.mxu0 0.0
        %796 = vmatprep.subr.mxu0 0.0
        %797 = vmatpush1.msra.mxu0 0.0
        %798 = vmatprep.subr.mxu0 0.0
        %799 = vmatpush1.msra.mxu0 0.0
        %800 = vmatprep.subr.mxu0 0.0
        %801 = vmatpush1.msra.mxu0 0.0
        %802 = vmatprep.subr.mxu0 0.0
        %803 = vmatpush1.msra.mxu0 0.0
        %804 = vmatprep.subr.mxu0 0.0
        %805 = vmatpush1.msra.mxu0 0.0
        %806 = vmatprep.subr.mxu0 0.0
        %807 = vmatpush1.msra.mxu0 0.0
        %808 = vmatprep.subr.mxu0 0.0
        %809 = vmatpush1.msra.mxu0 0.0
        %810 = vmatprep.subr.mxu0 0.0
        %811 = vmatpush1.msra.mxu0 0.0
        %812 = vmatprep.mubr.f32.mxu0 0.0
        %813 = vmatmul.mubr.f32.gmra.mrb[0].mxu0 %v743
        %v814 = vpop.f32.mrb[0].mxu0
        %v815 = vadd.f32 0.0, %v814
        %v816 = vpop.f32.mrb[0].mxu0
        %v817 = vadd.f32 0.0, %v816
        %818 = vmatprep.mubr.f32.mxu0 0.0
        %819 = vmatmul.mubr.f32.gmra.mrb[0].mxu0 %v746
        %v820 = vpop.f32.mrb[0].mxu0
        %v821 = vadd.f32 0.0, %v820
        %v822 = vpop.f32.mrb[0].mxu0
        %v823 = vadd.f32 0.0, %v822
        %824 = vdwg.mxu0
        %825 = vmatprep.subr.mxu0 %v817
        %826 = vmatpush1.msra.mxu0 %v815
        %827 = vmatprep.subr.mxu0 %v823
        %828 = vmatpush1.msra.mxu0 %v821
        %829 = vmatprep.subr.mxu0 0.0
        %830 = vmatpush1.msra.mxu0 0.0
        %831 = vmatprep.subr.mxu0 0.0
        %832 = vmatpush1.msra.mxu0 0.0
        %833 = vmatprep.subr.mxu0 0.0
        %834 = vmatpush1.msra.mxu0 0.0
        %835 = vmatprep.subr.mxu0 0.0
        %836 = vmatpush1.msra.mxu0 0.0
        %837 = vmatprep.subr.mxu0 0.0
        %838 = vmatpush1.msra.mxu0 0.0
        %839 = vmatprep.subr.mxu0 0.0
        %840 = vmatpush1.msra.mxu0 0.0
        %841 = vmatprep.subr.mxu0 0.0
        %842 = vmatpush1.msra.mxu0 0.0
        %843 = vmatprep.subr.mxu0 0.0
        %844 = vmatpush1.msra.mxu0 0.0
        %845 = vmatprep.subr.mxu0 0.0
        %846 = vmatpush1.msra.mxu0 0.0
        %847 = vmatprep.subr.mxu0 0.0
        %848 = vmatpush1.msra.mxu0 0.0
        %849 = vmatprep.subr.mxu0 0.0
        %850 = vmatpush1.msra.mxu0 0.0
        %851 = vmatprep.subr.mxu0 0.0
        %852 = vmatpush1.msra.mxu0 0.0
        %853 = vmatprep.subr.mxu0 0.0
        %854 = vmatpush1.msra.mxu0 0.0
        %855 = vmatprep.subr.mxu0 0.0
        %856 = vmatpush1.msra.mxu0 0.0
        %857 = vmatprep.subr.mxu0 0.0
        %858 = vmatpush1.msra.mxu0 0.0
        %859 = vmatprep.subr.mxu0 0.0
        %860 = vmatpush1.msra.mxu0 0.0
        %861 = vmatprep.subr.mxu0 0.0
        %862 = vmatpush1.msra.mxu0 0.0
        %863 = vmatprep.subr.mxu0 0.0
        %864 = vmatpush1.msra.mxu0 0.0
        %865 = vmatprep.subr.mxu0 0.0
        %866 = vmatpush1.msra.mxu0 0.0
        %867 = vmatprep.subr.mxu0 0.0
        %868 = vmatpush1.msra.mxu0 0.0
        %869 = vmatprep.subr.mxu0 0.0
        %870 = vmatpush1.msra.mxu0 0.0
        %871 = vmatprep.subr.mxu0 0.0
        %872 = vmatpush1.msra.mxu0 0.0
        %873 = vmatprep.subr.mxu0 0.0
        %874 = vmatpush1.msra.mxu0 0.0
        %875 = vmatprep.subr.mxu0 0.0
        %876 = vmatpush1.msra.mxu0 0.0
        %877 = vmatprep.subr.mxu0 0.0
        %878 = vmatpush1.msra.mxu0 0.0
        %879 = vmatprep.subr.mxu0 0.0
        %880 = vmatpush1.msra.mxu0 0.0
        %881 = vmatprep.subr.mxu0 0.0
        %882 = vmatpush1.msra.mxu0 0.0
        %883 = vmatprep.subr.mxu0 0.0
        %884 = vmatpush1.msra.mxu0 0.0
        %885 = vmatprep.subr.mxu0 0.0
        %886 = vmatpush1.msra.mxu0 0.0
        %887 = vmatprep.subr.mxu0 0.0
        %888 = vmatpush1.msra.mxu0 0.0
        %889 = vmatprep.mubr.f32.mxu0 0.0
        %890 = vmatmul.mubr.f32.gmra.mrb[0].mxu0 %v556
        %v891 = vpop.f32.mrb[0].mxu0
        %v892 = vadd.f32 0.0, %v891
        %v893 = vpop.f32.mrb[0].mxu0
        %v894 = vadd.f32 0.0, %v893
        %895 = vmatprep.mubr.f32.mxu0 0.0
        %896 = vmatmul.mubr.f32.gmra.mrb[0].mxu0 %v559
        %v897 = vpop.f32.mrb[0].mxu0
        %v898 = vadd.f32 0.0, %v897
        %v899 = vpop.f32.mrb[0].mxu0
        %v900 = vadd.f32 0.0, %v899
        %901 = vmatprep.mubr.f32.mxu0 0.0
        %902 = vmatmul.mubr.f32.gmra.mrb[0].mxu0 %v562
        %v903 = vpop.f32.mrb[0].mxu0
        %v904 = vadd.f32 0.0, %v903
        %v905 = vpop.f32.mrb[0].mxu0
        %v906 = vadd.f32 0.0, %v905
        %907 = vmatprep.mubr.f32.mxu0 0.0
        %908 = vmatmul.mubr.f32.gmra.mrb[0].mxu0 %v565
        %v909 = vpop.f32.mrb[0].mxu0
        %v910 = vadd.f32 0.0, %v909
        %v911 = vpop.f32.mrb[0].mxu0
        %v912 = vadd.f32 0.0, %v911
        %913 = vmatprep.mubr.f32.mxu0 0.0
        %914 = vmatmul.mubr.f32.gmra.mrb[0].mxu0 %v568
        %v915 = vpop.f32.mrb[0].mxu0
        %v916 = vadd.f32 0.0, %v915
        %v917 = vpop.f32.mrb[0].mxu0
        %v918 = vadd.f32 0.0, %v917
        %919 = vmatprep.mubr.f32.mxu0 0.0
        %920 = vmatmul.mubr.f32.gmra.mrb[0].mxu0 %v571
        %v921 = vpop.f32.mrb[0].mxu0
        %v922 = vadd.f32 0.0, %v921
        %v923 = vpop.f32.mrb[0].mxu0
        %v924 = vadd.f32 0.0, %v923
        %925 = vmatprep.mubr.f32.mxu0 0.0
        %926 = vmatmul.mubr.f32.gmra.mrb[0].mxu0 %v574
        %v927 = vpop.f32.mrb[0].mxu0
        %v928 = vadd.f32 0.0, %v927
        %v929 = vpop.f32.mrb[0].mxu0
        %v930 = vadd.f32 0.0, %v929
        %931 = vmatprep.mubr.f32.mxu0 0.0
        %932 = vmatmul.mubr.f32.gmra.mrb[0].mxu0 %v577
        %v933 = vpop.f32.mrb[0].mxu0
        %v934 = vadd.f32 0.0, %v933
        %v935 = vpop.f32.mrb[0].mxu0
        %v936 = vadd.f32 0.0, %v935
        %937 = vdwg.mxu0
        %s938 = scalar_lea.vmem %s401, 128 [#allocation12]
        %939 = vst [vmem:[%s938] sm:$0xff] %v892
        %940 = vst [vmem:[%s938 + $0x8] sm:$0xff] %v894
        %941 = vst [vmem:[%s938 + $0x10] sm:$0xff] %v898
        %942 = vst [vmem:[%s938 + $0x18] sm:$0xff] %v900
        %943 = vst [vmem:[%s938 + $0x20] sm:$0xff] %v904
        %944 = vst [vmem:[%s938 + $0x28] sm:$0xff] %v906
        %945 = vst [vmem:[%s938 + $0x30] sm:$0xff] %v910
        %946 = vst [vmem:[%s938 + $0x38] sm:$0xff] %v912
        %947 = vst [vmem:[%s938 + $0x40] sm:$0xff] %v916
        %948 = vst [vmem:[%s938 + $0x48] sm:$0xff] %v918
        %949 = vst [vmem:[%s938 + $0x50] sm:$0xff] %v922
        %950 = vst [vmem:[%s938 + $0x58] sm:$0xff] %v924
        %951 = vst [vmem:[%s938 + $0x60] sm:$0xff] %v928
        %952 = vst [vmem:[%s938 + $0x68] sm:$0xff] %v930
        %953 = vst [vmem:[%s938 + $0x70] sm:$0xff] %v934
        %954 = vst [vmem:[%s938 + $0x78] sm:$0xff] %v936
        %v955 = vld [vmem:[%s413] sm:$0xff]
        %v956 = vld [vmem:[%s413 + $0x8] sm:$0xff]
        %s957 = sld [smem:[#allocation6 + $0x100]]
        %v958 = vstv %s957
        %v959 = vmul.f32 %v955, %v958
        %v960 = vmul.f32 %v956, %v958
        %v961 = vld [vmem:[%s440] sm:$0xff]
        %v962 = vld [vmem:[%s440 + $0x8] sm:$0xff]
        %s963 = sld [smem:[#allocation6 + $0x101]]
        %v964 = vstv %s963
        %v965 = vmul.f32 %v961, %v964
        %v966 = vmul.f32 %v962, %v964
        %v967 = vadd.f32 %v959, %v965
        %v968 = vadd.f32 %v960, %v966
        %v969 = vld [vmem:[%s449] sm:$0xff]
        %v970 = vld [vmem:[%s449 + $0x8] sm:$0xff]
        %s971 = sld [smem:[#allocation6 + $0x102]]
        %v972 = vstv %s971
        %v973 = vmul.f32 %v969, %v972
        %v974 = vmul.f32 %v970, %v972
        %v975 = vadd.f32 %v967, %v973
        %v976 = vadd.f32 %v968, %v974
        %v977 = vld [vmem:[%s458] sm:$0xff]
        %v978 = vld [vmem:[%s458 + $0x8] sm:$0xff]
        %s979 = sld [smem:[#allocation6 + $0x103]]
        %v980 = vstv %s979
        %v981 = vmul.f32 %v977, %v980
        %v982 = vmul.f32 %v978, %v980
        %v983 = vadd.f32 %v975, %v981
        %v984 = vadd.f32 %v976, %v982
        %s985 = sld [smem:[#allocation7 + $0x2]]
        %v986 = vstv %s985
        %v987 = vadd.f32 %v983, %v986
        %v988 = vadd.f32 %v984, %v986
        %v990 = vsel %vm471, %v987, 0
        %v993 = vsel %vm471, %v988, 0
        %995 = vmatprep.subr.mxu0 %v431
        %996 = vmatpush1.msra.mxu0 %v430
        %997 = vmatprep.subr.mxu0 %v433
        %998 = vmatpush1.msra.mxu0 %v432
        %999 = vmatprep.subr.mxu0 0.0
        %1000 = vmatpush1.msra.mxu0 0.0
        %1001 = vmatprep.subr.mxu0 0.0
        %1002 = vmatpush1.msra.mxu0 0.0
        %1003 = vmatprep.subr.mxu0 0.0
        %1004 = vmatpush1.msra.mxu0 0.0
        %1005 = vmatprep.subr.mxu0 0.0
        %1006 = vmatpush1.msra.mxu0 0.0
        %1007 = vmatprep.subr.mxu0 0.0
        %1008 = vmatpush1.msra.mxu0 0.0
        %1009 = vmatprep.subr.mxu0 0.0
        %1010 = vmatpush1.msra.mxu0 0.0
        %1011 = vmatprep.subr.mxu0 0.0
        %1012 = vmatpush1.msra.mxu0 0.0
        %1013 = vmatprep.subr.mxu0 0.0
        %1014 = vmatpush1.msra.mxu0 0.0
        %1015 = vmatprep.subr.mxu0 0.0
        %1016 = vmatpush1.msra.mxu0 0.0
        %1017 = vmatprep.subr.mxu0 0.0
        %1018 = vmatpush1.msra.mxu0 0.0
        %1019 = vmatprep.subr.mxu0 0.0
        %1020 = vmatpush1.msra.mxu0 0.0
        %1021 = vmatprep.subr.mxu0 0.0
        %1022 = vmatpush1.msra.mxu0 0.0
        %1023 = vmatprep.subr.mxu0 0.0
        %1024 = vmatpush1.msra.mxu0 0.0
        %1025 = vmatprep.subr.mxu0 0.0
        %1026 = vmatpush1.msra.mxu0 0.0
        %1027 = vmatprep.subr.mxu0 0.0
        %1028 = vmatpush1.msra.mxu0 0.0
        %1029 = vmatprep.subr.mxu0 0.0
        %1030 = vmatpush1.msra.mxu0 0.0
        %1031 = vmatprep.subr.mxu0 0.0
        %1032 = vmatpush1.msra.mxu0 0.0
        %1033 = vmatprep.subr.mxu0 0.0
        %1034 = vmatpush1.msra.mxu0 0.0
        %1035 = vmatprep.subr.mxu0 0.0
        %1036 = vmatpush1.msra.mxu0 0.0
        %1037 = vmatprep.subr.mxu0 0.0
        %1038 = vmatpush1.msra.mxu0 0.0
        %1039 = vmatprep.subr.mxu0 0.0
        %1040 = vmatpush1.msra.mxu0 0.0
        %1041 = vmatprep.subr.mxu0 0.0
        %1042 = vmatpush1.msra.mxu0 0.0
        %1043 = vmatprep.subr.mxu0 0.0
        %1044 = vmatpush1.msra.mxu0 0.0
        %1045 = vmatprep.subr.mxu0 0.0
        %1046 = vmatpush1.msra.mxu0 0.0
        %1047 = vmatprep.subr.mxu0 0.0
        %1048 = vmatpush1.msra.mxu0 0.0
        %1049 = vmatprep.subr.mxu0 0.0
        %1050 = vmatpush1.msra.mxu0 0.0
        %1051 = vmatprep.subr.mxu0 0.0
        %1052 = vmatpush1.msra.mxu0 0.0
        %1053 = vmatprep.subr.mxu0 0.0
        %1054 = vmatpush1.msra.mxu0 0.0
        %1055 = vmatprep.subr.mxu0 0.0
        %1056 = vmatpush1.msra.mxu0 0.0
        %1057 = vmatprep.subr.mxu0 0.0
        %1058 = vmatpush1.msra.mxu0 0.0
        %1059 = vmatprep.mubr.f32.mxu0 0.0
        %1060 = vmatmul.mubr.f32.gmra.mrb[0].mxu0 %v990
        %v1061 = vpop.f32.mrb[0].mxu0
        %v1062 = vadd.f32 0.0, %v1061
        %v1063 = vpop.f32.mrb[0].mxu0
        %v1064 = vadd.f32 0.0, %v1063
        %1065 = vmatprep.mubr.f32.mxu0 0.0
        %1066 = vmatmul.mubr.f32.gmra.mrb[0].mxu0 %v993
        %v1067 = vpop.f32.mrb[0].mxu0
        %v1068 = vadd.f32 0.0, %v1067
        %v1069 = vpop.f32.mrb[0].mxu0
        %v1070 = vadd.f32 0.0, %v1069
        %1071 = vdwg.mxu0
        %1072 = vmatprep.subr.mxu0 %v1064
        %1073 = vmatpush1.msra.mxu0 %v1062
        %1074 = vmatprep.subr.mxu0 %v1070
        %1075 = vmatpush1.msra.mxu0 %v1068
        %1076 = vmatprep.subr.mxu0 0.0
        %1077 = vmatpush1.msra.mxu0 0.0
        %1078 = vmatprep.subr.mxu0 0.0
        %1079 = vmatpush1.msra.mxu0 0.0
        %1080 = vmatprep.subr.mxu0 0.0
        %1081 = vmatpush1.msra.mxu0 0.0
        %1082 = vmatprep.subr.mxu0 0.0
        %1083 = vmatpush1.msra.mxu0 0.0
        %1084 = vmatprep.subr.mxu0 0.0
        %1085 = vmatpush1.msra.mxu0 0.0
        %1086 = vmatprep.subr.mxu0 0.0
        %1087 = vmatpush1.msra.mxu0 0.0
        %1088 = vmatprep.subr.mxu0 0.0
        %1089 = vmatpush1.msra.mxu0 0.0
        %1090 = vmatprep.subr.mxu0 0.0
        %1091 = vmatpush1.msra.mxu0 0.0
        %1092 = vmatprep.subr.mxu0 0.0
        %1093 = vmatpush1.msra.mxu0 0.0
        %1094 = vmatprep.subr.mxu0 0.0
        %1095 = vmatpush1.msra.mxu0 0.0
        %1096 = vmatprep.subr.mxu0 0.0
        %1097 = vmatpush1.msra.mxu0 0.0
        %1098 = vmatprep.subr.mxu0 0.0
        %1099 = vmatpush1.msra.mxu0 0.0
        %1100 = vmatprep.subr.mxu0 0.0
        %1101 = vmatpush1.msra.mxu0 0.0
        %1102 = vmatprep.subr.mxu0 0.0
        %1103 = vmatpush1.msra.mxu0 0.0
        %1104 = vmatprep.subr.mxu0 0.0
        %1105 = vmatpush1.msra.mxu0 0.0
        %1106 = vmatprep.subr.mxu0 0.0
        %1107 = vmatpush1.msra.mxu0 0.0
        %1108 = vmatprep.subr.mxu0 0.0
        %1109 = vmatpush1.msra.mxu0 0.0
        %1110 = vmatprep.subr.mxu0 0.0
        %1111 = vmatpush1.msra.mxu0 0.0
        %1112 = vmatprep.subr.mxu0 0.0
        %1113 = vmatpush1.msra.mxu0 0.0
        %1114 = vmatprep.subr.mxu0 0.0
        %1115 = vmatpush1.msra.mxu0 0.0
        %1116 = vmatprep.subr.mxu0 0.0
        %1117 = vmatpush1.msra.mxu0 0.0
        %1118 = vmatprep.subr.mxu0 0.0
        %1119 = vmatpush1.msra.mxu0 0.0
        %1120 = vmatprep.subr.mxu0 0.0
        %1121 = vmatpush1.msra.mxu0 0.0
        %1122 = vmatprep.subr.mxu0 0.0
        %1123 = vmatpush1.msra.mxu0 0.0
        %1124 = vmatprep.subr.mxu0 0.0
        %1125 = vmatpush1.msra.mxu0 0.0
        %1126 = vmatprep.subr.mxu0 0.0
        %1127 = vmatpush1.msra.mxu0 0.0
        %1128 = vmatprep.subr.mxu0 0.0
        %1129 = vmatpush1.msra.mxu0 0.0
        %1130 = vmatprep.subr.mxu0 0.0
        %1131 = vmatpush1.msra.mxu0 0.0
        %1132 = vmatprep.subr.mxu0 0.0
        %1133 = vmatpush1.msra.mxu0 0.0
        %1134 = vmatprep.subr.mxu0 0.0
        %1135 = vmatpush1.msra.mxu0 0.0
        %1136 = vmatprep.mubr.f32.mxu0 0.0
        %1137 = vmatmul.mubr.f32.gmra.mrb[0].mxu0 %v556
        %v1138 = vpop.f32.mrb[0].mxu0
        %v1139 = vadd.f32 0.0, %v1138
        %v1140 = vpop.f32.mrb[0].mxu0
        %v1141 = vadd.f32 0.0, %v1140
        %1142 = vmatprep.mubr.f32.mxu0 0.0
        %1143 = vmatmul.mubr.f32.gmra.mrb[0].mxu0 %v559
        %v1144 = vpop.f32.mrb[0].mxu0
        %v1145 = vadd.f32 0.0, %v1144
        %v1146 = vpop.f32.mrb[0].mxu0
        %v1147 = vadd.f32 0.0, %v1146
        %1148 = vmatprep.mubr.f32.mxu0 0.0
        %1149 = vmatmul.mubr.f32.gmra.mrb[0].mxu0 %v562
        %v1150 = vpop.f32.mrb[0].mxu0
        %v1151 = vadd.f32 0.0, %v1150
        %v1152 = vpop.f32.mrb[0].mxu0
        %v1153 = vadd.f32 0.0, %v1152
        %1154 = vmatprep.mubr.f32.mxu0 0.0
        %1155 = vmatmul.mubr.f32.gmra.mrb[0].mxu0 %v565
        %v1156 = vpop.f32.mrb[0].mxu0
        %v1157 = vadd.f32 0.0, %v1156
        %v1158 = vpop.f32.mrb[0].mxu0
        %v1159 = vadd.f32 0.0, %v1158
        %1160 = vmatprep.mubr.f32.mxu0 0.0
        %1161 = vmatmul.mubr.f32.gmra.mrb[0].mxu0 %v568
        %v1162 = vpop.f32.mrb[0].mxu0
        %v1163 = vadd.f32 0.0, %v1162
        %v1164 = vpop.f32.mrb[0].mxu0
        %v1165 = vadd.f32 0.0, %v1164
        %1166 = vmatprep.mubr.f32.mxu0 0.0
        %1167 = vmatmul.mubr.f32.gmra.mrb[0].mxu0 %v571
        %v1168 = vpop.f32.mrb[0].mxu0
        %v1169 = vadd.f32 0.0, %v1168
        %v1170 = vpop.f32.mrb[0].mxu0
        %v1171 = vadd.f32 0.0, %v1170
        %1172 = vmatprep.mubr.f32.mxu0 0.0
        %1173 = vmatmul.mubr.f32.gmra.mrb[0].mxu0 %v574
        %v1174 = vpop.f32.mrb[0].mxu0
        %v1175 = vadd.f32 0.0, %v1174
        %v1176 = vpop.f32.mrb[0].mxu0
        %v1177 = vadd.f32 0.0, %v1176
        %1178 = vmatprep.mubr.f32.mxu0 0.0
        %1179 = vmatmul.mubr.f32.gmra.mrb[0].mxu0 %v577
        %v1180 = vpop.f32.mrb[0].mxu0
        %v1181 = vadd.f32 0.0, %v1180
        %v1182 = vpop.f32.mrb[0].mxu0
        %v1183 = vadd.f32 0.0, %v1182
        %1184 = vdwg.mxu0
        %s1185 = scalar_lea.vmem %s401, 256 [#allocation12]
        %1186 = vst [vmem:[%s1185] sm:$0xff] %v1139
        %1187 = vst [vmem:[%s1185 + $0x8] sm:$0xff] %v1141
        %1188 = vst [vmem:[%s1185 + $0x10] sm:$0xff] %v1145
        %1189 = vst [vmem:[%s1185 + $0x18] sm:$0xff] %v1147
        %1190 = vst [vmem:[%s1185 + $0x20] sm:$0xff] %v1151
        %1191 = vst [vmem:[%s1185 + $0x28] sm:$0xff] %v1153
        %1192 = vst [vmem:[%s1185 + $0x30] sm:$0xff] %v1157
        %1193 = vst [vmem:[%s1185 + $0x38] sm:$0xff] %v1159
        %1194 = vst [vmem:[%s1185 + $0x40] sm:$0xff] %v1163
        %1195 = vst [vmem:[%s1185 + $0x48] sm:$0xff] %v1165
        %1196 = vst [vmem:[%s1185 + $0x50] sm:$0xff] %v1169
        %1197 = vst [vmem:[%s1185 + $0x58] sm:$0xff] %v1171
        %1198 = vst [vmem:[%s1185 + $0x60] sm:$0xff] %v1175
        %1199 = vst [vmem:[%s1185 + $0x68] sm:$0xff] %v1177
        %1200 = vst [vmem:[%s1185 + $0x70] sm:$0xff] %v1181
        %1201 = vst [vmem:[%s1185 + $0x78] sm:$0xff] %v1183
        %v1202 = vld [vmem:[%s413] sm:$0xff]
        %v1203 = vld [vmem:[%s413 + $0x8] sm:$0xff]
        %s1204 = sld [smem:[#allocation6 + $0x180]]
        %v1205 = vstv %s1204
        %v1206 = vmul.f32 %v1202, %v1205
        %v1207 = vmul.f32 %v1203, %v1205
        %v1208 = vld [vmem:[%s440] sm:$0xff]
        %v1209 = vld [vmem:[%s440 + $0x8] sm:$0xff]
        %s1210 = sld [smem:[#allocation6 + $0x181]]
        %v1211 = vstv %s1210
        %v1212 = vmul.f32 %v1208, %v1211
        %v1213 = vmul.f32 %v1209, %v1211
        %v1214 = vadd.f32 %v1206, %v1212
        %v1215 = vadd.f32 %v1207, %v1213
        %v1216 = vld [vmem:[%s449] sm:$0xff]
        %v1217 = vld [vmem:[%s449 + $0x8] sm:$0xff]
        %s1218 = sld [smem:[#allocation6 + $0x182]]
        %v1219 = vstv %s1218
        %v1220 = vmul.f32 %v1216, %v1219
        %v1221 = vmul.f32 %v1217, %v1219
        %v1222 = vadd.f32 %v1214, %v1220
        %v1223 = vadd.f32 %v1215, %v1221
        %v1224 = vld [vmem:[%s458] sm:$0xff]
        %v1225 = vld [vmem:[%s458 + $0x8] sm:$0xff]
        %s1226 = sld [smem:[#allocation6 + $0x183]]
        %v1227 = vstv %s1226
        %v1228 = vmul.f32 %v1224, %v1227
        %v1229 = vmul.f32 %v1225, %v1227
        %v1230 = vadd.f32 %v1222, %v1228
        %v1231 = vadd.f32 %v1223, %v1229
        %s1232 = sld [smem:[#allocation7 + $0x3]]
        %v1233 = vstv %s1232
        %v1234 = vadd.f32 %v1230, %v1233
        %v1235 = vadd.f32 %v1231, %v1233
        %v1237 = vsel %vm471, %v1234, 0
        %v1240 = vsel %vm471, %v1235, 0
        %1242 = vmatprep.subr.mxu0 %v431
        %1243 = vmatpush1.msra.mxu0 %v430
        %1244 = vmatprep.subr.mxu0 %v433
        %1245 = vmatpush1.msra.mxu0 %v432
        %1246 = vmatprep.subr.mxu0 0.0
        %1247 = vmatpush1.msra.mxu0 0.0
        %1248 = vmatprep.subr.mxu0 0.0
        %1249 = vmatpush1.msra.mxu0 0.0
        %1250 = vmatprep.subr.mxu0 0.0
        %1251 = vmatpush1.msra.mxu0 0.0
        %1252 = vmatprep.subr.mxu0 0.0
        %1253 = vmatpush1.msra.mxu0 0.0
        %1254 = vmatprep.subr.mxu0 0.0
        %1255 = vmatpush1.msra.mxu0 0.0
        %1256 = vmatprep.subr.mxu0 0.0
        %1257 = vmatpush1.msra.mxu0 0.0
        %1258 = vmatprep.subr.mxu0 0.0
        %1259 = vmatpush1.msra.mxu0 0.0
        %1260 = vmatprep.subr.mxu0 0.0
        %1261 = vmatpush1.msra.mxu0 0.0
        %1262 = vmatprep.subr.mxu0 0.0
        %1263 = vmatpush1.msra.mxu0 0.0
        %1264 = vmatprep.subr.mxu0 0.0
        %1265 = vmatpush1.msra.mxu0 0.0
        %1266 = vmatprep.subr.mxu0 0.0
        %1267 = vmatpush1.msra.mxu0 0.0
        %1268 = vmatprep.subr.mxu0 0.0
        %1269 = vmatpush1.msra.mxu0 0.0
        %1270 = vmatprep.subr.mxu0 0.0
        %1271 = vmatpush1.msra.mxu0 0.0
        %1272 = vmatprep.subr.mxu0 0.0
        %1273 = vmatpush1.msra.mxu0 0.0
        %1274 = vmatprep.subr.mxu0 0.0
        %1275 = vmatpush1.msra.mxu0 0.0
        %1276 = vmatprep.subr.mxu0 0.0
        %1277 = vmatpush1.msra.mxu0 0.0
        %1278 = vmatprep.subr.mxu0 0.0
        %1279 = vmatpush1.msra.mxu0 0.0
        %1280 = vmatprep.subr.mxu0 0.0
        %1281 = vmatpush1.msra.mxu0 0.0
        %1282 = vmatprep.subr.mxu0 0.0
        %1283 = vmatpush1.msra.mxu0 0.0
        %1284 = vmatprep.subr.mxu0 0.0
        %1285 = vmatpush1.msra.mxu0 0.0
        %1286 = vmatprep.subr.mxu0 0.0
        %1287 = vmatpush1.msra.mxu0 0.0
        %1288 = vmatprep.subr.mxu0 0.0
        %1289 = vmatpush1.msra.mxu0 0.0
        %1290 = vmatprep.subr.mxu0 0.0
        %1291 = vmatpush1.msra.mxu0 0.0
        %1292 = vmatprep.subr.mxu0 0.0
        %1293 = vmatpush1.msra.mxu0 0.0
        %1294 = vmatprep.subr.mxu0 0.0
        %1295 = vmatpush1.msra.mxu0 0.0
        %1296 = vmatprep.subr.mxu0 0.0
        %1297 = vmatpush1.msra.mxu0 0.0
        %1298 = vmatprep.subr.mxu0 0.0
        %1299 = vmatpush1.msra.mxu0 0.0
        %1300 = vmatprep.subr.mxu0 0.0
        %1301 = vmatpush1.msra.mxu0 0.0
        %1302 = vmatprep.subr.mxu0 0.0
        %1303 = vmatpush1.msra.mxu0 0.0
        %1304 = vmatprep.subr.mxu0 0.0
        %1305 = vmatpush1.msra.mxu0 0.0
        %1306 = vmatprep.mubr.f32.mxu0 0.0
        %1307 = vmatmul.mubr.f32.gmra.mrb[0].mxu0 %v1237
        %v1308 = vpop.f32.mrb[0].mxu0
        %v1309 = vadd.f32 0.0, %v1308
        %v1310 = vpop.f32.mrb[0].mxu0
        %v1311 = vadd.f32 0.0, %v1310
        %1312 = vmatprep.mubr.f32.mxu0 0.0
        %1313 = vmatmul.mubr.f32.gmra.mrb[0].mxu0 %v1240
        %v1314 = vpop.f32.mrb[0].mxu0
        %v1315 = vadd.f32 0.0, %v1314
        %v1316 = vpop.f32.mrb[0].mxu0
        %v1317 = vadd.f32 0.0, %v1316
        %1318 = vdwg.mxu0
        %1319 = vmatprep.subr.mxu0 %v1311
        %1320 = vmatpush1.msra.mxu0 %v1309
        %1321 = vmatprep.subr.mxu0 %v1317
        %1322 = vmatpush1.msra.mxu0 %v1315
        %1323 = vmatprep.subr.mxu0 0.0
        %1324 = vmatpush1.msra.mxu0 0.0
        %1325 = vmatprep.subr.mxu0 0.0
        %1326 = vmatpush1.msra.mxu0 0.0
        %1327 = vmatprep.subr.mxu0 0.0
        %1328 = vmatpush1.msra.mxu0 0.0
        %1329 = vmatprep.subr.mxu0 0.0
        %1330 = vmatpush1.msra.mxu0 0.0
        %1331 = vmatprep.subr.mxu0 0.0
        %1332 = vmatpush1.msra.mxu0 0.0
        %1333 = vmatprep.subr.mxu0 0.0
        %1334 = vmatpush1.msra.mxu0 0.0
        %1335 = vmatprep.subr.mxu0 0.0
        %1336 = vmatpush1.msra.mxu0 0.0
        %1337 = vmatprep.subr.mxu0 0.0
        %1338 = vmatpush1.msra.mxu0 0.0
        %1339 = vmatprep.subr.mxu0 0.0
        %1340 = vmatpush1.msra.mxu0 0.0
        %1341 = vmatprep.subr.mxu0 0.0
        %1342 = vmatpush1.msra.mxu0 0.0
        %1343 = vmatprep.subr.mxu0 0.0
        %1344 = vmatpush1.msra.mxu0 0.0
        %1345 = vmatprep.subr.mxu0 0.0
        %1346 = vmatpush1.msra.mxu0 0.0
        %1347 = vmatprep.subr.mxu0 0.0
        %1348 = vmatpush1.msra.mxu0 0.0
        %1349 = vmatprep.subr.mxu0 0.0
        %1350 = vmatpush1.msra.mxu0 0.0
        %1351 = vmatprep.subr.mxu0 0.0
        %1352 = vmatpush1.msra.mxu0 0.0
        %1353 = vmatprep.subr.mxu0 0.0
        %1354 = vmatpush1.msra.mxu0 0.0
        %1355 = vmatprep.subr.mxu0 0.0
        %1356 = vmatpush1.msra.mxu0 0.0
        %1357 = vmatprep.subr.mxu0 0.0
        %1358 = vmatpush1.msra.mxu0 0.0
        %1359 = vmatprep.subr.mxu0 0.0
        %1360 = vmatpush1.msra.mxu0 0.0
        %1361 = vmatprep.subr.mxu0 0.0
        %1362 = vmatpush1.msra.mxu0 0.0
        %1363 = vmatprep.subr.mxu0 0.0
        %1364 = vmatpush1.msra.mxu0 0.0
        %1365 = vmatprep.subr.mxu0 0.0
        %1366 = vmatpush1.msra.mxu0 0.0
        %1367 = vmatprep.subr.mxu0 0.0
        %1368 = vmatpush1.msra.mxu0 0.0
        %1369 = vmatprep.subr.mxu0 0.0
        %1370 = vmatpush1.msra.mxu0 0.0
        %1371 = vmatprep.subr.mxu0 0.0
        %1372 = vmatpush1.msra.mxu0 0.0
        %1373 = vmatprep.subr.mxu0 0.0
        %1374 = vmatpush1.msra.mxu0 0.0
        %1375 = vmatprep.subr.mxu0 0.0
        %1376 = vmatpush1.msra.mxu0 0.0
        %1377 = vmatprep.subr.mxu0 0.0
        %1378 = vmatpush1.msra.mxu0 0.0
        %1379 = vmatprep.subr.mxu0 0.0
        %1380 = vmatpush1.msra.mxu0 0.0
        %1381 = vmatprep.subr.mxu0 0.0
        %1382 = vmatpush1.msra.mxu0 0.0
        %1383 = vmatprep.mubr.f32.mxu0 0.0
        %1384 = vmatmul.mubr.f32.gmra.mrb[0].mxu0 %v556
        %v1385 = vpop.f32.mrb[0].mxu0
        %v1386 = vadd.f32 0.0, %v1385
        %v1387 = vpop.f32.mrb[0].mxu0
        %v1388 = vadd.f32 0.0, %v1387
        %1389 = vmatprep.mubr.f32.mxu0 0.0
        %1390 = vmatmul.mubr.f32.gmra.mrb[0].mxu0 %v559
        %v1391 = vpop.f32.mrb[0].mxu0
        %v1392 = vadd.f32 0.0, %v1391
        %v1393 = vpop.f32.mrb[0].mxu0
        %v1394 = vadd.f32 0.0, %v1393
        %1395 = vmatprep.mubr.f32.mxu0 0.0
        %1396 = vmatmul.mubr.f32.gmra.mrb[0].mxu0 %v562
        %v1397 = vpop.f32.mrb[0].mxu0
        %v1398 = vadd.f32 0.0, %v1397
        %v1399 = vpop.f32.mrb[0].mxu0
        %v1400 = vadd.f32 0.0, %v1399
        %1401 = vmatprep.mubr.f32.mxu0 0.0
        %1402 = vmatmul.mubr.f32.gmra.mrb[0].mxu0 %v565
        %v1403 = vpop.f32.mrb[0].mxu0
        %v1404 = vadd.f32 0.0, %v1403
        %v1405 = vpop.f32.mrb[0].mxu0
        %v1406 = vadd.f32 0.0, %v1405
        %1407 = vmatprep.mubr.f32.mxu0 0.0
        %1408 = vmatmul.mubr.f32.gmra.mrb[0].mxu0 %v568
        %v1409 = vpop.f32.mrb[0].mxu0
        %v1410 = vadd.f32 0.0, %v1409
        %v1411 = vpop.f32.mrb[0].mxu0
        %v1412 = vadd.f32 0.0, %v1411
        %1413 = vmatprep.mubr.f32.mxu0 0.0
        %1414 = vmatmul.mubr.f32.gmra.mrb[0].mxu0 %v571
        %v1415 = vpop.f32.mrb[0].mxu0
        %v1416 = vadd.f32 0.0, %v1415
        %v1417 = vpop.f32.mrb[0].mxu0
        %v1418 = vadd.f32 0.0, %v1417
        %1419 = vmatprep.mubr.f32.mxu0 0.0
        %1420 = vmatmul.mubr.f32.gmra.mrb[0].mxu0 %v574
        %v1421 = vpop.f32.mrb[0].mxu0
        %v1422 = vadd.f32 0.0, %v1421
        %v1423 = vpop.f32.mrb[0].mxu0
        %v1424 = vadd.f32 0.0, %v1423
        %1425 = vmatprep.mubr.f32.mxu0 0.0
        %1426 = vmatmul.mubr.f32.gmra.mrb[0].mxu0 %v577
        %v1427 = vpop.f32.mrb[0].mxu0
        %v1428 = vadd.f32 0.0, %v1427
        %v1429 = vpop.f32.mrb[0].mxu0
        %v1430 = vadd.f32 0.0, %v1429
        %1431 = vdwg.mxu0
        %s1432 = scalar_lea.vmem %s401, 384 [#allocation12]
        %1433 = vst [vmem:[%s1432] sm:$0xff] %v1386
        %1434 = vst [vmem:[%s1432 + $0x8] sm:$0xff] %v1388
        %1435 = vst [vmem:[%s1432 + $0x10] sm:$0xff] %v1392
        %1436 = vst [vmem:[%s1432 + $0x18] sm:$0xff] %v1394
        %1437 = vst [vmem:[%s1432 + $0x20] sm:$0xff] %v1398
        %1438 = vst [vmem:[%s1432 + $0x28] sm:$0xff] %v1400
        %1439 = vst [vmem:[%s1432 + $0x30] sm:$0xff] %v1404
        %1440 = vst [vmem:[%s1432 + $0x38] sm:$0xff] %v1406
        %1441 = vst [vmem:[%s1432 + $0x40] sm:$0xff] %v1410
        %1442 = vst [vmem:[%s1432 + $0x48] sm:$0xff] %v1412
        %1443 = vst [vmem:[%s1432 + $0x50] sm:$0xff] %v1416
        %1444 = vst [vmem:[%s1432 + $0x58] sm:$0xff] %v1418
        %1445 = vst [vmem:[%s1432 + $0x60] sm:$0xff] %v1422
        %1446 = vst [vmem:[%s1432 + $0x68] sm:$0xff] %v1424
        %1447 = vst [vmem:[%s1432 + $0x70] sm:$0xff] %v1428
        %1448 = vst [vmem:[%s1432 + $0x78] sm:$0xff] %v1430
        %v1449 = vld [vmem:[%s413] sm:$0xff]
        %v1450 = vld [vmem:[%s413 + $0x8] sm:$0xff]
        %s1451 = sld [smem:[#allocation6 + $0x200]]
        %v1452 = vstv %s1451
        %v1453 = vmul.f32 %v1449, %v1452
        %v1454 = vmul.f32 %v1450, %v1452
        %v1455 = vld [vmem:[%s440] sm:$0xff]
        %v1456 = vld [vmem:[%s440 + $0x8] sm:$0xff]
        %s1457 = sld [smem:[#allocation6 + $0x201]]
        %v1458 = vstv %s1457
        %v1459 = vmul.f32 %v1455, %v1458
        %v1460 = vmul.f32 %v1456, %v1458
        %v1461 = vadd.f32 %v1453, %v1459
        %v1462 = vadd.f32 %v1454, %v1460
        %v1463 = vld [vmem:[%s449] sm:$0xff]
        %v1464 = vld [vmem:[%s449 + $0x8] sm:$0xff]
        %s1465 = sld [smem:[#allocation6 + $0x202]]
        %v1466 = vstv %s1465
        %v1467 = vmul.f32 %v1463, %v1466
        %v1468 = vmul.f32 %v1464, %v1466
        %v1469 = vadd.f32 %v1461, %v1467
        %v1470 = vadd.f32 %v1462, %v1468
        %v1471 = vld [vmem:[%s458] sm:$0xff]
        %v1472 = vld [vmem:[%s458 + $0x8] sm:$0xff]
        %s1473 = sld [smem:[#allocation6 + $0x203]]
        %v1474 = vstv %s1473
        %v1475 = vmul.f32 %v1471, %v1474
        %v1476 = vmul.f32 %v1472, %v1474
        %v1477 = vadd.f32 %v1469, %v1475
        %v1478 = vadd.f32 %v1470, %v1476
        %s1479 = sld [smem:[#allocation7 + $0x4]]
        %v1480 = vstv %s1479
        %v1481 = vadd.f32 %v1477, %v1480
        %v1482 = vadd.f32 %v1478, %v1480
        %v1484 = vsel %vm471, %v1481, 0
        %v1487 = vsel %vm471, %v1482, 0
        %1489 = vmatprep.subr.mxu0 %v431
        %1490 = vmatpush1.msra.mxu0 %v430
        %1491 = vmatprep.subr.mxu0 %v433
        %1492 = vmatpush1.msra.mxu0 %v432
        %1493 = vmatprep.subr.mxu0 0.0
        %1494 = vmatpush1.msra.mxu0 0.0
        %1495 = vmatprep.subr.mxu0 0.0
        %1496 = vmatpush1.msra.mxu0 0.0
        %1497 = vmatprep.subr.mxu0 0.0
        %1498 = vmatpush1.msra.mxu0 0.0
        %1499 = vmatprep.subr.mxu0 0.0
        %1500 = vmatpush1.msra.mxu0 0.0
        %1501 = vmatprep.subr.mxu0 0.0
        %1502 = vmatpush1.msra.mxu0 0.0
        %1503 = vmatprep.subr.mxu0 0.0
        %1504 = vmatpush1.msra.mxu0 0.0
        %1505 = vmatprep.subr.mxu0 0.0
        %1506 = vmatpush1.msra.mxu0 0.0
        %1507 = vmatprep.subr.mxu0 0.0
        %1508 = vmatpush1.msra.mxu0 0.0
        %1509 = vmatprep.subr.mxu0 0.0
        %1510 = vmatpush1.msra.mxu0 0.0
        %1511 = vmatprep.subr.mxu0 0.0
        %1512 = vmatpush1.msra.mxu0 0.0
        %1513 = vmatprep.subr.mxu0 0.0
        %1514 = vmatpush1.msra.mxu0 0.0
        %1515 = vmatprep.subr.mxu0 0.0
        %1516 = vmatpush1.msra.mxu0 0.0
        %1517 = vmatprep.subr.mxu0 0.0
        %1518 = vmatpush1.msra.mxu0 0.0
        %1519 = vmatprep.subr.mxu0 0.0
        %1520 = vmatpush1.msra.mxu0 0.0
        %1521 = vmatprep.subr.mxu0 0.0
        %1522 = vmatpush1.msra.mxu0 0.0
        %1523 = vmatprep.subr.mxu0 0.0
        %1524 = vmatpush1.msra.mxu0 0.0
        %1525 = vmatprep.subr.mxu0 0.0
        %1526 = vmatpush1.msra.mxu0 0.0
        %1527 = vmatprep.subr.mxu0 0.0
        %1528 = vmatpush1.msra.mxu0 0.0
        %1529 = vmatprep.subr.mxu0 0.0
        %1530 = vmatpush1.msra.mxu0 0.0
        %1531 = vmatprep.subr.mxu0 0.0
        %1532 = vmatpush1.msra.mxu0 0.0
        %1533 = vmatprep.subr.mxu0 0.0
        %1534 = vmatpush1.msra.mxu0 0.0
        %1535 = vmatprep.subr.mxu0 0.0
        %1536 = vmatpush1.msra.mxu0 0.0
        %1537 = vmatprep.subr.mxu0 0.0
        %1538 = vmatpush1.msra.mxu0 0.0
        %1539 = vmatprep.subr.mxu0 0.0
        %1540 = vmatpush1.msra.mxu0 0.0
        %1541 = vmatprep.subr.mxu0 0.0
        %1542 = vmatpush1.msra.mxu0 0.0
        %1543 = vmatprep.subr.mxu0 0.0
        %1544 = vmatpush1.msra.mxu0 0.0
        %1545 = vmatprep.subr.mxu0 0.0
        %1546 = vmatpush1.msra.mxu0 0.0
        %1547 = vmatprep.subr.mxu0 0.0
        %1548 = vmatpush1.msra.mxu0 0.0
        %1549 = vmatprep.subr.mxu0 0.0
        %1550 = vmatpush1.msra.mxu0 0.0
        %1551 = vmatprep.subr.mxu0 0.0
        %1552 = vmatpush1.msra.mxu0 0.0
        %1553 = vmatprep.mubr.f32.mxu0 0.0
        %1554 = vmatmul.mubr.f32.gmra.mrb[0].mxu0 %v1484
        %v1555 = vpop.f32.mrb[0].mxu0
        %v1556 = vadd.f32 0.0, %v1555
        %v1557 = vpop.f32.mrb[0].mxu0
        %v1558 = vadd.f32 0.0, %v1557
        %1559 = vmatprep.mubr.f32.mxu0 0.0
        %1560 = vmatmul.mubr.f32.gmra.mrb[0].mxu0 %v1487
        %v1561 = vpop.f32.mrb[0].mxu0
        %v1562 = vadd.f32 0.0, %v1561
        %v1563 = vpop.f32.mrb[0].mxu0
        %v1564 = vadd.f32 0.0, %v1563
        %1565 = vdwg.mxu0
        %1566 = vmatprep.subr.mxu0 %v1558
        %1567 = vmatpush1.msra.mxu0 %v1556
        %1568 = vmatprep.subr.mxu0 %v1564
        %1569 = vmatpush1.msra.mxu0 %v1562
        %1570 = vmatprep.subr.mxu0 0.0
        %1571 = vmatpush1.msra.mxu0 0.0
        %1572 = vmatprep.subr.mxu0 0.0
        %1573 = vmatpush1.msra.mxu0 0.0
        %1574 = vmatprep.subr.mxu0 0.0
        %1575 = vmatpush1.msra.mxu0 0.0
        %1576 = vmatprep.subr.mxu0 0.0
        %1577 = vmatpush1.msra.mxu0 0.0
        %1578 = vmatprep.subr.mxu0 0.0
        %1579 = vmatpush1.msra.mxu0 0.0
        %1580 = vmatprep.subr.mxu0 0.0
        %1581 = vmatpush1.msra.mxu0 0.0
        %1582 = vmatprep.subr.mxu0 0.0
        %1583 = vmatpush1.msra.mxu0 0.0
        %1584 = vmatprep.subr.mxu0 0.0
        %1585 = vmatpush1.msra.mxu0 0.0
        %1586 = vmatprep.subr.mxu0 0.0
        %1587 = vmatpush1.msra.mxu0 0.0
        %1588 = vmatprep.subr.mxu0 0.0
        %1589 = vmatpush1.msra.mxu0 0.0
        %1590 = vmatprep.subr.mxu0 0.0
        %1591 = vmatpush1.msra.mxu0 0.0
        %1592 = vmatprep.subr.mxu0 0.0
        %1593 = vmatpush1.msra.mxu0 0.0
        %1594 = vmatprep.subr.mxu0 0.0
        %1595 = vmatpush1.msra.mxu0 0.0
        %1596 = vmatprep.subr.mxu0 0.0
        %1597 = vmatpush1.msra.mxu0 0.0
        %1598 = vmatprep.subr.mxu0 0.0
        %1599 = vmatpush1.msra.mxu0 0.0
        %1600 = vmatprep.subr.mxu0 0.0
        %1601 = vmatpush1.msra.mxu0 0.0
        %1602 = vmatprep.subr.mxu0 0.0
        %1603 = vmatpush1.msra.mxu0 0.0
        %1604 = vmatprep.subr.mxu0 0.0
        %1605 = vmatpush1.msra.mxu0 0.0
        %1606 = vmatprep.subr.mxu0 0.0
        %1607 = vmatpush1.msra.mxu0 0.0
        %1608 = vmatprep.subr.mxu0 0.0
        %1609 = vmatpush1.msra.mxu0 0.0
        %1610 = vmatprep.subr.mxu0 0.0
        %1611 = vmatpush1.msra.mxu0 0.0
        %1612 = vmatprep.subr.mxu0 0.0
        %1613 = vmatpush1.msra.mxu0 0.0
        %1614 = vmatprep.subr.mxu0 0.0
        %1615 = vmatpush1.msra.mxu0 0.0
        %1616 = vmatprep.subr.mxu0 0.0
        %1617 = vmatpush1.msra.mxu0 0.0
        %1618 = vmatprep.subr.mxu0 0.0
        %1619 = vmatpush1.msra.mxu0 0.0
        %1620 = vmatprep.subr.mxu0 0.0
        %1621 = vmatpush1.msra.mxu0 0.0
        %1622 = vmatprep.subr.mxu0 0.0
        %1623 = vmatpush1.msra.mxu0 0.0
        %1624 = vmatprep.subr.mxu0 0.0
        %1625 = vmatpush1.msra.mxu0 0.0
        %1626 = vmatprep.subr.mxu0 0.0
        %1627 = vmatpush1.msra.mxu0 0.0
        %1628 = vmatprep.subr.mxu0 0.0
        %1629 = vmatpush1.msra.mxu0 0.0
        %1630 = vmatprep.mubr.f32.mxu0 0.0
        %1631 = vmatmul.mubr.f32.gmra.mrb[0].mxu0 %v556
        %v1632 = vpop.f32.mrb[0].mxu0
        %v1633 = vadd.f32 0.0, %v1632
        %v1634 = vpop.f32.mrb[0].mxu0
        %v1635 = vadd.f32 0.0, %v1634
        %1636 = vmatprep.mubr.f32.mxu0 0.0
        %1637 = vmatmul.mubr.f32.gmra.mrb[0].mxu0 %v559
        %v1638 = vpop.f32.mrb[0].mxu0
        %v1639 = vadd.f32 0.0, %v1638
        %v1640 = vpop.f32.mrb[0].mxu0
        %v1641 = vadd.f32 0.0, %v1640
        %1642 = vmatprep.mubr.f32.mxu0 0.0
        %1643 = vmatmul.mubr.f32.gmra.mrb[0].mxu0 %v562
        %v1644 = vpop.f32.mrb[0].mxu0
        %v1645 = vadd.f32 0.0, %v1644
        %v1646 = vpop.f32.mrb[0].mxu0
        %v1647 = vadd.f32 0.0, %v1646
        %1648 = vmatprep.mubr.f32.mxu0 0.0
        %1649 = vmatmul.mubr.f32.gmra.mrb[0].mxu0 %v565
        %v1650 = vpop.f32.mrb[0].mxu0
        %v1651 = vadd.f32 0.0, %v1650
        %v1652 = vpop.f32.mrb[0].mxu0
        %v1653 = vadd.f32 0.0, %v1652
        %1654 = vmatprep.mubr.f32.mxu0 0.0
        %1655 = vmatmul.mubr.f32.gmra.mrb[0].mxu0 %v568
        %v1656 = vpop.f32.mrb[0].mxu0
        %v1657 = vadd.f32 0.0, %v1656
        %v1658 = vpop.f32.mrb[0].mxu0
        %v1659 = vadd.f32 0.0, %v1658
        %1660 = vmatprep.mubr.f32.mxu0 0.0
        %1661 = vmatmul.mubr.f32.gmra.mrb[0].mxu0 %v571
        %v1662 = vpop.f32.mrb[0].mxu0
        %v1663 = vadd.f32 0.0, %v1662
        %v1664 = vpop.f32.mrb[0].mxu0
        %v1665 = vadd.f32 0.0, %v1664
        %1666 = vmatprep.mubr.f32.mxu0 0.0
        %1667 = vmatmul.mubr.f32.gmra.mrb[0].mxu0 %v574
        %v1668 = vpop.f32.mrb[0].mxu0
        %v1669 = vadd.f32 0.0, %v1668
        %v1670 = vpop.f32.mrb[0].mxu0
        %v1671 = vadd.f32 0.0, %v1670
        %1672 = vmatprep.mubr.f32.mxu0 0.0
        %1673 = vmatmul.mubr.f32.gmra.mrb[0].mxu0 %v577
        %v1674 = vpop.f32.mrb[0].mxu0
        %v1675 = vadd.f32 0.0, %v1674
        %v1676 = vpop.f32.mrb[0].mxu0
        %v1677 = vadd.f32 0.0, %v1676
        %1678 = vdwg.mxu0
        %s1679 = scalar_lea.vmem %s401, 512 [#allocation12]
        %1680 = vst [vmem:[%s1679] sm:$0xff] %v1633
        %1681 = vst [vmem:[%s1679 + $0x8] sm:$0xff] %v1635
        %1682 = vst [vmem:[%s1679 + $0x10] sm:$0xff] %v1639
        %1683 = vst [vmem:[%s1679 + $0x18] sm:$0xff] %v1641
        %1684 = vst [vmem:[%s1679 + $0x20] sm:$0xff] %v1645
        %1685 = vst [vmem:[%s1679 + $0x28] sm:$0xff] %v1647
        %1686 = vst [vmem:[%s1679 + $0x30] sm:$0xff] %v1651
        %1687 = vst [vmem:[%s1679 + $0x38] sm:$0xff] %v1653
        %1688 = vst [vmem:[%s1679 + $0x40] sm:$0xff] %v1657
        %1689 = vst [vmem:[%s1679 + $0x48] sm:$0xff] %v1659
        %1690 = vst [vmem:[%s1679 + $0x50] sm:$0xff] %v1663
        %1691 = vst [vmem:[%s1679 + $0x58] sm:$0xff] %v1665
        %1692 = vst [vmem:[%s1679 + $0x60] sm:$0xff] %v1669
        %1693 = vst [vmem:[%s1679 + $0x68] sm:$0xff] %v1671
        %1694 = vst [vmem:[%s1679 + $0x70] sm:$0xff] %v1675
        %1695 = vst [vmem:[%s1679 + $0x78] sm:$0xff] %v1677
        %v1696 = vld [vmem:[%s413] sm:$0xff]
        %v1697 = vld [vmem:[%s413 + $0x8] sm:$0xff]
        %s1698 = sld [smem:[#allocation6 + $0x280]]
        %v1699 = vstv %s1698
        %v1700 = vmul.f32 %v1696, %v1699
        %v1701 = vmul.f32 %v1697, %v1699
        %v1702 = vld [vmem:[%s440] sm:$0xff]
        %v1703 = vld [vmem:[%s440 + $0x8] sm:$0xff]
        %s1704 = sld [smem:[#allocation6 + $0x281]]
        %v1705 = vstv %s1704
        %v1706 = vmul.f32 %v1702, %v1705
        %v1707 = vmul.f32 %v1703, %v1705
        %v1708 = vadd.f32 %v1700, %v1706
        %v1709 = vadd.f32 %v1701, %v1707
        %v1710 = vld [vmem:[%s449] sm:$0xff]
        %v1711 = vld [vmem:[%s449 + $0x8] sm:$0xff]
        %s1712 = sld [smem:[#allocation6 + $0x282]]
        %v1713 = vstv %s1712
        %v1714 = vmul.f32 %v1710, %v1713
        %v1715 = vmul.f32 %v1711, %v1713
        %v1716 = vadd.f32 %v1708, %v1714
        %v1717 = vadd.f32 %v1709, %v1715
        %v1718 = vld [vmem:[%s458] sm:$0xff]
        %v1719 = vld [vmem:[%s458 + $0x8] sm:$0xff]
        %s1720 = sld [smem:[#allocation6 + $0x283]]
        %v1721 = vstv %s1720
        %v1722 = vmul.f32 %v1718, %v1721
        %v1723 = vmul.f32 %v1719, %v1721
        %v1724 = vadd.f32 %v1716, %v1722
        %v1725 = vadd.f32 %v1717, %v1723
        %s1726 = sld [smem:[#allocation7 + $0x5]]
        %v1727 = vstv %s1726
        %v1728 = vadd.f32 %v1724, %v1727
        %v1729 = vadd.f32 %v1725, %v1727
        %v1731 = vsel %vm471, %v1728, 0
        %v1734 = vsel %vm471, %v1729, 0
        %1736 = vmatprep.subr.mxu0 %v431
        %1737 = vmatpush1.msra.mxu0 %v430
        %1738 = vmatprep.subr.mxu0 %v433
        %1739 = vmatpush1.msra.mxu0 %v432
        %1740 = vmatprep.subr.mxu0 0.0
        %1741 = vmatpush1.msra.mxu0 0.0
        %1742 = vmatprep.subr.mxu0 0.0
        %1743 = vmatpush1.msra.mxu0 0.0
        %1744 = vmatprep.subr.mxu0 0.0
        %1745 = vmatpush1.msra.mxu0 0.0
        %1746 = vmatprep.subr.mxu0 0.0
        %1747 = vmatpush1.msra.mxu0 0.0
        %1748 = vmatprep.subr.mxu0 0.0
        %1749 = vmatpush1.msra.mxu0 0.0
        %1750 = vmatprep.subr.mxu0 0.0
        %1751 = vmatpush1.msra.mxu0 0.0
        %1752 = vmatprep.subr.mxu0 0.0
        %1753 = vmatpush1.msra.mxu0 0.0
        %1754 = vmatprep.subr.mxu0 0.0
        %1755 = vmatpush1.msra.mxu0 0.0
        %1756 = vmatprep.subr.mxu0 0.0
        %1757 = vmatpush1.msra.mxu0 0.0
        %1758 = vmatprep.subr.mxu0 0.0
        %1759 = vmatpush1.msra.mxu0 0.0
        %1760 = vmatprep.subr.mxu0 0.0
        %1761 = vmatpush1.msra.mxu0 0.0
        %1762 = vmatprep.subr.mxu0 0.0
        %1763 = vmatpush1.msra.mxu0 0.0
        %1764 = vmatprep.subr.mxu0 0.0
        %1765 = vmatpush1.msra.mxu0 0.0
        %1766 = vmatprep.subr.mxu0 0.0
        %1767 = vmatpush1.msra.mxu0 0.0
        %1768 = vmatprep.subr.mxu0 0.0
        %1769 = vmatpush1.msra.mxu0 0.0
        %1770 = vmatprep.subr.mxu0 0.0
        %1771 = vmatpush1.msra.mxu0 0.0
        %1772 = vmatprep.subr.mxu0 0.0
        %1773 = vmatpush1.msra.mxu0 0.0
        %1774 = vmatprep.subr.mxu0 0.0
        %1775 = vmatpush1.msra.mxu0 0.0
        %1776 = vmatprep.subr.mxu0 0.0
        %1777 = vmatpush1.msra.mxu0 0.0
        %1778 = vmatprep.subr.mxu0 0.0
        %1779 = vmatpush1.msra.mxu0 0.0
        %1780 = vmatprep.subr.mxu0 0.0
        %1781 = vmatpush1.msra.mxu0 0.0
        %1782 = vmatprep.subr.mxu0 0.0
        %1783 = vmatpush1.msra.mxu0 0.0
        %1784 = vmatprep.subr.mxu0 0.0
        %1785 = vmatpush1.msra.mxu0 0.0
        %1786 = vmatprep.subr.mxu0 0.0
        %1787 = vmatpush1.msra.mxu0 0.0
        %1788 = vmatprep.subr.mxu0 0.0
        %1789 = vmatpush1.msra.mxu0 0.0
        %1790 = vmatprep.subr.mxu0 0.0
        %1791 = vmatpush1.msra.mxu0 0.0
        %1792 = vmatprep.subr.mxu0 0.0
        %1793 = vmatpush1.msra.mxu0 0.0
        %1794 = vmatprep.subr.mxu0 0.0
        %1795 = vmatpush1.msra.mxu0 0.0
        %1796 = vmatprep.subr.mxu0 0.0
        %1797 = vmatpush1.msra.mxu0 0.0
        %1798 = vmatprep.subr.mxu0 0.0
        %1799 = vmatpush1.msra.mxu0 0.0
        %1800 = vmatprep.mubr.f32.mxu0 0.0
        %1801 = vmatmul.mubr.f32.gmra.mrb[0].mxu0 %v1731
        %v1802 = vpop.f32.mrb[0].mxu0
        %v1803 = vadd.f32 0.0, %v1802
        %v1804 = vpop.f32.mrb[0].mxu0
        %v1805 = vadd.f32 0.0, %v1804
        %1806 = vmatprep.mubr.f32.mxu0 0.0
        %1807 = vmatmul.mubr.f32.gmra.mrb[0].mxu0 %v1734
        %v1808 = vpop.f32.mrb[0].mxu0
        %v1809 = vadd.f32 0.0, %v1808
        %v1810 = vpop.f32.mrb[0].mxu0
        %v1811 = vadd.f32 0.0, %v1810
        %1812 = vdwg.mxu0
        %1813 = vmatprep.subr.mxu0 %v1805
        %1814 = vmatpush1.msra.mxu0 %v1803
        %1815 = vmatprep.subr.mxu0 %v1811
        %1816 = vmatpush1.msra.mxu0 %v1809
        %1817 = vmatprep.subr.mxu0 0.0
        %1818 = vmatpush1.msra.mxu0 0.0
        %1819 = vmatprep.subr.mxu0 0.0
        %1820 = vmatpush1.msra.mxu0 0.0
        %1821 = vmatprep.subr.mxu0 0.0
        %1822 = vmatpush1.msra.mxu0 0.0
        %1823 = vmatprep.subr.mxu0 0.0
        %1824 = vmatpush1.msra.mxu0 0.0
        %1825 = vmatprep.subr.mxu0 0.0
        %1826 = vmatpush1.msra.mxu0 0.0
        %1827 = vmatprep.subr.mxu0 0.0
        %1828 = vmatpush1.msra.mxu0 0.0
        %1829 = vmatprep.subr.mxu0 0.0
        %1830 = vmatpush1.msra.mxu0 0.0
        %1831 = vmatprep.subr.mxu0 0.0
        %1832 = vmatpush1.msra.mxu0 0.0
        %1833 = vmatprep.subr.mxu0 0.0
        %1834 = vmatpush1.msra.mxu0 0.0
        %1835 = vmatprep.subr.mxu0 0.0
        %1836 = vmatpush1.msra.mxu0 0.0
        %1837 = vmatprep.subr.mxu0 0.0
        %1838 = vmatpush1.msra.mxu0 0.0
        %1839 = vmatprep.subr.mxu0 0.0
        %1840 = vmatpush1.msra.mxu0 0.0
        %1841 = vmatprep.subr.mxu0 0.0
        %1842 = vmatpush1.msra.mxu0 0.0
        %1843 = vmatprep.subr.mxu0 0.0
        %1844 = vmatpush1.msra.mxu0 0.0
        %1845 = vmatprep.subr.mxu0 0.0
        %1846 = vmatpush1.msra.mxu0 0.0
        %1847 = vmatprep.subr.mxu0 0.0
        %1848 = vmatpush1.msra.mxu0 0.0
        %1849 = vmatprep.subr.mxu0 0.0
        %1850 = vmatpush1.msra.mxu0 0.0
        %1851 = vmatprep.subr.mxu0 0.0
        %1852 = vmatpush1.msra.mxu0 0.0
        %1853 = vmatprep.subr.mxu0 0.0
        %1854 = vmatpush1.msra.mxu0 0.0
        %1855 = vmatprep.subr.mxu0 0.0
        %1856 = vmatpush1.msra.mxu0 0.0
        %1857 = vmatprep.subr.mxu0 0.0
        %1858 = vmatpush1.msra.mxu0 0.0
        %1859 = vmatprep.subr.mxu0 0.0
        %1860 = vmatpush1.msra.mxu0 0.0
        %1861 = vmatprep.subr.mxu0 0.0
        %1862 = vmatpush1.msra.mxu0 0.0
        %1863 = vmatprep.subr.mxu0 0.0
        %1864 = vmatpush1.msra.mxu0 0.0
        %1865 = vmatprep.subr.mxu0 0.0
        %1866 = vmatpush1.msra.mxu0 0.0
        %1867 = vmatprep.subr.mxu0 0.0
        %1868 = vmatpush1.msra.mxu0 0.0
        %1869 = vmatprep.subr.mxu0 0.0
        %1870 = vmatpush1.msra.mxu0 0.0
        %1871 = vmatprep.subr.mxu0 0.0
        %1872 = vmatpush1.msra.mxu0 0.0
        %1873 = vmatprep.subr.mxu0 0.0
        %1874 = vmatpush1.msra.mxu0 0.0
        %1875 = vmatprep.subr.mxu0 0.0
        %1876 = vmatpush1.msra.mxu0 0.0
        %1877 = vmatprep.mubr.f32.mxu0 0.0
        %1878 = vmatmul.mubr.f32.gmra.mrb[0].mxu0 %v556
        %v1879 = vpop.f32.mrb[0].mxu0
        %v1880 = vadd.f32 0.0, %v1879
        %v1881 = vpop.f32.mrb[0].mxu0
        %v1882 = vadd.f32 0.0, %v1881
        %1883 = vmatprep.mubr.f32.mxu0 0.0
        %1884 = vmatmul.mubr.f32.gmra.mrb[0].mxu0 %v559
        %v1885 = vpop.f32.mrb[0].mxu0
        %v1886 = vadd.f32 0.0, %v1885
        %v1887 = vpop.f32.mrb[0].mxu0
        %v1888 = vadd.f32 0.0, %v1887
        %1889 = vmatprep.mubr.f32.mxu0 0.0
        %1890 = vmatmul.mubr.f32.gmra.mrb[0].mxu0 %v562
        %v1891 = vpop.f32.mrb[0].mxu0
        %v1892 = vadd.f32 0.0, %v1891
        %v1893 = vpop.f32.mrb[0].mxu0
        %v1894 = vadd.f32 0.0, %v1893
        %1895 = vmatprep.mubr.f32.mxu0 0.0
        %1896 = vmatmul.mubr.f32.gmra.mrb[0].mxu0 %v565
        %v1897 = vpop.f32.mrb[0].mxu0
        %v1898 = vadd.f32 0.0, %v1897
        %v1899 = vpop.f32.mrb[0].mxu0
        %v1900 = vadd.f32 0.0, %v1899
        %1901 = vmatprep.mubr.f32.mxu0 0.0
        %1902 = vmatmul.mubr.f32.gmra.mrb[0].mxu0 %v568
        %v1903 = vpop.f32.mrb[0].mxu0
        %v1904 = vadd.f32 0.0, %v1903
        %v1905 = vpop.f32.mrb[0].mxu0
        %v1906 = vadd.f32 0.0, %v1905
        %1907 = vmatprep.mubr.f32.mxu0 0.0
        %1908 = vmatmul.mubr.f32.gmra.mrb[0].mxu0 %v571
        %v1909 = vpop.f32.mrb[0].mxu0
        %v1910 = vadd.f32 0.0, %v1909
        %v1911 = vpop.f32.mrb[0].mxu0
        %v1912 = vadd.f32 0.0, %v1911
        %1913 = vmatprep.mubr.f32.mxu0 0.0
        %1914 = vmatmul.mubr.f32.gmra.mrb[0].mxu0 %v574
        %v1915 = vpop.f32.mrb[0].mxu0
        %v1916 = vadd.f32 0.0, %v1915
        %v1917 = vpop.f32.mrb[0].mxu0
        %v1918 = vadd.f32 0.0, %v1917
        %1919 = vmatprep.mubr.f32.mxu0 0.0
        %1920 = vmatmul.mubr.f32.gmra.mrb[0].mxu0 %v577
        %v1921 = vpop.f32.mrb[0].mxu0
        %v1922 = vadd.f32 0.0, %v1921
        %v1923 = vpop.f32.mrb[0].mxu0
        %v1924 = vadd.f32 0.0, %v1923
        %1925 = vdwg.mxu0
        %s1926 = scalar_lea.vmem %s401, 640 [#allocation12]
        %1927 = vst [vmem:[%s1926] sm:$0xff] %v1880
        %1928 = vst [vmem:[%s1926 + $0x8] sm:$0xff] %v1882
        %1929 = vst [vmem:[%s1926 + $0x10] sm:$0xff] %v1886
        %1930 = vst [vmem:[%s1926 + $0x18] sm:$0xff] %v1888
        %1931 = vst [vmem:[%s1926 + $0x20] sm:$0xff] %v1892
        %1932 = vst [vmem:[%s1926 + $0x28] sm:$0xff] %v1894
        %1933 = vst [vmem:[%s1926 + $0x30] sm:$0xff] %v1898
        %1934 = vst [vmem:[%s1926 + $0x38] sm:$0xff] %v1900
        %1935 = vst [vmem:[%s1926 + $0x40] sm:$0xff] %v1904
        %1936 = vst [vmem:[%s1926 + $0x48] sm:$0xff] %v1906
        %1937 = vst [vmem:[%s1926 + $0x50] sm:$0xff] %v1910
        %1938 = vst [vmem:[%s1926 + $0x58] sm:$0xff] %v1912
        %1939 = vst [vmem:[%s1926 + $0x60] sm:$0xff] %v1916
        %1940 = vst [vmem:[%s1926 + $0x68] sm:$0xff] %v1918
        %1941 = vst [vmem:[%s1926 + $0x70] sm:$0xff] %v1922
        %1942 = vst [vmem:[%s1926 + $0x78] sm:$0xff] %v1924
        %v1943 = vld [vmem:[%s413] sm:$0xff]
        %v1944 = vld [vmem:[%s413 + $0x8] sm:$0xff]
        %s1945 = sld [smem:[#allocation6 + $0x300]]
        %v1946 = vstv %s1945
        %v1947 = vmul.f32 %v1943, %v1946
        %v1948 = vmul.f32 %v1944, %v1946
        %v1949 = vld [vmem:[%s440] sm:$0xff]
        %v1950 = vld [vmem:[%s440 + $0x8] sm:$0xff]
        %s1951 = sld [smem:[#allocation6 + $0x301]]
        %v1952 = vstv %s1951
        %v1953 = vmul.f32 %v1949, %v1952
        %v1954 = vmul.f32 %v1950, %v1952
        %v1955 = vadd.f32 %v1947, %v1953
        %v1956 = vadd.f32 %v1948, %v1954
        %v1957 = vld [vmem:[%s449] sm:$0xff]
        %v1958 = vld [vmem:[%s449 + $0x8] sm:$0xff]
        %s1959 = sld [smem:[#allocation6 + $0x302]]
        %v1960 = vstv %s1959
        %v1961 = vmul.f32 %v1957, %v1960
        %v1962 = vmul.f32 %v1958, %v1960
        %v1963 = vadd.f32 %v1955, %v1961
        %v1964 = vadd.f32 %v1956, %v1962
        %v1965 = vld [vmem:[%s458] sm:$0xff]
        %v1966 = vld [vmem:[%s458 + $0x8] sm:$0xff]
        %s1967 = sld [smem:[#allocation6 + $0x303]]
        %v1968 = vstv %s1967
        %v1969 = vmul.f32 %v1965, %v1968
        %v1970 = vmul.f32 %v1966, %v1968
        %v1971 = vadd.f32 %v1963, %v1969
        %v1972 = vadd.f32 %v1964, %v1970
        %s1973 = sld [smem:[#allocation7 + $0x6]]
        %v1974 = vstv %s1973
        %v1975 = vadd.f32 %v1971, %v1974
        %v1976 = vadd.f32 %v1972, %v1974
        %v1978 = vsel %vm471, %v1975, 0
        %v1981 = vsel %vm471, %v1976, 0
        %1983 = vmatprep.subr.mxu0 %v431
        %1984 = vmatpush1.msra.mxu0 %v430
        %1985 = vmatprep.subr.mxu0 %v433
        %1986 = vmatpush1.msra.mxu0 %v432
        %1987 = vmatprep.subr.mxu0 0.0
        %1988 = vmatpush1.msra.mxu0 0.0
        %1989 = vmatprep.subr.mxu0 0.0
        %1990 = vmatpush1.msra.mxu0 0.0
        %1991 = vmatprep.subr.mxu0 0.0
        %1992 = vmatpush1.msra.mxu0 0.0
        %1993 = vmatprep.subr.mxu0 0.0
        %1994 = vmatpush1.msra.mxu0 0.0
        %1995 = vmatprep.subr.mxu0 0.0
        %1996 = vmatpush1.msra.mxu0 0.0
        %1997 = vmatprep.subr.mxu0 0.0
        %1998 = vmatpush1.msra.mxu0 0.0
        %1999 = vmatprep.subr.mxu0 0.0
        %2000 = vmatpush1.msra.mxu0 0.0
        %2001 = vmatprep.subr.mxu0 0.0
        %2002 = vmatpush1.msra.mxu0 0.0
        %2003 = vmatprep.subr.mxu0 0.0
        %2004 = vmatpush1.msra.mxu0 0.0
        %2005 = vmatprep.subr.mxu0 0.0
        %2006 = vmatpush1.msra.mxu0 0.0
        %2007 = vmatprep.subr.mxu0 0.0
        %2008 = vmatpush1.msra.mxu0 0.0
        %2009 = vmatprep.subr.mxu0 0.0
        %2010 = vmatpush1.msra.mxu0 0.0
        %2011 = vmatprep.subr.mxu0 0.0
        %2012 = vmatpush1.msra.mxu0 0.0
        %2013 = vmatprep.subr.mxu0 0.0
        %2014 = vmatpush1.msra.mxu0 0.0
        %2015 = vmatprep.subr.mxu0 0.0
        %2016 = vmatpush1.msra.mxu0 0.0
        %2017 = vmatprep.subr.mxu0 0.0
        %2018 = vmatpush1.msra.mxu0 0.0
        %2019 = vmatprep.subr.mxu0 0.0
        %2020 = vmatpush1.msra.mxu0 0.0
        %2021 = vmatprep.subr.mxu0 0.0
        %2022 = vmatpush1.msra.mxu0 0.0
        %2023 = vmatprep.subr.mxu0 0.0
        %2024 = vmatpush1.msra.mxu0 0.0
        %2025 = vmatprep.subr.mxu0 0.0
        %2026 = vmatpush1.msra.mxu0 0.0
        %2027 = vmatprep.subr.mxu0 0.0
        %2028 = vmatpush1.msra.mxu0 0.0
        %2029 = vmatprep.subr.mxu0 0.0
        %2030 = vmatpush1.msra.mxu0 0.0
        %2031 = vmatprep.subr.mxu0 0.0
        %2032 = vmatpush1.msra.mxu0 0.0
        %2033 = vmatprep.subr.mxu0 0.0
        %2034 = vmatpush1.msra.mxu0 0.0
        %2035 = vmatprep.subr.mxu0 0.0
        %2036 = vmatpush1.msra.mxu0 0.0
        %2037 = vmatprep.subr.mxu0 0.0
        %2038 = vmatpush1.msra.mxu0 0.0
        %2039 = vmatprep.subr.mxu0 0.0
        %2040 = vmatpush1.msra.mxu0 0.0
        %2041 = vmatprep.subr.mxu0 0.0
        %2042 = vmatpush1.msra.mxu0 0.0
        %2043 = vmatprep.subr.mxu0 0.0
        %2044 = vmatpush1.msra.mxu0 0.0
        %2045 = vmatprep.subr.mxu0 0.0
        %2046 = vmatpush1.msra.mxu0 0.0
        %2047 = vmatprep.mubr.f32.mxu0 0.0
        %2048 = vmatmul.mubr.f32.gmra.mrb[0].mxu0 %v1978
        %v2049 = vpop.f32.mrb[0].mxu0
        %v2050 = vadd.f32 0.0, %v2049
        %v2051 = vpop.f32.mrb[0].mxu0
        %v2052 = vadd.f32 0.0, %v2051
        %2053 = vmatprep.mubr.f32.mxu0 0.0
        %2054 = vmatmul.mubr.f32.gmra.mrb[0].mxu0 %v1981
        %v2055 = vpop.f32.mrb[0].mxu0
        %v2056 = vadd.f32 0.0, %v2055
        %v2057 = vpop.f32.mrb[0].mxu0
        %v2058 = vadd.f32 0.0, %v2057
        %2059 = vdwg.mxu0
        %2060 = vmatprep.subr.mxu0 %v2052
        %2061 = vmatpush1.msra.mxu0 %v2050
        %2062 = vmatprep.subr.mxu0 %v2058
        %2063 = vmatpush1.msra.mxu0 %v2056
        %2064 = vmatprep.subr.mxu0 0.0
        %2065 = vmatpush1.msra.mxu0 0.0
        %2066 = vmatprep.subr.mxu0 0.0
        %2067 = vmatpush1.msra.mxu0 0.0
        %2068 = vmatprep.subr.mxu0 0.0
        %2069 = vmatpush1.msra.mxu0 0.0
        %2070 = vmatprep.subr.mxu0 0.0
        %2071 = vmatpush1.msra.mxu0 0.0
        %2072 = vmatprep.subr.mxu0 0.0
        %2073 = vmatpush1.msra.mxu0 0.0
        %2074 = vmatprep.subr.mxu0 0.0
        %2075 = vmatpush1.msra.mxu0 0.0
        %2076 = vmatprep.subr.mxu0 0.0
        %2077 = vmatpush1.msra.mxu0 0.0
        %2078 = vmatprep.subr.mxu0 0.0
        %2079 = vmatpush1.msra.mxu0 0.0
        %2080 = vmatprep.subr.mxu0 0.0
        %2081 = vmatpush1.msra.mxu0 0.0
        %2082 = vmatprep.subr.mxu0 0.0
        %2083 = vmatpush1.msra.mxu0 0.0
        %2084 = vmatprep.subr.mxu0 0.0
        %2085 = vmatpush1.msra.mxu0 0.0
        %2086 = vmatprep.subr.mxu0 0.0
        %2087 = vmatpush1.msra.mxu0 0.0
        %2088 = vmatprep.subr.mxu0 0.0
        %2089 = vmatpush1.msra.mxu0 0.0
        %2090 = vmatprep.subr.mxu0 0.0
        %2091 = vmatpush1.msra.mxu0 0.0
        %2092 = vmatprep.subr.mxu0 0.0
        %2093 = vmatpush1.msra.mxu0 0.0
        %2094 = vmatprep.subr.mxu0 0.0
        %2095 = vmatpush1.msra.mxu0 0.0
        %2096 = vmatprep.subr.mxu0 0.0
        %2097 = vmatpush1.msra.mxu0 0.0
        %2098 = vmatprep.subr.mxu0 0.0
        %2099 = vmatpush1.msra.mxu0 0.0
        %2100 = vmatprep.subr.mxu0 0.0
        %2101 = vmatpush1.msra.mxu0 0.0
        %2102 = vmatprep.subr.mxu0 0.0
        %2103 = vmatpush1.msra.mxu0 0.0
        %2104 = vmatprep.subr.mxu0 0.0
        %2105 = vmatpush1.msra.mxu0 0.0
        %2106 = vmatprep.subr.mxu0 0.0
        %2107 = vmatpush1.msra.mxu0 0.0
        %2108 = vmatprep.subr.mxu0 0.0
        %2109 = vmatpush1.msra.mxu0 0.0
        %2110 = vmatprep.subr.mxu0 0.0
        %2111 = vmatpush1.msra.mxu0 0.0
        %2112 = vmatprep.subr.mxu0 0.0
        %2113 = vmatpush1.msra.mxu0 0.0
        %2114 = vmatprep.subr.mxu0 0.0
        %2115 = vmatpush1.msra.mxu0 0.0
        %2116 = vmatprep.subr.mxu0 0.0
        %2117 = vmatpush1.msra.mxu0 0.0
        %2118 = vmatprep.subr.mxu0 0.0
        %2119 = vmatpush1.msra.mxu0 0.0
        %2120 = vmatprep.subr.mxu0 0.0
        %2121 = vmatpush1.msra.mxu0 0.0
        %2122 = vmatprep.subr.mxu0 0.0
        %2123 = vmatpush1.msra.mxu0 0.0
        %2124 = vmatprep.mubr.f32.mxu0 0.0
        %2125 = vmatmul.mubr.f32.gmra.mrb[0].mxu0 %v556
        %v2126 = vpop.f32.mrb[0].mxu0
        %v2127 = vadd.f32 0.0, %v2126
        %v2128 = vpop.f32.mrb[0].mxu0
        %v2129 = vadd.f32 0.0, %v2128
        %2130 = vmatprep.mubr.f32.mxu0 0.0
        %2131 = vmatmul.mubr.f32.gmra.mrb[0].mxu0 %v559
        %v2132 = vpop.f32.mrb[0].mxu0
        %v2133 = vadd.f32 0.0, %v2132
        %v2134 = vpop.f32.mrb[0].mxu0
        %v2135 = vadd.f32 0.0, %v2134
        %2136 = vmatprep.mubr.f32.mxu0 0.0
        %2137 = vmatmul.mubr.f32.gmra.mrb[0].mxu0 %v562
        %v2138 = vpop.f32.mrb[0].mxu0
        %v2139 = vadd.f32 0.0, %v2138
        %v2140 = vpop.f32.mrb[0].mxu0
        %v2141 = vadd.f32 0.0, %v2140
        %2142 = vmatprep.mubr.f32.mxu0 0.0
        %2143 = vmatmul.mubr.f32.gmra.mrb[0].mxu0 %v565
        %v2144 = vpop.f32.mrb[0].mxu0
        %v2145 = vadd.f32 0.0, %v2144
        %v2146 = vpop.f32.mrb[0].mxu0
        %v2147 = vadd.f32 0.0, %v2146
        %2148 = vmatprep.mubr.f32.mxu0 0.0
        %2149 = vmatmul.mubr.f32.gmra.mrb[0].mxu0 %v568
        %v2150 = vpop.f32.mrb[0].mxu0
        %v2151 = vadd.f32 0.0, %v2150
        %v2152 = vpop.f32.mrb[0].mxu0
        %v2153 = vadd.f32 0.0, %v2152
        %2154 = vmatprep.mubr.f32.mxu0 0.0
        %2155 = vmatmul.mubr.f32.gmra.mrb[0].mxu0 %v571
        %v2156 = vpop.f32.mrb[0].mxu0
        %v2157 = vadd.f32 0.0, %v2156
        %v2158 = vpop.f32.mrb[0].mxu0
        %v2159 = vadd.f32 0.0, %v2158
        %2160 = vmatprep.mubr.f32.mxu0 0.0
        %2161 = vmatmul.mubr.f32.gmra.mrb[0].mxu0 %v574
        %v2162 = vpop.f32.mrb[0].mxu0
        %v2163 = vadd.f32 0.0, %v2162
        %v2164 = vpop.f32.mrb[0].mxu0
        %v2165 = vadd.f32 0.0, %v2164
        %2166 = vmatprep.mubr.f32.mxu0 0.0
        %2167 = vmatmul.mubr.f32.gmra.mrb[0].mxu0 %v577
        %v2168 = vpop.f32.mrb[0].mxu0
        %v2169 = vadd.f32 0.0, %v2168
        %v2170 = vpop.f32.mrb[0].mxu0
        %v2171 = vadd.f32 0.0, %v2170
        %2172 = vdwg.mxu0
        %s2173 = scalar_lea.vmem %s401, 768 [#allocation12]
        %2174 = vst [vmem:[%s2173] sm:$0xff] %v2127
        %2175 = vst [vmem:[%s2173 + $0x8] sm:$0xff] %v2129
        %2176 = vst [vmem:[%s2173 + $0x10] sm:$0xff] %v2133
        %2177 = vst [vmem:[%s2173 + $0x18] sm:$0xff] %v2135
        %2178 = vst [vmem:[%s2173 + $0x20] sm:$0xff] %v2139
        %2179 = vst [vmem:[%s2173 + $0x28] sm:$0xff] %v2141
        %2180 = vst [vmem:[%s2173 + $0x30] sm:$0xff] %v2145
        %2181 = vst [vmem:[%s2173 + $0x38] sm:$0xff] %v2147
        %2182 = vst [vmem:[%s2173 + $0x40] sm:$0xff] %v2151
        %2183 = vst [vmem:[%s2173 + $0x48] sm:$0xff] %v2153
        %2184 = vst [vmem:[%s2173 + $0x50] sm:$0xff] %v2157
        %2185 = vst [vmem:[%s2173 + $0x58] sm:$0xff] %v2159
        %2186 = vst [vmem:[%s2173 + $0x60] sm:$0xff] %v2163
        %2187 = vst [vmem:[%s2173 + $0x68] sm:$0xff] %v2165
        %2188 = vst [vmem:[%s2173 + $0x70] sm:$0xff] %v2169
        %2189 = vst [vmem:[%s2173 + $0x78] sm:$0xff] %v2171
        %v2190 = vld [vmem:[%s413] sm:$0xff]
        %v2191 = vld [vmem:[%s413 + $0x8] sm:$0xff]
        %s2192 = sld [smem:[#allocation6 + $0x380]]
        %v2193 = vstv %s2192
        %v2194 = vmul.f32 %v2190, %v2193
        %v2195 = vmul.f32 %v2191, %v2193
        %v2196 = vld [vmem:[%s440] sm:$0xff]
        %v2197 = vld [vmem:[%s440 + $0x8] sm:$0xff]
        %s2198 = sld [smem:[#allocation6 + $0x381]]
        %v2199 = vstv %s2198
        %v2200 = vmul.f32 %v2196, %v2199
        %v2201 = vmul.f32 %v2197, %v2199
        %v2202 = vadd.f32 %v2194, %v2200
        %v2203 = vadd.f32 %v2195, %v2201
        %v2204 = vld [vmem:[%s449] sm:$0xff]
        %v2205 = vld [vmem:[%s449 + $0x8] sm:$0xff]
        %s2206 = sld [smem:[#allocation6 + $0x382]]
        %v2207 = vstv %s2206
        %v2208 = vmul.f32 %v2204, %v2207
        %v2209 = vmul.f32 %v2205, %v2207
        %v2210 = vadd.f32 %v2202, %v2208
        %v2211 = vadd.f32 %v2203, %v2209
        %v2212 = vld [vmem:[%s458] sm:$0xff]
        %v2213 = vld [vmem:[%s458 + $0x8] sm:$0xff]
        %s2214 = sld [smem:[#allocation6 + $0x383]]
        %v2215 = vstv %s2214
        %v2216 = vmul.f32 %v2212, %v2215
        %v2217 = vmul.f32 %v2213, %v2215
        %v2218 = vadd.f32 %v2210, %v2216
        %v2219 = vadd.f32 %v2211, %v2217
        %s2220 = sld [smem:[#allocation7 + $0x7]]
        %v2221 = vstv %s2220
        %v2222 = vadd.f32 %v2218, %v2221
        %v2223 = vadd.f32 %v2219, %v2221
        %v2225 = vsel %vm471, %v2222, 0
        %v2228 = vsel %vm471, %v2223, 0
        %2230 = vmatprep.subr.mxu0 %v431
        %2231 = vmatpush1.msra.mxu0 %v430
        %2232 = vmatprep.subr.mxu0 %v433
        %2233 = vmatpush1.msra.mxu0 %v432
        %2234 = vmatprep.subr.mxu0 0.0
        %2235 = vmatpush1.msra.mxu0 0.0
        %2236 = vmatprep.subr.mxu0 0.0
        %2237 = vmatpush1.msra.mxu0 0.0
        %2238 = vmatprep.subr.mxu0 0.0
        %2239 = vmatpush1.msra.mxu0 0.0
        %2240 = vmatprep.subr.mxu0 0.0
        %2241 = vmatpush1.msra.mxu0 0.0
        %2242 = vmatprep.subr.mxu0 0.0
        %2243 = vmatpush1.msra.mxu0 0.0
        %2244 = vmatprep.subr.mxu0 0.0
        %2245 = vmatpush1.msra.mxu0 0.0
        %2246 = vmatprep.subr.mxu0 0.0
        %2247 = vmatpush1.msra.mxu0 0.0
        %2248 = vmatprep.subr.mxu0 0.0
        %2249 = vmatpush1.msra.mxu0 0.0
        %2250 = vmatprep.subr.mxu0 0.0
        %2251 = vmatpush1.msra.mxu0 0.0
        %2252 = vmatprep.subr.mxu0 0.0
        %2253 = vmatpush1.msra.mxu0 0.0
        %2254 = vmatprep.subr.mxu0 0.0
        %2255 = vmatpush1.msra.mxu0 0.0
        %2256 = vmatprep.subr.mxu0 0.0
        %2257 = vmatpush1.msra.mxu0 0.0
        %2258 = vmatprep.subr.mxu0 0.0
        %2259 = vmatpush1.msra.mxu0 0.0
        %2260 = vmatprep.subr.mxu0 0.0
        %2261 = vmatpush1.msra.mxu0 0.0
        %2262 = vmatprep.subr.mxu0 0.0
        %2263 = vmatpush1.msra.mxu0 0.0
        %2264 = vmatprep.subr.mxu0 0.0
        %2265 = vmatpush1.msra.mxu0 0.0
        %2266 = vmatprep.subr.mxu0 0.0
        %2267 = vmatpush1.msra.mxu0 0.0
        %2268 = vmatprep.subr.mxu0 0.0
        %2269 = vmatpush1.msra.mxu0 0.0
        %2270 = vmatprep.subr.mxu0 0.0
        %2271 = vmatpush1.msra.mxu0 0.0
        %2272 = vmatprep.subr.mxu0 0.0
        %2273 = vmatpush1.msra.mxu0 0.0
        %2274 = vmatprep.subr.mxu0 0.0
        %2275 = vmatpush1.msra.mxu0 0.0
        %2276 = vmatprep.subr.mxu0 0.0
        %2277 = vmatpush1.msra.mxu0 0.0
        %2278 = vmatprep.subr.mxu0 0.0
        %2279 = vmatpush1.msra.mxu0 0.0
        %2280 = vmatprep.subr.mxu0 0.0
        %2281 = vmatpush1.msra.mxu0 0.0
        %2282 = vmatprep.subr.mxu0 0.0
        %2283 = vmatpush1.msra.mxu0 0.0
        %2284 = vmatprep.subr.mxu0 0.0
        %2285 = vmatpush1.msra.mxu0 0.0
        %2286 = vmatprep.subr.mxu0 0.0
        %2287 = vmatpush1.msra.mxu0 0.0
        %2288 = vmatprep.subr.mxu0 0.0
        %2289 = vmatpush1.msra.mxu0 0.0
        %2290 = vmatprep.subr.mxu0 0.0
        %2291 = vmatpush1.msra.mxu0 0.0
        %2292 = vmatprep.subr.mxu0 0.0
        %2293 = vmatpush1.msra.mxu0 0.0
        %2294 = vmatprep.mubr.f32.mxu0 0.0
        %2295 = vmatmul.mubr.f32.gmra.mrb[0].mxu0 %v2225
        %v2296 = vpop.f32.mrb[0].mxu0
        %v2297 = vadd.f32 0.0, %v2296
        %v2298 = vpop.f32.mrb[0].mxu0
        %v2299 = vadd.f32 0.0, %v2298
        %2300 = vmatprep.mubr.f32.mxu0 0.0
        %2301 = vmatmul.mubr.f32.gmra.mrb[0].mxu0 %v2228
        %v2302 = vpop.f32.mrb[0].mxu0
        %v2303 = vadd.f32 0.0, %v2302
        %v2304 = vpop.f32.mrb[0].mxu0
        %v2305 = vadd.f32 0.0, %v2304
        %2306 = vdwg.mxu0
        %2307 = vmatprep.subr.mxu0 %v2299
        %2308 = vmatpush1.msra.mxu0 %v2297
        %2309 = vmatprep.subr.mxu0 %v2305
        %2310 = vmatpush1.msra.mxu0 %v2303
        %2311 = vmatprep.subr.mxu0 0.0
        %2312 = vmatpush1.msra.mxu0 0.0
        %2313 = vmatprep.subr.mxu0 0.0
        %2314 = vmatpush1.msra.mxu0 0.0
        %2315 = vmatprep.subr.mxu0 0.0
        %2316 = vmatpush1.msra.mxu0 0.0
        %2317 = vmatprep.subr.mxu0 0.0
        %2318 = vmatpush1.msra.mxu0 0.0
        %2319 = vmatprep.subr.mxu0 0.0
        %2320 = vmatpush1.msra.mxu0 0.0
        %2321 = vmatprep.subr.mxu0 0.0
        %2322 = vmatpush1.msra.mxu0 0.0
        %2323 = vmatprep.subr.mxu0 0.0
        %2324 = vmatpush1.msra.mxu0 0.0
        %2325 = vmatprep.subr.mxu0 0.0
        %2326 = vmatpush1.msra.mxu0 0.0
        %2327 = vmatprep.subr.mxu0 0.0
        %2328 = vmatpush1.msra.mxu0 0.0
        %2329 = vmatprep.subr.mxu0 0.0
        %2330 = vmatpush1.msra.mxu0 0.0
        %2331 = vmatprep.subr.mxu0 0.0
        %2332 = vmatpush1.msra.mxu0 0.0
        %2333 = vmatprep.subr.mxu0 0.0
        %2334 = vmatpush1.msra.mxu0 0.0
        %2335 = vmatprep.subr.mxu0 0.0
        %2336 = vmatpush1.msra.mxu0 0.0
        %2337 = vmatprep.subr.mxu0 0.0
        %2338 = vmatpush1.msra.mxu0 0.0
        %2339 = vmatprep.subr.mxu0 0.0
        %2340 = vmatpush1.msra.mxu0 0.0
        %2341 = vmatprep.subr.mxu0 0.0
        %2342 = vmatpush1.msra.mxu0 0.0
        %2343 = vmatprep.subr.mxu0 0.0
        %2344 = vmatpush1.msra.mxu0 0.0
        %2345 = vmatprep.subr.mxu0 0.0
        %2346 = vmatpush1.msra.mxu0 0.0
        %2347 = vmatprep.subr.mxu0 0.0
        %2348 = vmatpush1.msra.mxu0 0.0
        %2349 = vmatprep.subr.mxu0 0.0
        %2350 = vmatpush1.msra.mxu0 0.0
        %2351 = vmatprep.subr.mxu0 0.0
        %2352 = vmatpush1.msra.mxu0 0.0
        %2353 = vmatprep.subr.mxu0 0.0
        %2354 = vmatpush1.msra.mxu0 0.0
        %2355 = vmatprep.subr.mxu0 0.0
        %2356 = vmatpush1.msra.mxu0 0.0
        %2357 = vmatprep.subr.mxu0 0.0
        %2358 = vmatpush1.msra.mxu0 0.0
        %2359 = vmatprep.subr.mxu0 0.0
        %2360 = vmatpush1.msra.mxu0 0.0
        %2361 = vmatprep.subr.mxu0 0.0
        %2362 = vmatpush1.msra.mxu0 0.0
        %2363 = vmatprep.subr.mxu0 0.0
        %2364 = vmatpush1.msra.mxu0 0.0
        %2365 = vmatprep.subr.mxu0 0.0
        %2366 = vmatpush1.msra.mxu0 0.0
        %2367 = vmatprep.subr.mxu0 0.0
        %2368 = vmatpush1.msra.mxu0 0.0
        %2369 = vmatprep.subr.mxu0 0.0
        %2370 = vmatpush1.msra.mxu0 0.0
        %2371 = vmatprep.mubr.f32.mxu0 0.0
        %2372 = vmatmul.mubr.f32.gmra.mrb[0].mxu0 %v556
        %v2373 = vpop.f32.mrb[0].mxu0
        %v2374 = vadd.f32 0.0, %v2373
        %v2375 = vpop.f32.mrb[0].mxu0
        %v2376 = vadd.f32 0.0, %v2375
        %2377 = vmatprep.mubr.f32.mxu0 0.0
        %2378 = vmatmul.mubr.f32.gmra.mrb[0].mxu0 %v559
        %v2379 = vpop.f32.mrb[0].mxu0
        %v2380 = vadd.f32 0.0, %v2379
        %v2381 = vpop.f32.mrb[0].mxu0
        %v2382 = vadd.f32 0.0, %v2381
        %2383 = vmatprep.mubr.f32.mxu0 0.0
        %2384 = vmatmul.mubr.f32.gmra.mrb[0].mxu0 %v562
        %v2385 = vpop.f32.mrb[0].mxu0
        %v2386 = vadd.f32 0.0, %v2385
        %v2387 = vpop.f32.mrb[0].mxu0
        %v2388 = vadd.f32 0.0, %v2387
        %2389 = vmatprep.mubr.f32.mxu0 0.0
        %2390 = vmatmul.mubr.f32.gmra.mrb[0].mxu0 %v565
        %v2391 = vpop.f32.mrb[0].mxu0
        %v2392 = vadd.f32 0.0, %v2391
        %v2393 = vpop.f32.mrb[0].mxu0
        %v2394 = vadd.f32 0.0, %v2393
        %2395 = vmatprep.mubr.f32.mxu0 0.0
        %2396 = vmatmul.mubr.f32.gmra.mrb[0].mxu0 %v568
        %v2397 = vpop.f32.mrb[0].mxu0
        %v2398 = vadd.f32 0.0, %v2397
        %v2399 = vpop.f32.mrb[0].mxu0
        %v2400 = vadd.f32 0.0, %v2399
        %2401 = vmatprep.mubr.f32.mxu0 0.0
        %2402 = vmatmul.mubr.f32.gmra.mrb[0].mxu0 %v571
        %v2403 = vpop.f32.mrb[0].mxu0
        %v2404 = vadd.f32 0.0, %v2403
        %v2405 = vpop.f32.mrb[0].mxu0
        %v2406 = vadd.f32 0.0, %v2405
        %2407 = vmatprep.mubr.f32.mxu0 0.0
        %2408 = vmatmul.mubr.f32.gmra.mrb[0].mxu0 %v574
        %v2409 = vpop.f32.mrb[0].mxu0
        %v2410 = vadd.f32 0.0, %v2409
        %v2411 = vpop.f32.mrb[0].mxu0
        %v2412 = vadd.f32 0.0, %v2411
        %2413 = vmatprep.mubr.f32.mxu0 0.0
        %2414 = vmatmul.mubr.f32.gmra.mrb[0].mxu0 %v577
        %v2415 = vpop.f32.mrb[0].mxu0
        %v2416 = vadd.f32 0.0, %v2415
        %v2417 = vpop.f32.mrb[0].mxu0
        %v2418 = vadd.f32 0.0, %v2417
        %2419 = vdwg.mxu0
        %s2420 = scalar_lea.vmem %s401, 896 [#allocation12]
        %2421 = vst [vmem:[%s2420] sm:$0xff] %v2374
        %2422 = vst [vmem:[%s2420 + $0x8] sm:$0xff] %v2376
        %2423 = vst [vmem:[%s2420 + $0x10] sm:$0xff] %v2380
        %2424 = vst [vmem:[%s2420 + $0x18] sm:$0xff] %v2382
        %2425 = vst [vmem:[%s2420 + $0x20] sm:$0xff] %v2386
        %2426 = vst [vmem:[%s2420 + $0x28] sm:$0xff] %v2388
        %2427 = vst [vmem:[%s2420 + $0x30] sm:$0xff] %v2392
        %2428 = vst [vmem:[%s2420 + $0x38] sm:$0xff] %v2394
        %2429 = vst [vmem:[%s2420 + $0x40] sm:$0xff] %v2398
        %2430 = vst [vmem:[%s2420 + $0x48] sm:$0xff] %v2400
        %2431 = vst [vmem:[%s2420 + $0x50] sm:$0xff] %v2404
        %2432 = vst [vmem:[%s2420 + $0x58] sm:$0xff] %v2406
        %2433 = vst [vmem:[%s2420 + $0x60] sm:$0xff] %v2410
        %2434 = vst [vmem:[%s2420 + $0x68] sm:$0xff] %v2412
        %2435 = vst [vmem:[%s2420 + $0x70] sm:$0xff] %v2416
        %2436 = vst [vmem:[%s2420 + $0x78] sm:$0xff] %v2418
        %v2437 = vld [vmem:[%s401] sm:$0xff]
        %v2438 = vld [vmem:[%s401 + $0x8] sm:$0xff]
        %v2439 = vld [vmem:[%s401 + $0x10] sm:$0xff]
        %v2440 = vld [vmem:[%s401 + $0x18] sm:$0xff]
        %v2441 = vld [vmem:[%s401 + $0x20] sm:$0xff]
        %v2442 = vld [vmem:[%s401 + $0x28] sm:$0xff]
        %v2443 = vld [vmem:[%s401 + $0x30] sm:$0xff]
        %v2444 = vld [vmem:[%s401 + $0x38] sm:$0xff]
        %v2445 = vld [vmem:[%s401 + $0x40] sm:$0xff]
        %v2446 = vld [vmem:[%s401 + $0x48] sm:$0xff]
        %v2447 = vld [vmem:[%s401 + $0x50] sm:$0xff]
        %v2448 = vld [vmem:[%s401 + $0x58] sm:$0xff]
        %v2449 = vld [vmem:[%s401 + $0x60] sm:$0xff]
        %v2450 = vld [vmem:[%s401 + $0x68] sm:$0xff]
        %v2451 = vld [vmem:[%s401 + $0x70] sm:$0xff]
        %v2452 = vld [vmem:[%s401 + $0x78] sm:$0xff]
        %s2453 = sld [smem:[#allocation9]]
        %v2454 = vstv %s2453
        %v2455 = vmul.f32 %v2437, %v2454
        %v2456 = vmul.f32 %v2438, %v2454
        %v2457 = vmul.f32 %v2439, %v2454
        %v2458 = vmul.f32 %v2440, %v2454
        %v2459 = vmul.f32 %v2441, %v2454
        %v2460 = vmul.f32 %v2442, %v2454
        %v2461 = vmul.f32 %v2443, %v2454
        %v2462 = vmul.f32 %v2444, %v2454
        %v2463 = vmul.f32 %v2445, %v2454
        %v2464 = vmul.f32 %v2446, %v2454
        %v2465 = vmul.f32 %v2447, %v2454
        %v2466 = vmul.f32 %v2448, %v2454
        %v2467 = vmul.f32 %v2449, %v2454
        %v2468 = vmul.f32 %v2450, %v2454
        %v2469 = vmul.f32 %v2451, %v2454
        %v2470 = vmul.f32 %v2452, %v2454
        %v2471 = vld [vmem:[%s938] sm:$0xff]
        %v2472 = vld [vmem:[%s938 + $0x8] sm:$0xff]
        %v2473 = vld [vmem:[%s938 + $0x10] sm:$0xff]
        %v2474 = vld [vmem:[%s938 + $0x18] sm:$0xff]
        %v2475 = vld [vmem:[%s938 + $0x20] sm:$0xff]
        %v2476 = vld [vmem:[%s938 + $0x28] sm:$0xff]
        %v2477 = vld [vmem:[%s938 + $0x30] sm:$0xff]
        %v2478 = vld [vmem:[%s938 + $0x38] sm:$0xff]
        %v2479 = vld [vmem:[%s938 + $0x40] sm:$0xff]
        %v2480 = vld [vmem:[%s938 + $0x48] sm:$0xff]
        %v2481 = vld [vmem:[%s938 + $0x50] sm:$0xff]
        %v2482 = vld [vmem:[%s938 + $0x58] sm:$0xff]
        %v2483 = vld [vmem:[%s938 + $0x60] sm:$0xff]
        %v2484 = vld [vmem:[%s938 + $0x68] sm:$0xff]
        %v2485 = vld [vmem:[%s938 + $0x70] sm:$0xff]
        %v2486 = vld [vmem:[%s938 + $0x78] sm:$0xff]
        %s2487 = sld [smem:[#allocation9 + $0x1]]
        %v2488 = vstv %s2487
        %v2489 = vmul.f32 %v2471, %v2488
        %v2490 = vmul.f32 %v2472, %v2488
        %v2491 = vmul.f32 %v2473, %v2488
        %v2492 = vmul.f32 %v2474, %v2488
        %v2493 = vmul.f32 %v2475, %v2488
        %v2494 = vmul.f32 %v2476, %v2488
        %v2495 = vmul.f32 %v2477, %v2488
        %v2496 = vmul.f32 %v2478, %v2488
        %v2497 = vmul.f32 %v2479, %v2488
        %v2498 = vmul.f32 %v2480, %v2488
        %v2499 = vmul.f32 %v2481, %v2488
        %v2500 = vmul.f32 %v2482, %v2488
        %v2501 = vmul.f32 %v2483, %v2488
        %v2502 = vmul.f32 %v2484, %v2488
        %v2503 = vmul.f32 %v2485, %v2488
        %v2504 = vmul.f32 %v2486, %v2488
        %v2505 = vadd.f32 %v2455, %v2489
        %v2506 = vadd.f32 %v2456, %v2490
        %v2507 = vadd.f32 %v2457, %v2491
        %v2508 = vadd.f32 %v2458, %v2492
        %v2509 = vadd.f32 %v2459, %v2493
        %v2510 = vadd.f32 %v2460, %v2494
        %v2511 = vadd.f32 %v2461, %v2495
        %v2512 = vadd.f32 %v2462, %v2496
        %v2513 = vadd.f32 %v2463, %v2497
        %v2514 = vadd.f32 %v2464, %v2498
        %v2515 = vadd.f32 %v2465, %v2499
        %v2516 = vadd.f32 %v2466, %v2500
        %v2517 = vadd.f32 %v2467, %v2501
        %v2518 = vadd.f32 %v2468, %v2502
        %v2519 = vadd.f32 %v2469, %v2503
        %v2520 = vadd.f32 %v2470, %v2504
        %v2521 = vld [vmem:[%s1185] sm:$0xff]
        %v2522 = vld [vmem:[%s1185 + $0x8] sm:$0xff]
        %v2523 = vld [vmem:[%s1185 + $0x10] sm:$0xff]
        %v2524 = vld [vmem:[%s1185 + $0x18] sm:$0xff]
        %v2525 = vld [vmem:[%s1185 + $0x20] sm:$0xff]
        %v2526 = vld [vmem:[%s1185 + $0x28] sm:$0xff]
        %v2527 = vld [vmem:[%s1185 + $0x30] sm:$0xff]
        %v2528 = vld [vmem:[%s1185 + $0x38] sm:$0xff]
        %v2529 = vld [vmem:[%s1185 + $0x40] sm:$0xff]
        %v2530 = vld [vmem:[%s1185 + $0x48] sm:$0xff]
        %v2531 = vld [vmem:[%s1185 + $0x50] sm:$0xff]
        %v2532 = vld [vmem:[%s1185 + $0x58] sm:$0xff]
        %v2533 = vld [vmem:[%s1185 + $0x60] sm:$0xff]
        %v2534 = vld [vmem:[%s1185 + $0x68] sm:$0xff]
        %v2535 = vld [vmem:[%s1185 + $0x70] sm:$0xff]
        %v2536 = vld [vmem:[%s1185 + $0x78] sm:$0xff]
        %s2537 = sld [smem:[#allocation9 + $0x2]]
        %v2538 = vstv %s2537
        %v2539 = vmul.f32 %v2521, %v2538
        %v2540 = vmul.f32 %v2522, %v2538
        %v2541 = vmul.f32 %v2523, %v2538
        %v2542 = vmul.f32 %v2524, %v2538
        %v2543 = vmul.f32 %v2525, %v2538
        %v2544 = vmul.f32 %v2526, %v2538
        %v2545 = vmul.f32 %v2527, %v2538
        %v2546 = vmul.f32 %v2528, %v2538
        %v2547 = vmul.f32 %v2529, %v2538
        %v2548 = vmul.f32 %v2530, %v2538
        %v2549 = vmul.f32 %v2531, %v2538
        %v2550 = vmul.f32 %v2532, %v2538
        %v2551 = vmul.f32 %v2533, %v2538
        %v2552 = vmul.f32 %v2534, %v2538
        %v2553 = vmul.f32 %v2535, %v2538
        %v2554 = vmul.f32 %v2536, %v2538
        %v2555 = vadd.f32 %v2505, %v2539
        %v2556 = vadd.f32 %v2506, %v2540
        %v2557 = vadd.f32 %v2507, %v2541
        %v2558 = vadd.f32 %v2508, %v2542
        %v2559 = vadd.f32 %v2509, %v2543
        %v2560 = vadd.f32 %v2510, %v2544
        %v2561 = vadd.f32 %v2511, %v2545
        %v2562 = vadd.f32 %v2512, %v2546
        %v2563 = vadd.f32 %v2513, %v2547
        %v2564 = vadd.f32 %v2514, %v2548
        %v2565 = vadd.f32 %v2515, %v2549
        %v2566 = vadd.f32 %v2516, %v2550
        %v2567 = vadd.f32 %v2517, %v2551
        %v2568 = vadd.f32 %v2518, %v2552
        %v2569 = vadd.f32 %v2519, %v2553
        %v2570 = vadd.f32 %v2520, %v2554
        %v2571 = vld [vmem:[%s1432] sm:$0xff]
        %v2572 = vld [vmem:[%s1432 + $0x8] sm:$0xff]
        %v2573 = vld [vmem:[%s1432 + $0x10] sm:$0xff]
        %v2574 = vld [vmem:[%s1432 + $0x18] sm:$0xff]
        %v2575 = vld [vmem:[%s1432 + $0x20] sm:$0xff]
        %v2576 = vld [vmem:[%s1432 + $0x28] sm:$0xff]
        %v2577 = vld [vmem:[%s1432 + $0x30] sm:$0xff]
        %v2578 = vld [vmem:[%s1432 + $0x38] sm:$0xff]
        %v2579 = vld [vmem:[%s1432 + $0x40] sm:$0xff]
        %v2580 = vld [vmem:[%s1432 + $0x48] sm:$0xff]
        %v2581 = vld [vmem:[%s1432 + $0x50] sm:$0xff]
        %v2582 = vld [vmem:[%s1432 + $0x58] sm:$0xff]
        %v2583 = vld [vmem:[%s1432 + $0x60] sm:$0xff]
        %v2584 = vld [vmem:[%s1432 + $0x68] sm:$0xff]
        %v2585 = vld [vmem:[%s1432 + $0x70] sm:$0xff]
        %v2586 = vld [vmem:[%s1432 + $0x78] sm:$0xff]
        %s2587 = sld [smem:[#allocation9 + $0x3]]
        %v2588 = vstv %s2587
        %v2589 = vmul.f32 %v2571, %v2588
        %v2590 = vmul.f32 %v2572, %v2588
        %v2591 = vmul.f32 %v2573, %v2588
        %v2592 = vmul.f32 %v2574, %v2588
        %v2593 = vmul.f32 %v2575, %v2588
        %v2594 = vmul.f32 %v2576, %v2588
        %v2595 = vmul.f32 %v2577, %v2588
        %v2596 = vmul.f32 %v2578, %v2588
        %v2597 = vmul.f32 %v2579, %v2588
        %v2598 = vmul.f32 %v2580, %v2588
        %v2599 = vmul.f32 %v2581, %v2588
        %v2600 = vmul.f32 %v2582, %v2588
        %v2601 = vmul.f32 %v2583, %v2588
        %v2602 = vmul.f32 %v2584, %v2588
        %v2603 = vmul.f32 %v2585, %v2588
        %v2604 = vmul.f32 %v2586, %v2588
        %v2605 = vadd.f32 %v2555, %v2589
        %v2606 = vadd.f32 %v2556, %v2590
        %v2607 = vadd.f32 %v2557, %v2591
        %v2608 = vadd.f32 %v2558, %v2592
        %v2609 = vadd.f32 %v2559, %v2593
        %v2610 = vadd.f32 %v2560, %v2594
        %v2611 = vadd.f32 %v2561, %v2595
        %v2612 = vadd.f32 %v2562, %v2596
        %v2613 = vadd.f32 %v2563, %v2597
        %v2614 = vadd.f32 %v2564, %v2598
        %v2615 = vadd.f32 %v2565, %v2599
        %v2616 = vadd.f32 %v2566, %v2600
        %v2617 = vadd.f32 %v2567, %v2601
        %v2618 = vadd.f32 %v2568, %v2602
        %v2619 = vadd.f32 %v2569, %v2603
        %v2620 = vadd.f32 %v2570, %v2604
        %v2621 = vld [vmem:[%s1679] sm:$0xff]
        %v2622 = vld [vmem:[%s1679 + $0x8] sm:$0xff]
        %v2623 = vld [vmem:[%s1679 + $0x10] sm:$0xff]
        %v2624 = vld [vmem:[%s1679 + $0x18] sm:$0xff]
        %v2625 = vld [vmem:[%s1679 + $0x20] sm:$0xff]
        %v2626 = vld [vmem:[%s1679 + $0x28] sm:$0xff]
        %v2627 = vld [vmem:[%s1679 + $0x30] sm:$0xff]
        %v2628 = vld [vmem:[%s1679 + $0x38] sm:$0xff]
        %v2629 = vld [vmem:[%s1679 + $0x40] sm:$0xff]
        %v2630 = vld [vmem:[%s1679 + $0x48] sm:$0xff]
        %v2631 = vld [vmem:[%s1679 + $0x50] sm:$0xff]
        %v2632 = vld [vmem:[%s1679 + $0x58] sm:$0xff]
        %v2633 = vld [vmem:[%s1679 + $0x60] sm:$0xff]
        %v2634 = vld [vmem:[%s1679 + $0x68] sm:$0xff]
        %v2635 = vld [vmem:[%s1679 + $0x70] sm:$0xff]
        %v2636 = vld [vmem:[%s1679 + $0x78] sm:$0xff]
        %s2637 = sld [smem:[#allocation9 + $0x4]]
        %v2638 = vstv %s2637
        %v2639 = vmul.f32 %v2621, %v2638
        %v2640 = vmul.f32 %v2622, %v2638
        %v2641 = vmul.f32 %v2623, %v2638
        %v2642 = vmul.f32 %v2624, %v2638
        %v2643 = vmul.f32 %v2625, %v2638
        %v2644 = vmul.f32 %v2626, %v2638
        %v2645 = vmul.f32 %v2627, %v2638
        %v2646 = vmul.f32 %v2628, %v2638
        %v2647 = vmul.f32 %v2629, %v2638
        %v2648 = vmul.f32 %v2630, %v2638
        %v2649 = vmul.f32 %v2631, %v2638
        %v2650 = vmul.f32 %v2632, %v2638
        %v2651 = vmul.f32 %v2633, %v2638
        %v2652 = vmul.f32 %v2634, %v2638
        %v2653 = vmul.f32 %v2635, %v2638
        %v2654 = vmul.f32 %v2636, %v2638
        %v2655 = vadd.f32 %v2605, %v2639
        %v2656 = vadd.f32 %v2606, %v2640
        %v2657 = vadd.f32 %v2607, %v2641
        %v2658 = vadd.f32 %v2608, %v2642
        %v2659 = vadd.f32 %v2609, %v2643
        %v2660 = vadd.f32 %v2610, %v2644
        %v2661 = vadd.f32 %v2611, %v2645
        %v2662 = vadd.f32 %v2612, %v2646
        %v2663 = vadd.f32 %v2613, %v2647
        %v2664 = vadd.f32 %v2614, %v2648
        %v2665 = vadd.f32 %v2615, %v2649
        %v2666 = vadd.f32 %v2616, %v2650
        %v2667 = vadd.f32 %v2617, %v2651
        %v2668 = vadd.f32 %v2618, %v2652
        %v2669 = vadd.f32 %v2619, %v2653
        %v2670 = vadd.f32 %v2620, %v2654
        %v2671 = vld [vmem:[%s1926] sm:$0xff]
        %v2672 = vld [vmem:[%s1926 + $0x8] sm:$0xff]
        %v2673 = vld [vmem:[%s1926 + $0x10] sm:$0xff]
        %v2674 = vld [vmem:[%s1926 + $0x18] sm:$0xff]
        %v2675 = vld [vmem:[%s1926 + $0x20] sm:$0xff]
        %v2676 = vld [vmem:[%s1926 + $0x28] sm:$0xff]
        %v2677 = vld [vmem:[%s1926 + $0x30] sm:$0xff]
        %v2678 = vld [vmem:[%s1926 + $0x38] sm:$0xff]
        %v2679 = vld [vmem:[%s1926 + $0x40] sm:$0xff]
        %v2680 = vld [vmem:[%s1926 + $0x48] sm:$0xff]
        %v2681 = vld [vmem:[%s1926 + $0x50] sm:$0xff]
        %v2682 = vld [vmem:[%s1926 + $0x58] sm:$0xff]
        %v2683 = vld [vmem:[%s1926 + $0x60] sm:$0xff]
        %v2684 = vld [vmem:[%s1926 + $0x68] sm:$0xff]
        %v2685 = vld [vmem:[%s1926 + $0x70] sm:$0xff]
        %v2686 = vld [vmem:[%s1926 + $0x78] sm:$0xff]
        %s2687 = sld [smem:[#allocation9 + $0x5]]
        %v2688 = vstv %s2687
        %v2689 = vmul.f32 %v2671, %v2688
        %v2690 = vmul.f32 %v2672, %v2688
        %v2691 = vmul.f32 %v2673, %v2688
        %v2692 = vmul.f32 %v2674, %v2688
        %v2693 = vmul.f32 %v2675, %v2688
        %v2694 = vmul.f32 %v2676, %v2688
        %v2695 = vmul.f32 %v2677, %v2688
        %v2696 = vmul.f32 %v2678, %v2688
        %v2697 = vmul.f32 %v2679, %v2688
        %v2698 = vmul.f32 %v2680, %v2688
        %v2699 = vmul.f32 %v2681, %v2688
        %v2700 = vmul.f32 %v2682, %v2688
        %v2701 = vmul.f32 %v2683, %v2688
        %v2702 = vmul.f32 %v2684, %v2688
        %v2703 = vmul.f32 %v2685, %v2688
        %v2704 = vmul.f32 %v2686, %v2688
        %v2705 = vadd.f32 %v2655, %v2689
        %v2706 = vadd.f32 %v2656, %v2690
        %v2707 = vadd.f32 %v2657, %v2691
        %v2708 = vadd.f32 %v2658, %v2692
        %v2709 = vadd.f32 %v2659, %v2693
        %v2710 = vadd.f32 %v2660, %v2694
        %v2711 = vadd.f32 %v2661, %v2695
        %v2712 = vadd.f32 %v2662, %v2696
        %v2713 = vadd.f32 %v2663, %v2697
        %v2714 = vadd.f32 %v2664, %v2698
        %v2715 = vadd.f32 %v2665, %v2699
        %v2716 = vadd.f32 %v2666, %v2700
        %v2717 = vadd.f32 %v2667, %v2701
        %v2718 = vadd.f32 %v2668, %v2702
        %v2719 = vadd.f32 %v2669, %v2703
        %v2720 = vadd.f32 %v2670, %v2704
        %v2721 = vld [vmem:[%s2173] sm:$0xff]
        %v2722 = vld [vmem:[%s2173 + $0x8] sm:$0xff]
        %v2723 = vld [vmem:[%s2173 + $0x10] sm:$0xff]
        %v2724 = vld [vmem:[%s2173 + $0x18] sm:$0xff]
        %v2725 = vld [vmem:[%s2173 + $0x20] sm:$0xff]
        %v2726 = vld [vmem:[%s2173 + $0x28] sm:$0xff]
        %v2727 = vld [vmem:[%s2173 + $0x30] sm:$0xff]
        %v2728 = vld [vmem:[%s2173 + $0x38] sm:$0xff]
        %v2729 = vld [vmem:[%s2173 + $0x40] sm:$0xff]
        %v2730 = vld [vmem:[%s2173 + $0x48] sm:$0xff]
        %v2731 = vld [vmem:[%s2173 + $0x50] sm:$0xff]
        %v2732 = vld [vmem:[%s2173 + $0x58] sm:$0xff]
        %v2733 = vld [vmem:[%s2173 + $0x60] sm:$0xff]
        %v2734 = vld [vmem:[%s2173 + $0x68] sm:$0xff]
        %v2735 = vld [vmem:[%s2173 + $0x70] sm:$0xff]
        %v2736 = vld [vmem:[%s2173 + $0x78] sm:$0xff]
        %s2737 = sld [smem:[#allocation9 + $0x6]]
        %v2738 = vstv %s2737
        %v2739 = vmul.f32 %v2721, %v2738
        %v2740 = vmul.f32 %v2722, %v2738
        %v2741 = vmul.f32 %v2723, %v2738
        %v2742 = vmul.f32 %v2724, %v2738
        %v2743 = vmul.f32 %v2725, %v2738
        %v2744 = vmul.f32 %v2726, %v2738
        %v2745 = vmul.f32 %v2727, %v2738
        %v2746 = vmul.f32 %v2728, %v2738
        %v2747 = vmul.f32 %v2729, %v2738
        %v2748 = vmul.f32 %v2730, %v2738
        %v2749 = vmul.f32 %v2731, %v2738
        %v2750 = vmul.f32 %v2732, %v2738
        %v2751 = vmul.f32 %v2733, %v2738
        %v2752 = vmul.f32 %v2734, %v2738
        %v2753 = vmul.f32 %v2735, %v2738
        %v2754 = vmul.f32 %v2736, %v2738
        %v2755 = vadd.f32 %v2705, %v2739
        %v2756 = vadd.f32 %v2706, %v2740
        %v2757 = vadd.f32 %v2707, %v2741
        %v2758 = vadd.f32 %v2708, %v2742
        %v2759 = vadd.f32 %v2709, %v2743
        %v2760 = vadd.f32 %v2710, %v2744
        %v2761 = vadd.f32 %v2711, %v2745
        %v2762 = vadd.f32 %v2712, %v2746
        %v2763 = vadd.f32 %v2713, %v2747
        %v2764 = vadd.f32 %v2714, %v2748
        %v2765 = vadd.f32 %v2715, %v2749
        %v2766 = vadd.f32 %v2716, %v2750
        %v2767 = vadd.f32 %v2717, %v2751
        %v2768 = vadd.f32 %v2718, %v2752
        %v2769 = vadd.f32 %v2719, %v2753
        %v2770 = vadd.f32 %v2720, %v2754
        %v2771 = vld [vmem:[%s2420] sm:$0xff]
        %v2772 = vld [vmem:[%s2420 + $0x8] sm:$0xff]
        %v2773 = vld [vmem:[%s2420 + $0x10] sm:$0xff]
        %v2774 = vld [vmem:[%s2420 + $0x18] sm:$0xff]
        %v2775 = vld [vmem:[%s2420 + $0x20] sm:$0xff]
        %v2776 = vld [vmem:[%s2420 + $0x28] sm:$0xff]
        %v2777 = vld [vmem:[%s2420 + $0x30] sm:$0xff]
        %v2778 = vld [vmem:[%s2420 + $0x38] sm:$0xff]
        %v2779 = vld [vmem:[%s2420 + $0x40] sm:$0xff]
        %v2780 = vld [vmem:[%s2420 + $0x48] sm:$0xff]
        %v2781 = vld [vmem:[%s2420 + $0x50] sm:$0xff]
        %v2782 = vld [vmem:[%s2420 + $0x58] sm:$0xff]
        %v2783 = vld [vmem:[%s2420 + $0x60] sm:$0xff]
        %v2784 = vld [vmem:[%s2420 + $0x68] sm:$0xff]
        %v2785 = vld [vmem:[%s2420 + $0x70] sm:$0xff]
        %v2786 = vld [vmem:[%s2420 + $0x78] sm:$0xff]
        %s2787 = sld [smem:[#allocation9 + $0x7]]
        %v2788 = vstv %s2787
        %v2789 = vmul.f32 %v2771, %v2788
        %v2790 = vmul.f32 %v2772, %v2788
        %v2791 = vmul.f32 %v2773, %v2788
        %v2792 = vmul.f32 %v2774, %v2788
        %v2793 = vmul.f32 %v2775, %v2788
        %v2794 = vmul.f32 %v2776, %v2788
        %v2795 = vmul.f32 %v2777, %v2788
        %v2796 = vmul.f32 %v2778, %v2788
        %v2797 = vmul.f32 %v2779, %v2788
        %v2798 = vmul.f32 %v2780, %v2788
        %v2799 = vmul.f32 %v2781, %v2788
        %v2800 = vmul.f32 %v2782, %v2788
        %v2801 = vmul.f32 %v2783, %v2788
        %v2802 = vmul.f32 %v2784, %v2788
        %v2803 = vmul.f32 %v2785, %v2788
        %v2804 = vmul.f32 %v2786, %v2788
        %v2805 = vadd.f32 %v2755, %v2789
        %v2806 = vadd.f32 %v2756, %v2790
        %v2807 = vadd.f32 %v2757, %v2791
        %v2808 = vadd.f32 %v2758, %v2792
        %v2809 = vadd.f32 %v2759, %v2793
        %v2810 = vadd.f32 %v2760, %v2794
        %v2811 = vadd.f32 %v2761, %v2795
        %v2812 = vadd.f32 %v2762, %v2796
        %v2813 = vadd.f32 %v2763, %v2797
        %v2814 = vadd.f32 %v2764, %v2798
        %v2815 = vadd.f32 %v2765, %v2799
        %v2816 = vadd.f32 %v2766, %v2800
        %v2817 = vadd.f32 %v2767, %v2801
        %v2818 = vadd.f32 %v2768, %v2802
        %v2819 = vadd.f32 %v2769, %v2803
        %v2820 = vadd.f32 %v2770, %v2804
        %s2821 = sld [smem:[#allocation10]]
        %v2822 = vstv %s2821
        %v2823 = vadd.f32 %v2805, %v2822
        %v2824 = vadd.f32 %v2806, %v2822
        %v2825 = vadd.f32 %v2807, %v2822
        %v2826 = vadd.f32 %v2808, %v2822
        %v2827 = vadd.f32 %v2809, %v2822
        %v2828 = vadd.f32 %v2810, %v2822
        %v2829 = vadd.f32 %v2811, %v2822
        %v2830 = vadd.f32 %v2812, %v2822
        %v2831 = vadd.f32 %v2813, %v2822
        %v2832 = vadd.f32 %v2814, %v2822
        %v2833 = vadd.f32 %v2815, %v2822
        %v2834 = vadd.f32 %v2816, %v2822
        %v2835 = vadd.f32 %v2817, %v2822
        %v2836 = vadd.f32 %v2818, %v2822
        %v2837 = vadd.f32 %v2819, %v2822
        %v2838 = vadd.f32 %v2820, %v2822
        %v2839 = vxor.u32 %v2823, 2147483648
        %v2840 = vxor.u32 %v2824, 2147483648
        %v2841 = vxor.u32 %v2825, 2147483648
        %v2842 = vxor.u32 %v2826, 2147483648
        %v2843 = vxor.u32 %v2827, 2147483648
        %v2844 = vxor.u32 %v2828, 2147483648
        %v2845 = vxor.u32 %v2829, 2147483648
        %v2846 = vxor.u32 %v2830, 2147483648
        %v2847 = vxor.u32 %v2831, 2147483648
        %v2848 = vxor.u32 %v2832, 2147483648
        %v2849 = vxor.u32 %v2833, 2147483648
        %v2850 = vxor.u32 %v2834, 2147483648
        %v2851 = vxor.u32 %v2835, 2147483648
        %v2852 = vxor.u32 %v2836, 2147483648
        %v2853 = vxor.u32 %v2837, 2147483648
        %v2854 = vxor.u32 %v2838, 2147483648
        %v2855 = vmul.f32 %v2839, 1.442695
        %v2856 = vpow.pop %v2855
        %v2857 = vmul.f32 %v2840, 1.442695
        %v2858 = vpow.pop %v2857
        %v2859 = vmul.f32 %v2841, 1.442695
        %v2860 = vpow.pop %v2859
        %v2861 = vmul.f32 %v2842, 1.442695
        %v2862 = vpow.pop %v2861
        %v2863 = vmul.f32 %v2843, 1.442695
        %v2864 = vpow.pop %v2863
        %v2865 = vmul.f32 %v2844, 1.442695
        %v2866 = vpow.pop %v2865
        %v2867 = vmul.f32 %v2845, 1.442695
        %v2868 = vpow.pop %v2867
        %v2869 = vmul.f32 %v2846, 1.442695
        %v2870 = vpow.pop %v2869
        %v2871 = vmul.f32 %v2847, 1.442695
        %v2872 = vpow.pop %v2871
        %v2873 = vmul.f32 %v2848, 1.442695
        %v2874 = vpow.pop %v2873
        %v2875 = vmul.f32 %v2849, 1.442695
        %v2876 = vpow.pop %v2875
        %v2877 = vmul.f32 %v2850, 1.442695
        %v2878 = vpow.pop %v2877
        %v2879 = vmul.f32 %v2851, 1.442695
        %v2880 = vpow.pop %v2879
        %v2881 = vmul.f32 %v2852, 1.442695
        %v2882 = vpow.pop %v2881
        %v2883 = vmul.f32 %v2853, 1.442695
        %v2884 = vpow.pop %v2883
        %v2885 = vmul.f32 %v2854, 1.442695
        %v2886 = vpow.pop %v2885
        %v2887 = vadd.f32 %v2856, 1.0
        %v2888 = vadd.f32 %v2858, 1.0
        %v2889 = vadd.f32 %v2860, 1.0
        %v2890 = vadd.f32 %v2862, 1.0
        %v2891 = vadd.f32 %v2864, 1.0
        %v2892 = vadd.f32 %v2866, 1.0
        %v2893 = vadd.f32 %v2868, 1.0
        %v2894 = vadd.f32 %v2870, 1.0
        %v2895 = vadd.f32 %v2872, 1.0
        %v2896 = vadd.f32 %v2874, 1.0
        %v2897 = vadd.f32 %v2876, 1.0
        %v2898 = vadd.f32 %v2878, 1.0
        %v2899 = vadd.f32 %v2880, 1.0
        %v2900 = vadd.f32 %v2882, 1.0
        %v2901 = vadd.f32 %v2884, 1.0
        %v2902 = vadd.f32 %v2886, 1.0
        %v2903 = vrcp.pop %v2887
        %v2904 = vmul.f32 1.0, %v2903
        %v2905 = vrcp.pop %v2888
        %v2906 = vmul.f32 1.0, %v2905
        %v2907 = vrcp.pop %v2889
        %v2908 = vmul.f32 1.0, %v2907
        %v2909 = vrcp.pop %v2890
        %v2910 = vmul.f32 1.0, %v2909
        %v2911 = vrcp.pop %v2891
        %v2912 = vmul.f32 1.0, %v2911
        %v2913 = vrcp.pop %v2892
        %v2914 = vmul.f32 1.0, %v2913
        %v2915 = vrcp.pop %v2893
        %v2916 = vmul.f32 1.0, %v2915
        %v2917 = vrcp.pop %v2894
        %v2918 = vmul.f32 1.0, %v2917
        %v2919 = vrcp.pop %v2895
        %v2920 = vmul.f32 1.0, %v2919
        %v2921 = vrcp.pop %v2896
        %v2922 = vmul.f32 1.0, %v2921
        %v2923 = vrcp.pop %v2897
        %v2924 = vmul.f32 1.0, %v2923
        %v2925 = vrcp.pop %v2898
        %v2926 = vmul.f32 1.0, %v2925
        %v2927 = vrcp.pop %v2899
        %v2928 = vmul.f32 1.0, %v2927
        %v2929 = vrcp.pop %v2900
        %v2930 = vmul.f32 1.0, %v2929
        %v2931 = vrcp.pop %v2901
        %v2932 = vmul.f32 1.0, %v2931
        %v2933 = vrcp.pop %v2902
        %v2934 = vmul.f32 1.0, %v2933
        %2935 = vst [vmem:[%s408] sm:$0xff] %v2904
        %2936 = vst [vmem:[%s408 + $0x8] sm:$0xff] %v2906
        %2937 = vst [vmem:[%s408 + $0x10] sm:$0xff] %v2908
        %2938 = vst [vmem:[%s408 + $0x18] sm:$0xff] %v2910
        %2939 = vst [vmem:[%s408 + $0x20] sm:$0xff] %v2912
        %2940 = vst [vmem:[%s408 + $0x28] sm:$0xff] %v2914
        %2941 = vst [vmem:[%s408 + $0x30] sm:$0xff] %v2916
        %2942 = vst [vmem:[%s408 + $0x38] sm:$0xff] %v2918
        %2943 = vst [vmem:[%s408 + $0x40] sm:$0xff] %v2920
        %2944 = vst [vmem:[%s408 + $0x48] sm:$0xff] %v2922
        %2945 = vst [vmem:[%s408 + $0x50] sm:$0xff] %v2924
        %2946 = vst [vmem:[%s408 + $0x58] sm:$0xff] %v2926
        %2947 = vst [vmem:[%s408 + $0x60] sm:$0xff] %v2928
        %2948 = vst [vmem:[%s408 + $0x68] sm:$0xff] %v2930
        %2949 = vst [vmem:[%s408 + $0x70] sm:$0xff] %v2932
        %2950 = vst [vmem:[%s408 + $0x78] sm:$0xff] %v2934
        %v2951 = vld [vmem:[%s401] sm:$0xff]
        %v2952 = vld [vmem:[%s401 + $0x8] sm:$0xff]
        %v2953 = vld [vmem:[%s401 + $0x10] sm:$0xff]
        %v2954 = vld [vmem:[%s401 + $0x18] sm:$0xff]
        %v2955 = vld [vmem:[%s401 + $0x20] sm:$0xff]
        %v2956 = vld [vmem:[%s401 + $0x28] sm:$0xff]
        %v2957 = vld [vmem:[%s401 + $0x30] sm:$0xff]
        %v2958 = vld [vmem:[%s401 + $0x38] sm:$0xff]
        %v2959 = vld [vmem:[%s401 + $0x40] sm:$0xff]
        %v2960 = vld [vmem:[%s401 + $0x48] sm:$0xff]
        %v2961 = vld [vmem:[%s401 + $0x50] sm:$0xff]
        %v2962 = vld [vmem:[%s401 + $0x58] sm:$0xff]
        %v2963 = vld [vmem:[%s401 + $0x60] sm:$0xff]
        %v2964 = vld [vmem:[%s401 + $0x68] sm:$0xff]
        %v2965 = vld [vmem:[%s401 + $0x70] sm:$0xff]
        %v2966 = vld [vmem:[%s401 + $0x78] sm:$0xff]
        %s2967 = sld [smem:[#allocation9 + $0x80]]
        %v2968 = vstv %s2967
        %v2969 = vmul.f32 %v2951, %v2968
        %v2970 = vmul.f32 %v2952, %v2968
        %v2971 = vmul.f32 %v2953, %v2968
        %v2972 = vmul.f32 %v2954, %v2968
        %v2973 = vmul.f32 %v2955, %v2968
        %v2974 = vmul.f32 %v2956, %v2968
        %v2975 = vmul.f32 %v2957, %v2968
        %v2976 = vmul.f32 %v2958, %v2968
        %v2977 = vmul.f32 %v2959, %v2968
        %v2978 = vmul.f32 %v2960, %v2968
        %v2979 = vmul.f32 %v2961, %v2968
        %v2980 = vmul.f32 %v2962, %v2968
        %v2981 = vmul.f32 %v2963, %v2968
        %v2982 = vmul.f32 %v2964, %v2968
        %v2983 = vmul.f32 %v2965, %v2968
        %v2984 = vmul.f32 %v2966, %v2968
        %v2985 = vld [vmem:[%s938] sm:$0xff]
        %v2986 = vld [vmem:[%s938 + $0x8] sm:$0xff]
        %v2987 = vld [vmem:[%s938 + $0x10] sm:$0xff]
        %v2988 = vld [vmem:[%s938 + $0x18] sm:$0xff]
        %v2989 = vld [vmem:[%s938 + $0x20] sm:$0xff]
        %v2990 = vld [vmem:[%s938 + $0x28] sm:$0xff]
        %v2991 = vld [vmem:[%s938 + $0x30] sm:$0xff]
        %v2992 = vld [vmem:[%s938 + $0x38] sm:$0xff]
        %v2993 = vld [vmem:[%s938 + $0x40] sm:$0xff]
        %v2994 = vld [vmem:[%s938 + $0x48] sm:$0xff]
        %v2995 = vld [vmem:[%s938 + $0x50] sm:$0xff]
        %v2996 = vld [vmem:[%s938 + $0x58] sm:$0xff]
        %v2997 = vld [vmem:[%s938 + $0x60] sm:$0xff]
        %v2998 = vld [vmem:[%s938 + $0x68] sm:$0xff]
        %v2999 = vld [vmem:[%s938 + $0x70] sm:$0xff]
        %v3000 = vld [vmem:[%s938 + $0x78] sm:$0xff]
        %s3001 = sld [smem:[#allocation9 + $0x81]]
        %v3002 = vstv %s3001
        %v3003 = vmul.f32 %v2985, %v3002
        %v3004 = vmul.f32 %v2986, %v3002
        %v3005 = vmul.f32 %v2987, %v3002
        %v3006 = vmul.f32 %v2988, %v3002
        %v3007 = vmul.f32 %v2989, %v3002
        %v3008 = vmul.f32 %v2990, %v3002
        %v3009 = vmul.f32 %v2991, %v3002
        %v3010 = vmul.f32 %v2992, %v3002
        %v3011 = vmul.f32 %v2993, %v3002
        %v3012 = vmul.f32 %v2994, %v3002
        %v3013 = vmul.f32 %v2995, %v3002
        %v3014 = vmul.f32 %v2996, %v3002
        %v3015 = vmul.f32 %v2997, %v3002
        %v3016 = vmul.f32 %v2998, %v3002
        %v3017 = vmul.f32 %v2999, %v3002
        %v3018 = vmul.f32 %v3000, %v3002
        %v3019 = vadd.f32 %v2969, %v3003
        %v3020 = vadd.f32 %v2970, %v3004
        %v3021 = vadd.f32 %v2971, %v3005
        %v3022 = vadd.f32 %v2972, %v3006
        %v3023 = vadd.f32 %v2973, %v3007
        %v3024 = vadd.f32 %v2974, %v3008
        %v3025 = vadd.f32 %v2975, %v3009
        %v3026 = vadd.f32 %v2976, %v3010
        %v3027 = vadd.f32 %v2977, %v3011
        %v3028 = vadd.f32 %v2978, %v3012
        %v3029 = vadd.f32 %v2979, %v3013
        %v3030 = vadd.f32 %v2980, %v3014
        %v3031 = vadd.f32 %v2981, %v3015
        %v3032 = vadd.f32 %v2982, %v3016
        %v3033 = vadd.f32 %v2983, %v3017
        %v3034 = vadd.f32 %v2984, %v3018
        %v3035 = vld [vmem:[%s1185] sm:$0xff]
        %v3036 = vld [vmem:[%s1185 + $0x8] sm:$0xff]
        %v3037 = vld [vmem:[%s1185 + $0x10] sm:$0xff]
        %v3038 = vld [vmem:[%s1185 + $0x18] sm:$0xff]
        %v3039 = vld [vmem:[%s1185 + $0x20] sm:$0xff]
        %v3040 = vld [vmem:[%s1185 + $0x28] sm:$0xff]
        %v3041 = vld [vmem:[%s1185 + $0x30] sm:$0xff]
        %v3042 = vld [vmem:[%s1185 + $0x38] sm:$0xff]
        %v3043 = vld [vmem:[%s1185 + $0x40] sm:$0xff]
        %v3044 = vld [vmem:[%s1185 + $0x48] sm:$0xff]
        %v3045 = vld [vmem:[%s1185 + $0x50] sm:$0xff]
        %v3046 = vld [vmem:[%s1185 + $0x58] sm:$0xff]
        %v3047 = vld [vmem:[%s1185 + $0x60] sm:$0xff]
        %v3048 = vld [vmem:[%s1185 + $0x68] sm:$0xff]
        %v3049 = vld [vmem:[%s1185 + $0x70] sm:$0xff]
        %v3050 = vld [vmem:[%s1185 + $0x78] sm:$0xff]
        %s3051 = sld [smem:[#allocation9 + $0x82]]
        %v3052 = vstv %s3051
        %v3053 = vmul.f32 %v3035, %v3052
        %v3054 = vmul.f32 %v3036, %v3052
        %v3055 = vmul.f32 %v3037, %v3052
        %v3056 = vmul.f32 %v3038, %v3052
        %v3057 = vmul.f32 %v3039, %v3052
        %v3058 = vmul.f32 %v3040, %v3052
        %v3059 = vmul.f32 %v3041, %v3052
        %v3060 = vmul.f32 %v3042, %v3052
        %v3061 = vmul.f32 %v3043, %v3052
        %v3062 = vmul.f32 %v3044, %v3052
        %v3063 = vmul.f32 %v3045, %v3052
        %v3064 = vmul.f32 %v3046, %v3052
        %v3065 = vmul.f32 %v3047, %v3052
        %v3066 = vmul.f32 %v3048, %v3052
        %v3067 = vmul.f32 %v3049, %v3052
        %v3068 = vmul.f32 %v3050, %v3052
        %v3069 = vadd.f32 %v3019, %v3053
        %v3070 = vadd.f32 %v3020, %v3054
        %v3071 = vadd.f32 %v3021, %v3055
        %v3072 = vadd.f32 %v3022, %v3056
        %v3073 = vadd.f32 %v3023, %v3057
        %v3074 = vadd.f32 %v3024, %v3058
        %v3075 = vadd.f32 %v3025, %v3059
        %v3076 = vadd.f32 %v3026, %v3060
        %v3077 = vadd.f32 %v3027, %v3061
        %v3078 = vadd.f32 %v3028, %v3062
        %v3079 = vadd.f32 %v3029, %v3063
        %v3080 = vadd.f32 %v3030, %v3064
        %v3081 = vadd.f32 %v3031, %v3065
        %v3082 = vadd.f32 %v3032, %v3066
        %v3083 = vadd.f32 %v3033, %v3067
        %v3084 = vadd.f32 %v3034, %v3068
        %v3085 = vld [vmem:[%s1432] sm:$0xff]
        %v3086 = vld [vmem:[%s1432 + $0x8] sm:$0xff]
        %v3087 = vld [vmem:[%s1432 + $0x10] sm:$0xff]
        %v3088 = vld [vmem:[%s1432 + $0x18] sm:$0xff]
        %v3089 = vld [vmem:[%s1432 + $0x20] sm:$0xff]
        %v3090 = vld [vmem:[%s1432 + $0x28] sm:$0xff]
        %v3091 = vld [vmem:[%s1432 + $0x30] sm:$0xff]
        %v3092 = vld [vmem:[%s1432 + $0x38] sm:$0xff]
        %v3093 = vld [vmem:[%s1432 + $0x40] sm:$0xff]
        %v3094 = vld [vmem:[%s1432 + $0x48] sm:$0xff]
        %v3095 = vld [vmem:[%s1432 + $0x50] sm:$0xff]
        %v3096 = vld [vmem:[%s1432 + $0x58] sm:$0xff]
        %v3097 = vld [vmem:[%s1432 + $0x60] sm:$0xff]
        %v3098 = vld [vmem:[%s1432 + $0x68] sm:$0xff]
        %v3099 = vld [vmem:[%s1432 + $0x70] sm:$0xff]
        %v3100 = vld [vmem:[%s1432 + $0x78] sm:$0xff]
        %s3101 = sld [smem:[#allocation9 + $0x83]]
        %v3102 = vstv %s3101
        %v3103 = vmul.f32 %v3085, %v3102
        %v3104 = vmul.f32 %v3086, %v3102
        %v3105 = vmul.f32 %v3087, %v3102
        %v3106 = vmul.f32 %v3088, %v3102
        %v3107 = vmul.f32 %v3089, %v3102
        %v3108 = vmul.f32 %v3090, %v3102
        %v3109 = vmul.f32 %v3091, %v3102
        %v3110 = vmul.f32 %v3092, %v3102
        %v3111 = vmul.f32 %v3093, %v3102
        %v3112 = vmul.f32 %v3094, %v3102
        %v3113 = vmul.f32 %v3095, %v3102
        %v3114 = vmul.f32 %v3096, %v3102
        %v3115 = vmul.f32 %v3097, %v3102
        %v3116 = vmul.f32 %v3098, %v3102
        %v3117 = vmul.f32 %v3099, %v3102
        %v3118 = vmul.f32 %v3100, %v3102
        %v3119 = vadd.f32 %v3069, %v3103
        %v3120 = vadd.f32 %v3070, %v3104
        %v3121 = vadd.f32 %v3071, %v3105
        %v3122 = vadd.f32 %v3072, %v3106
        %v3123 = vadd.f32 %v3073, %v3107
        %v3124 = vadd.f32 %v3074, %v3108
        %v3125 = vadd.f32 %v3075, %v3109
        %v3126 = vadd.f32 %v3076, %v3110
        %v3127 = vadd.f32 %v3077, %v3111
        %v3128 = vadd.f32 %v3078, %v3112
        %v3129 = vadd.f32 %v3079, %v3113
        %v3130 = vadd.f32 %v3080, %v3114
        %v3131 = vadd.f32 %v3081, %v3115
        %v3132 = vadd.f32 %v3082, %v3116
        %v3133 = vadd.f32 %v3083, %v3117
        %v3134 = vadd.f32 %v3084, %v3118
        %v3135 = vld [vmem:[%s1679] sm:$0xff]
        %v3136 = vld [vmem:[%s1679 + $0x8] sm:$0xff]
        %v3137 = vld [vmem:[%s1679 + $0x10] sm:$0xff]
        %v3138 = vld [vmem:[%s1679 + $0x18] sm:$0xff]
        %v3139 = vld [vmem:[%s1679 + $0x20] sm:$0xff]
        %v3140 = vld [vmem:[%s1679 + $0x28] sm:$0xff]
        %v3141 = vld [vmem:[%s1679 + $0x30] sm:$0xff]
        %v3142 = vld [vmem:[%s1679 + $0x38] sm:$0xff]
        %v3143 = vld [vmem:[%s1679 + $0x40] sm:$0xff]
        %v3144 = vld [vmem:[%s1679 + $0x48] sm:$0xff]
        %v3145 = vld [vmem:[%s1679 + $0x50] sm:$0xff]
        %v3146 = vld [vmem:[%s1679 + $0x58] sm:$0xff]
        %v3147 = vld [vmem:[%s1679 + $0x60] sm:$0xff]
        %v3148 = vld [vmem:[%s1679 + $0x68] sm:$0xff]
        %v3149 = vld [vmem:[%s1679 + $0x70] sm:$0xff]
        %v3150 = vld [vmem:[%s1679 + $0x78] sm:$0xff]
        %s3151 = sld [smem:[#allocation9 + $0x84]]
        %v3152 = vstv %s3151
        %v3153 = vmul.f32 %v3135, %v3152
        %v3154 = vmul.f32 %v3136, %v3152
        %v3155 = vmul.f32 %v3137, %v3152
        %v3156 = vmul.f32 %v3138, %v3152
        %v3157 = vmul.f32 %v3139, %v3152
        %v3158 = vmul.f32 %v3140, %v3152
        %v3159 = vmul.f32 %v3141, %v3152
        %v3160 = vmul.f32 %v3142, %v3152
        %v3161 = vmul.f32 %v3143, %v3152
        %v3162 = vmul.f32 %v3144, %v3152
        %v3163 = vmul.f32 %v3145, %v3152
        %v3164 = vmul.f32 %v3146, %v3152
        %v3165 = vmul.f32 %v3147, %v3152
        %v3166 = vmul.f32 %v3148, %v3152
        %v3167 = vmul.f32 %v3149, %v3152
        %v3168 = vmul.f32 %v3150, %v3152
        %v3169 = vadd.f32 %v3119, %v3153
        %v3170 = vadd.f32 %v3120, %v3154
        %v3171 = vadd.f32 %v3121, %v3155
        %v3172 = vadd.f32 %v3122, %v3156
        %v3173 = vadd.f32 %v3123, %v3157
        %v3174 = vadd.f32 %v3124, %v3158
        %v3175 = vadd.f32 %v3125, %v3159
        %v3176 = vadd.f32 %v3126, %v3160
        %v3177 = vadd.f32 %v3127, %v3161
        %v3178 = vadd.f32 %v3128, %v3162
        %v3179 = vadd.f32 %v3129, %v3163
        %v3180 = vadd.f32 %v3130, %v3164
        %v3181 = vadd.f32 %v3131, %v3165
        %v3182 = vadd.f32 %v3132, %v3166
        %v3183 = vadd.f32 %v3133, %v3167
        %v3184 = vadd.f32 %v3134, %v3168
        %v3185 = vld [vmem:[%s1926] sm:$0xff]
        %v3186 = vld [vmem:[%s1926 + $0x8] sm:$0xff]
        %v3187 = vld [vmem:[%s1926 + $0x10] sm:$0xff]
        %v3188 = vld [vmem:[%s1926 + $0x18] sm:$0xff]
        %v3189 = vld [vmem:[%s1926 + $0x20] sm:$0xff]
        %v3190 = vld [vmem:[%s1926 + $0x28] sm:$0xff]
        %v3191 = vld [vmem:[%s1926 + $0x30] sm:$0xff]
        %v3192 = vld [vmem:[%s1926 + $0x38] sm:$0xff]
        %v3193 = vld [vmem:[%s1926 + $0x40] sm:$0xff]
        %v3194 = vld [vmem:[%s1926 + $0x48] sm:$0xff]
        %v3195 = vld [vmem:[%s1926 + $0x50] sm:$0xff]
        %v3196 = vld [vmem:[%s1926 + $0x58] sm:$0xff]
        %v3197 = vld [vmem:[%s1926 + $0x60] sm:$0xff]
        %v3198 = vld [vmem:[%s1926 + $0x68] sm:$0xff]
        %v3199 = vld [vmem:[%s1926 + $0x70] sm:$0xff]
        %v3200 = vld [vmem:[%s1926 + $0x78] sm:$0xff]
        %s3201 = sld [smem:[#allocation9 + $0x85]]
        %v3202 = vstv %s3201
        %v3203 = vmul.f32 %v3185, %v3202
        %v3204 = vmul.f32 %v3186, %v3202
        %v3205 = vmul.f32 %v3187, %v3202
        %v3206 = vmul.f32 %v3188, %v3202
        %v3207 = vmul.f32 %v3189, %v3202
        %v3208 = vmul.f32 %v3190, %v3202
        %v3209 = vmul.f32 %v3191, %v3202
        %v3210 = vmul.f32 %v3192, %v3202
        %v3211 = vmul.f32 %v3193, %v3202
        %v3212 = vmul.f32 %v3194, %v3202
        %v3213 = vmul.f32 %v3195, %v3202
        %v3214 = vmul.f32 %v3196, %v3202
        %v3215 = vmul.f32 %v3197, %v3202
        %v3216 = vmul.f32 %v3198, %v3202
        %v3217 = vmul.f32 %v3199, %v3202
        %v3218 = vmul.f32 %v3200, %v3202
        %v3219 = vadd.f32 %v3169, %v3203
        %v3220 = vadd.f32 %v3170, %v3204
        %v3221 = vadd.f32 %v3171, %v3205
        %v3222 = vadd.f32 %v3172, %v3206
        %v3223 = vadd.f32 %v3173, %v3207
        %v3224 = vadd.f32 %v3174, %v3208
        %v3225 = vadd.f32 %v3175, %v3209
        %v3226 = vadd.f32 %v3176, %v3210
        %v3227 = vadd.f32 %v3177, %v3211
        %v3228 = vadd.f32 %v3178, %v3212
        %v3229 = vadd.f32 %v3179, %v3213
        %v3230 = vadd.f32 %v3180, %v3214
        %v3231 = vadd.f32 %v3181, %v3215
        %v3232 = vadd.f32 %v3182, %v3216
        %v3233 = vadd.f32 %v3183, %v3217
        %v3234 = vadd.f32 %v3184, %v3218
        %v3235 = vld [vmem:[%s2173] sm:$0xff]
        %v3236 = vld [vmem:[%s2173 + $0x8] sm:$0xff]
        %v3237 = vld [vmem:[%s2173 + $0x10] sm:$0xff]
        %v3238 = vld [vmem:[%s2173 + $0x18] sm:$0xff]
        %v3239 = vld [vmem:[%s2173 + $0x20] sm:$0xff]
        %v3240 = vld [vmem:[%s2173 + $0x28] sm:$0xff]
        %v3241 = vld [vmem:[%s2173 + $0x30] sm:$0xff]
        %v3242 = vld [vmem:[%s2173 + $0x38] sm:$0xff]
        %v3243 = vld [vmem:[%s2173 + $0x40] sm:$0xff]
        %v3244 = vld [vmem:[%s2173 + $0x48] sm:$0xff]
        %v3245 = vld [vmem:[%s2173 + $0x50] sm:$0xff]
        %v3246 = vld [vmem:[%s2173 + $0x58] sm:$0xff]
        %v3247 = vld [vmem:[%s2173 + $0x60] sm:$0xff]
        %v3248 = vld [vmem:[%s2173 + $0x68] sm:$0xff]
        %v3249 = vld [vmem:[%s2173 + $0x70] sm:$0xff]
        %v3250 = vld [vmem:[%s2173 + $0x78] sm:$0xff]
        %s3251 = sld [smem:[#allocation9 + $0x86]]
        %v3252 = vstv %s3251
        %v3253 = vmul.f32 %v3235, %v3252
        %v3254 = vmul.f32 %v3236, %v3252
        %v3255 = vmul.f32 %v3237, %v3252
        %v3256 = vmul.f32 %v3238, %v3252
        %v3257 = vmul.f32 %v3239, %v3252
        %v3258 = vmul.f32 %v3240, %v3252
        %v3259 = vmul.f32 %v3241, %v3252
        %v3260 = vmul.f32 %v3242, %v3252
        %v3261 = vmul.f32 %v3243, %v3252
        %v3262 = vmul.f32 %v3244, %v3252
        %v3263 = vmul.f32 %v3245, %v3252
        %v3264 = vmul.f32 %v3246, %v3252
        %v3265 = vmul.f32 %v3247, %v3252
        %v3266 = vmul.f32 %v3248, %v3252
        %v3267 = vmul.f32 %v3249, %v3252
        %v3268 = vmul.f32 %v3250, %v3252
        %v3269 = vadd.f32 %v3219, %v3253
        %v3270 = vadd.f32 %v3220, %v3254
        %v3271 = vadd.f32 %v3221, %v3255
        %v3272 = vadd.f32 %v3222, %v3256
        %v3273 = vadd.f32 %v3223, %v3257
        %v3274 = vadd.f32 %v3224, %v3258
        %v3275 = vadd.f32 %v3225, %v3259
        %v3276 = vadd.f32 %v3226, %v3260
        %v3277 = vadd.f32 %v3227, %v3261
        %v3278 = vadd.f32 %v3228, %v3262
        %v3279 = vadd.f32 %v3229, %v3263
        %v3280 = vadd.f32 %v3230, %v3264
        %v3281 = vadd.f32 %v3231, %v3265
        %v3282 = vadd.f32 %v3232, %v3266
        %v3283 = vadd.f32 %v3233, %v3267
        %v3284 = vadd.f32 %v3234, %v3268
        %v3285 = vld [vmem:[%s2420] sm:$0xff]
        %v3286 = vld [vmem:[%s2420 + $0x8] sm:$0xff]
        %v3287 = vld [vmem:[%s2420 + $0x10] sm:$0xff]
        %v3288 = vld [vmem:[%s2420 + $0x18] sm:$0xff]
        %v3289 = vld [vmem:[%s2420 + $0x20] sm:$0xff]
        %v3290 = vld [vmem:[%s2420 + $0x28] sm:$0xff]
        %v3291 = vld [vmem:[%s2420 + $0x30] sm:$0xff]
        %v3292 = vld [vmem:[%s2420 + $0x38] sm:$0xff]
        %v3293 = vld [vmem:[%s2420 + $0x40] sm:$0xff]
        %v3294 = vld [vmem:[%s2420 + $0x48] sm:$0xff]
        %v3295 = vld [vmem:[%s2420 + $0x50] sm:$0xff]
        %v3296 = vld [vmem:[%s2420 + $0x58] sm:$0xff]
        %v3297 = vld [vmem:[%s2420 + $0x60] sm:$0xff]
        %v3298 = vld [vmem:[%s2420 + $0x68] sm:$0xff]
        %v3299 = vld [vmem:[%s2420 + $0x70] sm:$0xff]
        %v3300 = vld [vmem:[%s2420 + $0x78] sm:$0xff]
        %s3301 = sld [smem:[#allocation9 + $0x87]]
        %v3302 = vstv %s3301
        %v3303 = vmul.f32 %v3285, %v3302
        %v3304 = vmul.f32 %v3286, %v3302
        %v3305 = vmul.f32 %v3287, %v3302
        %v3306 = vmul.f32 %v3288, %v3302
        %v3307 = vmul.f32 %v3289, %v3302
        %v3308 = vmul.f32 %v3290, %v3302
        %v3309 = vmul.f32 %v3291, %v3302
        %v3310 = vmul.f32 %v3292, %v3302
        %v3311 = vmul.f32 %v3293, %v3302
        %v3312 = vmul.f32 %v3294, %v3302
        %v3313 = vmul.f32 %v3295, %v3302
        %v3314 = vmul.f32 %v3296, %v3302
        %v3315 = vmul.f32 %v3297, %v3302
        %v3316 = vmul.f32 %v3298, %v3302
        %v3317 = vmul.f32 %v3299, %v3302
        %v3318 = vmul.f32 %v3300, %v3302
        %v3319 = vadd.f32 %v3269, %v3303
        %v3320 = vadd.f32 %v3270, %v3304
        %v3321 = vadd.f32 %v3271, %v3305
        %v3322 = vadd.f32 %v3272, %v3306
        %v3323 = vadd.f32 %v3273, %v3307
        %v3324 = vadd.f32 %v3274, %v3308
        %v3325 = vadd.f32 %v3275, %v3309
        %v3326 = vadd.f32 %v3276, %v3310
        %v3327 = vadd.f32 %v3277, %v3311
        %v3328 = vadd.f32 %v3278, %v3312
        %v3329 = vadd.f32 %v3279, %v3313
        %v3330 = vadd.f32 %v3280, %v3314
        %v3331 = vadd.f32 %v3281, %v3315
        %v3332 = vadd.f32 %v3282, %v3316
        %v3333 = vadd.f32 %v3283, %v3317
        %v3334 = vadd.f32 %v3284, %v3318
        %s3335 = sld [smem:[#allocation10 + $0x1]]
        %v3336 = vstv %s3335
        %v3337 = vadd.f32 %v3319, %v3336
        %v3338 = vadd.f32 %v3320, %v3336
        %v3339 = vadd.f32 %v3321, %v3336
        %v3340 = vadd.f32 %v3322, %v3336
        %v3341 = vadd.f32 %v3323, %v3336
        %v3342 = vadd.f32 %v3324, %v3336
        %v3343 = vadd.f32 %v3325, %v3336
        %v3344 = vadd.f32 %v3326, %v3336
        %v3345 = vadd.f32 %v3327, %v3336
        %v3346 = vadd.f32 %v3328, %v3336
        %v3347 = vadd.f32 %v3329, %v3336
        %v3348 = vadd.f32 %v3330, %v3336
        %v3349 = vadd.f32 %v3331, %v3336
        %v3350 = vadd.f32 %v3332, %v3336
        %v3351 = vadd.f32 %v3333, %v3336
        %v3352 = vadd.f32 %v3334, %v3336
        %v3353 = vxor.u32 %v3337, 2147483648
        %v3354 = vxor.u32 %v3338, 2147483648
        %v3355 = vxor.u32 %v3339, 2147483648
        %v3356 = vxor.u32 %v3340, 2147483648
        %v3357 = vxor.u32 %v3341, 2147483648
        %v3358 = vxor.u32 %v3342, 2147483648
        %v3359 = vxor.u32 %v3343, 2147483648
        %v3360 = vxor.u32 %v3344, 2147483648
        %v3361 = vxor.u32 %v3345, 2147483648
        %v3362 = vxor.u32 %v3346, 2147483648
        %v3363 = vxor.u32 %v3347, 2147483648
        %v3364 = vxor.u32 %v3348, 2147483648
        %v3365 = vxor.u32 %v3349, 2147483648
        %v3366 = vxor.u32 %v3350, 2147483648
        %v3367 = vxor.u32 %v3351, 2147483648
        %v3368 = vxor.u32 %v3352, 2147483648
        %v3369 = vmul.f32 %v3353, 1.442695
        %v3370 = vpow.pop %v3369
        %v3371 = vmul.f32 %v3354, 1.442695
        %v3372 = vpow.pop %v3371
        %v3373 = vmul.f32 %v3355, 1.442695
        %v3374 = vpow.pop %v3373
        %v3375 = vmul.f32 %v3356, 1.442695
        %v3376 = vpow.pop %v3375
        %v3377 = vmul.f32 %v3357, 1.442695
        %v3378 = vpow.pop %v3377
        %v3379 = vmul.f32 %v3358, 1.442695
        %v3380 = vpow.pop %v3379
        %v3381 = vmul.f32 %v3359, 1.442695
        %v3382 = vpow.pop %v3381
        %v3383 = vmul.f32 %v3360, 1.442695
        %v3384 = vpow.pop %v3383
        %v3385 = vmul.f32 %v3361, 1.442695
        %v3386 = vpow.pop %v3385
        %v3387 = vmul.f32 %v3362, 1.442695
        %v3388 = vpow.pop %v3387
        %v3389 = vmul.f32 %v3363, 1.442695
        %v3390 = vpow.pop %v3389
        %v3391 = vmul.f32 %v3364, 1.442695
        %v3392 = vpow.pop %v3391
        %v3393 = vmul.f32 %v3365, 1.442695
        %v3394 = vpow.pop %v3393
        %v3395 = vmul.f32 %v3366, 1.442695
        %v3396 = vpow.pop %v3395
        %v3397 = vmul.f32 %v3367, 1.442695
        %v3398 = vpow.pop %v3397
        %v3399 = vmul.f32 %v3368, 1.442695
        %v3400 = vpow.pop %v3399
        %v3401 = vadd.f32 %v3370, 1.0
        %v3402 = vadd.f32 %v3372, 1.0
        %v3403 = vadd.f32 %v3374, 1.0
        %v3404 = vadd.f32 %v3376, 1.0
        %v3405 = vadd.f32 %v3378, 1.0
        %v3406 = vadd.f32 %v3380, 1.0
        %v3407 = vadd.f32 %v3382, 1.0
        %v3408 = vadd.f32 %v3384, 1.0
        %v3409 = vadd.f32 %v3386, 1.0
        %v3410 = vadd.f32 %v3388, 1.0
        %v3411 = vadd.f32 %v3390, 1.0
        %v3412 = vadd.f32 %v3392, 1.0
        %v3413 = vadd.f32 %v3394, 1.0
        %v3414 = vadd.f32 %v3396, 1.0
        %v3415 = vadd.f32 %v3398, 1.0
        %v3416 = vadd.f32 %v3400, 1.0
        %v3417 = vrcp.pop %v3401
        %v3418 = vmul.f32 1.0, %v3417
        %v3419 = vrcp.pop %v3402
        %v3420 = vmul.f32 1.0, %v3419
        %v3421 = vrcp.pop %v3403
        %v3422 = vmul.f32 1.0, %v3421
        %v3423 = vrcp.pop %v3404
        %v3424 = vmul.f32 1.0, %v3423
        %v3425 = vrcp.pop %v3405
        %v3426 = vmul.f32 1.0, %v3425
        %v3427 = vrcp.pop %v3406
        %v3428 = vmul.f32 1.0, %v3427
        %v3429 = vrcp.pop %v3407
        %v3430 = vmul.f32 1.0, %v3429
        %v3431 = vrcp.pop %v3408
        %v3432 = vmul.f32 1.0, %v3431
        %v3433 = vrcp.pop %v3409
        %v3434 = vmul.f32 1.0, %v3433
        %v3435 = vrcp.pop %v3410
        %v3436 = vmul.f32 1.0, %v3435
        %v3437 = vrcp.pop %v3411
        %v3438 = vmul.f32 1.0, %v3437
        %v3439 = vrcp.pop %v3412
        %v3440 = vmul.f32 1.0, %v3439
        %v3441 = vrcp.pop %v3413
        %v3442 = vmul.f32 1.0, %v3441
        %v3443 = vrcp.pop %v3414
        %v3444 = vmul.f32 1.0, %v3443
        %v3445 = vrcp.pop %v3415
        %v3446 = vmul.f32 1.0, %v3445
        %v3447 = vrcp.pop %v3416
        %v3448 = vmul.f32 1.0, %v3447
        %s3449 = scalar_lea.vmem %s408, 128 [#allocation13]
        %3450 = vst [vmem:[%s3449] sm:$0xff] %v3418
        %3451 = vst [vmem:[%s3449 + $0x8] sm:$0xff] %v3420
        %3452 = vst [vmem:[%s3449 + $0x10] sm:$0xff] %v3422
        %3453 = vst [vmem:[%s3449 + $0x18] sm:$0xff] %v3424
        %3454 = vst [vmem:[%s3449 + $0x20] sm:$0xff] %v3426
        %3455 = vst [vmem:[%s3449 + $0x28] sm:$0xff] %v3428
        %3456 = vst [vmem:[%s3449 + $0x30] sm:$0xff] %v3430
        %3457 = vst [vmem:[%s3449 + $0x38] sm:$0xff] %v3432
        %3458 = vst [vmem:[%s3449 + $0x40] sm:$0xff] %v3434
        %3459 = vst [vmem:[%s3449 + $0x48] sm:$0xff] %v3436
        %3460 = vst [vmem:[%s3449 + $0x50] sm:$0xff] %v3438
        %3461 = vst [vmem:[%s3449 + $0x58] sm:$0xff] %v3440
        %3462 = vst [vmem:[%s3449 + $0x60] sm:$0xff] %v3442
        %3463 = vst [vmem:[%s3449 + $0x68] sm:$0xff] %v3444
        %3464 = vst [vmem:[%s3449 + $0x70] sm:$0xff] %v3446
        %3465 = vst [vmem:[%s3449 + $0x78] sm:$0xff] %v3448
        %v3466 = vld [vmem:[%s401] sm:$0xff]
        %v3467 = vld [vmem:[%s401 + $0x8] sm:$0xff]
        %v3468 = vld [vmem:[%s401 + $0x10] sm:$0xff]
        %v3469 = vld [vmem:[%s401 + $0x18] sm:$0xff]
        %v3470 = vld [vmem:[%s401 + $0x20] sm:$0xff]
        %v3471 = vld [vmem:[%s401 + $0x28] sm:$0xff]
        %v3472 = vld [vmem:[%s401 + $0x30] sm:$0xff]
        %v3473 = vld [vmem:[%s401 + $0x38] sm:$0xff]
        %v3474 = vld [vmem:[%s401 + $0x40] sm:$0xff]
        %v3475 = vld [vmem:[%s401 + $0x48] sm:$0xff]
        %v3476 = vld [vmem:[%s401 + $0x50] sm:$0xff]
        %v3477 = vld [vmem:[%s401 + $0x58] sm:$0xff]
        %v3478 = vld [vmem:[%s401 + $0x60] sm:$0xff]
        %v3479 = vld [vmem:[%s401 + $0x68] sm:$0xff]
        %v3480 = vld [vmem:[%s401 + $0x70] sm:$0xff]
        %v3481 = vld [vmem:[%s401 + $0x78] sm:$0xff]
        %s3482 = sld [smem:[#allocation9 + $0x100]]
        %v3483 = vstv %s3482
        %v3484 = vmul.f32 %v3466, %v3483
        %v3485 = vmul.f32 %v3467, %v3483
        %v3486 = vmul.f32 %v3468, %v3483
        %v3487 = vmul.f32 %v3469, %v3483
        %v3488 = vmul.f32 %v3470, %v3483
        %v3489 = vmul.f32 %v3471, %v3483
        %v3490 = vmul.f32 %v3472, %v3483
        %v3491 = vmul.f32 %v3473, %v3483
        %v3492 = vmul.f32 %v3474, %v3483
        %v3493 = vmul.f32 %v3475, %v3483
        %v3494 = vmul.f32 %v3476, %v3483
        %v3495 = vmul.f32 %v3477, %v3483
        %v3496 = vmul.f32 %v3478, %v3483
        %v3497 = vmul.f32 %v3479, %v3483
        %v3498 = vmul.f32 %v3480, %v3483
        %v3499 = vmul.f32 %v3481, %v3483
        %v3500 = vld [vmem:[%s938] sm:$0xff]
        %v3501 = vld [vmem:[%s938 + $0x8] sm:$0xff]
        %v3502 = vld [vmem:[%s938 + $0x10] sm:$0xff]
        %v3503 = vld [vmem:[%s938 + $0x18] sm:$0xff]
        %v3504 = vld [vmem:[%s938 + $0x20] sm:$0xff]
        %v3505 = vld [vmem:[%s938 + $0x28] sm:$0xff]
        %v3506 = vld [vmem:[%s938 + $0x30] sm:$0xff]
        %v3507 = vld [vmem:[%s938 + $0x38] sm:$0xff]
        %v3508 = vld [vmem:[%s938 + $0x40] sm:$0xff]
        %v3509 = vld [vmem:[%s938 + $0x48] sm:$0xff]
        %v3510 = vld [vmem:[%s938 + $0x50] sm:$0xff]
        %v3511 = vld [vmem:[%s938 + $0x58] sm:$0xff]
        %v3512 = vld [vmem:[%s938 + $0x60] sm:$0xff]
        %v3513 = vld [vmem:[%s938 + $0x68] sm:$0xff]
        %v3514 = vld [vmem:[%s938 + $0x70] sm:$0xff]
        %v3515 = vld [vmem:[%s938 + $0x78] sm:$0xff]
        %s3516 = sld [smem:[#allocation9 + $0x101]]
        %v3517 = vstv %s3516
        %v3518 = vmul.f32 %v3500, %v3517
        %v3519 = vmul.f32 %v3501, %v3517
        %v3520 = vmul.f32 %v3502, %v3517
        %v3521 = vmul.f32 %v3503, %v3517
        %v3522 = vmul.f32 %v3504, %v3517
        %v3523 = vmul.f32 %v3505, %v3517
        %v3524 = vmul.f32 %v3506, %v3517
        %v3525 = vmul.f32 %v3507, %v3517
        %v3526 = vmul.f32 %v3508, %v3517
        %v3527 = vmul.f32 %v3509, %v3517
        %v3528 = vmul.f32 %v3510, %v3517
        %v3529 = vmul.f32 %v3511, %v3517
        %v3530 = vmul.f32 %v3512, %v3517
        %v3531 = vmul.f32 %v3513, %v3517
        %v3532 = vmul.f32 %v3514, %v3517
        %v3533 = vmul.f32 %v3515, %v3517
        %v3534 = vadd.f32 %v3484, %v3518
        %v3535 = vadd.f32 %v3485, %v3519
        %v3536 = vadd.f32 %v3486, %v3520
        %v3537 = vadd.f32 %v3487, %v3521
        %v3538 = vadd.f32 %v3488, %v3522
        %v3539 = vadd.f32 %v3489, %v3523
        %v3540 = vadd.f32 %v3490, %v3524
        %v3541 = vadd.f32 %v3491, %v3525
        %v3542 = vadd.f32 %v3492, %v3526
        %v3543 = vadd.f32 %v3493, %v3527
        %v3544 = vadd.f32 %v3494, %v3528
        %v3545 = vadd.f32 %v3495, %v3529
        %v3546 = vadd.f32 %v3496, %v3530
        %v3547 = vadd.f32 %v3497, %v3531
        %v3548 = vadd.f32 %v3498, %v3532
        %v3549 = vadd.f32 %v3499, %v3533
        %v3550 = vld [vmem:[%s1185] sm:$0xff]
        %v3551 = vld [vmem:[%s1185 + $0x8] sm:$0xff]
        %v3552 = vld [vmem:[%s1185 + $0x10] sm:$0xff]
        %v3553 = vld [vmem:[%s1185 + $0x18] sm:$0xff]
        %v3554 = vld [vmem:[%s1185 + $0x20] sm:$0xff]
        %v3555 = vld [vmem:[%s1185 + $0x28] sm:$0xff]
        %v3556 = vld [vmem:[%s1185 + $0x30] sm:$0xff]
        %v3557 = vld [vmem:[%s1185 + $0x38] sm:$0xff]
        %v3558 = vld [vmem:[%s1185 + $0x40] sm:$0xff]
        %v3559 = vld [vmem:[%s1185 + $0x48] sm:$0xff]
        %v3560 = vld [vmem:[%s1185 + $0x50] sm:$0xff]
        %v3561 = vld [vmem:[%s1185 + $0x58] sm:$0xff]
        %v3562 = vld [vmem:[%s1185 + $0x60] sm:$0xff]
        %v3563 = vld [vmem:[%s1185 + $0x68] sm:$0xff]
        %v3564 = vld [vmem:[%s1185 + $0x70] sm:$0xff]
        %v3565 = vld [vmem:[%s1185 + $0x78] sm:$0xff]
        %s3566 = sld [smem:[#allocation9 + $0x102]]
        %v3567 = vstv %s3566
        %v3568 = vmul.f32 %v3550, %v3567
        %v3569 = vmul.f32 %v3551, %v3567
        %v3570 = vmul.f32 %v3552, %v3567
        %v3571 = vmul.f32 %v3553, %v3567
        %v3572 = vmul.f32 %v3554, %v3567
        %v3573 = vmul.f32 %v3555, %v3567
        %v3574 = vmul.f32 %v3556, %v3567
        %v3575 = vmul.f32 %v3557, %v3567
        %v3576 = vmul.f32 %v3558, %v3567
        %v3577 = vmul.f32 %v3559, %v3567
        %v3578 = vmul.f32 %v3560, %v3567
        %v3579 = vmul.f32 %v3561, %v3567
        %v3580 = vmul.f32 %v3562, %v3567
        %v3581 = vmul.f32 %v3563, %v3567
        %v3582 = vmul.f32 %v3564, %v3567
        %v3583 = vmul.f32 %v3565, %v3567
        %v3584 = vadd.f32 %v3534, %v3568
        %v3585 = vadd.f32 %v3535, %v3569
        %v3586 = vadd.f32 %v3536, %v3570
        %v3587 = vadd.f32 %v3537, %v3571
        %v3588 = vadd.f32 %v3538, %v3572
        %v3589 = vadd.f32 %v3539, %v3573
        %v3590 = vadd.f32 %v3540, %v3574
        %v3591 = vadd.f32 %v3541, %v3575
        %v3592 = vadd.f32 %v3542, %v3576
        %v3593 = vadd.f32 %v3543, %v3577
        %v3594 = vadd.f32 %v3544, %v3578
        %v3595 = vadd.f32 %v3545, %v3579
        %v3596 = vadd.f32 %v3546, %v3580
        %v3597 = vadd.f32 %v3547, %v3581
        %v3598 = vadd.f32 %v3548, %v3582
        %v3599 = vadd.f32 %v3549, %v3583
        %v3600 = vld [vmem:[%s1432] sm:$0xff]
        %v3601 = vld [vmem:[%s1432 + $0x8] sm:$0xff]
        %v3602 = vld [vmem:[%s1432 + $0x10] sm:$0xff]
        %v3603 = vld [vmem:[%s1432 + $0x18] sm:$0xff]
        %v3604 = vld [vmem:[%s1432 + $0x20] sm:$0xff]
        %v3605 = vld [vmem:[%s1432 + $0x28] sm:$0xff]
        %v3606 = vld [vmem:[%s1432 + $0x30] sm:$0xff]
        %v3607 = vld [vmem:[%s1432 + $0x38] sm:$0xff]
        %v3608 = vld [vmem:[%s1432 + $0x40] sm:$0xff]
        %v3609 = vld [vmem:[%s1432 + $0x48] sm:$0xff]
        %v3610 = vld [vmem:[%s1432 + $0x50] sm:$0xff]
        %v3611 = vld [vmem:[%s1432 + $0x58] sm:$0xff]
        %v3612 = vld [vmem:[%s1432 + $0x60] sm:$0xff]
        %v3613 = vld [vmem:[%s1432 + $0x68] sm:$0xff]
        %v3614 = vld [vmem:[%s1432 + $0x70] sm:$0xff]
        %v3615 = vld [vmem:[%s1432 + $0x78] sm:$0xff]
        %s3616 = sld [smem:[#allocation9 + $0x103]]
        %v3617 = vstv %s3616
        %v3618 = vmul.f32 %v3600, %v3617
        %v3619 = vmul.f32 %v3601, %v3617
        %v3620 = vmul.f32 %v3602, %v3617
        %v3621 = vmul.f32 %v3603, %v3617
        %v3622 = vmul.f32 %v3604, %v3617
        %v3623 = vmul.f32 %v3605, %v3617
        %v3624 = vmul.f32 %v3606, %v3617
        %v3625 = vmul.f32 %v3607, %v3617
        %v3626 = vmul.f32 %v3608, %v3617
        %v3627 = vmul.f32 %v3609, %v3617
        %v3628 = vmul.f32 %v3610, %v3617
        %v3629 = vmul.f32 %v3611, %v3617
        %v3630 = vmul.f32 %v3612, %v3617
        %v3631 = vmul.f32 %v3613, %v3617
        %v3632 = vmul.f32 %v3614, %v3617
        %v3633 = vmul.f32 %v3615, %v3617
        %v3634 = vadd.f32 %v3584, %v3618
        %v3635 = vadd.f32 %v3585, %v3619
        %v3636 = vadd.f32 %v3586, %v3620
        %v3637 = vadd.f32 %v3587, %v3621
        %v3638 = vadd.f32 %v3588, %v3622
        %v3639 = vadd.f32 %v3589, %v3623
        %v3640 = vadd.f32 %v3590, %v3624
        %v3641 = vadd.f32 %v3591, %v3625
        %v3642 = vadd.f32 %v3592, %v3626
        %v3643 = vadd.f32 %v3593, %v3627
        %v3644 = vadd.f32 %v3594, %v3628
        %v3645 = vadd.f32 %v3595, %v3629
        %v3646 = vadd.f32 %v3596, %v3630
        %v3647 = vadd.f32 %v3597, %v3631
        %v3648 = vadd.f32 %v3598, %v3632
        %v3649 = vadd.f32 %v3599, %v3633
        %v3650 = vld [vmem:[%s1679] sm:$0xff]
        %v3651 = vld [vmem:[%s1679 + $0x8] sm:$0xff]
        %v3652 = vld [vmem:[%s1679 + $0x10] sm:$0xff]
        %v3653 = vld [vmem:[%s1679 + $0x18] sm:$0xff]
        %v3654 = vld [vmem:[%s1679 + $0x20] sm:$0xff]
        %v3655 = vld [vmem:[%s1679 + $0x28] sm:$0xff]
        %v3656 = vld [vmem:[%s1679 + $0x30] sm:$0xff]
        %v3657 = vld [vmem:[%s1679 + $0x38] sm:$0xff]
        %v3658 = vld [vmem:[%s1679 + $0x40] sm:$0xff]
        %v3659 = vld [vmem:[%s1679 + $0x48] sm:$0xff]
        %v3660 = vld [vmem:[%s1679 + $0x50] sm:$0xff]
        %v3661 = vld [vmem:[%s1679 + $0x58] sm:$0xff]
        %v3662 = vld [vmem:[%s1679 + $0x60] sm:$0xff]
        %v3663 = vld [vmem:[%s1679 + $0x68] sm:$0xff]
        %v3664 = vld [vmem:[%s1679 + $0x70] sm:$0xff]
        %v3665 = vld [vmem:[%s1679 + $0x78] sm:$0xff]
        %s3666 = sld [smem:[#allocation9 + $0x104]]
        %v3667 = vstv %s3666
        %v3668 = vmul.f32 %v3650, %v3667
        %v3669 = vmul.f32 %v3651, %v3667
        %v3670 = vmul.f32 %v3652, %v3667
        %v3671 = vmul.f32 %v3653, %v3667
        %v3672 = vmul.f32 %v3654, %v3667
        %v3673 = vmul.f32 %v3655, %v3667
        %v3674 = vmul.f32 %v3656, %v3667
        %v3675 = vmul.f32 %v3657, %v3667
        %v3676 = vmul.f32 %v3658, %v3667
        %v3677 = vmul.f32 %v3659, %v3667
        %v3678 = vmul.f32 %v3660, %v3667
        %v3679 = vmul.f32 %v3661, %v3667
        %v3680 = vmul.f32 %v3662, %v3667
        %v3681 = vmul.f32 %v3663, %v3667
        %v3682 = vmul.f32 %v3664, %v3667
        %v3683 = vmul.f32 %v3665, %v3667
        %v3684 = vadd.f32 %v3634, %v3668
        %v3685 = vadd.f32 %v3635, %v3669
        %v3686 = vadd.f32 %v3636, %v3670
        %v3687 = vadd.f32 %v3637, %v3671
        %v3688 = vadd.f32 %v3638, %v3672
        %v3689 = vadd.f32 %v3639, %v3673
        %v3690 = vadd.f32 %v3640, %v3674
        %v3691 = vadd.f32 %v3641, %v3675
        %v3692 = vadd.f32 %v3642, %v3676
        %v3693 = vadd.f32 %v3643, %v3677
        %v3694 = vadd.f32 %v3644, %v3678
        %v3695 = vadd.f32 %v3645, %v3679
        %v3696 = vadd.f32 %v3646, %v3680
        %v3697 = vadd.f32 %v3647, %v3681
        %v3698 = vadd.f32 %v3648, %v3682
        %v3699 = vadd.f32 %v3649, %v3683
        %v3700 = vld [vmem:[%s1926] sm:$0xff]
        %v3701 = vld [vmem:[%s1926 + $0x8] sm:$0xff]
        %v3702 = vld [vmem:[%s1926 + $0x10] sm:$0xff]
        %v3703 = vld [vmem:[%s1926 + $0x18] sm:$0xff]
        %v3704 = vld [vmem:[%s1926 + $0x20] sm:$0xff]
        %v3705 = vld [vmem:[%s1926 + $0x28] sm:$0xff]
        %v3706 = vld [vmem:[%s1926 + $0x30] sm:$0xff]
        %v3707 = vld [vmem:[%s1926 + $0x38] sm:$0xff]
        %v3708 = vld [vmem:[%s1926 + $0x40] sm:$0xff]
        %v3709 = vld [vmem:[%s1926 + $0x48] sm:$0xff]
        %v3710 = vld [vmem:[%s1926 + $0x50] sm:$0xff]
        %v3711 = vld [vmem:[%s1926 + $0x58] sm:$0xff]
        %v3712 = vld [vmem:[%s1926 + $0x60] sm:$0xff]
        %v3713 = vld [vmem:[%s1926 + $0x68] sm:$0xff]
        %v3714 = vld [vmem:[%s1926 + $0x70] sm:$0xff]
        %v3715 = vld [vmem:[%s1926 + $0x78] sm:$0xff]
        %s3716 = sld [smem:[#allocation9 + $0x105]]
        %v3717 = vstv %s3716
        %v3718 = vmul.f32 %v3700, %v3717
        %v3719 = vmul.f32 %v3701, %v3717
        %v3720 = vmul.f32 %v3702, %v3717
        %v3721 = vmul.f32 %v3703, %v3717
        %v3722 = vmul.f32 %v3704, %v3717
        %v3723 = vmul.f32 %v3705, %v3717
        %v3724 = vmul.f32 %v3706, %v3717
        %v3725 = vmul.f32 %v3707, %v3717
        %v3726 = vmul.f32 %v3708, %v3717
        %v3727 = vmul.f32 %v3709, %v3717
        %v3728 = vmul.f32 %v3710, %v3717
        %v3729 = vmul.f32 %v3711, %v3717
        %v3730 = vmul.f32 %v3712, %v3717
        %v3731 = vmul.f32 %v3713, %v3717
        %v3732 = vmul.f32 %v3714, %v3717
        %v3733 = vmul.f32 %v3715, %v3717
        %v3734 = vadd.f32 %v3684, %v3718
        %v3735 = vadd.f32 %v3685, %v3719
        %v3736 = vadd.f32 %v3686, %v3720
        %v3737 = vadd.f32 %v3687, %v3721
        %v3738 = vadd.f32 %v3688, %v3722
        %v3739 = vadd.f32 %v3689, %v3723
        %v3740 = vadd.f32 %v3690, %v3724
        %v3741 = vadd.f32 %v3691, %v3725
        %v3742 = vadd.f32 %v3692, %v3726
        %v3743 = vadd.f32 %v3693, %v3727
        %v3744 = vadd.f32 %v3694, %v3728
        %v3745 = vadd.f32 %v3695, %v3729
        %v3746 = vadd.f32 %v3696, %v3730
        %v3747 = vadd.f32 %v3697, %v3731
        %v3748 = vadd.f32 %v3698, %v3732
        %v3749 = vadd.f32 %v3699, %v3733
        %v3750 = vld [vmem:[%s2173] sm:$0xff]
        %v3751 = vld [vmem:[%s2173 + $0x8] sm:$0xff]
        %v3752 = vld [vmem:[%s2173 + $0x10] sm:$0xff]
        %v3753 = vld [vmem:[%s2173 + $0x18] sm:$0xff]
        %v3754 = vld [vmem:[%s2173 + $0x20] sm:$0xff]
        %v3755 = vld [vmem:[%s2173 + $0x28] sm:$0xff]
        %v3756 = vld [vmem:[%s2173 + $0x30] sm:$0xff]
        %v3757 = vld [vmem:[%s2173 + $0x38] sm:$0xff]
        %v3758 = vld [vmem:[%s2173 + $0x40] sm:$0xff]
        %v3759 = vld [vmem:[%s2173 + $0x48] sm:$0xff]
        %v3760 = vld [vmem:[%s2173 + $0x50] sm:$0xff]
        %v3761 = vld [vmem:[%s2173 + $0x58] sm:$0xff]
        %v3762 = vld [vmem:[%s2173 + $0x60] sm:$0xff]
        %v3763 = vld [vmem:[%s2173 + $0x68] sm:$0xff]
        %v3764 = vld [vmem:[%s2173 + $0x70] sm:$0xff]
        %v3765 = vld [vmem:[%s2173 + $0x78] sm:$0xff]
        %s3766 = sld [smem:[#allocation9 + $0x106]]
        %v3767 = vstv %s3766
        %v3768 = vmul.f32 %v3750, %v3767
        %v3769 = vmul.f32 %v3751, %v3767
        %v3770 = vmul.f32 %v3752, %v3767
        %v3771 = vmul.f32 %v3753, %v3767
        %v3772 = vmul.f32 %v3754, %v3767
        %v3773 = vmul.f32 %v3755, %v3767
        %v3774 = vmul.f32 %v3756, %v3767
        %v3775 = vmul.f32 %v3757, %v3767
        %v3776 = vmul.f32 %v3758, %v3767
        %v3777 = vmul.f32 %v3759, %v3767
        %v3778 = vmul.f32 %v3760, %v3767
        %v3779 = vmul.f32 %v3761, %v3767
        %v3780 = vmul.f32 %v3762, %v3767
        %v3781 = vmul.f32 %v3763, %v3767
        %v3782 = vmul.f32 %v3764, %v3767
        %v3783 = vmul.f32 %v3765, %v3767
        %v3784 = vadd.f32 %v3734, %v3768
        %v3785 = vadd.f32 %v3735, %v3769
        %v3786 = vadd.f32 %v3736, %v3770
        %v3787 = vadd.f32 %v3737, %v3771
        %v3788 = vadd.f32 %v3738, %v3772
        %v3789 = vadd.f32 %v3739, %v3773
        %v3790 = vadd.f32 %v3740, %v3774
        %v3791 = vadd.f32 %v3741, %v3775
        %v3792 = vadd.f32 %v3742, %v3776
        %v3793 = vadd.f32 %v3743, %v3777
        %v3794 = vadd.f32 %v3744, %v3778
        %v3795 = vadd.f32 %v3745, %v3779
        %v3796 = vadd.f32 %v3746, %v3780
        %v3797 = vadd.f32 %v3747, %v3781
        %v3798 = vadd.f32 %v3748, %v3782
        %v3799 = vadd.f32 %v3749, %v3783
        %v3800 = vld [vmem:[%s2420] sm:$0xff]
        %v3801 = vld [vmem:[%s2420 + $0x8] sm:$0xff]
        %v3802 = vld [vmem:[%s2420 + $0x10] sm:$0xff]
        %v3803 = vld [vmem:[%s2420 + $0x18] sm:$0xff]
        %v3804 = vld [vmem:[%s2420 + $0x20] sm:$0xff]
        %v3805 = vld [vmem:[%s2420 + $0x28] sm:$0xff]
        %v3806 = vld [vmem:[%s2420 + $0x30] sm:$0xff]
        %v3807 = vld [vmem:[%s2420 + $0x38] sm:$0xff]
        %v3808 = vld [vmem:[%s2420 + $0x40] sm:$0xff]
        %v3809 = vld [vmem:[%s2420 + $0x48] sm:$0xff]
        %v3810 = vld [vmem:[%s2420 + $0x50] sm:$0xff]
        %v3811 = vld [vmem:[%s2420 + $0x58] sm:$0xff]
        %v3812 = vld [vmem:[%s2420 + $0x60] sm:$0xff]
        %v3813 = vld [vmem:[%s2420 + $0x68] sm:$0xff]
        %v3814 = vld [vmem:[%s2420 + $0x70] sm:$0xff]
        %v3815 = vld [vmem:[%s2420 + $0x78] sm:$0xff]
        %s3816 = sld [smem:[#allocation9 + $0x107]]
        %v3817 = vstv %s3816
        %v3818 = vmul.f32 %v3800, %v3817
        %v3819 = vmul.f32 %v3801, %v3817
        %v3820 = vmul.f32 %v3802, %v3817
        %v3821 = vmul.f32 %v3803, %v3817
        %v3822 = vmul.f32 %v3804, %v3817
        %v3823 = vmul.f32 %v3805, %v3817
        %v3824 = vmul.f32 %v3806, %v3817
        %v3825 = vmul.f32 %v3807, %v3817
        %v3826 = vmul.f32 %v3808, %v3817
        %v3827 = vmul.f32 %v3809, %v3817
        %v3828 = vmul.f32 %v3810, %v3817
        %v3829 = vmul.f32 %v3811, %v3817
        %v3830 = vmul.f32 %v3812, %v3817
        %v3831 = vmul.f32 %v3813, %v3817
        %v3832 = vmul.f32 %v3814, %v3817
        %v3833 = vmul.f32 %v3815, %v3817
        %v3834 = vadd.f32 %v3784, %v3818
        %v3835 = vadd.f32 %v3785, %v3819
        %v3836 = vadd.f32 %v3786, %v3820
        %v3837 = vadd.f32 %v3787, %v3821
        %v3838 = vadd.f32 %v3788, %v3822
        %v3839 = vadd.f32 %v3789, %v3823
        %v3840 = vadd.f32 %v3790, %v3824
        %v3841 = vadd.f32 %v3791, %v3825
        %v3842 = vadd.f32 %v3792, %v3826
        %v3843 = vadd.f32 %v3793, %v3827
        %v3844 = vadd.f32 %v3794, %v3828
        %v3845 = vadd.f32 %v3795, %v3829
        %v3846 = vadd.f32 %v3796, %v3830
        %v3847 = vadd.f32 %v3797, %v3831
        %v3848 = vadd.f32 %v3798, %v3832
        %v3849 = vadd.f32 %v3799, %v3833
        %s3850 = sld [smem:[#allocation10 + $0x2]]
        %v3851 = vstv %s3850
        %v3852 = vadd.f32 %v3834, %v3851
        %v3853 = vadd.f32 %v3835, %v3851
        %v3854 = vadd.f32 %v3836, %v3851
        %v3855 = vadd.f32 %v3837, %v3851
        %v3856 = vadd.f32 %v3838, %v3851
        %v3857 = vadd.f32 %v3839, %v3851
        %v3858 = vadd.f32 %v3840, %v3851
        %v3859 = vadd.f32 %v3841, %v3851
        %v3860 = vadd.f32 %v3842, %v3851
        %v3861 = vadd.f32 %v3843, %v3851
        %v3862 = vadd.f32 %v3844, %v3851
        %v3863 = vadd.f32 %v3845, %v3851
        %v3864 = vadd.f32 %v3846, %v3851
        %v3865 = vadd.f32 %v3847, %v3851
        %v3866 = vadd.f32 %v3848, %v3851
        %v3867 = vadd.f32 %v3849, %v3851
        %v3868 = vxor.u32 %v3852, 2147483648
        %v3869 = vxor.u32 %v3853, 2147483648
        %v3870 = vxor.u32 %v3854, 2147483648
        %v3871 = vxor.u32 %v3855, 2147483648
        %v3872 = vxor.u32 %v3856, 2147483648
        %v3873 = vxor.u32 %v3857, 2147483648
        %v3874 = vxor.u32 %v3858, 2147483648
        %v3875 = vxor.u32 %v3859, 2147483648
        %v3876 = vxor.u32 %v3860, 2147483648
        %v3877 = vxor.u32 %v3861, 2147483648
        %v3878 = vxor.u32 %v3862, 2147483648
        %v3879 = vxor.u32 %v3863, 2147483648
        %v3880 = vxor.u32 %v3864, 2147483648
        %v3881 = vxor.u32 %v3865, 2147483648
        %v3882 = vxor.u32 %v3866, 2147483648
        %v3883 = vxor.u32 %v3867, 2147483648
        %v3884 = vmul.f32 %v3868, 1.442695
        %v3885 = vpow.pop %v3884
        %v3886 = vmul.f32 %v3869, 1.442695
        %v3887 = vpow.pop %v3886
        %v3888 = vmul.f32 %v3870, 1.442695
        %v3889 = vpow.pop %v3888
        %v3890 = vmul.f32 %v3871, 1.442695
        %v3891 = vpow.pop %v3890
        %v3892 = vmul.f32 %v3872, 1.442695
        %v3893 = vpow.pop %v3892
        %v3894 = vmul.f32 %v3873, 1.442695
        %v3895 = vpow.pop %v3894
        %v3896 = vmul.f32 %v3874, 1.442695
        %v3897 = vpow.pop %v3896
        %v3898 = vmul.f32 %v3875, 1.442695
        %v3899 = vpow.pop %v3898
        %v3900 = vmul.f32 %v3876, 1.442695
        %v3901 = vpow.pop %v3900
        %v3902 = vmul.f32 %v3877, 1.442695
        %v3903 = vpow.pop %v3902
        %v3904 = vmul.f32 %v3878, 1.442695
        %v3905 = vpow.pop %v3904
        %v3906 = vmul.f32 %v3879, 1.442695
        %v3907 = vpow.pop %v3906
        %v3908 = vmul.f32 %v3880, 1.442695
        %v3909 = vpow.pop %v3908
        %v3910 = vmul.f32 %v3881, 1.442695
        %v3911 = vpow.pop %v3910
        %v3912 = vmul.f32 %v3882, 1.442695
        %v3913 = vpow.pop %v3912
        %v3914 = vmul.f32 %v3883, 1.442695
        %v3915 = vpow.pop %v3914
        %v3916 = vadd.f32 %v3885, 1.0
        %v3917 = vadd.f32 %v3887, 1.0
        %v3918 = vadd.f32 %v3889, 1.0
        %v3919 = vadd.f32 %v3891, 1.0
        %v3920 = vadd.f32 %v3893, 1.0
        %v3921 = vadd.f32 %v3895, 1.0
        %v3922 = vadd.f32 %v3897, 1.0
        %v3923 = vadd.f32 %v3899, 1.0
        %v3924 = vadd.f32 %v3901, 1.0
        %v3925 = vadd.f32 %v3903, 1.0
        %v3926 = vadd.f32 %v3905, 1.0
        %v3927 = vadd.f32 %v3907, 1.0
        %v3928 = vadd.f32 %v3909, 1.0
        %v3929 = vadd.f32 %v3911, 1.0
        %v3930 = vadd.f32 %v3913, 1.0
        %v3931 = vadd.f32 %v3915, 1.0
        %v3932 = vrcp.pop %v3916
        %v3933 = vmul.f32 1.0, %v3932
        %v3934 = vrcp.pop %v3917
        %v3935 = vmul.f32 1.0, %v3934
        %v3936 = vrcp.pop %v3918
        %v3937 = vmul.f32 1.0, %v3936
        %v3938 = vrcp.pop %v3919
        %v3939 = vmul.f32 1.0, %v3938
        %v3940 = vrcp.pop %v3920
        %v3941 = vmul.f32 1.0, %v3940
        %v3942 = vrcp.pop %v3921
        %v3943 = vmul.f32 1.0, %v3942
        %v3944 = vrcp.pop %v3922
        %v3945 = vmul.f32 1.0, %v3944
        %v3946 = vrcp.pop %v3923
        %v3947 = vmul.f32 1.0, %v3946
        %v3948 = vrcp.pop %v3924
        %v3949 = vmul.f32 1.0, %v3948
        %v3950 = vrcp.pop %v3925
        %v3951 = vmul.f32 1.0, %v3950
        %v3952 = vrcp.pop %v3926
        %v3953 = vmul.f32 1.0, %v3952
        %v3954 = vrcp.pop %v3927
        %v3955 = vmul.f32 1.0, %v3954
        %v3956 = vrcp.pop %v3928
        %v3957 = vmul.f32 1.0, %v3956
        %v3958 = vrcp.pop %v3929
        %v3959 = vmul.f32 1.0, %v3958
        %v3960 = vrcp.pop %v3930
        %v3961 = vmul.f32 1.0, %v3960
        %v3962 = vrcp.pop %v3931
        %v3963 = vmul.f32 1.0, %v3962
        %s3964 = scalar_lea.vmem %s408, 256 [#allocation13]
        %3965 = vst [vmem:[%s3964] sm:$0xff] %v3933
        %3966 = vst [vmem:[%s3964 + $0x8] sm:$0xff] %v3935
        %3967 = vst [vmem:[%s3964 + $0x10] sm:$0xff] %v3937
        %3968 = vst [vmem:[%s3964 + $0x18] sm:$0xff] %v3939
        %3969 = vst [vmem:[%s3964 + $0x20] sm:$0xff] %v3941
        %3970 = vst [vmem:[%s3964 + $0x28] sm:$0xff] %v3943
        %3971 = vst [vmem:[%s3964 + $0x30] sm:$0xff] %v3945
        %3972 = vst [vmem:[%s3964 + $0x38] sm:$0xff] %v3947
        %3973 = vst [vmem:[%s3964 + $0x40] sm:$0xff] %v3949
        %3974 = vst [vmem:[%s3964 + $0x48] sm:$0xff] %v3951
        %3975 = vst [vmem:[%s3964 + $0x50] sm:$0xff] %v3953
        %3976 = vst [vmem:[%s3964 + $0x58] sm:$0xff] %v3955
        %3977 = vst [vmem:[%s3964 + $0x60] sm:$0xff] %v3957
        %3978 = vst [vmem:[%s3964 + $0x68] sm:$0xff] %v3959
        %3979 = vst [vmem:[%s3964 + $0x70] sm:$0xff] %v3961
        %3980 = vst [vmem:[%s3964 + $0x78] sm:$0xff] %v3963
        %v3981 = vld [vmem:[%s401] sm:$0xff]
        %v3982 = vld [vmem:[%s401 + $0x8] sm:$0xff]
        %v3983 = vld [vmem:[%s401 + $0x10] sm:$0xff]
        %v3984 = vld [vmem:[%s401 + $0x18] sm:$0xff]
        %v3985 = vld [vmem:[%s401 + $0x20] sm:$0xff]
        %v3986 = vld [vmem:[%s401 + $0x28] sm:$0xff]
        %v3987 = vld [vmem:[%s401 + $0x30] sm:$0xff]
        %v3988 = vld [vmem:[%s401 + $0x38] sm:$0xff]
        %v3989 = vld [vmem:[%s401 + $0x40] sm:$0xff]
        %v3990 = vld [vmem:[%s401 + $0x48] sm:$0xff]
        %v3991 = vld [vmem:[%s401 + $0x50] sm:$0xff]
        %v3992 = vld [vmem:[%s401 + $0x58] sm:$0xff]
        %v3993 = vld [vmem:[%s401 + $0x60] sm:$0xff]
        %v3994 = vld [vmem:[%s401 + $0x68] sm:$0xff]
        %v3995 = vld [vmem:[%s401 + $0x70] sm:$0xff]
        %v3996 = vld [vmem:[%s401 + $0x78] sm:$0xff]
        %s3997 = sld [smem:[#allocation9 + $0x180]]
        %v3998 = vstv %s3997
        %v3999 = vmul.f32 %v3981, %v3998
        %v4000 = vmul.f32 %v3982, %v3998
        %v4001 = vmul.f32 %v3983, %v3998
        %v4002 = vmul.f32 %v3984, %v3998
        %v4003 = vmul.f32 %v3985, %v3998
        %v4004 = vmul.f32 %v3986, %v3998
        %v4005 = vmul.f32 %v3987, %v3998
        %v4006 = vmul.f32 %v3988, %v3998
        %v4007 = vmul.f32 %v3989, %v3998
        %v4008 = vmul.f32 %v3990, %v3998
        %v4009 = vmul.f32 %v3991, %v3998
        %v4010 = vmul.f32 %v3992, %v3998
        %v4011 = vmul.f32 %v3993, %v3998
        %v4012 = vmul.f32 %v3994, %v3998
        %v4013 = vmul.f32 %v3995, %v3998
        %v4014 = vmul.f32 %v3996, %v3998
        %v4015 = vld [vmem:[%s938] sm:$0xff]
        %v4016 = vld [vmem:[%s938 + $0x8] sm:$0xff]
        %v4017 = vld [vmem:[%s938 + $0x10] sm:$0xff]
        %v4018 = vld [vmem:[%s938 + $0x18] sm:$0xff]
        %v4019 = vld [vmem:[%s938 + $0x20] sm:$0xff]
        %v4020 = vld [vmem:[%s938 + $0x28] sm:$0xff]
        %v4021 = vld [vmem:[%s938 + $0x30] sm:$0xff]
        %v4022 = vld [vmem:[%s938 + $0x38] sm:$0xff]
        %v4023 = vld [vmem:[%s938 + $0x40] sm:$0xff]
        %v4024 = vld [vmem:[%s938 + $0x48] sm:$0xff]
        %v4025 = vld [vmem:[%s938 + $0x50] sm:$0xff]
        %v4026 = vld [vmem:[%s938 + $0x58] sm:$0xff]
        %v4027 = vld [vmem:[%s938 + $0x60] sm:$0xff]
        %v4028 = vld [vmem:[%s938 + $0x68] sm:$0xff]
        %v4029 = vld [vmem:[%s938 + $0x70] sm:$0xff]
        %v4030 = vld [vmem:[%s938 + $0x78] sm:$0xff]
        %s4031 = sld [smem:[#allocation9 + $0x181]]
        %v4032 = vstv %s4031
        %v4033 = vmul.f32 %v4015, %v4032
        %v4034 = vmul.f32 %v4016, %v4032
        %v4035 = vmul.f32 %v4017, %v4032
        %v4036 = vmul.f32 %v4018, %v4032
        %v4037 = vmul.f32 %v4019, %v4032
        %v4038 = vmul.f32 %v4020, %v4032
        %v4039 = vmul.f32 %v4021, %v4032
        %v4040 = vmul.f32 %v4022, %v4032
        %v4041 = vmul.f32 %v4023, %v4032
        %v4042 = vmul.f32 %v4024, %v4032
        %v4043 = vmul.f32 %v4025, %v4032
        %v4044 = vmul.f32 %v4026, %v4032
        %v4045 = vmul.f32 %v4027, %v4032
        %v4046 = vmul.f32 %v4028, %v4032
        %v4047 = vmul.f32 %v4029, %v4032
        %v4048 = vmul.f32 %v4030, %v4032
        %v4049 = vadd.f32 %v3999, %v4033
        %v4050 = vadd.f32 %v4000, %v4034
        %v4051 = vadd.f32 %v4001, %v4035
        %v4052 = vadd.f32 %v4002, %v4036
        %v4053 = vadd.f32 %v4003, %v4037
        %v4054 = vadd.f32 %v4004, %v4038
        %v4055 = vadd.f32 %v4005, %v4039
        %v4056 = vadd.f32 %v4006, %v4040
        %v4057 = vadd.f32 %v4007, %v4041
        %v4058 = vadd.f32 %v4008, %v4042
        %v4059 = vadd.f32 %v4009, %v4043
        %v4060 = vadd.f32 %v4010, %v4044
        %v4061 = vadd.f32 %v4011, %v4045
        %v4062 = vadd.f32 %v4012, %v4046
        %v4063 = vadd.f32 %v4013, %v4047
        %v4064 = vadd.f32 %v4014, %v4048
        %v4065 = vld [vmem:[%s1185] sm:$0xff]
        %v4066 = vld [vmem:[%s1185 + $0x8] sm:$0xff]
        %v4067 = vld [vmem:[%s1185 + $0x10] sm:$0xff]
        %v4068 = vld [vmem:[%s1185 + $0x18] sm:$0xff]
        %v4069 = vld [vmem:[%s1185 + $0x20] sm:$0xff]
        %v4070 = vld [vmem:[%s1185 + $0x28] sm:$0xff]
        %v4071 = vld [vmem:[%s1185 + $0x30] sm:$0xff]
        %v4072 = vld [vmem:[%s1185 + $0x38] sm:$0xff]
        %v4073 = vld [vmem:[%s1185 + $0x40] sm:$0xff]
        %v4074 = vld [vmem:[%s1185 + $0x48] sm:$0xff]
        %v4075 = vld [vmem:[%s1185 + $0x50] sm:$0xff]
        %v4076 = vld [vmem:[%s1185 + $0x58] sm:$0xff]
        %v4077 = vld [vmem:[%s1185 + $0x60] sm:$0xff]
        %v4078 = vld [vmem:[%s1185 + $0x68] sm:$0xff]
        %v4079 = vld [vmem:[%s1185 + $0x70] sm:$0xff]
        %v4080 = vld [vmem:[%s1185 + $0x78] sm:$0xff]
        %s4081 = sld [smem:[#allocation9 + $0x182]]
        %v4082 = vstv %s4081
        %v4083 = vmul.f32 %v4065, %v4082
        %v4084 = vmul.f32 %v4066, %v4082
        %v4085 = vmul.f32 %v4067, %v4082
        %v4086 = vmul.f32 %v4068, %v4082
        %v4087 = vmul.f32 %v4069, %v4082
        %v4088 = vmul.f32 %v4070, %v4082
        %v4089 = vmul.f32 %v4071, %v4082
        %v4090 = vmul.f32 %v4072, %v4082
        %v4091 = vmul.f32 %v4073, %v4082
        %v4092 = vmul.f32 %v4074, %v4082
        %v4093 = vmul.f32 %v4075, %v4082
        %v4094 = vmul.f32 %v4076, %v4082
        %v4095 = vmul.f32 %v4077, %v4082
        %v4096 = vmul.f32 %v4078, %v4082
        %v4097 = vmul.f32 %v4079, %v4082
        %v4098 = vmul.f32 %v4080, %v4082
        %v4099 = vadd.f32 %v4049, %v4083
        %v4100 = vadd.f32 %v4050, %v4084
        %v4101 = vadd.f32 %v4051, %v4085
        %v4102 = vadd.f32 %v4052, %v4086
        %v4103 = vadd.f32 %v4053, %v4087
        %v4104 = vadd.f32 %v4054, %v4088
        %v4105 = vadd.f32 %v4055, %v4089
        %v4106 = vadd.f32 %v4056, %v4090
        %v4107 = vadd.f32 %v4057, %v4091
        %v4108 = vadd.f32 %v4058, %v4092
        %v4109 = vadd.f32 %v4059, %v4093
        %v4110 = vadd.f32 %v4060, %v4094
        %v4111 = vadd.f32 %v4061, %v4095
        %v4112 = vadd.f32 %v4062, %v4096
        %v4113 = vadd.f32 %v4063, %v4097
        %v4114 = vadd.f32 %v4064, %v4098
        %v4115 = vld [vmem:[%s1432] sm:$0xff]
        %v4116 = vld [vmem:[%s1432 + $0x8] sm:$0xff]
        %v4117 = vld [vmem:[%s1432 + $0x10] sm:$0xff]
        %v4118 = vld [vmem:[%s1432 + $0x18] sm:$0xff]
        %v4119 = vld [vmem:[%s1432 + $0x20] sm:$0xff]
        %v4120 = vld [vmem:[%s1432 + $0x28] sm:$0xff]
        %v4121 = vld [vmem:[%s1432 + $0x30] sm:$0xff]
        %v4122 = vld [vmem:[%s1432 + $0x38] sm:$0xff]
        %v4123 = vld [vmem:[%s1432 + $0x40] sm:$0xff]
        %v4124 = vld [vmem:[%s1432 + $0x48] sm:$0xff]
        %v4125 = vld [vmem:[%s1432 + $0x50] sm:$0xff]
        %v4126 = vld [vmem:[%s1432 + $0x58] sm:$0xff]
        %v4127 = vld [vmem:[%s1432 + $0x60] sm:$0xff]
        %v4128 = vld [vmem:[%s1432 + $0x68] sm:$0xff]
        %v4129 = vld [vmem:[%s1432 + $0x70] sm:$0xff]
        %v4130 = vld [vmem:[%s1432 + $0x78] sm:$0xff]
        %s4131 = sld [smem:[#allocation9 + $0x183]]
        %v4132 = vstv %s4131
        %v4133 = vmul.f32 %v4115, %v4132
        %v4134 = vmul.f32 %v4116, %v4132
        %v4135 = vmul.f32 %v4117, %v4132
        %v4136 = vmul.f32 %v4118, %v4132
        %v4137 = vmul.f32 %v4119, %v4132
        %v4138 = vmul.f32 %v4120, %v4132
        %v4139 = vmul.f32 %v4121, %v4132
        %v4140 = vmul.f32 %v4122, %v4132
        %v4141 = vmul.f32 %v4123, %v4132
        %v4142 = vmul.f32 %v4124, %v4132
        %v4143 = vmul.f32 %v4125, %v4132
        %v4144 = vmul.f32 %v4126, %v4132
        %v4145 = vmul.f32 %v4127, %v4132
        %v4146 = vmul.f32 %v4128, %v4132
        %v4147 = vmul.f32 %v4129, %v4132
        %v4148 = vmul.f32 %v4130, %v4132
        %v4149 = vadd.f32 %v4099, %v4133
        %v4150 = vadd.f32 %v4100, %v4134
        %v4151 = vadd.f32 %v4101, %v4135
        %v4152 = vadd.f32 %v4102, %v4136
        %v4153 = vadd.f32 %v4103, %v4137
        %v4154 = vadd.f32 %v4104, %v4138
        %v4155 = vadd.f32 %v4105, %v4139
        %v4156 = vadd.f32 %v4106, %v4140
        %v4157 = vadd.f32 %v4107, %v4141
        %v4158 = vadd.f32 %v4108, %v4142
        %v4159 = vadd.f32 %v4109, %v4143
        %v4160 = vadd.f32 %v4110, %v4144
        %v4161 = vadd.f32 %v4111, %v4145
        %v4162 = vadd.f32 %v4112, %v4146
        %v4163 = vadd.f32 %v4113, %v4147
        %v4164 = vadd.f32 %v4114, %v4148
        %v4165 = vld [vmem:[%s1679] sm:$0xff]
        %v4166 = vld [vmem:[%s1679 + $0x8] sm:$0xff]
        %v4167 = vld [vmem:[%s1679 + $0x10] sm:$0xff]
        %v4168 = vld [vmem:[%s1679 + $0x18] sm:$0xff]
        %v4169 = vld [vmem:[%s1679 + $0x20] sm:$0xff]
        %v4170 = vld [vmem:[%s1679 + $0x28] sm:$0xff]
        %v4171 = vld [vmem:[%s1679 + $0x30] sm:$0xff]
        %v4172 = vld [vmem:[%s1679 + $0x38] sm:$0xff]
        %v4173 = vld [vmem:[%s1679 + $0x40] sm:$0xff]
        %v4174 = vld [vmem:[%s1679 + $0x48] sm:$0xff]
        %v4175 = vld [vmem:[%s1679 + $0x50] sm:$0xff]
        %v4176 = vld [vmem:[%s1679 + $0x58] sm:$0xff]
        %v4177 = vld [vmem:[%s1679 + $0x60] sm:$0xff]
        %v4178 = vld [vmem:[%s1679 + $0x68] sm:$0xff]
        %v4179 = vld [vmem:[%s1679 + $0x70] sm:$0xff]
        %v4180 = vld [vmem:[%s1679 + $0x78] sm:$0xff]
        %s4181 = sld [smem:[#allocation9 + $0x184]]
        %v4182 = vstv %s4181
        %v4183 = vmul.f32 %v4165, %v4182
        %v4184 = vmul.f32 %v4166, %v4182
        %v4185 = vmul.f32 %v4167, %v4182
        %v4186 = vmul.f32 %v4168, %v4182
        %v4187 = vmul.f32 %v4169, %v4182
        %v4188 = vmul.f32 %v4170, %v4182
        %v4189 = vmul.f32 %v4171, %v4182
        %v4190 = vmul.f32 %v4172, %v4182
        %v4191 = vmul.f32 %v4173, %v4182
        %v4192 = vmul.f32 %v4174, %v4182
        %v4193 = vmul.f32 %v4175, %v4182
        %v4194 = vmul.f32 %v4176, %v4182
        %v4195 = vmul.f32 %v4177, %v4182
        %v4196 = vmul.f32 %v4178, %v4182
        %v4197 = vmul.f32 %v4179, %v4182
        %v4198 = vmul.f32 %v4180, %v4182
        %v4199 = vadd.f32 %v4149, %v4183
        %v4200 = vadd.f32 %v4150, %v4184
        %v4201 = vadd.f32 %v4151, %v4185
        %v4202 = vadd.f32 %v4152, %v4186
        %v4203 = vadd.f32 %v4153, %v4187
        %v4204 = vadd.f32 %v4154, %v4188
        %v4205 = vadd.f32 %v4155, %v4189
        %v4206 = vadd.f32 %v4156, %v4190
        %v4207 = vadd.f32 %v4157, %v4191
        %v4208 = vadd.f32 %v4158, %v4192
        %v4209 = vadd.f32 %v4159, %v4193
        %v4210 = vadd.f32 %v4160, %v4194
        %v4211 = vadd.f32 %v4161, %v4195
        %v4212 = vadd.f32 %v4162, %v4196
        %v4213 = vadd.f32 %v4163, %v4197
        %v4214 = vadd.f32 %v4164, %v4198
        %v4215 = vld [vmem:[%s1926] sm:$0xff]
        %v4216 = vld [vmem:[%s1926 + $0x8] sm:$0xff]
        %v4217 = vld [vmem:[%s1926 + $0x10] sm:$0xff]
        %v4218 = vld [vmem:[%s1926 + $0x18] sm:$0xff]
        %v4219 = vld [vmem:[%s1926 + $0x20] sm:$0xff]
        %v4220 = vld [vmem:[%s1926 + $0x28] sm:$0xff]
        %v4221 = vld [vmem:[%s1926 + $0x30] sm:$0xff]
        %v4222 = vld [vmem:[%s1926 + $0x38] sm:$0xff]
        %v4223 = vld [vmem:[%s1926 + $0x40] sm:$0xff]
        %v4224 = vld [vmem:[%s1926 + $0x48] sm:$0xff]
        %v4225 = vld [vmem:[%s1926 + $0x50] sm:$0xff]
        %v4226 = vld [vmem:[%s1926 + $0x58] sm:$0xff]
        %v4227 = vld [vmem:[%s1926 + $0x60] sm:$0xff]
        %v4228 = vld [vmem:[%s1926 + $0x68] sm:$0xff]
        %v4229 = vld [vmem:[%s1926 + $0x70] sm:$0xff]
        %v4230 = vld [vmem:[%s1926 + $0x78] sm:$0xff]
        %s4231 = sld [smem:[#allocation9 + $0x185]]
        %v4232 = vstv %s4231
        %v4233 = vmul.f32 %v4215, %v4232
        %v4234 = vmul.f32 %v4216, %v4232
        %v4235 = vmul.f32 %v4217, %v4232
        %v4236 = vmul.f32 %v4218, %v4232
        %v4237 = vmul.f32 %v4219, %v4232
        %v4238 = vmul.f32 %v4220, %v4232
        %v4239 = vmul.f32 %v4221, %v4232
        %v4240 = vmul.f32 %v4222, %v4232
        %v4241 = vmul.f32 %v4223, %v4232
        %v4242 = vmul.f32 %v4224, %v4232
        %v4243 = vmul.f32 %v4225, %v4232
        %v4244 = vmul.f32 %v4226, %v4232
        %v4245 = vmul.f32 %v4227, %v4232
        %v4246 = vmul.f32 %v4228, %v4232
        %v4247 = vmul.f32 %v4229, %v4232
        %v4248 = vmul.f32 %v4230, %v4232
        %v4249 = vadd.f32 %v4199, %v4233
        %v4250 = vadd.f32 %v4200, %v4234
        %v4251 = vadd.f32 %v4201, %v4235
        %v4252 = vadd.f32 %v4202, %v4236
        %v4253 = vadd.f32 %v4203, %v4237
        %v4254 = vadd.f32 %v4204, %v4238
        %v4255 = vadd.f32 %v4205, %v4239
        %v4256 = vadd.f32 %v4206, %v4240
        %v4257 = vadd.f32 %v4207, %v4241
        %v4258 = vadd.f32 %v4208, %v4242
        %v4259 = vadd.f32 %v4209, %v4243
        %v4260 = vadd.f32 %v4210, %v4244
        %v4261 = vadd.f32 %v4211, %v4245
        %v4262 = vadd.f32 %v4212, %v4246
        %v4263 = vadd.f32 %v4213, %v4247
        %v4264 = vadd.f32 %v4214, %v4248
        %v4265 = vld [vmem:[%s2173] sm:$0xff]
        %v4266 = vld [vmem:[%s2173 + $0x8] sm:$0xff]
        %v4267 = vld [vmem:[%s2173 + $0x10] sm:$0xff]
        %v4268 = vld [vmem:[%s2173 + $0x18] sm:$0xff]
        %v4269 = vld [vmem:[%s2173 + $0x20] sm:$0xff]
        %v4270 = vld [vmem:[%s2173 + $0x28] sm:$0xff]
        %v4271 = vld [vmem:[%s2173 + $0x30] sm:$0xff]
        %v4272 = vld [vmem:[%s2173 + $0x38] sm:$0xff]
        %v4273 = vld [vmem:[%s2173 + $0x40] sm:$0xff]
        %v4274 = vld [vmem:[%s2173 + $0x48] sm:$0xff]
        %v4275 = vld [vmem:[%s2173 + $0x50] sm:$0xff]
        %v4276 = vld [vmem:[%s2173 + $0x58] sm:$0xff]
        %v4277 = vld [vmem:[%s2173 + $0x60] sm:$0xff]
        %v4278 = vld [vmem:[%s2173 + $0x68] sm:$0xff]
        %v4279 = vld [vmem:[%s2173 + $0x70] sm:$0xff]
        %v4280 = vld [vmem:[%s2173 + $0x78] sm:$0xff]
        %s4281 = sld [smem:[#allocation9 + $0x186]]
        %v4282 = vstv %s4281
        %v4283 = vmul.f32 %v4265, %v4282
        %v4284 = vmul.f32 %v4266, %v4282
        %v4285 = vmul.f32 %v4267, %v4282
        %v4286 = vmul.f32 %v4268, %v4282
        %v4287 = vmul.f32 %v4269, %v4282
        %v4288 = vmul.f32 %v4270, %v4282
        %v4289 = vmul.f32 %v4271, %v4282
        %v4290 = vmul.f32 %v4272, %v4282
        %v4291 = vmul.f32 %v4273, %v4282
        %v4292 = vmul.f32 %v4274, %v4282
        %v4293 = vmul.f32 %v4275, %v4282
        %v4294 = vmul.f32 %v4276, %v4282
        %v4295 = vmul.f32 %v4277, %v4282
        %v4296 = vmul.f32 %v4278, %v4282
        %v4297 = vmul.f32 %v4279, %v4282
        %v4298 = vmul.f32 %v4280, %v4282
        %v4299 = vadd.f32 %v4249, %v4283
        %v4300 = vadd.f32 %v4250, %v4284
        %v4301 = vadd.f32 %v4251, %v4285
        %v4302 = vadd.f32 %v4252, %v4286
        %v4303 = vadd.f32 %v4253, %v4287
        %v4304 = vadd.f32 %v4254, %v4288
        %v4305 = vadd.f32 %v4255, %v4289
        %v4306 = vadd.f32 %v4256, %v4290
        %v4307 = vadd.f32 %v4257, %v4291
        %v4308 = vadd.f32 %v4258, %v4292
        %v4309 = vadd.f32 %v4259, %v4293
        %v4310 = vadd.f32 %v4260, %v4294
        %v4311 = vadd.f32 %v4261, %v4295
        %v4312 = vadd.f32 %v4262, %v4296
        %v4313 = vadd.f32 %v4263, %v4297
        %v4314 = vadd.f32 %v4264, %v4298
        %v4315 = vld [vmem:[%s2420] sm:$0xff]
        %v4316 = vld [vmem:[%s2420 + $0x8] sm:$0xff]
        %v4317 = vld [vmem:[%s2420 + $0x10] sm:$0xff]
        %v4318 = vld [vmem:[%s2420 + $0x18] sm:$0xff]
        %v4319 = vld [vmem:[%s2420 + $0x20] sm:$0xff]
        %v4320 = vld [vmem:[%s2420 + $0x28] sm:$0xff]
        %v4321 = vld [vmem:[%s2420 + $0x30] sm:$0xff]
        %v4322 = vld [vmem:[%s2420 + $0x38] sm:$0xff]
        %v4323 = vld [vmem:[%s2420 + $0x40] sm:$0xff]
        %v4324 = vld [vmem:[%s2420 + $0x48] sm:$0xff]
        %v4325 = vld [vmem:[%s2420 + $0x50] sm:$0xff]
        %v4326 = vld [vmem:[%s2420 + $0x58] sm:$0xff]
        %v4327 = vld [vmem:[%s2420 + $0x60] sm:$0xff]
        %v4328 = vld [vmem:[%s2420 + $0x68] sm:$0xff]
        %v4329 = vld [vmem:[%s2420 + $0x70] sm:$0xff]
        %v4330 = vld [vmem:[%s2420 + $0x78] sm:$0xff]
        %s4331 = sld [smem:[#allocation9 + $0x187]]
        %v4332 = vstv %s4331
        %v4333 = vmul.f32 %v4315, %v4332
        %v4334 = vmul.f32 %v4316, %v4332
        %v4335 = vmul.f32 %v4317, %v4332
        %v4336 = vmul.f32 %v4318, %v4332
        %v4337 = vmul.f32 %v4319, %v4332
        %v4338 = vmul.f32 %v4320, %v4332
        %v4339 = vmul.f32 %v4321, %v4332
        %v4340 = vmul.f32 %v4322, %v4332
        %v4341 = vmul.f32 %v4323, %v4332
        %v4342 = vmul.f32 %v4324, %v4332
        %v4343 = vmul.f32 %v4325, %v4332
        %v4344 = vmul.f32 %v4326, %v4332
        %v4345 = vmul.f32 %v4327, %v4332
        %v4346 = vmul.f32 %v4328, %v4332
        %v4347 = vmul.f32 %v4329, %v4332
        %v4348 = vmul.f32 %v4330, %v4332
        %v4349 = vadd.f32 %v4299, %v4333
        %v4350 = vadd.f32 %v4300, %v4334
        %v4351 = vadd.f32 %v4301, %v4335
        %v4352 = vadd.f32 %v4302, %v4336
        %v4353 = vadd.f32 %v4303, %v4337
        %v4354 = vadd.f32 %v4304, %v4338
        %v4355 = vadd.f32 %v4305, %v4339
        %v4356 = vadd.f32 %v4306, %v4340
        %v4357 = vadd.f32 %v4307, %v4341
        %v4358 = vadd.f32 %v4308, %v4342
        %v4359 = vadd.f32 %v4309, %v4343
        %v4360 = vadd.f32 %v4310, %v4344
        %v4361 = vadd.f32 %v4311, %v4345
        %v4362 = vadd.f32 %v4312, %v4346
        %v4363 = vadd.f32 %v4313, %v4347
        %v4364 = vadd.f32 %v4314, %v4348
        %s4365 = sld [smem:[#allocation10 + $0x3]]
        %v4366 = vstv %s4365
        %v4367 = vadd.f32 %v4349, %v4366
        %v4368 = vadd.f32 %v4350, %v4366
        %v4369 = vadd.f32 %v4351, %v4366
        %v4370 = vadd.f32 %v4352, %v4366
        %v4371 = vadd.f32 %v4353, %v4366
        %v4372 = vadd.f32 %v4354, %v4366
        %v4373 = vadd.f32 %v4355, %v4366
        %v4374 = vadd.f32 %v4356, %v4366
        %v4375 = vadd.f32 %v4357, %v4366
        %v4376 = vadd.f32 %v4358, %v4366
        %v4377 = vadd.f32 %v4359, %v4366
        %v4378 = vadd.f32 %v4360, %v4366
        %v4379 = vadd.f32 %v4361, %v4366
        %v4380 = vadd.f32 %v4362, %v4366
        %v4381 = vadd.f32 %v4363, %v4366
        %v4382 = vadd.f32 %v4364, %v4366
        %v4383 = vxor.u32 %v4367, 2147483648
        %v4384 = vxor.u32 %v4368, 2147483648
        %v4385 = vxor.u32 %v4369, 2147483648
        %v4386 = vxor.u32 %v4370, 2147483648
        %v4387 = vxor.u32 %v4371, 2147483648
        %v4388 = vxor.u32 %v4372, 2147483648
        %v4389 = vxor.u32 %v4373, 2147483648
        %v4390 = vxor.u32 %v4374, 2147483648
        %v4391 = vxor.u32 %v4375, 2147483648
        %v4392 = vxor.u32 %v4376, 2147483648
        %v4393 = vxor.u32 %v4377, 2147483648
        %v4394 = vxor.u32 %v4378, 2147483648
        %v4395 = vxor.u32 %v4379, 2147483648
        %v4396 = vxor.u32 %v4380, 2147483648
        %v4397 = vxor.u32 %v4381, 2147483648
        %v4398 = vxor.u32 %v4382, 2147483648
        %v4399 = vmul.f32 %v4383, 1.442695
        %v4400 = vpow.pop %v4399
        %v4401 = vmul.f32 %v4384, 1.442695
        %v4402 = vpow.pop %v4401
        %v4403 = vmul.f32 %v4385, 1.442695
        %v4404 = vpow.pop %v4403
        %v4405 = vmul.f32 %v4386, 1.442695
        %v4406 = vpow.pop %v4405
        %v4407 = vmul.f32 %v4387, 1.442695
        %v4408 = vpow.pop %v4407
        %v4409 = vmul.f32 %v4388, 1.442695
        %v4410 = vpow.pop %v4409
        %v4411 = vmul.f32 %v4389, 1.442695
        %v4412 = vpow.pop %v4411
        %v4413 = vmul.f32 %v4390, 1.442695
        %v4414 = vpow.pop %v4413
        %v4415 = vmul.f32 %v4391, 1.442695
        %v4416 = vpow.pop %v4415
        %v4417 = vmul.f32 %v4392, 1.442695
        %v4418 = vpow.pop %v4417
        %v4419 = vmul.f32 %v4393, 1.442695
        %v4420 = vpow.pop %v4419
        %v4421 = vmul.f32 %v4394, 1.442695
        %v4422 = vpow.pop %v4421
        %v4423 = vmul.f32 %v4395, 1.442695
        %v4424 = vpow.pop %v4423
        %v4425 = vmul.f32 %v4396, 1.442695
        %v4426 = vpow.pop %v4425
        %v4427 = vmul.f32 %v4397, 1.442695
        %v4428 = vpow.pop %v4427
        %v4429 = vmul.f32 %v4398, 1.442695
        %v4430 = vpow.pop %v4429
        %v4431 = vadd.f32 %v4400, 1.0
        %v4432 = vadd.f32 %v4402, 1.0
        %v4433 = vadd.f32 %v4404, 1.0
        %v4434 = vadd.f32 %v4406, 1.0
        %v4435 = vadd.f32 %v4408, 1.0
        %v4436 = vadd.f32 %v4410, 1.0
        %v4437 = vadd.f32 %v4412, 1.0
        %v4438 = vadd.f32 %v4414, 1.0
        %v4439 = vadd.f32 %v4416, 1.0
        %v4440 = vadd.f32 %v4418, 1.0
        %v4441 = vadd.f32 %v4420, 1.0
        %v4442 = vadd.f32 %v4422, 1.0
        %v4443 = vadd.f32 %v4424, 1.0
        %v4444 = vadd.f32 %v4426, 1.0
        %v4445 = vadd.f32 %v4428, 1.0
        %v4446 = vadd.f32 %v4430, 1.0
        %v4447 = vrcp.pop %v4431
        %v4448 = vmul.f32 1.0, %v4447
        %v4449 = vrcp.pop %v4432
        %v4450 = vmul.f32 1.0, %v4449
        %v4451 = vrcp.pop %v4433
        %v4452 = vmul.f32 1.0, %v4451
        %v4453 = vrcp.pop %v4434
        %v4454 = vmul.f32 1.0, %v4453
        %v4455 = vrcp.pop %v4435
        %v4456 = vmul.f32 1.0, %v4455
        %v4457 = vrcp.pop %v4436
        %v4458 = vmul.f32 1.0, %v4457
        %v4459 = vrcp.pop %v4437
        %v4460 = vmul.f32 1.0, %v4459
        %v4461 = vrcp.pop %v4438
        %v4462 = vmul.f32 1.0, %v4461
        %v4463 = vrcp.pop %v4439
        %v4464 = vmul.f32 1.0, %v4463
        %v4465 = vrcp.pop %v4440
        %v4466 = vmul.f32 1.0, %v4465
        %v4467 = vrcp.pop %v4441
        %v4468 = vmul.f32 1.0, %v4467
        %v4469 = vrcp.pop %v4442
        %v4470 = vmul.f32 1.0, %v4469
        %v4471 = vrcp.pop %v4443
        %v4472 = vmul.f32 1.0, %v4471
        %v4473 = vrcp.pop %v4444
        %v4474 = vmul.f32 1.0, %v4473
        %v4475 = vrcp.pop %v4445
        %v4476 = vmul.f32 1.0, %v4475
        %v4477 = vrcp.pop %v4446
        %v4478 = vmul.f32 1.0, %v4477
        %s4479 = scalar_lea.vmem %s408, 384 [#allocation13]
        %4480 = vst [vmem:[%s4479] sm:$0xff] %v4448
        %4481 = vst [vmem:[%s4479 + $0x8] sm:$0xff] %v4450
        %4482 = vst [vmem:[%s4479 + $0x10] sm:$0xff] %v4452
        %4483 = vst [vmem:[%s4479 + $0x18] sm:$0xff] %v4454
        %4484 = vst [vmem:[%s4479 + $0x20] sm:$0xff] %v4456
        %4485 = vst [vmem:[%s4479 + $0x28] sm:$0xff] %v4458
        %4486 = vst [vmem:[%s4479 + $0x30] sm:$0xff] %v4460
        %4487 = vst [vmem:[%s4479 + $0x38] sm:$0xff] %v4462
        %4488 = vst [vmem:[%s4479 + $0x40] sm:$0xff] %v4464
        %4489 = vst [vmem:[%s4479 + $0x48] sm:$0xff] %v4466
        %4490 = vst [vmem:[%s4479 + $0x50] sm:$0xff] %v4468
        %4491 = vst [vmem:[%s4479 + $0x58] sm:$0xff] %v4470
        %4492 = vst [vmem:[%s4479 + $0x60] sm:$0xff] %v4472
        %4493 = vst [vmem:[%s4479 + $0x68] sm:$0xff] %v4474
        %4494 = vst [vmem:[%s4479 + $0x70] sm:$0xff] %v4476
        %4495 = vst [vmem:[%s4479 + $0x78] sm:$0xff] %v4478
        %v4496 = vld [vmem:[%s401] sm:$0xff]
        %v4497 = vld [vmem:[%s401 + $0x8] sm:$0xff]
        %v4498 = vld [vmem:[%s401 + $0x10] sm:$0xff]
        %v4499 = vld [vmem:[%s401 + $0x18] sm:$0xff]
        %v4500 = vld [vmem:[%s401 + $0x20] sm:$0xff]
        %v4501 = vld [vmem:[%s401 + $0x28] sm:$0xff]
        %v4502 = vld [vmem:[%s401 + $0x30] sm:$0xff]
        %v4503 = vld [vmem:[%s401 + $0x38] sm:$0xff]
        %v4504 = vld [vmem:[%s401 + $0x40] sm:$0xff]
        %v4505 = vld [vmem:[%s401 + $0x48] sm:$0xff]
        %v4506 = vld [vmem:[%s401 + $0x50] sm:$0xff]
        %v4507 = vld [vmem:[%s401 + $0x58] sm:$0xff]
        %v4508 = vld [vmem:[%s401 + $0x60] sm:$0xff]
        %v4509 = vld [vmem:[%s401 + $0x68] sm:$0xff]
        %v4510 = vld [vmem:[%s401 + $0x70] sm:$0xff]
        %v4511 = vld [vmem:[%s401 + $0x78] sm:$0xff]
        %s4512 = sld [smem:[#allocation9 + $0x200]]
        %v4513 = vstv %s4512
        %v4514 = vmul.f32 %v4496, %v4513
        %v4515 = vmul.f32 %v4497, %v4513
        %v4516 = vmul.f32 %v4498, %v4513
        %v4517 = vmul.f32 %v4499, %v4513
        %v4518 = vmul.f32 %v4500, %v4513
        %v4519 = vmul.f32 %v4501, %v4513
        %v4520 = vmul.f32 %v4502, %v4513
        %v4521 = vmul.f32 %v4503, %v4513
        %v4522 = vmul.f32 %v4504, %v4513
        %v4523 = vmul.f32 %v4505, %v4513
        %v4524 = vmul.f32 %v4506, %v4513
        %v4525 = vmul.f32 %v4507, %v4513
        %v4526 = vmul.f32 %v4508, %v4513
        %v4527 = vmul.f32 %v4509, %v4513
        %v4528 = vmul.f32 %v4510, %v4513
        %v4529 = vmul.f32 %v4511, %v4513
        %v4530 = vld [vmem:[%s938] sm:$0xff]
        %v4531 = vld [vmem:[%s938 + $0x8] sm:$0xff]
        %v4532 = vld [vmem:[%s938 + $0x10] sm:$0xff]
        %v4533 = vld [vmem:[%s938 + $0x18] sm:$0xff]
        %v4534 = vld [vmem:[%s938 + $0x20] sm:$0xff]
        %v4535 = vld [vmem:[%s938 + $0x28] sm:$0xff]
        %v4536 = vld [vmem:[%s938 + $0x30] sm:$0xff]
        %v4537 = vld [vmem:[%s938 + $0x38] sm:$0xff]
        %v4538 = vld [vmem:[%s938 + $0x40] sm:$0xff]
        %v4539 = vld [vmem:[%s938 + $0x48] sm:$0xff]
        %v4540 = vld [vmem:[%s938 + $0x50] sm:$0xff]
        %v4541 = vld [vmem:[%s938 + $0x58] sm:$0xff]
        %v4542 = vld [vmem:[%s938 + $0x60] sm:$0xff]
        %v4543 = vld [vmem:[%s938 + $0x68] sm:$0xff]
        %v4544 = vld [vmem:[%s938 + $0x70] sm:$0xff]
        %v4545 = vld [vmem:[%s938 + $0x78] sm:$0xff]
        %s4546 = sld [smem:[#allocation9 + $0x201]]
        %v4547 = vstv %s4546
        %v4548 = vmul.f32 %v4530, %v4547
        %v4549 = vmul.f32 %v4531, %v4547
        %v4550 = vmul.f32 %v4532, %v4547
        %v4551 = vmul.f32 %v4533, %v4547
        %v4552 = vmul.f32 %v4534, %v4547
        %v4553 = vmul.f32 %v4535, %v4547
        %v4554 = vmul.f32 %v4536, %v4547
        %v4555 = vmul.f32 %v4537, %v4547
        %v4556 = vmul.f32 %v4538, %v4547
        %v4557 = vmul.f32 %v4539, %v4547
        %v4558 = vmul.f32 %v4540, %v4547
        %v4559 = vmul.f32 %v4541, %v4547
        %v4560 = vmul.f32 %v4542, %v4547
        %v4561 = vmul.f32 %v4543, %v4547
        %v4562 = vmul.f32 %v4544, %v4547
        %v4563 = vmul.f32 %v4545, %v4547
        %v4564 = vadd.f32 %v4514, %v4548
        %v4565 = vadd.f32 %v4515, %v4549
        %v4566 = vadd.f32 %v4516, %v4550
        %v4567 = vadd.f32 %v4517, %v4551
        %v4568 = vadd.f32 %v4518, %v4552
        %v4569 = vadd.f32 %v4519, %v4553
        %v4570 = vadd.f32 %v4520, %v4554
        %v4571 = vadd.f32 %v4521, %v4555
        %v4572 = vadd.f32 %v4522, %v4556
        %v4573 = vadd.f32 %v4523, %v4557
        %v4574 = vadd.f32 %v4524, %v4558
        %v4575 = vadd.f32 %v4525, %v4559
        %v4576 = vadd.f32 %v4526, %v4560
        %v4577 = vadd.f32 %v4527, %v4561
        %v4578 = vadd.f32 %v4528, %v4562
        %v4579 = vadd.f32 %v4529, %v4563
        %v4580 = vld [vmem:[%s1185] sm:$0xff]
        %v4581 = vld [vmem:[%s1185 + $0x8] sm:$0xff]
        %v4582 = vld [vmem:[%s1185 + $0x10] sm:$0xff]
        %v4583 = vld [vmem:[%s1185 + $0x18] sm:$0xff]
        %v4584 = vld [vmem:[%s1185 + $0x20] sm:$0xff]
        %v4585 = vld [vmem:[%s1185 + $0x28] sm:$0xff]
        %v4586 = vld [vmem:[%s1185 + $0x30] sm:$0xff]
        %v4587 = vld [vmem:[%s1185 + $0x38] sm:$0xff]
        %v4588 = vld [vmem:[%s1185 + $0x40] sm:$0xff]
        %v4589 = vld [vmem:[%s1185 + $0x48] sm:$0xff]
        %v4590 = vld [vmem:[%s1185 + $0x50] sm:$0xff]
        %v4591 = vld [vmem:[%s1185 + $0x58] sm:$0xff]
        %v4592 = vld [vmem:[%s1185 + $0x60] sm:$0xff]
        %v4593 = vld [vmem:[%s1185 + $0x68] sm:$0xff]
        %v4594 = vld [vmem:[%s1185 + $0x70] sm:$0xff]
        %v4595 = vld [vmem:[%s1185 + $0x78] sm:$0xff]
        %s4596 = sld [smem:[#allocation9 + $0x202]]
        %v4597 = vstv %s4596
        %v4598 = vmul.f32 %v4580, %v4597
        %v4599 = vmul.f32 %v4581, %v4597
        %v4600 = vmul.f32 %v4582, %v4597
        %v4601 = vmul.f32 %v4583, %v4597
        %v4602 = vmul.f32 %v4584, %v4597
        %v4603 = vmul.f32 %v4585, %v4597
        %v4604 = vmul.f32 %v4586, %v4597
        %v4605 = vmul.f32 %v4587, %v4597
        %v4606 = vmul.f32 %v4588, %v4597
        %v4607 = vmul.f32 %v4589, %v4597
        %v4608 = vmul.f32 %v4590, %v4597
        %v4609 = vmul.f32 %v4591, %v4597
        %v4610 = vmul.f32 %v4592, %v4597
        %v4611 = vmul.f32 %v4593, %v4597
        %v4612 = vmul.f32 %v4594, %v4597
        %v4613 = vmul.f32 %v4595, %v4597
        %v4614 = vadd.f32 %v4564, %v4598
        %v4615 = vadd.f32 %v4565, %v4599
        %v4616 = vadd.f32 %v4566, %v4600
        %v4617 = vadd.f32 %v4567, %v4601
        %v4618 = vadd.f32 %v4568, %v4602
        %v4619 = vadd.f32 %v4569, %v4603
        %v4620 = vadd.f32 %v4570, %v4604
        %v4621 = vadd.f32 %v4571, %v4605
        %v4622 = vadd.f32 %v4572, %v4606
        %v4623 = vadd.f32 %v4573, %v4607
        %v4624 = vadd.f32 %v4574, %v4608
        %v4625 = vadd.f32 %v4575, %v4609
        %v4626 = vadd.f32 %v4576, %v4610
        %v4627 = vadd.f32 %v4577, %v4611
        %v4628 = vadd.f32 %v4578, %v4612
        %v4629 = vadd.f32 %v4579, %v4613
        %v4630 = vld [vmem:[%s1432] sm:$0xff]
        %v4631 = vld [vmem:[%s1432 + $0x8] sm:$0xff]
        %v4632 = vld [vmem:[%s1432 + $0x10] sm:$0xff]
        %v4633 = vld [vmem:[%s1432 + $0x18] sm:$0xff]
        %v4634 = vld [vmem:[%s1432 + $0x20] sm:$0xff]
        %v4635 = vld [vmem:[%s1432 + $0x28] sm:$0xff]
        %v4636 = vld [vmem:[%s1432 + $0x30] sm:$0xff]
        %v4637 = vld [vmem:[%s1432 + $0x38] sm:$0xff]
        %v4638 = vld [vmem:[%s1432 + $0x40] sm:$0xff]
        %v4639 = vld [vmem:[%s1432 + $0x48] sm:$0xff]
        %v4640 = vld [vmem:[%s1432 + $0x50] sm:$0xff]
        %v4641 = vld [vmem:[%s1432 + $0x58] sm:$0xff]
        %v4642 = vld [vmem:[%s1432 + $0x60] sm:$0xff]
        %v4643 = vld [vmem:[%s1432 + $0x68] sm:$0xff]
        %v4644 = vld [vmem:[%s1432 + $0x70] sm:$0xff]
        %v4645 = vld [vmem:[%s1432 + $0x78] sm:$0xff]
        %s4646 = sld [smem:[#allocation9 + $0x203]]
        %v4647 = vstv %s4646
        %v4648 = vmul.f32 %v4630, %v4647
        %v4649 = vmul.f32 %v4631, %v4647
        %v4650 = vmul.f32 %v4632, %v4647
        %v4651 = vmul.f32 %v4633, %v4647
        %v4652 = vmul.f32 %v4634, %v4647
        %v4653 = vmul.f32 %v4635, %v4647
        %v4654 = vmul.f32 %v4636, %v4647
        %v4655 = vmul.f32 %v4637, %v4647
        %v4656 = vmul.f32 %v4638, %v4647
        %v4657 = vmul.f32 %v4639, %v4647
        %v4658 = vmul.f32 %v4640, %v4647
        %v4659 = vmul.f32 %v4641, %v4647
        %v4660 = vmul.f32 %v4642, %v4647
        %v4661 = vmul.f32 %v4643, %v4647
        %v4662 = vmul.f32 %v4644, %v4647
        %v4663 = vmul.f32 %v4645, %v4647
        %v4664 = vadd.f32 %v4614, %v4648
        %v4665 = vadd.f32 %v4615, %v4649
        %v4666 = vadd.f32 %v4616, %v4650
        %v4667 = vadd.f32 %v4617, %v4651
        %v4668 = vadd.f32 %v4618, %v4652
        %v4669 = vadd.f32 %v4619, %v4653
        %v4670 = vadd.f32 %v4620, %v4654
        %v4671 = vadd.f32 %v4621, %v4655
        %v4672 = vadd.f32 %v4622, %v4656
        %v4673 = vadd.f32 %v4623, %v4657
        %v4674 = vadd.f32 %v4624, %v4658
        %v4675 = vadd.f32 %v4625, %v4659
        %v4676 = vadd.f32 %v4626, %v4660
        %v4677 = vadd.f32 %v4627, %v4661
        %v4678 = vadd.f32 %v4628, %v4662
        %v4679 = vadd.f32 %v4629, %v4663
        %v4680 = vld [vmem:[%s1679] sm:$0xff]
        %v4681 = vld [vmem:[%s1679 + $0x8] sm:$0xff]
        %v4682 = vld [vmem:[%s1679 + $0x10] sm:$0xff]
        %v4683 = vld [vmem:[%s1679 + $0x18] sm:$0xff]
        %v4684 = vld [vmem:[%s1679 + $0x20] sm:$0xff]
        %v4685 = vld [vmem:[%s1679 + $0x28] sm:$0xff]
        %v4686 = vld [vmem:[%s1679 + $0x30] sm:$0xff]
        %v4687 = vld [vmem:[%s1679 + $0x38] sm:$0xff]
        %v4688 = vld [vmem:[%s1679 + $0x40] sm:$0xff]
        %v4689 = vld [vmem:[%s1679 + $0x48] sm:$0xff]
        %v4690 = vld [vmem:[%s1679 + $0x50] sm:$0xff]
        %v4691 = vld [vmem:[%s1679 + $0x58] sm:$0xff]
        %v4692 = vld [vmem:[%s1679 + $0x60] sm:$0xff]
        %v4693 = vld [vmem:[%s1679 + $0x68] sm:$0xff]
        %v4694 = vld [vmem:[%s1679 + $0x70] sm:$0xff]
        %v4695 = vld [vmem:[%s1679 + $0x78] sm:$0xff]
        %s4696 = sld [smem:[#allocation9 + $0x204]]
        %v4697 = vstv %s4696
        %v4698 = vmul.f32 %v4680, %v4697
        %v4699 = vmul.f32 %v4681, %v4697
        %v4700 = vmul.f32 %v4682, %v4697
        %v4701 = vmul.f32 %v4683, %v4697
        %v4702 = vmul.f32 %v4684, %v4697
        %v4703 = vmul.f32 %v4685, %v4697
        %v4704 = vmul.f32 %v4686, %v4697
        %v4705 = vmul.f32 %v4687, %v4697
        %v4706 = vmul.f32 %v4688, %v4697
        %v4707 = vmul.f32 %v4689, %v4697
        %v4708 = vmul.f32 %v4690, %v4697
        %v4709 = vmul.f32 %v4691, %v4697
        %v4710 = vmul.f32 %v4692, %v4697
        %v4711 = vmul.f32 %v4693, %v4697
        %v4712 = vmul.f32 %v4694, %v4697
        %v4713 = vmul.f32 %v4695, %v4697
        %v4714 = vadd.f32 %v4664, %v4698
        %v4715 = vadd.f32 %v4665, %v4699
        %v4716 = vadd.f32 %v4666, %v4700
        %v4717 = vadd.f32 %v4667, %v4701
        %v4718 = vadd.f32 %v4668, %v4702
        %v4719 = vadd.f32 %v4669, %v4703
        %v4720 = vadd.f32 %v4670, %v4704
        %v4721 = vadd.f32 %v4671, %v4705
        %v4722 = vadd.f32 %v4672, %v4706
        %v4723 = vadd.f32 %v4673, %v4707
        %v4724 = vadd.f32 %v4674, %v4708
        %v4725 = vadd.f32 %v4675, %v4709
        %v4726 = vadd.f32 %v4676, %v4710
        %v4727 = vadd.f32 %v4677, %v4711
        %v4728 = vadd.f32 %v4678, %v4712
        %v4729 = vadd.f32 %v4679, %v4713
        %v4730 = vld [vmem:[%s1926] sm:$0xff]
        %v4731 = vld [vmem:[%s1926 + $0x8] sm:$0xff]
        %v4732 = vld [vmem:[%s1926 + $0x10] sm:$0xff]
        %v4733 = vld [vmem:[%s1926 + $0x18] sm:$0xff]
        %v4734 = vld [vmem:[%s1926 + $0x20] sm:$0xff]
        %v4735 = vld [vmem:[%s1926 + $0x28] sm:$0xff]
        %v4736 = vld [vmem:[%s1926 + $0x30] sm:$0xff]
        %v4737 = vld [vmem:[%s1926 + $0x38] sm:$0xff]
        %v4738 = vld [vmem:[%s1926 + $0x40] sm:$0xff]
        %v4739 = vld [vmem:[%s1926 + $0x48] sm:$0xff]
        %v4740 = vld [vmem:[%s1926 + $0x50] sm:$0xff]
        %v4741 = vld [vmem:[%s1926 + $0x58] sm:$0xff]
        %v4742 = vld [vmem:[%s1926 + $0x60] sm:$0xff]
        %v4743 = vld [vmem:[%s1926 + $0x68] sm:$0xff]
        %v4744 = vld [vmem:[%s1926 + $0x70] sm:$0xff]
        %v4745 = vld [vmem:[%s1926 + $0x78] sm:$0xff]
        %s4746 = sld [smem:[#allocation9 + $0x205]]
        %v4747 = vstv %s4746
        %v4748 = vmul.f32 %v4730, %v4747
        %v4749 = vmul.f32 %v4731, %v4747
        %v4750 = vmul.f32 %v4732, %v4747
        %v4751 = vmul.f32 %v4733, %v4747
        %v4752 = vmul.f32 %v4734, %v4747
        %v4753 = vmul.f32 %v4735, %v4747
        %v4754 = vmul.f32 %v4736, %v4747
        %v4755 = vmul.f32 %v4737, %v4747
        %v4756 = vmul.f32 %v4738, %v4747
        %v4757 = vmul.f32 %v4739, %v4747
        %v4758 = vmul.f32 %v4740, %v4747
        %v4759 = vmul.f32 %v4741, %v4747
        %v4760 = vmul.f32 %v4742, %v4747
        %v4761 = vmul.f32 %v4743, %v4747
        %v4762 = vmul.f32 %v4744, %v4747
        %v4763 = vmul.f32 %v4745, %v4747
        %v4764 = vadd.f32 %v4714, %v4748
        %v4765 = vadd.f32 %v4715, %v4749
        %v4766 = vadd.f32 %v4716, %v4750
        %v4767 = vadd.f32 %v4717, %v4751
        %v4768 = vadd.f32 %v4718, %v4752
        %v4769 = vadd.f32 %v4719, %v4753
        %v4770 = vadd.f32 %v4720, %v4754
        %v4771 = vadd.f32 %v4721, %v4755
        %v4772 = vadd.f32 %v4722, %v4756
        %v4773 = vadd.f32 %v4723, %v4757
        %v4774 = vadd.f32 %v4724, %v4758
        %v4775 = vadd.f32 %v4725, %v4759
        %v4776 = vadd.f32 %v4726, %v4760
        %v4777 = vadd.f32 %v4727, %v4761
        %v4778 = vadd.f32 %v4728, %v4762
        %v4779 = vadd.f32 %v4729, %v4763
        %v4780 = vld [vmem:[%s2173] sm:$0xff]
        %v4781 = vld [vmem:[%s2173 + $0x8] sm:$0xff]
        %v4782 = vld [vmem:[%s2173 + $0x10] sm:$0xff]
        %v4783 = vld [vmem:[%s2173 + $0x18] sm:$0xff]
        %v4784 = vld [vmem:[%s2173 + $0x20] sm:$0xff]
        %v4785 = vld [vmem:[%s2173 + $0x28] sm:$0xff]
        %v4786 = vld [vmem:[%s2173 + $0x30] sm:$0xff]
        %v4787 = vld [vmem:[%s2173 + $0x38] sm:$0xff]
        %v4788 = vld [vmem:[%s2173 + $0x40] sm:$0xff]
        %v4789 = vld [vmem:[%s2173 + $0x48] sm:$0xff]
        %v4790 = vld [vmem:[%s2173 + $0x50] sm:$0xff]
        %v4791 = vld [vmem:[%s2173 + $0x58] sm:$0xff]
        %v4792 = vld [vmem:[%s2173 + $0x60] sm:$0xff]
        %v4793 = vld [vmem:[%s2173 + $0x68] sm:$0xff]
        %v4794 = vld [vmem:[%s2173 + $0x70] sm:$0xff]
        %v4795 = vld [vmem:[%s2173 + $0x78] sm:$0xff]
        %s4796 = sld [smem:[#allocation9 + $0x206]]
        %v4797 = vstv %s4796
        %v4798 = vmul.f32 %v4780, %v4797
        %v4799 = vmul.f32 %v4781, %v4797
        %v4800 = vmul.f32 %v4782, %v4797
        %v4801 = vmul.f32 %v4783, %v4797
        %v4802 = vmul.f32 %v4784, %v4797
        %v4803 = vmul.f32 %v4785, %v4797
        %v4804 = vmul.f32 %v4786, %v4797
        %v4805 = vmul.f32 %v4787, %v4797
        %v4806 = vmul.f32 %v4788, %v4797
        %v4807 = vmul.f32 %v4789, %v4797
        %v4808 = vmul.f32 %v4790, %v4797
        %v4809 = vmul.f32 %v4791, %v4797
        %v4810 = vmul.f32 %v4792, %v4797
        %v4811 = vmul.f32 %v4793, %v4797
        %v4812 = vmul.f32 %v4794, %v4797
        %v4813 = vmul.f32 %v4795, %v4797
        %v4814 = vadd.f32 %v4764, %v4798
        %v4815 = vadd.f32 %v4765, %v4799
        %v4816 = vadd.f32 %v4766, %v4800
        %v4817 = vadd.f32 %v4767, %v4801
        %v4818 = vadd.f32 %v4768, %v4802
        %v4819 = vadd.f32 %v4769, %v4803
        %v4820 = vadd.f32 %v4770, %v4804
        %v4821 = vadd.f32 %v4771, %v4805
        %v4822 = vadd.f32 %v4772, %v4806
        %v4823 = vadd.f32 %v4773, %v4807
        %v4824 = vadd.f32 %v4774, %v4808
        %v4825 = vadd.f32 %v4775, %v4809
        %v4826 = vadd.f32 %v4776, %v4810
        %v4827 = vadd.f32 %v4777, %v4811
        %v4828 = vadd.f32 %v4778, %v4812
        %v4829 = vadd.f32 %v4779, %v4813
        %v4830 = vld [vmem:[%s2420] sm:$0xff]
        %v4831 = vld [vmem:[%s2420 + $0x8] sm:$0xff]
        %v4832 = vld [vmem:[%s2420 + $0x10] sm:$0xff]
        %v4833 = vld [vmem:[%s2420 + $0x18] sm:$0xff]
        %v4834 = vld [vmem:[%s2420 + $0x20] sm:$0xff]
        %v4835 = vld [vmem:[%s2420 + $0x28] sm:$0xff]
        %v4836 = vld [vmem:[%s2420 + $0x30] sm:$0xff]
        %v4837 = vld [vmem:[%s2420 + $0x38] sm:$0xff]
        %v4838 = vld [vmem:[%s2420 + $0x40] sm:$0xff]
        %v4839 = vld [vmem:[%s2420 + $0x48] sm:$0xff]
        %v4840 = vld [vmem:[%s2420 + $0x50] sm:$0xff]
        %v4841 = vld [vmem:[%s2420 + $0x58] sm:$0xff]
        %v4842 = vld [vmem:[%s2420 + $0x60] sm:$0xff]
        %v4843 = vld [vmem:[%s2420 + $0x68] sm:$0xff]
        %v4844 = vld [vmem:[%s2420 + $0x70] sm:$0xff]
        %v4845 = vld [vmem:[%s2420 + $0x78] sm:$0xff]
        %s4846 = sld [smem:[#allocation9 + $0x207]]
        %v4847 = vstv %s4846
        %v4848 = vmul.f32 %v4830, %v4847
        %v4849 = vmul.f32 %v4831, %v4847
        %v4850 = vmul.f32 %v4832, %v4847
        %v4851 = vmul.f32 %v4833, %v4847
        %v4852 = vmul.f32 %v4834, %v4847
        %v4853 = vmul.f32 %v4835, %v4847
        %v4854 = vmul.f32 %v4836, %v4847
        %v4855 = vmul.f32 %v4837, %v4847
        %v4856 = vmul.f32 %v4838, %v4847
        %v4857 = vmul.f32 %v4839, %v4847
        %v4858 = vmul.f32 %v4840, %v4847
        %v4859 = vmul.f32 %v4841, %v4847
        %v4860 = vmul.f32 %v4842, %v4847
        %v4861 = vmul.f32 %v4843, %v4847
        %v4862 = vmul.f32 %v4844, %v4847
        %v4863 = vmul.f32 %v4845, %v4847
        %v4864 = vadd.f32 %v4814, %v4848
        %v4865 = vadd.f32 %v4815, %v4849
        %v4866 = vadd.f32 %v4816, %v4850
        %v4867 = vadd.f32 %v4817, %v4851
        %v4868 = vadd.f32 %v4818, %v4852
        %v4869 = vadd.f32 %v4819, %v4853
        %v4870 = vadd.f32 %v4820, %v4854
        %v4871 = vadd.f32 %v4821, %v4855
        %v4872 = vadd.f32 %v4822, %v4856
        %v4873 = vadd.f32 %v4823, %v4857
        %v4874 = vadd.f32 %v4824, %v4858
        %v4875 = vadd.f32 %v4825, %v4859
        %v4876 = vadd.f32 %v4826, %v4860
        %v4877 = vadd.f32 %v4827, %v4861
        %v4878 = vadd.f32 %v4828, %v4862
        %v4879 = vadd.f32 %v4829, %v4863
        %s4880 = sld [smem:[#allocation10 + $0x4]]
        %v4881 = vstv %s4880
        %v4882 = vadd.f32 %v4864, %v4881
        %v4883 = vadd.f32 %v4865, %v4881
        %v4884 = vadd.f32 %v4866, %v4881
        %v4885 = vadd.f32 %v4867, %v4881
        %v4886 = vadd.f32 %v4868, %v4881
        %v4887 = vadd.f32 %v4869, %v4881
        %v4888 = vadd.f32 %v4870, %v4881
        %v4889 = vadd.f32 %v4871, %v4881
        %v4890 = vadd.f32 %v4872, %v4881
        %v4891 = vadd.f32 %v4873, %v4881
        %v4892 = vadd.f32 %v4874, %v4881
        %v4893 = vadd.f32 %v4875, %v4881
        %v4894 = vadd.f32 %v4876, %v4881
        %v4895 = vadd.f32 %v4877, %v4881
        %v4896 = vadd.f32 %v4878, %v4881
        %v4897 = vadd.f32 %v4879, %v4881
        %v4898 = vxor.u32 %v4882, 2147483648
        %v4899 = vxor.u32 %v4883, 2147483648
        %v4900 = vxor.u32 %v4884, 2147483648
        %v4901 = vxor.u32 %v4885, 2147483648
        %v4902 = vxor.u32 %v4886, 2147483648
        %v4903 = vxor.u32 %v4887, 2147483648
        %v4904 = vxor.u32 %v4888, 2147483648
        %v4905 = vxor.u32 %v4889, 2147483648
        %v4906 = vxor.u32 %v4890, 2147483648
        %v4907 = vxor.u32 %v4891, 2147483648
        %v4908 = vxor.u32 %v4892, 2147483648
        %v4909 = vxor.u32 %v4893, 2147483648
        %v4910 = vxor.u32 %v4894, 2147483648
        %v4911 = vxor.u32 %v4895, 2147483648
        %v4912 = vxor.u32 %v4896, 2147483648
        %v4913 = vxor.u32 %v4897, 2147483648
        %v4914 = vmul.f32 %v4898, 1.442695
        %v4915 = vpow.pop %v4914
        %v4916 = vmul.f32 %v4899, 1.442695
        %v4917 = vpow.pop %v4916
        %v4918 = vmul.f32 %v4900, 1.442695
        %v4919 = vpow.pop %v4918
        %v4920 = vmul.f32 %v4901, 1.442695
        %v4921 = vpow.pop %v4920
        %v4922 = vmul.f32 %v4902, 1.442695
        %v4923 = vpow.pop %v4922
        %v4924 = vmul.f32 %v4903, 1.442695
        %v4925 = vpow.pop %v4924
        %v4926 = vmul.f32 %v4904, 1.442695
        %v4927 = vpow.pop %v4926
        %v4928 = vmul.f32 %v4905, 1.442695
        %v4929 = vpow.pop %v4928
        %v4930 = vmul.f32 %v4906, 1.442695
        %v4931 = vpow.pop %v4930
        %v4932 = vmul.f32 %v4907, 1.442695
        %v4933 = vpow.pop %v4932
        %v4934 = vmul.f32 %v4908, 1.442695
        %v4935 = vpow.pop %v4934
        %v4936 = vmul.f32 %v4909, 1.442695
        %v4937 = vpow.pop %v4936
        %v4938 = vmul.f32 %v4910, 1.442695
        %v4939 = vpow.pop %v4938
        %v4940 = vmul.f32 %v4911, 1.442695
        %v4941 = vpow.pop %v4940
        %v4942 = vmul.f32 %v4912, 1.442695
        %v4943 = vpow.pop %v4942
        %v4944 = vmul.f32 %v4913, 1.442695
        %v4945 = vpow.pop %v4944
        %v4946 = vadd.f32 %v4915, 1.0
        %v4947 = vadd.f32 %v4917, 1.0
        %v4948 = vadd.f32 %v4919, 1.0
        %v4949 = vadd.f32 %v4921, 1.0
        %v4950 = vadd.f32 %v4923, 1.0
        %v4951 = vadd.f32 %v4925, 1.0
        %v4952 = vadd.f32 %v4927, 1.0
        %v4953 = vadd.f32 %v4929, 1.0
        %v4954 = vadd.f32 %v4931, 1.0
        %v4955 = vadd.f32 %v4933, 1.0
        %v4956 = vadd.f32 %v4935, 1.0
        %v4957 = vadd.f32 %v4937, 1.0
        %v4958 = vadd.f32 %v4939, 1.0
        %v4959 = vadd.f32 %v4941, 1.0
        %v4960 = vadd.f32 %v4943, 1.0
        %v4961 = vadd.f32 %v4945, 1.0
        %v4962 = vrcp.pop %v4946
        %v4963 = vmul.f32 1.0, %v4962
        %v4964 = vrcp.pop %v4947
        %v4965 = vmul.f32 1.0, %v4964
        %v4966 = vrcp.pop %v4948
        %v4967 = vmul.f32 1.0, %v4966
        %v4968 = vrcp.pop %v4949
        %v4969 = vmul.f32 1.0, %v4968
        %v4970 = vrcp.pop %v4950
        %v4971 = vmul.f32 1.0, %v4970
        %v4972 = vrcp.pop %v4951
        %v4973 = vmul.f32 1.0, %v4972
        %v4974 = vrcp.pop %v4952
        %v4975 = vmul.f32 1.0, %v4974
        %v4976 = vrcp.pop %v4953
        %v4977 = vmul.f32 1.0, %v4976
        %v4978 = vrcp.pop %v4954
        %v4979 = vmul.f32 1.0, %v4978
        %v4980 = vrcp.pop %v4955
        %v4981 = vmul.f32 1.0, %v4980
        %v4982 = vrcp.pop %v4956
        %v4983 = vmul.f32 1.0, %v4982
        %v4984 = vrcp.pop %v4957
        %v4985 = vmul.f32 1.0, %v4984
        %v4986 = vrcp.pop %v4958
        %v4987 = vmul.f32 1.0, %v4986
        %v4988 = vrcp.pop %v4959
        %v4989 = vmul.f32 1.0, %v4988
        %v4990 = vrcp.pop %v4960
        %v4991 = vmul.f32 1.0, %v4990
        %v4992 = vrcp.pop %v4961
        %v4993 = vmul.f32 1.0, %v4992
        %s4994 = scalar_lea.vmem %s408, 512 [#allocation13]
        %4995 = vst [vmem:[%s4994] sm:$0xff] %v4963
        %4996 = vst [vmem:[%s4994 + $0x8] sm:$0xff] %v4965
        %4997 = vst [vmem:[%s4994 + $0x10] sm:$0xff] %v4967
        %4998 = vst [vmem:[%s4994 + $0x18] sm:$0xff] %v4969
        %4999 = vst [vmem:[%s4994 + $0x20] sm:$0xff] %v4971
        %5000 = vst [vmem:[%s4994 + $0x28] sm:$0xff] %v4973
        %5001 = vst [vmem:[%s4994 + $0x30] sm:$0xff] %v4975
        %5002 = vst [vmem:[%s4994 + $0x38] sm:$0xff] %v4977
        %5003 = vst [vmem:[%s4994 + $0x40] sm:$0xff] %v4979
        %5004 = vst [vmem:[%s4994 + $0x48] sm:$0xff] %v4981
        %5005 = vst [vmem:[%s4994 + $0x50] sm:$0xff] %v4983
        %5006 = vst [vmem:[%s4994 + $0x58] sm:$0xff] %v4985
        %5007 = vst [vmem:[%s4994 + $0x60] sm:$0xff] %v4987
        %5008 = vst [vmem:[%s4994 + $0x68] sm:$0xff] %v4989
        %5009 = vst [vmem:[%s4994 + $0x70] sm:$0xff] %v4991
        %5010 = vst [vmem:[%s4994 + $0x78] sm:$0xff] %v4993
        %v5011 = vld [vmem:[%s401] sm:$0xff]
        %v5012 = vld [vmem:[%s401 + $0x8] sm:$0xff]
        %v5013 = vld [vmem:[%s401 + $0x10] sm:$0xff]
        %v5014 = vld [vmem:[%s401 + $0x18] sm:$0xff]
        %v5015 = vld [vmem:[%s401 + $0x20] sm:$0xff]
        %v5016 = vld [vmem:[%s401 + $0x28] sm:$0xff]
        %v5017 = vld [vmem:[%s401 + $0x30] sm:$0xff]
        %v5018 = vld [vmem:[%s401 + $0x38] sm:$0xff]
        %v5019 = vld [vmem:[%s401 + $0x40] sm:$0xff]
        %v5020 = vld [vmem:[%s401 + $0x48] sm:$0xff]
        %v5021 = vld [vmem:[%s401 + $0x50] sm:$0xff]
        %v5022 = vld [vmem:[%s401 + $0x58] sm:$0xff]
        %v5023 = vld [vmem:[%s401 + $0x60] sm:$0xff]
        %v5024 = vld [vmem:[%s401 + $0x68] sm:$0xff]
        %v5025 = vld [vmem:[%s401 + $0x70] sm:$0xff]
        %v5026 = vld [vmem:[%s401 + $0x78] sm:$0xff]
        %s5027 = sld [smem:[#allocation9 + $0x280]]
        %v5028 = vstv %s5027
        %v5029 = vmul.f32 %v5011, %v5028
        %v5030 = vmul.f32 %v5012, %v5028
        %v5031 = vmul.f32 %v5013, %v5028
        %v5032 = vmul.f32 %v5014, %v5028
        %v5033 = vmul.f32 %v5015, %v5028
        %v5034 = vmul.f32 %v5016, %v5028
        %v5035 = vmul.f32 %v5017, %v5028
        %v5036 = vmul.f32 %v5018, %v5028
        %v5037 = vmul.f32 %v5019, %v5028
        %v5038 = vmul.f32 %v5020, %v5028
        %v5039 = vmul.f32 %v5021, %v5028
        %v5040 = vmul.f32 %v5022, %v5028
        %v5041 = vmul.f32 %v5023, %v5028
        %v5042 = vmul.f32 %v5024, %v5028
        %v5043 = vmul.f32 %v5025, %v5028
        %v5044 = vmul.f32 %v5026, %v5028
        %v5045 = vld [vmem:[%s938] sm:$0xff]
        %v5046 = vld [vmem:[%s938 + $0x8] sm:$0xff]
        %v5047 = vld [vmem:[%s938 + $0x10] sm:$0xff]
        %v5048 = vld [vmem:[%s938 + $0x18] sm:$0xff]
        %v5049 = vld [vmem:[%s938 + $0x20] sm:$0xff]
        %v5050 = vld [vmem:[%s938 + $0x28] sm:$0xff]
        %v5051 = vld [vmem:[%s938 + $0x30] sm:$0xff]
        %v5052 = vld [vmem:[%s938 + $0x38] sm:$0xff]
        %v5053 = vld [vmem:[%s938 + $0x40] sm:$0xff]
        %v5054 = vld [vmem:[%s938 + $0x48] sm:$0xff]
        %v5055 = vld [vmem:[%s938 + $0x50] sm:$0xff]
        %v5056 = vld [vmem:[%s938 + $0x58] sm:$0xff]
        %v5057 = vld [vmem:[%s938 + $0x60] sm:$0xff]
        %v5058 = vld [vmem:[%s938 + $0x68] sm:$0xff]
        %v5059 = vld [vmem:[%s938 + $0x70] sm:$0xff]
        %v5060 = vld [vmem:[%s938 + $0x78] sm:$0xff]
        %s5061 = sld [smem:[#allocation9 + $0x281]]
        %v5062 = vstv %s5061
        %v5063 = vmul.f32 %v5045, %v5062
        %v5064 = vmul.f32 %v5046, %v5062
        %v5065 = vmul.f32 %v5047, %v5062
        %v5066 = vmul.f32 %v5048, %v5062
        %v5067 = vmul.f32 %v5049, %v5062
        %v5068 = vmul.f32 %v5050, %v5062
        %v5069 = vmul.f32 %v5051, %v5062
        %v5070 = vmul.f32 %v5052, %v5062
        %v5071 = vmul.f32 %v5053, %v5062
        %v5072 = vmul.f32 %v5054, %v5062
        %v5073 = vmul.f32 %v5055, %v5062
        %v5074 = vmul.f32 %v5056, %v5062
        %v5075 = vmul.f32 %v5057, %v5062
        %v5076 = vmul.f32 %v5058, %v5062
        %v5077 = vmul.f32 %v5059, %v5062
        %v5078 = vmul.f32 %v5060, %v5062
        %v5079 = vadd.f32 %v5029, %v5063
        %v5080 = vadd.f32 %v5030, %v5064
        %v5081 = vadd.f32 %v5031, %v5065
        %v5082 = vadd.f32 %v5032, %v5066
        %v5083 = vadd.f32 %v5033, %v5067
        %v5084 = vadd.f32 %v5034, %v5068
        %v5085 = vadd.f32 %v5035, %v5069
        %v5086 = vadd.f32 %v5036, %v5070
        %v5087 = vadd.f32 %v5037, %v5071
        %v5088 = vadd.f32 %v5038, %v5072
        %v5089 = vadd.f32 %v5039, %v5073
        %v5090 = vadd.f32 %v5040, %v5074
        %v5091 = vadd.f32 %v5041, %v5075
        %v5092 = vadd.f32 %v5042, %v5076
        %v5093 = vadd.f32 %v5043, %v5077
        %v5094 = vadd.f32 %v5044, %v5078
        %v5095 = vld [vmem:[%s1185] sm:$0xff]
        %v5096 = vld [vmem:[%s1185 + $0x8] sm:$0xff]
        %v5097 = vld [vmem:[%s1185 + $0x10] sm:$0xff]
        %v5098 = vld [vmem:[%s1185 + $0x18] sm:$0xff]
        %v5099 = vld [vmem:[%s1185 + $0x20] sm:$0xff]
        %v5100 = vld [vmem:[%s1185 + $0x28] sm:$0xff]
        %v5101 = vld [vmem:[%s1185 + $0x30] sm:$0xff]
        %v5102 = vld [vmem:[%s1185 + $0x38] sm:$0xff]
        %v5103 = vld [vmem:[%s1185 + $0x40] sm:$0xff]
        %v5104 = vld [vmem:[%s1185 + $0x48] sm:$0xff]
        %v5105 = vld [vmem:[%s1185 + $0x50] sm:$0xff]
        %v5106 = vld [vmem:[%s1185 + $0x58] sm:$0xff]
        %v5107 = vld [vmem:[%s1185 + $0x60] sm:$0xff]
        %v5108 = vld [vmem:[%s1185 + $0x68] sm:$0xff]
        %v5109 = vld [vmem:[%s1185 + $0x70] sm:$0xff]
        %v5110 = vld [vmem:[%s1185 + $0x78] sm:$0xff]
        %s5111 = sld [smem:[#allocation9 + $0x282]]
        %v5112 = vstv %s5111
        %v5113 = vmul.f32 %v5095, %v5112
        %v5114 = vmul.f32 %v5096, %v5112
        %v5115 = vmul.f32 %v5097, %v5112
        %v5116 = vmul.f32 %v5098, %v5112
        %v5117 = vmul.f32 %v5099, %v5112
        %v5118 = vmul.f32 %v5100, %v5112
        %v5119 = vmul.f32 %v5101, %v5112
        %v5120 = vmul.f32 %v5102, %v5112
        %v5121 = vmul.f32 %v5103, %v5112
        %v5122 = vmul.f32 %v5104, %v5112
        %v5123 = vmul.f32 %v5105, %v5112
        %v5124 = vmul.f32 %v5106, %v5112
        %v5125 = vmul.f32 %v5107, %v5112
        %v5126 = vmul.f32 %v5108, %v5112
        %v5127 = vmul.f32 %v5109, %v5112
        %v5128 = vmul.f32 %v5110, %v5112
        %v5129 = vadd.f32 %v5079, %v5113
        %v5130 = vadd.f32 %v5080, %v5114
        %v5131 = vadd.f32 %v5081, %v5115
        %v5132 = vadd.f32 %v5082, %v5116
        %v5133 = vadd.f32 %v5083, %v5117
        %v5134 = vadd.f32 %v5084, %v5118
        %v5135 = vadd.f32 %v5085, %v5119
        %v5136 = vadd.f32 %v5086, %v5120
        %v5137 = vadd.f32 %v5087, %v5121
        %v5138 = vadd.f32 %v5088, %v5122
        %v5139 = vadd.f32 %v5089, %v5123
        %v5140 = vadd.f32 %v5090, %v5124
        %v5141 = vadd.f32 %v5091, %v5125
        %v5142 = vadd.f32 %v5092, %v5126
        %v5143 = vadd.f32 %v5093, %v5127
        %v5144 = vadd.f32 %v5094, %v5128
        %v5145 = vld [vmem:[%s1432] sm:$0xff]
        %v5146 = vld [vmem:[%s1432 + $0x8] sm:$0xff]
        %v5147 = vld [vmem:[%s1432 + $0x10] sm:$0xff]
        %v5148 = vld [vmem:[%s1432 + $0x18] sm:$0xff]
        %v5149 = vld [vmem:[%s1432 + $0x20] sm:$0xff]
        %v5150 = vld [vmem:[%s1432 + $0x28] sm:$0xff]
        %v5151 = vld [vmem:[%s1432 + $0x30] sm:$0xff]
        %v5152 = vld [vmem:[%s1432 + $0x38] sm:$0xff]
        %v5153 = vld [vmem:[%s1432 + $0x40] sm:$0xff]
        %v5154 = vld [vmem:[%s1432 + $0x48] sm:$0xff]
        %v5155 = vld [vmem:[%s1432 + $0x50] sm:$0xff]
        %v5156 = vld [vmem:[%s1432 + $0x58] sm:$0xff]
        %v5157 = vld [vmem:[%s1432 + $0x60] sm:$0xff]
        %v5158 = vld [vmem:[%s1432 + $0x68] sm:$0xff]
        %v5159 = vld [vmem:[%s1432 + $0x70] sm:$0xff]
        %v5160 = vld [vmem:[%s1432 + $0x78] sm:$0xff]
        %s5161 = sld [smem:[#allocation9 + $0x283]]
        %v5162 = vstv %s5161
        %v5163 = vmul.f32 %v5145, %v5162
        %v5164 = vmul.f32 %v5146, %v5162
        %v5165 = vmul.f32 %v5147, %v5162
        %v5166 = vmul.f32 %v5148, %v5162
        %v5167 = vmul.f32 %v5149, %v5162
        %v5168 = vmul.f32 %v5150, %v5162
        %v5169 = vmul.f32 %v5151, %v5162
        %v5170 = vmul.f32 %v5152, %v5162
        %v5171 = vmul.f32 %v5153, %v5162
        %v5172 = vmul.f32 %v5154, %v5162
        %v5173 = vmul.f32 %v5155, %v5162
        %v5174 = vmul.f32 %v5156, %v5162
        %v5175 = vmul.f32 %v5157, %v5162
        %v5176 = vmul.f32 %v5158, %v5162
        %v5177 = vmul.f32 %v5159, %v5162
        %v5178 = vmul.f32 %v5160, %v5162
        %v5179 = vadd.f32 %v5129, %v5163
        %v5180 = vadd.f32 %v5130, %v5164
        %v5181 = vadd.f32 %v5131, %v5165
        %v5182 = vadd.f32 %v5132, %v5166
        %v5183 = vadd.f32 %v5133, %v5167
        %v5184 = vadd.f32 %v5134, %v5168
        %v5185 = vadd.f32 %v5135, %v5169
        %v5186 = vadd.f32 %v5136, %v5170
        %v5187 = vadd.f32 %v5137, %v5171
        %v5188 = vadd.f32 %v5138, %v5172
        %v5189 = vadd.f32 %v5139, %v5173
        %v5190 = vadd.f32 %v5140, %v5174
        %v5191 = vadd.f32 %v5141, %v5175
        %v5192 = vadd.f32 %v5142, %v5176
        %v5193 = vadd.f32 %v5143, %v5177
        %v5194 = vadd.f32 %v5144, %v5178
        %v5195 = vld [vmem:[%s1679] sm:$0xff]
        %v5196 = vld [vmem:[%s1679 + $0x8] sm:$0xff]
        %v5197 = vld [vmem:[%s1679 + $0x10] sm:$0xff]
        %v5198 = vld [vmem:[%s1679 + $0x18] sm:$0xff]
        %v5199 = vld [vmem:[%s1679 + $0x20] sm:$0xff]
        %v5200 = vld [vmem:[%s1679 + $0x28] sm:$0xff]
        %v5201 = vld [vmem:[%s1679 + $0x30] sm:$0xff]
        %v5202 = vld [vmem:[%s1679 + $0x38] sm:$0xff]
        %v5203 = vld [vmem:[%s1679 + $0x40] sm:$0xff]
        %v5204 = vld [vmem:[%s1679 + $0x48] sm:$0xff]
        %v5205 = vld [vmem:[%s1679 + $0x50] sm:$0xff]
        %v5206 = vld [vmem:[%s1679 + $0x58] sm:$0xff]
        %v5207 = vld [vmem:[%s1679 + $0x60] sm:$0xff]
        %v5208 = vld [vmem:[%s1679 + $0x68] sm:$0xff]
        %v5209 = vld [vmem:[%s1679 + $0x70] sm:$0xff]
        %v5210 = vld [vmem:[%s1679 + $0x78] sm:$0xff]
        %s5211 = sld [smem:[#allocation9 + $0x284]]
        %v5212 = vstv %s5211
        %v5213 = vmul.f32 %v5195, %v5212
        %v5214 = vmul.f32 %v5196, %v5212
        %v5215 = vmul.f32 %v5197, %v5212
        %v5216 = vmul.f32 %v5198, %v5212
        %v5217 = vmul.f32 %v5199, %v5212
        %v5218 = vmul.f32 %v5200, %v5212
        %v5219 = vmul.f32 %v5201, %v5212
        %v5220 = vmul.f32 %v5202, %v5212
        %v5221 = vmul.f32 %v5203, %v5212
        %v5222 = vmul.f32 %v5204, %v5212
        %v5223 = vmul.f32 %v5205, %v5212
        %v5224 = vmul.f32 %v5206, %v5212
        %v5225 = vmul.f32 %v5207, %v5212
        %v5226 = vmul.f32 %v5208, %v5212
        %v5227 = vmul.f32 %v5209, %v5212
        %v5228 = vmul.f32 %v5210, %v5212
        %v5229 = vadd.f32 %v5179, %v5213
        %v5230 = vadd.f32 %v5180, %v5214
        %v5231 = vadd.f32 %v5181, %v5215
        %v5232 = vadd.f32 %v5182, %v5216
        %v5233 = vadd.f32 %v5183, %v5217
        %v5234 = vadd.f32 %v5184, %v5218
        %v5235 = vadd.f32 %v5185, %v5219
        %v5236 = vadd.f32 %v5186, %v5220
        %v5237 = vadd.f32 %v5187, %v5221
        %v5238 = vadd.f32 %v5188, %v5222
        %v5239 = vadd.f32 %v5189, %v5223
        %v5240 = vadd.f32 %v5190, %v5224
        %v5241 = vadd.f32 %v5191, %v5225
        %v5242 = vadd.f32 %v5192, %v5226
        %v5243 = vadd.f32 %v5193, %v5227
        %v5244 = vadd.f32 %v5194, %v5228
        %v5245 = vld [vmem:[%s1926] sm:$0xff]
        %v5246 = vld [vmem:[%s1926 + $0x8] sm:$0xff]
        %v5247 = vld [vmem:[%s1926 + $0x10] sm:$0xff]
        %v5248 = vld [vmem:[%s1926 + $0x18] sm:$0xff]
        %v5249 = vld [vmem:[%s1926 + $0x20] sm:$0xff]
        %v5250 = vld [vmem:[%s1926 + $0x28] sm:$0xff]
        %v5251 = vld [vmem:[%s1926 + $0x30] sm:$0xff]
        %v5252 = vld [vmem:[%s1926 + $0x38] sm:$0xff]
        %v5253 = vld [vmem:[%s1926 + $0x40] sm:$0xff]
        %v5254 = vld [vmem:[%s1926 + $0x48] sm:$0xff]
        %v5255 = vld [vmem:[%s1926 + $0x50] sm:$0xff]
        %v5256 = vld [vmem:[%s1926 + $0x58] sm:$0xff]
        %v5257 = vld [vmem:[%s1926 + $0x60] sm:$0xff]
        %v5258 = vld [vmem:[%s1926 + $0x68] sm:$0xff]
        %v5259 = vld [vmem:[%s1926 + $0x70] sm:$0xff]
        %v5260 = vld [vmem:[%s1926 + $0x78] sm:$0xff]
        %s5261 = sld [smem:[#allocation9 + $0x285]]
        %v5262 = vstv %s5261
        %v5263 = vmul.f32 %v5245, %v5262
        %v5264 = vmul.f32 %v5246, %v5262
        %v5265 = vmul.f32 %v5247, %v5262
        %v5266 = vmul.f32 %v5248, %v5262
        %v5267 = vmul.f32 %v5249, %v5262
        %v5268 = vmul.f32 %v5250, %v5262
        %v5269 = vmul.f32 %v5251, %v5262
        %v5270 = vmul.f32 %v5252, %v5262
        %v5271 = vmul.f32 %v5253, %v5262
        %v5272 = vmul.f32 %v5254, %v5262
        %v5273 = vmul.f32 %v5255, %v5262
        %v5274 = vmul.f32 %v5256, %v5262
        %v5275 = vmul.f32 %v5257, %v5262
        %v5276 = vmul.f32 %v5258, %v5262
        %v5277 = vmul.f32 %v5259, %v5262
        %v5278 = vmul.f32 %v5260, %v5262
        %v5279 = vadd.f32 %v5229, %v5263
        %v5280 = vadd.f32 %v5230, %v5264
        %v5281 = vadd.f32 %v5231, %v5265
        %v5282 = vadd.f32 %v5232, %v5266
        %v5283 = vadd.f32 %v5233, %v5267
        %v5284 = vadd.f32 %v5234, %v5268
        %v5285 = vadd.f32 %v5235, %v5269
        %v5286 = vadd.f32 %v5236, %v5270
        %v5287 = vadd.f32 %v5237, %v5271
        %v5288 = vadd.f32 %v5238, %v5272
        %v5289 = vadd.f32 %v5239, %v5273
        %v5290 = vadd.f32 %v5240, %v5274
        %v5291 = vadd.f32 %v5241, %v5275
        %v5292 = vadd.f32 %v5242, %v5276
        %v5293 = vadd.f32 %v5243, %v5277
        %v5294 = vadd.f32 %v5244, %v5278
        %v5295 = vld [vmem:[%s2173] sm:$0xff]
        %v5296 = vld [vmem:[%s2173 + $0x8] sm:$0xff]
        %v5297 = vld [vmem:[%s2173 + $0x10] sm:$0xff]
        %v5298 = vld [vmem:[%s2173 + $0x18] sm:$0xff]
        %v5299 = vld [vmem:[%s2173 + $0x20] sm:$0xff]
        %v5300 = vld [vmem:[%s2173 + $0x28] sm:$0xff]
        %v5301 = vld [vmem:[%s2173 + $0x30] sm:$0xff]
        %v5302 = vld [vmem:[%s2173 + $0x38] sm:$0xff]
        %v5303 = vld [vmem:[%s2173 + $0x40] sm:$0xff]
        %v5304 = vld [vmem:[%s2173 + $0x48] sm:$0xff]
        %v5305 = vld [vmem:[%s2173 + $0x50] sm:$0xff]
        %v5306 = vld [vmem:[%s2173 + $0x58] sm:$0xff]
        %v5307 = vld [vmem:[%s2173 + $0x60] sm:$0xff]
        %v5308 = vld [vmem:[%s2173 + $0x68] sm:$0xff]
        %v5309 = vld [vmem:[%s2173 + $0x70] sm:$0xff]
        %v5310 = vld [vmem:[%s2173 + $0x78] sm:$0xff]
        %s5311 = sld [smem:[#allocation9 + $0x286]]
        %v5312 = vstv %s5311
        %v5313 = vmul.f32 %v5295, %v5312
        %v5314 = vmul.f32 %v5296, %v5312
        %v5315 = vmul.f32 %v5297, %v5312
        %v5316 = vmul.f32 %v5298, %v5312
        %v5317 = vmul.f32 %v5299, %v5312
        %v5318 = vmul.f32 %v5300, %v5312
        %v5319 = vmul.f32 %v5301, %v5312
        %v5320 = vmul.f32 %v5302, %v5312
        %v5321 = vmul.f32 %v5303, %v5312
        %v5322 = vmul.f32 %v5304, %v5312
        %v5323 = vmul.f32 %v5305, %v5312
        %v5324 = vmul.f32 %v5306, %v5312
        %v5325 = vmul.f32 %v5307, %v5312
        %v5326 = vmul.f32 %v5308, %v5312
        %v5327 = vmul.f32 %v5309, %v5312
        %v5328 = vmul.f32 %v5310, %v5312
        %v5329 = vadd.f32 %v5279, %v5313
        %v5330 = vadd.f32 %v5280, %v5314
        %v5331 = vadd.f32 %v5281, %v5315
        %v5332 = vadd.f32 %v5282, %v5316
        %v5333 = vadd.f32 %v5283, %v5317
        %v5334 = vadd.f32 %v5284, %v5318
        %v5335 = vadd.f32 %v5285, %v5319
        %v5336 = vadd.f32 %v5286, %v5320
        %v5337 = vadd.f32 %v5287, %v5321
        %v5338 = vadd.f32 %v5288, %v5322
        %v5339 = vadd.f32 %v5289, %v5323
        %v5340 = vadd.f32 %v5290, %v5324
        %v5341 = vadd.f32 %v5291, %v5325
        %v5342 = vadd.f32 %v5292, %v5326
        %v5343 = vadd.f32 %v5293, %v5327
        %v5344 = vadd.f32 %v5294, %v5328
        %v5345 = vld [vmem:[%s2420] sm:$0xff]
        %v5346 = vld [vmem:[%s2420 + $0x8] sm:$0xff]
        %v5347 = vld [vmem:[%s2420 + $0x10] sm:$0xff]
        %v5348 = vld [vmem:[%s2420 + $0x18] sm:$0xff]
        %v5349 = vld [vmem:[%s2420 + $0x20] sm:$0xff]
        %v5350 = vld [vmem:[%s2420 + $0x28] sm:$0xff]
        %v5351 = vld [vmem:[%s2420 + $0x30] sm:$0xff]
        %v5352 = vld [vmem:[%s2420 + $0x38] sm:$0xff]
        %v5353 = vld [vmem:[%s2420 + $0x40] sm:$0xff]
        %v5354 = vld [vmem:[%s2420 + $0x48] sm:$0xff]
        %v5355 = vld [vmem:[%s2420 + $0x50] sm:$0xff]
        %v5356 = vld [vmem:[%s2420 + $0x58] sm:$0xff]
        %v5357 = vld [vmem:[%s2420 + $0x60] sm:$0xff]
        %v5358 = vld [vmem:[%s2420 + $0x68] sm:$0xff]
        %v5359 = vld [vmem:[%s2420 + $0x70] sm:$0xff]
        %v5360 = vld [vmem:[%s2420 + $0x78] sm:$0xff]
        %s5361 = sld [smem:[#allocation9 + $0x287]]
        %v5362 = vstv %s5361
        %v5363 = vmul.f32 %v5345, %v5362
        %v5364 = vmul.f32 %v5346, %v5362
        %v5365 = vmul.f32 %v5347, %v5362
        %v5366 = vmul.f32 %v5348, %v5362
        %v5367 = vmul.f32 %v5349, %v5362
        %v5368 = vmul.f32 %v5350, %v5362
        %v5369 = vmul.f32 %v5351, %v5362
        %v5370 = vmul.f32 %v5352, %v5362
        %v5371 = vmul.f32 %v5353, %v5362
        %v5372 = vmul.f32 %v5354, %v5362
        %v5373 = vmul.f32 %v5355, %v5362
        %v5374 = vmul.f32 %v5356, %v5362
        %v5375 = vmul.f32 %v5357, %v5362
        %v5376 = vmul.f32 %v5358, %v5362
        %v5377 = vmul.f32 %v5359, %v5362
        %v5378 = vmul.f32 %v5360, %v5362
        %v5379 = vadd.f32 %v5329, %v5363
        %v5380 = vadd.f32 %v5330, %v5364
        %v5381 = vadd.f32 %v5331, %v5365
        %v5382 = vadd.f32 %v5332, %v5366
        %v5383 = vadd.f32 %v5333, %v5367
        %v5384 = vadd.f32 %v5334, %v5368
        %v5385 = vadd.f32 %v5335, %v5369
        %v5386 = vadd.f32 %v5336, %v5370
        %v5387 = vadd.f32 %v5337, %v5371
        %v5388 = vadd.f32 %v5338, %v5372
        %v5389 = vadd.f32 %v5339, %v5373
        %v5390 = vadd.f32 %v5340, %v5374
        %v5391 = vadd.f32 %v5341, %v5375
        %v5392 = vadd.f32 %v5342, %v5376
        %v5393 = vadd.f32 %v5343, %v5377
        %v5394 = vadd.f32 %v5344, %v5378
        %s5395 = sld [smem:[#allocation10 + $0x5]]
        %v5396 = vstv %s5395
        %v5397 = vadd.f32 %v5379, %v5396
        %v5398 = vadd.f32 %v5380, %v5396
        %v5399 = vadd.f32 %v5381, %v5396
        %v5400 = vadd.f32 %v5382, %v5396
        %v5401 = vadd.f32 %v5383, %v5396
        %v5402 = vadd.f32 %v5384, %v5396
        %v5403 = vadd.f32 %v5385, %v5396
        %v5404 = vadd.f32 %v5386, %v5396
        %v5405 = vadd.f32 %v5387, %v5396
        %v5406 = vadd.f32 %v5388, %v5396
        %v5407 = vadd.f32 %v5389, %v5396
        %v5408 = vadd.f32 %v5390, %v5396
        %v5409 = vadd.f32 %v5391, %v5396
        %v5410 = vadd.f32 %v5392, %v5396
        %v5411 = vadd.f32 %v5393, %v5396
        %v5412 = vadd.f32 %v5394, %v5396
        %v5413 = vxor.u32 %v5397, 2147483648
        %v5414 = vxor.u32 %v5398, 2147483648
        %v5415 = vxor.u32 %v5399, 2147483648
        %v5416 = vxor.u32 %v5400, 2147483648
        %v5417 = vxor.u32 %v5401, 2147483648
        %v5418 = vxor.u32 %v5402, 2147483648
        %v5419 = vxor.u32 %v5403, 2147483648
        %v5420 = vxor.u32 %v5404, 2147483648
        %v5421 = vxor.u32 %v5405, 2147483648
        %v5422 = vxor.u32 %v5406, 2147483648
        %v5423 = vxor.u32 %v5407, 2147483648
        %v5424 = vxor.u32 %v5408, 2147483648
        %v5425 = vxor.u32 %v5409, 2147483648
        %v5426 = vxor.u32 %v5410, 2147483648
        %v5427 = vxor.u32 %v5411, 2147483648
        %v5428 = vxor.u32 %v5412, 2147483648
        %v5429 = vmul.f32 %v5413, 1.442695
        %v5430 = vpow.pop %v5429
        %v5431 = vmul.f32 %v5414, 1.442695
        %v5432 = vpow.pop %v5431
        %v5433 = vmul.f32 %v5415, 1.442695
        %v5434 = vpow.pop %v5433
        %v5435 = vmul.f32 %v5416, 1.442695
        %v5436 = vpow.pop %v5435
        %v5437 = vmul.f32 %v5417, 1.442695
        %v5438 = vpow.pop %v5437
        %v5439 = vmul.f32 %v5418, 1.442695
        %v5440 = vpow.pop %v5439
        %v5441 = vmul.f32 %v5419, 1.442695
        %v5442 = vpow.pop %v5441
        %v5443 = vmul.f32 %v5420, 1.442695
        %v5444 = vpow.pop %v5443
        %v5445 = vmul.f32 %v5421, 1.442695
        %v5446 = vpow.pop %v5445
        %v5447 = vmul.f32 %v5422, 1.442695
        %v5448 = vpow.pop %v5447
        %v5449 = vmul.f32 %v5423, 1.442695
        %v5450 = vpow.pop %v5449
        %v5451 = vmul.f32 %v5424, 1.442695
        %v5452 = vpow.pop %v5451
        %v5453 = vmul.f32 %v5425, 1.442695
        %v5454 = vpow.pop %v5453
        %v5455 = vmul.f32 %v5426, 1.442695
        %v5456 = vpow.pop %v5455
        %v5457 = vmul.f32 %v5427, 1.442695
        %v5458 = vpow.pop %v5457
        %v5459 = vmul.f32 %v5428, 1.442695
        %v5460 = vpow.pop %v5459
        %v5461 = vadd.f32 %v5430, 1.0
        %v5462 = vadd.f32 %v5432, 1.0
        %v5463 = vadd.f32 %v5434, 1.0
        %v5464 = vadd.f32 %v5436, 1.0
        %v5465 = vadd.f32 %v5438, 1.0
        %v5466 = vadd.f32 %v5440, 1.0
        %v5467 = vadd.f32 %v5442, 1.0
        %v5468 = vadd.f32 %v5444, 1.0
        %v5469 = vadd.f32 %v5446, 1.0
        %v5470 = vadd.f32 %v5448, 1.0
        %v5471 = vadd.f32 %v5450, 1.0
        %v5472 = vadd.f32 %v5452, 1.0
        %v5473 = vadd.f32 %v5454, 1.0
        %v5474 = vadd.f32 %v5456, 1.0
        %v5475 = vadd.f32 %v5458, 1.0
        %v5476 = vadd.f32 %v5460, 1.0
        %v5477 = vrcp.pop %v5461
        %v5478 = vmul.f32 1.0, %v5477
        %v5479 = vrcp.pop %v5462
        %v5480 = vmul.f32 1.0, %v5479
        %v5481 = vrcp.pop %v5463
        %v5482 = vmul.f32 1.0, %v5481
        %v5483 = vrcp.pop %v5464
        %v5484 = vmul.f32 1.0, %v5483
        %v5485 = vrcp.pop %v5465
        %v5486 = vmul.f32 1.0, %v5485
        %v5487 = vrcp.pop %v5466
        %v5488 = vmul.f32 1.0, %v5487
        %v5489 = vrcp.pop %v5467
        %v5490 = vmul.f32 1.0, %v5489
        %v5491 = vrcp.pop %v5468
        %v5492 = vmul.f32 1.0, %v5491
        %v5493 = vrcp.pop %v5469
        %v5494 = vmul.f32 1.0, %v5493
        %v5495 = vrcp.pop %v5470
        %v5496 = vmul.f32 1.0, %v5495
        %v5497 = vrcp.pop %v5471
        %v5498 = vmul.f32 1.0, %v5497
        %v5499 = vrcp.pop %v5472
        %v5500 = vmul.f32 1.0, %v5499
        %v5501 = vrcp.pop %v5473
        %v5502 = vmul.f32 1.0, %v5501
        %v5503 = vrcp.pop %v5474
        %v5504 = vmul.f32 1.0, %v5503
        %v5505 = vrcp.pop %v5475
        %v5506 = vmul.f32 1.0, %v5505
        %v5507 = vrcp.pop %v5476
        %v5508 = vmul.f32 1.0, %v5507
        %s5509 = scalar_lea.vmem %s408, 640 [#allocation13]
        %5510 = vst [vmem:[%s5509] sm:$0xff] %v5478
        %5511 = vst [vmem:[%s5509 + $0x8] sm:$0xff] %v5480
        %5512 = vst [vmem:[%s5509 + $0x10] sm:$0xff] %v5482
        %5513 = vst [vmem:[%s5509 + $0x18] sm:$0xff] %v5484
        %5514 = vst [vmem:[%s5509 + $0x20] sm:$0xff] %v5486
        %5515 = vst [vmem:[%s5509 + $0x28] sm:$0xff] %v5488
        %5516 = vst [vmem:[%s5509 + $0x30] sm:$0xff] %v5490
        %5517 = vst [vmem:[%s5509 + $0x38] sm:$0xff] %v5492
        %5518 = vst [vmem:[%s5509 + $0x40] sm:$0xff] %v5494
        %5519 = vst [vmem:[%s5509 + $0x48] sm:$0xff] %v5496
        %5520 = vst [vmem:[%s5509 + $0x50] sm:$0xff] %v5498
        %5521 = vst [vmem:[%s5509 + $0x58] sm:$0xff] %v5500
        %5522 = vst [vmem:[%s5509 + $0x60] sm:$0xff] %v5502
        %5523 = vst [vmem:[%s5509 + $0x68] sm:$0xff] %v5504
        %5524 = vst [vmem:[%s5509 + $0x70] sm:$0xff] %v5506
        %5525 = vst [vmem:[%s5509 + $0x78] sm:$0xff] %v5508
        %v5526 = vld [vmem:[%s401] sm:$0xff]
        %v5527 = vld [vmem:[%s401 + $0x8] sm:$0xff]
        %v5528 = vld [vmem:[%s401 + $0x10] sm:$0xff]
        %v5529 = vld [vmem:[%s401 + $0x18] sm:$0xff]
        %v5530 = vld [vmem:[%s401 + $0x20] sm:$0xff]
        %v5531 = vld [vmem:[%s401 + $0x28] sm:$0xff]
        %v5532 = vld [vmem:[%s401 + $0x30] sm:$0xff]
        %v5533 = vld [vmem:[%s401 + $0x38] sm:$0xff]
        %v5534 = vld [vmem:[%s401 + $0x40] sm:$0xff]
        %v5535 = vld [vmem:[%s401 + $0x48] sm:$0xff]
        %v5536 = vld [vmem:[%s401 + $0x50] sm:$0xff]
        %v5537 = vld [vmem:[%s401 + $0x58] sm:$0xff]
        %v5538 = vld [vmem:[%s401 + $0x60] sm:$0xff]
        %v5539 = vld [vmem:[%s401 + $0x68] sm:$0xff]
        %v5540 = vld [vmem:[%s401 + $0x70] sm:$0xff]
        %v5541 = vld [vmem:[%s401 + $0x78] sm:$0xff]
        %s5542 = sld [smem:[#allocation9 + $0x300]]
        %v5543 = vstv %s5542
        %v5544 = vmul.f32 %v5526, %v5543
        %v5545 = vmul.f32 %v5527, %v5543
        %v5546 = vmul.f32 %v5528, %v5543
        %v5547 = vmul.f32 %v5529, %v5543
        %v5548 = vmul.f32 %v5530, %v5543
        %v5549 = vmul.f32 %v5531, %v5543
        %v5550 = vmul.f32 %v5532, %v5543
        %v5551 = vmul.f32 %v5533, %v5543
        %v5552 = vmul.f32 %v5534, %v5543
        %v5553 = vmul.f32 %v5535, %v5543
        %v5554 = vmul.f32 %v5536, %v5543
        %v5555 = vmul.f32 %v5537, %v5543
        %v5556 = vmul.f32 %v5538, %v5543
        %v5557 = vmul.f32 %v5539, %v5543
        %v5558 = vmul.f32 %v5540, %v5543
        %v5559 = vmul.f32 %v5541, %v5543
        %v5560 = vld [vmem:[%s938] sm:$0xff]
        %v5561 = vld [vmem:[%s938 + $0x8] sm:$0xff]
        %v5562 = vld [vmem:[%s938 + $0x10] sm:$0xff]
        %v5563 = vld [vmem:[%s938 + $0x18] sm:$0xff]
        %v5564 = vld [vmem:[%s938 + $0x20] sm:$0xff]
        %v5565 = vld [vmem:[%s938 + $0x28] sm:$0xff]
        %v5566 = vld [vmem:[%s938 + $0x30] sm:$0xff]
        %v5567 = vld [vmem:[%s938 + $0x38] sm:$0xff]
        %v5568 = vld [vmem:[%s938 + $0x40] sm:$0xff]
        %v5569 = vld [vmem:[%s938 + $0x48] sm:$0xff]
        %v5570 = vld [vmem:[%s938 + $0x50] sm:$0xff]
        %v5571 = vld [vmem:[%s938 + $0x58] sm:$0xff]
        %v5572 = vld [vmem:[%s938 + $0x60] sm:$0xff]
        %v5573 = vld [vmem:[%s938 + $0x68] sm:$0xff]
        %v5574 = vld [vmem:[%s938 + $0x70] sm:$0xff]
        %v5575 = vld [vmem:[%s938 + $0x78] sm:$0xff]
        %s5576 = sld [smem:[#allocation9 + $0x301]]
        %v5577 = vstv %s5576
        %v5578 = vmul.f32 %v5560, %v5577
        %v5579 = vmul.f32 %v5561, %v5577
        %v5580 = vmul.f32 %v5562, %v5577
        %v5581 = vmul.f32 %v5563, %v5577
        %v5582 = vmul.f32 %v5564, %v5577
        %v5583 = vmul.f32 %v5565, %v5577
        %v5584 = vmul.f32 %v5566, %v5577
        %v5585 = vmul.f32 %v5567, %v5577
        %v5586 = vmul.f32 %v5568, %v5577
        %v5587 = vmul.f32 %v5569, %v5577
        %v5588 = vmul.f32 %v5570, %v5577
        %v5589 = vmul.f32 %v5571, %v5577
        %v5590 = vmul.f32 %v5572, %v5577
        %v5591 = vmul.f32 %v5573, %v5577
        %v5592 = vmul.f32 %v5574, %v5577
        %v5593 = vmul.f32 %v5575, %v5577
        %v5594 = vadd.f32 %v5544, %v5578
        %v5595 = vadd.f32 %v5545, %v5579
        %v5596 = vadd.f32 %v5546, %v5580
        %v5597 = vadd.f32 %v5547, %v5581
        %v5598 = vadd.f32 %v5548, %v5582
        %v5599 = vadd.f32 %v5549, %v5583
        %v5600 = vadd.f32 %v5550, %v5584
        %v5601 = vadd.f32 %v5551, %v5585
        %v5602 = vadd.f32 %v5552, %v5586
        %v5603 = vadd.f32 %v5553, %v5587
        %v5604 = vadd.f32 %v5554, %v5588
        %v5605 = vadd.f32 %v5555, %v5589
        %v5606 = vadd.f32 %v5556, %v5590
        %v5607 = vadd.f32 %v5557, %v5591
        %v5608 = vadd.f32 %v5558, %v5592
        %v5609 = vadd.f32 %v5559, %v5593
        %v5610 = vld [vmem:[%s1185] sm:$0xff]
        %v5611 = vld [vmem:[%s1185 + $0x8] sm:$0xff]
        %v5612 = vld [vmem:[%s1185 + $0x10] sm:$0xff]
        %v5613 = vld [vmem:[%s1185 + $0x18] sm:$0xff]
        %v5614 = vld [vmem:[%s1185 + $0x20] sm:$0xff]
        %v5615 = vld [vmem:[%s1185 + $0x28] sm:$0xff]
        %v5616 = vld [vmem:[%s1185 + $0x30] sm:$0xff]
        %v5617 = vld [vmem:[%s1185 + $0x38] sm:$0xff]
        %v5618 = vld [vmem:[%s1185 + $0x40] sm:$0xff]
        %v5619 = vld [vmem:[%s1185 + $0x48] sm:$0xff]
        %v5620 = vld [vmem:[%s1185 + $0x50] sm:$0xff]
        %v5621 = vld [vmem:[%s1185 + $0x58] sm:$0xff]
        %v5622 = vld [vmem:[%s1185 + $0x60] sm:$0xff]
        %v5623 = vld [vmem:[%s1185 + $0x68] sm:$0xff]
        %v5624 = vld [vmem:[%s1185 + $0x70] sm:$0xff]
        %v5625 = vld [vmem:[%s1185 + $0x78] sm:$0xff]
        %s5626 = sld [smem:[#allocation9 + $0x302]]
        %v5627 = vstv %s5626
        %v5628 = vmul.f32 %v5610, %v5627
        %v5629 = vmul.f32 %v5611, %v5627
        %v5630 = vmul.f32 %v5612, %v5627
        %v5631 = vmul.f32 %v5613, %v5627
        %v5632 = vmul.f32 %v5614, %v5627
        %v5633 = vmul.f32 %v5615, %v5627
        %v5634 = vmul.f32 %v5616, %v5627
        %v5635 = vmul.f32 %v5617, %v5627
        %v5636 = vmul.f32 %v5618, %v5627
        %v5637 = vmul.f32 %v5619, %v5627
        %v5638 = vmul.f32 %v5620, %v5627
        %v5639 = vmul.f32 %v5621, %v5627
        %v5640 = vmul.f32 %v5622, %v5627
        %v5641 = vmul.f32 %v5623, %v5627
        %v5642 = vmul.f32 %v5624, %v5627
        %v5643 = vmul.f32 %v5625, %v5627
        %v5644 = vadd.f32 %v5594, %v5628
        %v5645 = vadd.f32 %v5595, %v5629
        %v5646 = vadd.f32 %v5596, %v5630
        %v5647 = vadd.f32 %v5597, %v5631
        %v5648 = vadd.f32 %v5598, %v5632
        %v5649 = vadd.f32 %v5599, %v5633
        %v5650 = vadd.f32 %v5600, %v5634
        %v5651 = vadd.f32 %v5601, %v5635
        %v5652 = vadd.f32 %v5602, %v5636
        %v5653 = vadd.f32 %v5603, %v5637
        %v5654 = vadd.f32 %v5604, %v5638
        %v5655 = vadd.f32 %v5605, %v5639
        %v5656 = vadd.f32 %v5606, %v5640
        %v5657 = vadd.f32 %v5607, %v5641
        %v5658 = vadd.f32 %v5608, %v5642
        %v5659 = vadd.f32 %v5609, %v5643
        %v5660 = vld [vmem:[%s1432] sm:$0xff]
        %v5661 = vld [vmem:[%s1432 + $0x8] sm:$0xff]
        %v5662 = vld [vmem:[%s1432 + $0x10] sm:$0xff]
        %v5663 = vld [vmem:[%s1432 + $0x18] sm:$0xff]
        %v5664 = vld [vmem:[%s1432 + $0x20] sm:$0xff]
        %v5665 = vld [vmem:[%s1432 + $0x28] sm:$0xff]
        %v5666 = vld [vmem:[%s1432 + $0x30] sm:$0xff]
        %v5667 = vld [vmem:[%s1432 + $0x38] sm:$0xff]
        %v5668 = vld [vmem:[%s1432 + $0x40] sm:$0xff]
        %v5669 = vld [vmem:[%s1432 + $0x48] sm:$0xff]
        %v5670 = vld [vmem:[%s1432 + $0x50] sm:$0xff]
        %v5671 = vld [vmem:[%s1432 + $0x58] sm:$0xff]
        %v5672 = vld [vmem:[%s1432 + $0x60] sm:$0xff]
        %v5673 = vld [vmem:[%s1432 + $0x68] sm:$0xff]
        %v5674 = vld [vmem:[%s1432 + $0x70] sm:$0xff]
        %v5675 = vld [vmem:[%s1432 + $0x78] sm:$0xff]
        %s5676 = sld [smem:[#allocation9 + $0x303]]
        %v5677 = vstv %s5676
        %v5678 = vmul.f32 %v5660, %v5677
        %v5679 = vmul.f32 %v5661, %v5677
        %v5680 = vmul.f32 %v5662, %v5677
        %v5681 = vmul.f32 %v5663, %v5677
        %v5682 = vmul.f32 %v5664, %v5677
        %v5683 = vmul.f32 %v5665, %v5677
        %v5684 = vmul.f32 %v5666, %v5677
        %v5685 = vmul.f32 %v5667, %v5677
        %v5686 = vmul.f32 %v5668, %v5677
        %v5687 = vmul.f32 %v5669, %v5677
        %v5688 = vmul.f32 %v5670, %v5677
        %v5689 = vmul.f32 %v5671, %v5677
        %v5690 = vmul.f32 %v5672, %v5677
        %v5691 = vmul.f32 %v5673, %v5677
        %v5692 = vmul.f32 %v5674, %v5677
        %v5693 = vmul.f32 %v5675, %v5677
        %v5694 = vadd.f32 %v5644, %v5678
        %v5695 = vadd.f32 %v5645, %v5679
        %v5696 = vadd.f32 %v5646, %v5680
        %v5697 = vadd.f32 %v5647, %v5681
        %v5698 = vadd.f32 %v5648, %v5682
        %v5699 = vadd.f32 %v5649, %v5683
        %v5700 = vadd.f32 %v5650, %v5684
        %v5701 = vadd.f32 %v5651, %v5685
        %v5702 = vadd.f32 %v5652, %v5686
        %v5703 = vadd.f32 %v5653, %v5687
        %v5704 = vadd.f32 %v5654, %v5688
        %v5705 = vadd.f32 %v5655, %v5689
        %v5706 = vadd.f32 %v5656, %v5690
        %v5707 = vadd.f32 %v5657, %v5691
        %v5708 = vadd.f32 %v5658, %v5692
        %v5709 = vadd.f32 %v5659, %v5693
        %v5710 = vld [vmem:[%s1679] sm:$0xff]
        %v5711 = vld [vmem:[%s1679 + $0x8] sm:$0xff]
        %v5712 = vld [vmem:[%s1679 + $0x10] sm:$0xff]
        %v5713 = vld [vmem:[%s1679 + $0x18] sm:$0xff]
        %v5714 = vld [vmem:[%s1679 + $0x20] sm:$0xff]
        %v5715 = vld [vmem:[%s1679 + $0x28] sm:$0xff]
        %v5716 = vld [vmem:[%s1679 + $0x30] sm:$0xff]
        %v5717 = vld [vmem:[%s1679 + $0x38] sm:$0xff]
        %v5718 = vld [vmem:[%s1679 + $0x40] sm:$0xff]
        %v5719 = vld [vmem:[%s1679 + $0x48] sm:$0xff]
        %v5720 = vld [vmem:[%s1679 + $0x50] sm:$0xff]
        %v5721 = vld [vmem:[%s1679 + $0x58] sm:$0xff]
        %v5722 = vld [vmem:[%s1679 + $0x60] sm:$0xff]
        %v5723 = vld [vmem:[%s1679 + $0x68] sm:$0xff]
        %v5724 = vld [vmem:[%s1679 + $0x70] sm:$0xff]
        %v5725 = vld [vmem:[%s1679 + $0x78] sm:$0xff]
        %s5726 = sld [smem:[#allocation9 + $0x304]]
        %v5727 = vstv %s5726
        %v5728 = vmul.f32 %v5710, %v5727
        %v5729 = vmul.f32 %v5711, %v5727
        %v5730 = vmul.f32 %v5712, %v5727
        %v5731 = vmul.f32 %v5713, %v5727
        %v5732 = vmul.f32 %v5714, %v5727
        %v5733 = vmul.f32 %v5715, %v5727
        %v5734 = vmul.f32 %v5716, %v5727
        %v5735 = vmul.f32 %v5717, %v5727
        %v5736 = vmul.f32 %v5718, %v5727
        %v5737 = vmul.f32 %v5719, %v5727
        %v5738 = vmul.f32 %v5720, %v5727
        %v5739 = vmul.f32 %v5721, %v5727
        %v5740 = vmul.f32 %v5722, %v5727
        %v5741 = vmul.f32 %v5723, %v5727
        %v5742 = vmul.f32 %v5724, %v5727
        %v5743 = vmul.f32 %v5725, %v5727
        %v5744 = vadd.f32 %v5694, %v5728
        %v5745 = vadd.f32 %v5695, %v5729
        %v5746 = vadd.f32 %v5696, %v5730
        %v5747 = vadd.f32 %v5697, %v5731
        %v5748 = vadd.f32 %v5698, %v5732
        %v5749 = vadd.f32 %v5699, %v5733
        %v5750 = vadd.f32 %v5700, %v5734
        %v5751 = vadd.f32 %v5701, %v5735
        %v5752 = vadd.f32 %v5702, %v5736
        %v5753 = vadd.f32 %v5703, %v5737
        %v5754 = vadd.f32 %v5704, %v5738
        %v5755 = vadd.f32 %v5705, %v5739
        %v5756 = vadd.f32 %v5706, %v5740
        %v5757 = vadd.f32 %v5707, %v5741
        %v5758 = vadd.f32 %v5708, %v5742
        %v5759 = vadd.f32 %v5709, %v5743
        %v5760 = vld [vmem:[%s1926] sm:$0xff]
        %v5761 = vld [vmem:[%s1926 + $0x8] sm:$0xff]
        %v5762 = vld [vmem:[%s1926 + $0x10] sm:$0xff]
        %v5763 = vld [vmem:[%s1926 + $0x18] sm:$0xff]
        %v5764 = vld [vmem:[%s1926 + $0x20] sm:$0xff]
        %v5765 = vld [vmem:[%s1926 + $0x28] sm:$0xff]
        %v5766 = vld [vmem:[%s1926 + $0x30] sm:$0xff]
        %v5767 = vld [vmem:[%s1926 + $0x38] sm:$0xff]
        %v5768 = vld [vmem:[%s1926 + $0x40] sm:$0xff]
        %v5769 = vld [vmem:[%s1926 + $0x48] sm:$0xff]
        %v5770 = vld [vmem:[%s1926 + $0x50] sm:$0xff]
        %v5771 = vld [vmem:[%s1926 + $0x58] sm:$0xff]
        %v5772 = vld [vmem:[%s1926 + $0x60] sm:$0xff]
        %v5773 = vld [vmem:[%s1926 + $0x68] sm:$0xff]
        %v5774 = vld [vmem:[%s1926 + $0x70] sm:$0xff]
        %v5775 = vld [vmem:[%s1926 + $0x78] sm:$0xff]
        %s5776 = sld [smem:[#allocation9 + $0x305]]
        %v5777 = vstv %s5776
        %v5778 = vmul.f32 %v5760, %v5777
        %v5779 = vmul.f32 %v5761, %v5777
        %v5780 = vmul.f32 %v5762, %v5777
        %v5781 = vmul.f32 %v5763, %v5777
        %v5782 = vmul.f32 %v5764, %v5777
        %v5783 = vmul.f32 %v5765, %v5777
        %v5784 = vmul.f32 %v5766, %v5777
        %v5785 = vmul.f32 %v5767, %v5777
        %v5786 = vmul.f32 %v5768, %v5777
        %v5787 = vmul.f32 %v5769, %v5777
        %v5788 = vmul.f32 %v5770, %v5777
        %v5789 = vmul.f32 %v5771, %v5777
        %v5790 = vmul.f32 %v5772, %v5777
        %v5791 = vmul.f32 %v5773, %v5777
        %v5792 = vmul.f32 %v5774, %v5777
        %v5793 = vmul.f32 %v5775, %v5777
        %v5794 = vadd.f32 %v5744, %v5778
        %v5795 = vadd.f32 %v5745, %v5779
        %v5796 = vadd.f32 %v5746, %v5780
        %v5797 = vadd.f32 %v5747, %v5781
        %v5798 = vadd.f32 %v5748, %v5782
        %v5799 = vadd.f32 %v5749, %v5783
        %v5800 = vadd.f32 %v5750, %v5784
        %v5801 = vadd.f32 %v5751, %v5785
        %v5802 = vadd.f32 %v5752, %v5786
        %v5803 = vadd.f32 %v5753, %v5787
        %v5804 = vadd.f32 %v5754, %v5788
        %v5805 = vadd.f32 %v5755, %v5789
        %v5806 = vadd.f32 %v5756, %v5790
        %v5807 = vadd.f32 %v5757, %v5791
        %v5808 = vadd.f32 %v5758, %v5792
        %v5809 = vadd.f32 %v5759, %v5793
        %v5810 = vld [vmem:[%s2173] sm:$0xff]
        %v5811 = vld [vmem:[%s2173 + $0x8] sm:$0xff]
        %v5812 = vld [vmem:[%s2173 + $0x10] sm:$0xff]
        %v5813 = vld [vmem:[%s2173 + $0x18] sm:$0xff]
        %v5814 = vld [vmem:[%s2173 + $0x20] sm:$0xff]
        %v5815 = vld [vmem:[%s2173 + $0x28] sm:$0xff]
        %v5816 = vld [vmem:[%s2173 + $0x30] sm:$0xff]
        %v5817 = vld [vmem:[%s2173 + $0x38] sm:$0xff]
        %v5818 = vld [vmem:[%s2173 + $0x40] sm:$0xff]
        %v5819 = vld [vmem:[%s2173 + $0x48] sm:$0xff]
        %v5820 = vld [vmem:[%s2173 + $0x50] sm:$0xff]
        %v5821 = vld [vmem:[%s2173 + $0x58] sm:$0xff]
        %v5822 = vld [vmem:[%s2173 + $0x60] sm:$0xff]
        %v5823 = vld [vmem:[%s2173 + $0x68] sm:$0xff]
        %v5824 = vld [vmem:[%s2173 + $0x70] sm:$0xff]
        %v5825 = vld [vmem:[%s2173 + $0x78] sm:$0xff]
        %s5826 = sld [smem:[#allocation9 + $0x306]]
        %v5827 = vstv %s5826
        %v5828 = vmul.f32 %v5810, %v5827
        %v5829 = vmul.f32 %v5811, %v5827
        %v5830 = vmul.f32 %v5812, %v5827
        %v5831 = vmul.f32 %v5813, %v5827
        %v5832 = vmul.f32 %v5814, %v5827
        %v5833 = vmul.f32 %v5815, %v5827
        %v5834 = vmul.f32 %v5816, %v5827
        %v5835 = vmul.f32 %v5817, %v5827
        %v5836 = vmul.f32 %v5818, %v5827
        %v5837 = vmul.f32 %v5819, %v5827
        %v5838 = vmul.f32 %v5820, %v5827
        %v5839 = vmul.f32 %v5821, %v5827
        %v5840 = vmul.f32 %v5822, %v5827
        %v5841 = vmul.f32 %v5823, %v5827
        %v5842 = vmul.f32 %v5824, %v5827
        %v5843 = vmul.f32 %v5825, %v5827
        %v5844 = vadd.f32 %v5794, %v5828
        %v5845 = vadd.f32 %v5795, %v5829
        %v5846 = vadd.f32 %v5796, %v5830
        %v5847 = vadd.f32 %v5797, %v5831
        %v5848 = vadd.f32 %v5798, %v5832
        %v5849 = vadd.f32 %v5799, %v5833
        %v5850 = vadd.f32 %v5800, %v5834
        %v5851 = vadd.f32 %v5801, %v5835
        %v5852 = vadd.f32 %v5802, %v5836
        %v5853 = vadd.f32 %v5803, %v5837
        %v5854 = vadd.f32 %v5804, %v5838
        %v5855 = vadd.f32 %v5805, %v5839
        %v5856 = vadd.f32 %v5806, %v5840
        %v5857 = vadd.f32 %v5807, %v5841
        %v5858 = vadd.f32 %v5808, %v5842
        %v5859 = vadd.f32 %v5809, %v5843
        %v5860 = vld [vmem:[%s2420] sm:$0xff]
        %v5861 = vld [vmem:[%s2420 + $0x8] sm:$0xff]
        %v5862 = vld [vmem:[%s2420 + $0x10] sm:$0xff]
        %v5863 = vld [vmem:[%s2420 + $0x18] sm:$0xff]
        %v5864 = vld [vmem:[%s2420 + $0x20] sm:$0xff]
        %v5865 = vld [vmem:[%s2420 + $0x28] sm:$0xff]
        %v5866 = vld [vmem:[%s2420 + $0x30] sm:$0xff]
        %v5867 = vld [vmem:[%s2420 + $0x38] sm:$0xff]
        %v5868 = vld [vmem:[%s2420 + $0x40] sm:$0xff]
        %v5869 = vld [vmem:[%s2420 + $0x48] sm:$0xff]
        %v5870 = vld [vmem:[%s2420 + $0x50] sm:$0xff]
        %v5871 = vld [vmem:[%s2420 + $0x58] sm:$0xff]
        %v5872 = vld [vmem:[%s2420 + $0x60] sm:$0xff]
        %v5873 = vld [vmem:[%s2420 + $0x68] sm:$0xff]
        %v5874 = vld [vmem:[%s2420 + $0x70] sm:$0xff]
        %v5875 = vld [vmem:[%s2420 + $0x78] sm:$0xff]
        %s5876 = sld [smem:[#allocation9 + $0x307]]
        %v5877 = vstv %s5876
        %v5878 = vmul.f32 %v5860, %v5877
        %v5879 = vmul.f32 %v5861, %v5877
        %v5880 = vmul.f32 %v5862, %v5877
        %v5881 = vmul.f32 %v5863, %v5877
        %v5882 = vmul.f32 %v5864, %v5877
        %v5883 = vmul.f32 %v5865, %v5877
        %v5884 = vmul.f32 %v5866, %v5877
        %v5885 = vmul.f32 %v5867, %v5877
        %v5886 = vmul.f32 %v5868, %v5877
        %v5887 = vmul.f32 %v5869, %v5877
        %v5888 = vmul.f32 %v5870, %v5877
        %v5889 = vmul.f32 %v5871, %v5877
        %v5890 = vmul.f32 %v5872, %v5877
        %v5891 = vmul.f32 %v5873, %v5877
        %v5892 = vmul.f32 %v5874, %v5877
        %v5893 = vmul.f32 %v5875, %v5877
        %v5894 = vadd.f32 %v5844, %v5878
        %v5895 = vadd.f32 %v5845, %v5879
        %v5896 = vadd.f32 %v5846, %v5880
        %v5897 = vadd.f32 %v5847, %v5881
        %v5898 = vadd.f32 %v5848, %v5882
        %v5899 = vadd.f32 %v5849, %v5883
        %v5900 = vadd.f32 %v5850, %v5884
        %v5901 = vadd.f32 %v5851, %v5885
        %v5902 = vadd.f32 %v5852, %v5886
        %v5903 = vadd.f32 %v5853, %v5887
        %v5904 = vadd.f32 %v5854, %v5888
        %v5905 = vadd.f32 %v5855, %v5889
        %v5906 = vadd.f32 %v5856, %v5890
        %v5907 = vadd.f32 %v5857, %v5891
        %v5908 = vadd.f32 %v5858, %v5892
        %v5909 = vadd.f32 %v5859, %v5893
        %s5910 = sld [smem:[#allocation10 + $0x6]]
        %v5911 = vstv %s5910
        %v5912 = vadd.f32 %v5894, %v5911
        %v5913 = vadd.f32 %v5895, %v5911
        %v5914 = vadd.f32 %v5896, %v5911
        %v5915 = vadd.f32 %v5897, %v5911
        %v5916 = vadd.f32 %v5898, %v5911
        %v5917 = vadd.f32 %v5899, %v5911
        %v5918 = vadd.f32 %v5900, %v5911
        %v5919 = vadd.f32 %v5901, %v5911
        %v5920 = vadd.f32 %v5902, %v5911
        %v5921 = vadd.f32 %v5903, %v5911
        %v5922 = vadd.f32 %v5904, %v5911
        %v5923 = vadd.f32 %v5905, %v5911
        %v5924 = vadd.f32 %v5906, %v5911
        %v5925 = vadd.f32 %v5907, %v5911
        %v5926 = vadd.f32 %v5908, %v5911
        %v5927 = vadd.f32 %v5909, %v5911
        %v5928 = vxor.u32 %v5912, 2147483648
        %v5929 = vxor.u32 %v5913, 2147483648
        %v5930 = vxor.u32 %v5914, 2147483648
        %v5931 = vxor.u32 %v5915, 2147483648
        %v5932 = vxor.u32 %v5916, 2147483648
        %v5933 = vxor.u32 %v5917, 2147483648
        %v5934 = vxor.u32 %v5918, 2147483648
        %v5935 = vxor.u32 %v5919, 2147483648
        %v5936 = vxor.u32 %v5920, 2147483648
        %v5937 = vxor.u32 %v5921, 2147483648
        %v5938 = vxor.u32 %v5922, 2147483648
        %v5939 = vxor.u32 %v5923, 2147483648
        %v5940 = vxor.u32 %v5924, 2147483648
        %v5941 = vxor.u32 %v5925, 2147483648
        %v5942 = vxor.u32 %v5926, 2147483648
        %v5943 = vxor.u32 %v5927, 2147483648
        %v5944 = vmul.f32 %v5928, 1.442695
        %v5945 = vpow.pop %v5944
        %v5946 = vmul.f32 %v5929, 1.442695
        %v5947 = vpow.pop %v5946
        %v5948 = vmul.f32 %v5930, 1.442695
        %v5949 = vpow.pop %v5948
        %v5950 = vmul.f32 %v5931, 1.442695
        %v5951 = vpow.pop %v5950
        %v5952 = vmul.f32 %v5932, 1.442695
        %v5953 = vpow.pop %v5952
        %v5954 = vmul.f32 %v5933, 1.442695
        %v5955 = vpow.pop %v5954
        %v5956 = vmul.f32 %v5934, 1.442695
        %v5957 = vpow.pop %v5956
        %v5958 = vmul.f32 %v5935, 1.442695
        %v5959 = vpow.pop %v5958
        %v5960 = vmul.f32 %v5936, 1.442695
        %v5961 = vpow.pop %v5960
        %v5962 = vmul.f32 %v5937, 1.442695
        %v5963 = vpow.pop %v5962
        %v5964 = vmul.f32 %v5938, 1.442695
        %v5965 = vpow.pop %v5964
        %v5966 = vmul.f32 %v5939, 1.442695
        %v5967 = vpow.pop %v5966
        %v5968 = vmul.f32 %v5940, 1.442695
        %v5969 = vpow.pop %v5968
        %v5970 = vmul.f32 %v5941, 1.442695
        %v5971 = vpow.pop %v5970
        %v5972 = vmul.f32 %v5942, 1.442695
        %v5973 = vpow.pop %v5972
        %v5974 = vmul.f32 %v5943, 1.442695
        %v5975 = vpow.pop %v5974
        %v5976 = vadd.f32 %v5945, 1.0
        %v5977 = vadd.f32 %v5947, 1.0
        %v5978 = vadd.f32 %v5949, 1.0
        %v5979 = vadd.f32 %v5951, 1.0
        %v5980 = vadd.f32 %v5953, 1.0
        %v5981 = vadd.f32 %v5955, 1.0
        %v5982 = vadd.f32 %v5957, 1.0
        %v5983 = vadd.f32 %v5959, 1.0
        %v5984 = vadd.f32 %v5961, 1.0
        %v5985 = vadd.f32 %v5963, 1.0
        %v5986 = vadd.f32 %v5965, 1.0
        %v5987 = vadd.f32 %v5967, 1.0
        %v5988 = vadd.f32 %v5969, 1.0
        %v5989 = vadd.f32 %v5971, 1.0
        %v5990 = vadd.f32 %v5973, 1.0
        %v5991 = vadd.f32 %v5975, 1.0
        %v5992 = vrcp.pop %v5976
        %v5993 = vmul.f32 1.0, %v5992
        %v5994 = vrcp.pop %v5977
        %v5995 = vmul.f32 1.0, %v5994
        %v5996 = vrcp.pop %v5978
        %v5997 = vmul.f32 1.0, %v5996
        %v5998 = vrcp.pop %v5979
        %v5999 = vmul.f32 1.0, %v5998
        %v6000 = vrcp.pop %v5980
        %v6001 = vmul.f32 1.0, %v6000
        %v6002 = vrcp.pop %v5981
        %v6003 = vmul.f32 1.0, %v6002
        %v6004 = vrcp.pop %v5982
        %v6005 = vmul.f32 1.0, %v6004
        %v6006 = vrcp.pop %v5983
        %v6007 = vmul.f32 1.0, %v6006
        %v6008 = vrcp.pop %v5984
        %v6009 = vmul.f32 1.0, %v6008
        %v6010 = vrcp.pop %v5985
        %v6011 = vmul.f32 1.0, %v6010
        %v6012 = vrcp.pop %v5986
        %v6013 = vmul.f32 1.0, %v6012
        %v6014 = vrcp.pop %v5987
        %v6015 = vmul.f32 1.0, %v6014
        %v6016 = vrcp.pop %v5988
        %v6017 = vmul.f32 1.0, %v6016
        %v6018 = vrcp.pop %v5989
        %v6019 = vmul.f32 1.0, %v6018
        %v6020 = vrcp.pop %v5990
        %v6021 = vmul.f32 1.0, %v6020
        %v6022 = vrcp.pop %v5991
        %v6023 = vmul.f32 1.0, %v6022
        %s6024 = scalar_lea.vmem %s408, 768 [#allocation13]
        %6025 = vst [vmem:[%s6024] sm:$0xff] %v5993
        %6026 = vst [vmem:[%s6024 + $0x8] sm:$0xff] %v5995
        %6027 = vst [vmem:[%s6024 + $0x10] sm:$0xff] %v5997
        %6028 = vst [vmem:[%s6024 + $0x18] sm:$0xff] %v5999
        %6029 = vst [vmem:[%s6024 + $0x20] sm:$0xff] %v6001
        %6030 = vst [vmem:[%s6024 + $0x28] sm:$0xff] %v6003
        %6031 = vst [vmem:[%s6024 + $0x30] sm:$0xff] %v6005
        %6032 = vst [vmem:[%s6024 + $0x38] sm:$0xff] %v6007
        %6033 = vst [vmem:[%s6024 + $0x40] sm:$0xff] %v6009
        %6034 = vst [vmem:[%s6024 + $0x48] sm:$0xff] %v6011
        %6035 = vst [vmem:[%s6024 + $0x50] sm:$0xff] %v6013
        %6036 = vst [vmem:[%s6024 + $0x58] sm:$0xff] %v6015
        %6037 = vst [vmem:[%s6024 + $0x60] sm:$0xff] %v6017
        %6038 = vst [vmem:[%s6024 + $0x68] sm:$0xff] %v6019
        %6039 = vst [vmem:[%s6024 + $0x70] sm:$0xff] %v6021
        %6040 = vst [vmem:[%s6024 + $0x78] sm:$0xff] %v6023
        %v6041 = vld [vmem:[%s401] sm:$0xff]
        %v6042 = vld [vmem:[%s401 + $0x8] sm:$0xff]
        %v6043 = vld [vmem:[%s401 + $0x10] sm:$0xff]
        %v6044 = vld [vmem:[%s401 + $0x18] sm:$0xff]
        %v6045 = vld [vmem:[%s401 + $0x20] sm:$0xff]
        %v6046 = vld [vmem:[%s401 + $0x28] sm:$0xff]
        %v6047 = vld [vmem:[%s401 + $0x30] sm:$0xff]
        %v6048 = vld [vmem:[%s401 + $0x38] sm:$0xff]
        %v6049 = vld [vmem:[%s401 + $0x40] sm:$0xff]
        %v6050 = vld [vmem:[%s401 + $0x48] sm:$0xff]
        %v6051 = vld [vmem:[%s401 + $0x50] sm:$0xff]
        %v6052 = vld [vmem:[%s401 + $0x58] sm:$0xff]
        %v6053 = vld [vmem:[%s401 + $0x60] sm:$0xff]
        %v6054 = vld [vmem:[%s401 + $0x68] sm:$0xff]
        %v6055 = vld [vmem:[%s401 + $0x70] sm:$0xff]
        %v6056 = vld [vmem:[%s401 + $0x78] sm:$0xff]
        %s6057 = sld [smem:[#allocation9 + $0x380]]
        %v6058 = vstv %s6057
        %v6059 = vmul.f32 %v6041, %v6058
        %v6060 = vmul.f32 %v6042, %v6058
        %v6061 = vmul.f32 %v6043, %v6058
        %v6062 = vmul.f32 %v6044, %v6058
        %v6063 = vmul.f32 %v6045, %v6058
        %v6064 = vmul.f32 %v6046, %v6058
        %v6065 = vmul.f32 %v6047, %v6058
        %v6066 = vmul.f32 %v6048, %v6058
        %v6067 = vmul.f32 %v6049, %v6058
        %v6068 = vmul.f32 %v6050, %v6058
        %v6069 = vmul.f32 %v6051, %v6058
        %v6070 = vmul.f32 %v6052, %v6058
        %v6071 = vmul.f32 %v6053, %v6058
        %v6072 = vmul.f32 %v6054, %v6058
        %v6073 = vmul.f32 %v6055, %v6058
        %v6074 = vmul.f32 %v6056, %v6058
        %v6075 = vld [vmem:[%s938] sm:$0xff]
        %v6076 = vld [vmem:[%s938 + $0x8] sm:$0xff]
        %v6077 = vld [vmem:[%s938 + $0x10] sm:$0xff]
        %v6078 = vld [vmem:[%s938 + $0x18] sm:$0xff]
        %v6079 = vld [vmem:[%s938 + $0x20] sm:$0xff]
        %v6080 = vld [vmem:[%s938 + $0x28] sm:$0xff]
        %v6081 = vld [vmem:[%s938 + $0x30] sm:$0xff]
        %v6082 = vld [vmem:[%s938 + $0x38] sm:$0xff]
        %v6083 = vld [vmem:[%s938 + $0x40] sm:$0xff]
        %v6084 = vld [vmem:[%s938 + $0x48] sm:$0xff]
        %v6085 = vld [vmem:[%s938 + $0x50] sm:$0xff]
        %v6086 = vld [vmem:[%s938 + $0x58] sm:$0xff]
        %v6087 = vld [vmem:[%s938 + $0x60] sm:$0xff]
        %v6088 = vld [vmem:[%s938 + $0x68] sm:$0xff]
        %v6089 = vld [vmem:[%s938 + $0x70] sm:$0xff]
        %v6090 = vld [vmem:[%s938 + $0x78] sm:$0xff]
        %s6091 = sld [smem:[#allocation9 + $0x381]]
        %v6092 = vstv %s6091
        %v6093 = vmul.f32 %v6075, %v6092
        %v6094 = vmul.f32 %v6076, %v6092
        %v6095 = vmul.f32 %v6077, %v6092
        %v6096 = vmul.f32 %v6078, %v6092
        %v6097 = vmul.f32 %v6079, %v6092
        %v6098 = vmul.f32 %v6080, %v6092
        %v6099 = vmul.f32 %v6081, %v6092
        %v6100 = vmul.f32 %v6082, %v6092
        %v6101 = vmul.f32 %v6083, %v6092
        %v6102 = vmul.f32 %v6084, %v6092
        %v6103 = vmul.f32 %v6085, %v6092
        %v6104 = vmul.f32 %v6086, %v6092
        %v6105 = vmul.f32 %v6087, %v6092
        %v6106 = vmul.f32 %v6088, %v6092
        %v6107 = vmul.f32 %v6089, %v6092
        %v6108 = vmul.f32 %v6090, %v6092
        %v6109 = vadd.f32 %v6059, %v6093
        %v6110 = vadd.f32 %v6060, %v6094
        %v6111 = vadd.f32 %v6061, %v6095
        %v6112 = vadd.f32 %v6062, %v6096
        %v6113 = vadd.f32 %v6063, %v6097
        %v6114 = vadd.f32 %v6064, %v6098
        %v6115 = vadd.f32 %v6065, %v6099
        %v6116 = vadd.f32 %v6066, %v6100
        %v6117 = vadd.f32 %v6067, %v6101
        %v6118 = vadd.f32 %v6068, %v6102
        %v6119 = vadd.f32 %v6069, %v6103
        %v6120 = vadd.f32 %v6070, %v6104
        %v6121 = vadd.f32 %v6071, %v6105
        %v6122 = vadd.f32 %v6072, %v6106
        %v6123 = vadd.f32 %v6073, %v6107
        %v6124 = vadd.f32 %v6074, %v6108
        %v6125 = vld [vmem:[%s1185] sm:$0xff]
        %v6126 = vld [vmem:[%s1185 + $0x8] sm:$0xff]
        %v6127 = vld [vmem:[%s1185 + $0x10] sm:$0xff]
        %v6128 = vld [vmem:[%s1185 + $0x18] sm:$0xff]
        %v6129 = vld [vmem:[%s1185 + $0x20] sm:$0xff]
        %v6130 = vld [vmem:[%s1185 + $0x28] sm:$0xff]
        %v6131 = vld [vmem:[%s1185 + $0x30] sm:$0xff]
        %v6132 = vld [vmem:[%s1185 + $0x38] sm:$0xff]
        %v6133 = vld [vmem:[%s1185 + $0x40] sm:$0xff]
        %v6134 = vld [vmem:[%s1185 + $0x48] sm:$0xff]
        %v6135 = vld [vmem:[%s1185 + $0x50] sm:$0xff]
        %v6136 = vld [vmem:[%s1185 + $0x58] sm:$0xff]
        %v6137 = vld [vmem:[%s1185 + $0x60] sm:$0xff]
        %v6138 = vld [vmem:[%s1185 + $0x68] sm:$0xff]
        %v6139 = vld [vmem:[%s1185 + $0x70] sm:$0xff]
        %v6140 = vld [vmem:[%s1185 + $0x78] sm:$0xff]
        %s6141 = sld [smem:[#allocation9 + $0x382]]
        %v6142 = vstv %s6141
        %v6143 = vmul.f32 %v6125, %v6142
        %v6144 = vmul.f32 %v6126, %v6142
        %v6145 = vmul.f32 %v6127, %v6142
        %v6146 = vmul.f32 %v6128, %v6142
        %v6147 = vmul.f32 %v6129, %v6142
        %v6148 = vmul.f32 %v6130, %v6142
        %v6149 = vmul.f32 %v6131, %v6142
        %v6150 = vmul.f32 %v6132, %v6142
        %v6151 = vmul.f32 %v6133, %v6142
        %v6152 = vmul.f32 %v6134, %v6142
        %v6153 = vmul.f32 %v6135, %v6142
        %v6154 = vmul.f32 %v6136, %v6142
        %v6155 = vmul.f32 %v6137, %v6142
        %v6156 = vmul.f32 %v6138, %v6142
        %v6157 = vmul.f32 %v6139, %v6142
        %v6158 = vmul.f32 %v6140, %v6142
        %v6159 = vadd.f32 %v6109, %v6143
        %v6160 = vadd.f32 %v6110, %v6144
        %v6161 = vadd.f32 %v6111, %v6145
        %v6162 = vadd.f32 %v6112, %v6146
        %v6163 = vadd.f32 %v6113, %v6147
        %v6164 = vadd.f32 %v6114, %v6148
        %v6165 = vadd.f32 %v6115, %v6149
        %v6166 = vadd.f32 %v6116, %v6150
        %v6167 = vadd.f32 %v6117, %v6151
        %v6168 = vadd.f32 %v6118, %v6152
        %v6169 = vadd.f32 %v6119, %v6153
        %v6170 = vadd.f32 %v6120, %v6154
        %v6171 = vadd.f32 %v6121, %v6155
        %v6172 = vadd.f32 %v6122, %v6156
        %v6173 = vadd.f32 %v6123, %v6157
        %v6174 = vadd.f32 %v6124, %v6158
        %v6175 = vld [vmem:[%s1432] sm:$0xff]
        %v6176 = vld [vmem:[%s1432 + $0x8] sm:$0xff]
        %v6177 = vld [vmem:[%s1432 + $0x10] sm:$0xff]
        %v6178 = vld [vmem:[%s1432 + $0x18] sm:$0xff]
        %v6179 = vld [vmem:[%s1432 + $0x20] sm:$0xff]
        %v6180 = vld [vmem:[%s1432 + $0x28] sm:$0xff]
        %v6181 = vld [vmem:[%s1432 + $0x30] sm:$0xff]
        %v6182 = vld [vmem:[%s1432 + $0x38] sm:$0xff]
        %v6183 = vld [vmem:[%s1432 + $0x40] sm:$0xff]
        %v6184 = vld [vmem:[%s1432 + $0x48] sm:$0xff]
        %v6185 = vld [vmem:[%s1432 + $0x50] sm:$0xff]
        %v6186 = vld [vmem:[%s1432 + $0x58] sm:$0xff]
        %v6187 = vld [vmem:[%s1432 + $0x60] sm:$0xff]
        %v6188 = vld [vmem:[%s1432 + $0x68] sm:$0xff]
        %v6189 = vld [vmem:[%s1432 + $0x70] sm:$0xff]
        %v6190 = vld [vmem:[%s1432 + $0x78] sm:$0xff]
        %s6191 = sld [smem:[#allocation9 + $0x383]]
        %v6192 = vstv %s6191
        %v6193 = vmul.f32 %v6175, %v6192
        %v6194 = vmul.f32 %v6176, %v6192
        %v6195 = vmul.f32 %v6177, %v6192
        %v6196 = vmul.f32 %v6178, %v6192
        %v6197 = vmul.f32 %v6179, %v6192
        %v6198 = vmul.f32 %v6180, %v6192
        %v6199 = vmul.f32 %v6181, %v6192
        %v6200 = vmul.f32 %v6182, %v6192
        %v6201 = vmul.f32 %v6183, %v6192
        %v6202 = vmul.f32 %v6184, %v6192
        %v6203 = vmul.f32 %v6185, %v6192
        %v6204 = vmul.f32 %v6186, %v6192
        %v6205 = vmul.f32 %v6187, %v6192
        %v6206 = vmul.f32 %v6188, %v6192
        %v6207 = vmul.f32 %v6189, %v6192
        %v6208 = vmul.f32 %v6190, %v6192
        %v6209 = vadd.f32 %v6159, %v6193
        %v6210 = vadd.f32 %v6160, %v6194
        %v6211 = vadd.f32 %v6161, %v6195
        %v6212 = vadd.f32 %v6162, %v6196
        %v6213 = vadd.f32 %v6163, %v6197
        %v6214 = vadd.f32 %v6164, %v6198
        %v6215 = vadd.f32 %v6165, %v6199
        %v6216 = vadd.f32 %v6166, %v6200
        %v6217 = vadd.f32 %v6167, %v6201
        %v6218 = vadd.f32 %v6168, %v6202
        %v6219 = vadd.f32 %v6169, %v6203
        %v6220 = vadd.f32 %v6170, %v6204
        %v6221 = vadd.f32 %v6171, %v6205
        %v6222 = vadd.f32 %v6172, %v6206
        %v6223 = vadd.f32 %v6173, %v6207
        %v6224 = vadd.f32 %v6174, %v6208
        %v6225 = vld [vmem:[%s1679] sm:$0xff]
        %v6226 = vld [vmem:[%s1679 + $0x8] sm:$0xff]
        %v6227 = vld [vmem:[%s1679 + $0x10] sm:$0xff]
        %v6228 = vld [vmem:[%s1679 + $0x18] sm:$0xff]
        %v6229 = vld [vmem:[%s1679 + $0x20] sm:$0xff]
        %v6230 = vld [vmem:[%s1679 + $0x28] sm:$0xff]
        %v6231 = vld [vmem:[%s1679 + $0x30] sm:$0xff]
        %v6232 = vld [vmem:[%s1679 + $0x38] sm:$0xff]
        %v6233 = vld [vmem:[%s1679 + $0x40] sm:$0xff]
        %v6234 = vld [vmem:[%s1679 + $0x48] sm:$0xff]
        %v6235 = vld [vmem:[%s1679 + $0x50] sm:$0xff]
        %v6236 = vld [vmem:[%s1679 + $0x58] sm:$0xff]
        %v6237 = vld [vmem:[%s1679 + $0x60] sm:$0xff]
        %v6238 = vld [vmem:[%s1679 + $0x68] sm:$0xff]
        %v6239 = vld [vmem:[%s1679 + $0x70] sm:$0xff]
        %v6240 = vld [vmem:[%s1679 + $0x78] sm:$0xff]
        %s6241 = sld [smem:[#allocation9 + $0x384]]
        %v6242 = vstv %s6241
        %v6243 = vmul.f32 %v6225, %v6242
        %v6244 = vmul.f32 %v6226, %v6242
        %v6245 = vmul.f32 %v6227, %v6242
        %v6246 = vmul.f32 %v6228, %v6242
        %v6247 = vmul.f32 %v6229, %v6242
        %v6248 = vmul.f32 %v6230, %v6242
        %v6249 = vmul.f32 %v6231, %v6242
        %v6250 = vmul.f32 %v6232, %v6242
        %v6251 = vmul.f32 %v6233, %v6242
        %v6252 = vmul.f32 %v6234, %v6242
        %v6253 = vmul.f32 %v6235, %v6242
        %v6254 = vmul.f32 %v6236, %v6242
        %v6255 = vmul.f32 %v6237, %v6242
        %v6256 = vmul.f32 %v6238, %v6242
        %v6257 = vmul.f32 %v6239, %v6242
        %v6258 = vmul.f32 %v6240, %v6242
        %v6259 = vadd.f32 %v6209, %v6243
        %v6260 = vadd.f32 %v6210, %v6244
        %v6261 = vadd.f32 %v6211, %v6245
        %v6262 = vadd.f32 %v6212, %v6246
        %v6263 = vadd.f32 %v6213, %v6247
        %v6264 = vadd.f32 %v6214, %v6248
        %v6265 = vadd.f32 %v6215, %v6249
        %v6266 = vadd.f32 %v6216, %v6250
        %v6267 = vadd.f32 %v6217, %v6251
        %v6268 = vadd.f32 %v6218, %v6252
        %v6269 = vadd.f32 %v6219, %v6253
        %v6270 = vadd.f32 %v6220, %v6254
        %v6271 = vadd.f32 %v6221, %v6255
        %v6272 = vadd.f32 %v6222, %v6256
        %v6273 = vadd.f32 %v6223, %v6257
        %v6274 = vadd.f32 %v6224, %v6258
        %v6275 = vld [vmem:[%s1926] sm:$0xff]
        %v6276 = vld [vmem:[%s1926 + $0x8] sm:$0xff]
        %v6277 = vld [vmem:[%s1926 + $0x10] sm:$0xff]
        %v6278 = vld [vmem:[%s1926 + $0x18] sm:$0xff]
        %v6279 = vld [vmem:[%s1926 + $0x20] sm:$0xff]
        %v6280 = vld [vmem:[%s1926 + $0x28] sm:$0xff]
        %v6281 = vld [vmem:[%s1926 + $0x30] sm:$0xff]
        %v6282 = vld [vmem:[%s1926 + $0x38] sm:$0xff]
        %v6283 = vld [vmem:[%s1926 + $0x40] sm:$0xff]
        %v6284 = vld [vmem:[%s1926 + $0x48] sm:$0xff]
        %v6285 = vld [vmem:[%s1926 + $0x50] sm:$0xff]
        %v6286 = vld [vmem:[%s1926 + $0x58] sm:$0xff]
        %v6287 = vld [vmem:[%s1926 + $0x60] sm:$0xff]
        %v6288 = vld [vmem:[%s1926 + $0x68] sm:$0xff]
        %v6289 = vld [vmem:[%s1926 + $0x70] sm:$0xff]
        %v6290 = vld [vmem:[%s1926 + $0x78] sm:$0xff]
        %s6291 = sld [smem:[#allocation9 + $0x385]]
        %v6292 = vstv %s6291
        %v6293 = vmul.f32 %v6275, %v6292
        %v6294 = vmul.f32 %v6276, %v6292
        %v6295 = vmul.f32 %v6277, %v6292
        %v6296 = vmul.f32 %v6278, %v6292
        %v6297 = vmul.f32 %v6279, %v6292
        %v6298 = vmul.f32 %v6280, %v6292
        %v6299 = vmul.f32 %v6281, %v6292
        %v6300 = vmul.f32 %v6282, %v6292
        %v6301 = vmul.f32 %v6283, %v6292
        %v6302 = vmul.f32 %v6284, %v6292
        %v6303 = vmul.f32 %v6285, %v6292
        %v6304 = vmul.f32 %v6286, %v6292
        %v6305 = vmul.f32 %v6287, %v6292
        %v6306 = vmul.f32 %v6288, %v6292
        %v6307 = vmul.f32 %v6289, %v6292
        %v6308 = vmul.f32 %v6290, %v6292
        %v6309 = vadd.f32 %v6259, %v6293
        %v6310 = vadd.f32 %v6260, %v6294
        %v6311 = vadd.f32 %v6261, %v6295
        %v6312 = vadd.f32 %v6262, %v6296
        %v6313 = vadd.f32 %v6263, %v6297
        %v6314 = vadd.f32 %v6264, %v6298
        %v6315 = vadd.f32 %v6265, %v6299
        %v6316 = vadd.f32 %v6266, %v6300
        %v6317 = vadd.f32 %v6267, %v6301
        %v6318 = vadd.f32 %v6268, %v6302
        %v6319 = vadd.f32 %v6269, %v6303
        %v6320 = vadd.f32 %v6270, %v6304
        %v6321 = vadd.f32 %v6271, %v6305
        %v6322 = vadd.f32 %v6272, %v6306
        %v6323 = vadd.f32 %v6273, %v6307
        %v6324 = vadd.f32 %v6274, %v6308
        %v6325 = vld [vmem:[%s2173] sm:$0xff]
        %v6326 = vld [vmem:[%s2173 + $0x8] sm:$0xff]
        %v6327 = vld [vmem:[%s2173 + $0x10] sm:$0xff]
        %v6328 = vld [vmem:[%s2173 + $0x18] sm:$0xff]
        %v6329 = vld [vmem:[%s2173 + $0x20] sm:$0xff]
        %v6330 = vld [vmem:[%s2173 + $0x28] sm:$0xff]
        %v6331 = vld [vmem:[%s2173 + $0x30] sm:$0xff]
        %v6332 = vld [vmem:[%s2173 + $0x38] sm:$0xff]
        %v6333 = vld [vmem:[%s2173 + $0x40] sm:$0xff]
        %v6334 = vld [vmem:[%s2173 + $0x48] sm:$0xff]
        %v6335 = vld [vmem:[%s2173 + $0x50] sm:$0xff]
        %v6336 = vld [vmem:[%s2173 + $0x58] sm:$0xff]
        %v6337 = vld [vmem:[%s2173 + $0x60] sm:$0xff]
        %v6338 = vld [vmem:[%s2173 + $0x68] sm:$0xff]
        %v6339 = vld [vmem:[%s2173 + $0x70] sm:$0xff]
        %v6340 = vld [vmem:[%s2173 + $0x78] sm:$0xff]
        %s6341 = sld [smem:[#allocation9 + $0x386]]
        %v6342 = vstv %s6341
        %v6343 = vmul.f32 %v6325, %v6342
        %v6344 = vmul.f32 %v6326, %v6342
        %v6345 = vmul.f32 %v6327, %v6342
        %v6346 = vmul.f32 %v6328, %v6342
        %v6347 = vmul.f32 %v6329, %v6342
        %v6348 = vmul.f32 %v6330, %v6342
        %v6349 = vmul.f32 %v6331, %v6342
        %v6350 = vmul.f32 %v6332, %v6342
        %v6351 = vmul.f32 %v6333, %v6342
        %v6352 = vmul.f32 %v6334, %v6342
        %v6353 = vmul.f32 %v6335, %v6342
        %v6354 = vmul.f32 %v6336, %v6342
        %v6355 = vmul.f32 %v6337, %v6342
        %v6356 = vmul.f32 %v6338, %v6342
        %v6357 = vmul.f32 %v6339, %v6342
        %v6358 = vmul.f32 %v6340, %v6342
        %v6359 = vadd.f32 %v6309, %v6343
        %v6360 = vadd.f32 %v6310, %v6344
        %v6361 = vadd.f32 %v6311, %v6345
        %v6362 = vadd.f32 %v6312, %v6346
        %v6363 = vadd.f32 %v6313, %v6347
        %v6364 = vadd.f32 %v6314, %v6348
        %v6365 = vadd.f32 %v6315, %v6349
        %v6366 = vadd.f32 %v6316, %v6350
        %v6367 = vadd.f32 %v6317, %v6351
        %v6368 = vadd.f32 %v6318, %v6352
        %v6369 = vadd.f32 %v6319, %v6353
        %v6370 = vadd.f32 %v6320, %v6354
        %v6371 = vadd.f32 %v6321, %v6355
        %v6372 = vadd.f32 %v6322, %v6356
        %v6373 = vadd.f32 %v6323, %v6357
        %v6374 = vadd.f32 %v6324, %v6358
        %v6375 = vld [vmem:[%s2420] sm:$0xff]
        %v6376 = vld [vmem:[%s2420 + $0x8] sm:$0xff]
        %v6377 = vld [vmem:[%s2420 + $0x10] sm:$0xff]
        %v6378 = vld [vmem:[%s2420 + $0x18] sm:$0xff]
        %v6379 = vld [vmem:[%s2420 + $0x20] sm:$0xff]
        %v6380 = vld [vmem:[%s2420 + $0x28] sm:$0xff]
        %v6381 = vld [vmem:[%s2420 + $0x30] sm:$0xff]
        %v6382 = vld [vmem:[%s2420 + $0x38] sm:$0xff]
        %v6383 = vld [vmem:[%s2420 + $0x40] sm:$0xff]
        %v6384 = vld [vmem:[%s2420 + $0x48] sm:$0xff]
        %v6385 = vld [vmem:[%s2420 + $0x50] sm:$0xff]
        %v6386 = vld [vmem:[%s2420 + $0x58] sm:$0xff]
        %v6387 = vld [vmem:[%s2420 + $0x60] sm:$0xff]
        %v6388 = vld [vmem:[%s2420 + $0x68] sm:$0xff]
        %v6389 = vld [vmem:[%s2420 + $0x70] sm:$0xff]
        %v6390 = vld [vmem:[%s2420 + $0x78] sm:$0xff]
        %s6391 = sld [smem:[#allocation9 + $0x387]]
        %v6392 = vstv %s6391
        %v6393 = vmul.f32 %v6375, %v6392
        %v6394 = vmul.f32 %v6376, %v6392
        %v6395 = vmul.f32 %v6377, %v6392
        %v6396 = vmul.f32 %v6378, %v6392
        %v6397 = vmul.f32 %v6379, %v6392
        %v6398 = vmul.f32 %v6380, %v6392
        %v6399 = vmul.f32 %v6381, %v6392
        %v6400 = vmul.f32 %v6382, %v6392
        %v6401 = vmul.f32 %v6383, %v6392
        %v6402 = vmul.f32 %v6384, %v6392
        %v6403 = vmul.f32 %v6385, %v6392
        %v6404 = vmul.f32 %v6386, %v6392
        %v6405 = vmul.f32 %v6387, %v6392
        %v6406 = vmul.f32 %v6388, %v6392
        %v6407 = vmul.f32 %v6389, %v6392
        %v6408 = vmul.f32 %v6390, %v6392
        %v6409 = vadd.f32 %v6359, %v6393
        %v6410 = vadd.f32 %v6360, %v6394
        %v6411 = vadd.f32 %v6361, %v6395
        %v6412 = vadd.f32 %v6362, %v6396
        %v6413 = vadd.f32 %v6363, %v6397
        %v6414 = vadd.f32 %v6364, %v6398
        %v6415 = vadd.f32 %v6365, %v6399
        %v6416 = vadd.f32 %v6366, %v6400
        %v6417 = vadd.f32 %v6367, %v6401
        %v6418 = vadd.f32 %v6368, %v6402
        %v6419 = vadd.f32 %v6369, %v6403
        %v6420 = vadd.f32 %v6370, %v6404
        %v6421 = vadd.f32 %v6371, %v6405
        %v6422 = vadd.f32 %v6372, %v6406
        %v6423 = vadd.f32 %v6373, %v6407
        %v6424 = vadd.f32 %v6374, %v6408
        %s6425 = sld [smem:[#allocation10 + $0x7]]
        %v6426 = vstv %s6425
        %v6427 = vadd.f32 %v6409, %v6426
        %v6428 = vadd.f32 %v6410, %v6426
        %v6429 = vadd.f32 %v6411, %v6426
        %v6430 = vadd.f32 %v6412, %v6426
        %v6431 = vadd.f32 %v6413, %v6426
        %v6432 = vadd.f32 %v6414, %v6426
        %v6433 = vadd.f32 %v6415, %v6426
        %v6434 = vadd.f32 %v6416, %v6426
        %v6435 = vadd.f32 %v6417, %v6426
        %v6436 = vadd.f32 %v6418, %v6426
        %v6437 = vadd.f32 %v6419, %v6426
        %v6438 = vadd.f32 %v6420, %v6426
        %v6439 = vadd.f32 %v6421, %v6426
        %v6440 = vadd.f32 %v6422, %v6426
        %v6441 = vadd.f32 %v6423, %v6426
        %v6442 = vadd.f32 %v6424, %v6426
        %v6443 = vxor.u32 %v6427, 2147483648
        %v6444 = vxor.u32 %v6428, 2147483648
        %v6445 = vxor.u32 %v6429, 2147483648
        %v6446 = vxor.u32 %v6430, 2147483648
        %v6447 = vxor.u32 %v6431, 2147483648
        %v6448 = vxor.u32 %v6432, 2147483648
        %v6449 = vxor.u32 %v6433, 2147483648
        %v6450 = vxor.u32 %v6434, 2147483648
        %v6451 = vxor.u32 %v6435, 2147483648
        %v6452 = vxor.u32 %v6436, 2147483648
        %v6453 = vxor.u32 %v6437, 2147483648
        %v6454 = vxor.u32 %v6438, 2147483648
        %v6455 = vxor.u32 %v6439, 2147483648
        %v6456 = vxor.u32 %v6440, 2147483648
        %v6457 = vxor.u32 %v6441, 2147483648
        %v6458 = vxor.u32 %v6442, 2147483648
        %v6459 = vmul.f32 %v6443, 1.442695
        %v6460 = vpow.pop %v6459
        %v6461 = vmul.f32 %v6444, 1.442695
        %v6462 = vpow.pop %v6461
        %v6463 = vmul.f32 %v6445, 1.442695
        %v6464 = vpow.pop %v6463
        %v6465 = vmul.f32 %v6446, 1.442695
        %v6466 = vpow.pop %v6465
        %v6467 = vmul.f32 %v6447, 1.442695
        %v6468 = vpow.pop %v6467
        %v6469 = vmul.f32 %v6448, 1.442695
        %v6470 = vpow.pop %v6469
        %v6471 = vmul.f32 %v6449, 1.442695
        %v6472 = vpow.pop %v6471
        %v6473 = vmul.f32 %v6450, 1.442695
        %v6474 = vpow.pop %v6473
        %v6475 = vmul.f32 %v6451, 1.442695
        %v6476 = vpow.pop %v6475
        %v6477 = vmul.f32 %v6452, 1.442695
        %v6478 = vpow.pop %v6477
        %v6479 = vmul.f32 %v6453, 1.442695
        %v6480 = vpow.pop %v6479
        %v6481 = vmul.f32 %v6454, 1.442695
        %v6482 = vpow.pop %v6481
        %v6483 = vmul.f32 %v6455, 1.442695
        %v6484 = vpow.pop %v6483
        %v6485 = vmul.f32 %v6456, 1.442695
        %v6486 = vpow.pop %v6485
        %v6487 = vmul.f32 %v6457, 1.442695
        %v6488 = vpow.pop %v6487
        %v6489 = vmul.f32 %v6458, 1.442695
        %v6490 = vpow.pop %v6489
        %v6491 = vadd.f32 %v6460, 1.0
        %v6492 = vadd.f32 %v6462, 1.0
        %v6493 = vadd.f32 %v6464, 1.0
        %v6494 = vadd.f32 %v6466, 1.0
        %v6495 = vadd.f32 %v6468, 1.0
        %v6496 = vadd.f32 %v6470, 1.0
        %v6497 = vadd.f32 %v6472, 1.0
        %v6498 = vadd.f32 %v6474, 1.0
        %v6499 = vadd.f32 %v6476, 1.0
        %v6500 = vadd.f32 %v6478, 1.0
        %v6501 = vadd.f32 %v6480, 1.0
        %v6502 = vadd.f32 %v6482, 1.0
        %v6503 = vadd.f32 %v6484, 1.0
        %v6504 = vadd.f32 %v6486, 1.0
        %v6505 = vadd.f32 %v6488, 1.0
        %v6506 = vadd.f32 %v6490, 1.0
        %v6507 = vrcp.pop %v6491
        %v6508 = vmul.f32 1.0, %v6507
        %v6509 = vrcp.pop %v6492
        %v6510 = vmul.f32 1.0, %v6509
        %v6511 = vrcp.pop %v6493
        %v6512 = vmul.f32 1.0, %v6511
        %v6513 = vrcp.pop %v6494
        %v6514 = vmul.f32 1.0, %v6513
        %v6515 = vrcp.pop %v6495
        %v6516 = vmul.f32 1.0, %v6515
        %v6517 = vrcp.pop %v6496
        %v6518 = vmul.f32 1.0, %v6517
        %v6519 = vrcp.pop %v6497
        %v6520 = vmul.f32 1.0, %v6519
        %v6521 = vrcp.pop %v6498
        %v6522 = vmul.f32 1.0, %v6521
        %v6523 = vrcp.pop %v6499
        %v6524 = vmul.f32 1.0, %v6523
        %v6525 = vrcp.pop %v6500
        %v6526 = vmul.f32 1.0, %v6525
        %v6527 = vrcp.pop %v6501
        %v6528 = vmul.f32 1.0, %v6527
        %v6529 = vrcp.pop %v6502
        %v6530 = vmul.f32 1.0, %v6529
        %v6531 = vrcp.pop %v6503
        %v6532 = vmul.f32 1.0, %v6531
        %v6533 = vrcp.pop %v6504
        %v6534 = vmul.f32 1.0, %v6533
        %v6535 = vrcp.pop %v6505
        %v6536 = vmul.f32 1.0, %v6535
        %v6537 = vrcp.pop %v6506
        %v6538 = vmul.f32 1.0, %v6537
        %s6539 = scalar_lea.vmem %s408, 896 [#allocation13]
        %6540 = vst [vmem:[%s6539] sm:$0xff] %v6508
        %6541 = vst [vmem:[%s6539 + $0x8] sm:$0xff] %v6510
        %6542 = vst [vmem:[%s6539 + $0x10] sm:$0xff] %v6512
        %6543 = vst [vmem:[%s6539 + $0x18] sm:$0xff] %v6514
        %6544 = vst [vmem:[%s6539 + $0x20] sm:$0xff] %v6516
        %6545 = vst [vmem:[%s6539 + $0x28] sm:$0xff] %v6518
        %6546 = vst [vmem:[%s6539 + $0x30] sm:$0xff] %v6520
        %6547 = vst [vmem:[%s6539 + $0x38] sm:$0xff] %v6522
        %6548 = vst [vmem:[%s6539 + $0x40] sm:$0xff] %v6524
        %6549 = vst [vmem:[%s6539 + $0x48] sm:$0xff] %v6526
        %6550 = vst [vmem:[%s6539 + $0x50] sm:$0xff] %v6528
        %6551 = vst [vmem:[%s6539 + $0x58] sm:$0xff] %v6530
        %6552 = vst [vmem:[%s6539 + $0x60] sm:$0xff] %v6532
        %6553 = vst [vmem:[%s6539 + $0x68] sm:$0xff] %v6534
        %6554 = vst [vmem:[%s6539 + $0x70] sm:$0xff] %v6536
        %6555 = vst [vmem:[%s6539 + $0x78] sm:$0xff] %v6538
        %s6556 = sand.u32 %s209, 1
        %s6557 = scalar_lea.sflag [#allocation4], %s6556
        %s6558 = sand.u32 %s209, 1
        %s6559 = smul.addr %s6558, 1024
        %s6560 = scalar_lea.vmem [#allocation12], %s6559
        %s6561 = sand.u32 %s237, 1
        %s6562 = scalar_lea.sflag [#allocation14], %s6561
        %s6563 = sand.u32 %s237, 1
        %s6564 = smul.addr %s6563, 1024
        %s6565 = scalar_lea.vmem [#allocation13], %s6564
        // Predicated region
        $region69: #{after_res_forward.1} parent=47 // pred_check
          %p6566 = pneg %p219
        $region70: #{after_res_forward.1} parent=47 // pred_check_branch
          %6568 = sbr.rel (%p6566) target = $region72
        $region71: #{after_res_forward.1} parent=47 // pred_region
          #allocation16 [shape = 'u32[6]{0}', space=smem, size = 0x18, scoped, tag = 'DMA stride descriptor']
          %s6569 = smul.u32 8, %s35
          %s6571 = ssub.s32 16384, 16384
          %6572 = vsyncadd %s6557, %s6571
          %s6573 = smul.addr %s6569, 2
          %s6574 = smul.addr %s34, 512
          %s6575 = sadd.s32 %s6573, %s6574
          %s6576 = smul.addr %s6575, 128
          %s6577 = scalar_lea.hbm %s7, %s6576
          %s6579 = sshll.u32 1, 14
          %s6580 = sxor.u32 4294967295, %s6579
          %s6583 = sshll.u32 7, 18
          %s6584 = sxor.u32 4294967295, %s6583
          %s6585 = sand.u32 0, %s6584
          %s6587 = sor.u32 %s6585, 0
          %s6589 = sshll.u32 3, 24
          %s6590 = sxor.u32 4294967295, %s6589
          %s6591 = sand.u32 %s6587, %s6590
          %s6593 = sor.u32 %s6591, 0
          %s6594 = sshll.u32 %s6560, 4
          %s6595 = int_to_ptr.vmem [resolvable:$true] %s6594
          %6601 = sst [smem:[#allocation16]] 2048
          %s6602 = scalar_lea.smem [#allocation16], 1
          %6603 = sst [smem:[%s6602]] 8192
          %s6604 = scalar_lea.smem [#allocation16], 2
          %6605 = sst [smem:[%s6604]] 8
          %s6606 = scalar_lea.smem [#allocation16], 3
          %6607 = sst [smem:[%s6606]] 256
          %s6608 = scalar_lea.smem [#allocation16], 4
          %6609 = sst [smem:[%s6608]] 256
          %s6610 = scalar_lea.smem [#allocation16], 5
          %6611 = sst [smem:[%s6610]] 16
          %6613 = dma.general %s6595, 16384, %s6577, %s6557, [#allocation15], [#allocation16], %s6593, 0
        $region72: #{after_res_forward.1} parent=47 // pred_fallthru
          _
        // Predicated region
        $region73: #{after_res_forward.1} parent=47 // pred_check
          %p6614 = pneg %p247
        $region74: #{after_res_forward.1} parent=47 // pred_check_branch
          %6616 = sbr.rel (%p6614) target = $region76
        $region75: #{after_res_forward.1} parent=47 // pred_region
          #allocation18 [shape = 'u32[6]{0}', space=smem, size = 0x18, scoped, tag = 'DMA stride descriptor']
          %s6617 = smul.u32 8, %s35
          %s6619 = ssub.s32 16384, 16384
          %6620 = vsyncadd %s6562, %s6619
          %s6621 = smul.addr %s6617, 2
          %s6622 = smul.addr %s34, 512
          %s6623 = sadd.s32 %s6621, %s6622
          %s6624 = smul.addr %s6623, 128
          %s6625 = scalar_lea.hbm %s8, %s6624
          %s6627 = sshll.u32 1, 14
          %s6628 = sxor.u32 4294967295, %s6627
          %s6631 = sshll.u32 7, 18
          %s6632 = sxor.u32 4294967295, %s6631
          %s6633 = sand.u32 0, %s6632
          %s6635 = sor.u32 %s6633, 0
          %s6637 = sshll.u32 3, 24
          %s6638 = sxor.u32 4294967295, %s6637
          %s6639 = sand.u32 %s6635, %s6638
          %s6641 = sor.u32 %s6639, 0
          %s6642 = sshll.u32 %s6565, 4
          %s6643 = int_to_ptr.vmem [resolvable:$true] %s6642
          %6649 = sst [smem:[#allocation18]] 2048
          %s6650 = scalar_lea.smem [#allocation18], 1
          %6651 = sst [smem:[%s6650]] 8192
          %s6652 = scalar_lea.smem [#allocation18], 2
          %6653 = sst [smem:[%s6652]] 8
          %s6654 = scalar_lea.smem [#allocation18], 3
          %6655 = sst [smem:[%s6654]] 256
          %s6656 = scalar_lea.smem [#allocation18], 4
          %6657 = sst [smem:[%s6656]] 256
          %s6658 = scalar_lea.smem [#allocation18], 5
          %6659 = sst [smem:[%s6658]] 16
          %6661 = dma.general %s6643, 16384, %s6625, %s6562, [#allocation17], [#allocation18], %s6641, 0
        $region76: #{after_res_forward.1} parent=47 // pred_fallthru
          _
      $region48: #{after_res_forward.1} parent=5 // pred_fallthru
        _
      %p6662 = scmp.le.s32.totalorder 2, %s25
      // Predicated region
      $region77: #{after_res_forward.1} parent=5 // pred_check
        %p6663 = pneg %p6662
      $region78: #{after_res_forward.1} parent=5 // pred_check_branch
        %6665 = sbr.rel (%p6663) target = $region80
      $region79: #{after_res_forward.1} parent=5 // pred_region
        %s6666 = ssub.s32 %s25, 2
        // Predicated region
        $region81: #{after_res_forward.1} parent=79 // pred_check
          %p6667 = pneg %p225
        $region82: #{after_res_forward.1} parent=79 // pred_check_branch
          %6669 = sbr.rel (%p6667) target = $region84
        $region83: #{after_res_forward.1} parent=79 // pred_region
          %s6670 = sand.u32 %s210, 1
          %s6671 = scalar_lea.sflag [#allocation4], %s6670
          %s6672 = sand.u32 %s210, 1
          %s6673 = smul.addr %s6672, 1024
          %s6674 = scalar_lea.vmem [#allocation12], %s6673
          %6675 = dma.done %s6671, 16384
        $region84: #{after_res_forward.1} parent=79 // pred_fallthru
          _
        // Predicated region
        $region85: #{after_res_forward.1} parent=79 // pred_check
          %p6676 = pneg %p253
        $region86: #{after_res_forward.1} parent=79 // pred_check_branch
          %6678 = sbr.rel (%p6676) target = $region88
        $region87: #{after_res_forward.1} parent=79 // pred_region
          %s6679 = sand.u32 %s238, 1
          %s6680 = scalar_lea.sflag [#allocation14], %s6679
          %s6681 = sand.u32 %s238, 1
          %s6682 = smul.addr %s6681, 1024
          %s6683 = scalar_lea.vmem [#allocation13], %s6682
          %6684 = dma.done %s6680, 16384
        $region88: #{after_res_forward.1} parent=79 // pred_fallthru
          _
      $region80: #{after_res_forward.1} parent=5 // pred_fallthru
        _
    $region6: #{after_res_forward.1} parent=1 // loop_footer
      %s29 = sadd.s32 1, %s25
    $region7: #{after_res_forward.1} parent=1 // loop_footer_branch
      %24 = sbr.rel target = $region3
    $region8: #{after_res_forward.1} parent=1 // loop_exit
      _
    %6685 = vsyncpa [#allocation3], 1
    %s6686 = scalar_lea.sflag [#allocation3], 1
    %6687 = vsyncpa %s6686, 1
    %6688 = vsyncpa [#allocation4], 1
    %s6689 = scalar_lea.sflag [#allocation4], 1
    %6690 = vsyncpa %s6689, 1
    %6691 = vsyncpa [#allocation14], 1
    %s6692 = scalar_lea.sflag [#allocation14], 1
    %6693 = vsyncpa %s6692, 1
    %6694 = vsyncpa [#allocation5], 1
    %s6695 = scalar_lea.sflag [#allocation5], 1
    %6696 = vsyncpa %s6695, 1
    %6697 = vsyncpa [#allocation8], 1
    %6698 = vsyncpa [#allocation11], 1

</llo_original>
